<compile_context>
chip_gen: v7x
topology: tpu7x:2x2x1
jax: 0.10.0
libtpu: 0.0.40
codegen_flags: <defaults>
</compile_context>

<pallas_src>
import numpy as np
import jax
import jax.numpy as jnp
from jax.experimental import pallas as pl
from jax.experimental.pallas import tpu as pltpu

# ------------------------------------------------------------------------- #
# Reference numpy helpers (copied verbatim from the PyTorch module)          #
# ------------------------------------------------------------------------- #
def get_hull(hull, bbox):
    original_hull = []
    binary_hull = []
    feature_hull = []
    w = bbox[2]
    h = bbox[3]
    for i in hull:
        original_hull.append([int(i[1] * h / 30), int(i[0] * w / 60)])
        binary_hull.append([i[1] / 30, i[0] / 60])
        feature_hull.append([int(i[1]), int(i[0])])
    return (original_hull, binary_hull, feature_hull)


def uniformsample(pgtnp_px2, newpnum):
    pnum, cnum = pgtnp_px2.shape
    assert cnum == 2
    idxnext_p = (np.arange(pnum, dtype=np.int32) + 1) % pnum
    pgtnext_px2 = pgtnp_px2[idxnext_p]
    edgelen_p = np.sqrt(np.sum((pgtnext_px2 - pgtnp_px2) ** 2, axis=1))
    edgeidxsort_p = np.argsort(edgelen_p)
    if pnum > newpnum:
        edgeidxkeep_k = edgeidxsort_p[pnum - newpnum:]
        edgeidxsort_k = np.sort(edgeidxkeep_k)
        pgtnp_kx2 = pgtnp_px2[edgeidxsort_k]
        assert pgtnp_kx2.shape[0] == newpnum
        return pgtnp_kx2
    else:
        edgenum = np.round(edgelen_p * newpnum / np.sum(edgelen_p)).astype(np.int32)
        for i in range(pnum):
            if edgenum[i] == 0:
                edgenum[i] = 1
        edgenumsum = np.sum(edgenum)
        if edgenumsum != newpnum:
            if edgenumsum > newpnum:
                id = -1
                passnum = edgenumsum - newpnum
                while passnum > 0:
                    edgeid = edgeidxsort_p[id]
                    if edgenum[edgeid] > passnum:
                        edgenum[edgeid] -= passnum
                        passnum -= passnum
                    else:
                        passnum -= edgenum[edgeid] - 1
                        edgenum[edgeid] -= edgenum[edgeid] - 1
                        id -= 1
            else:
                id = -1
                edgeid = edgeidxsort_p[id]
                edgenum[edgeid] += newpnum - edgenumsum
        assert np.sum(edgenum) == newpnum
        psample = []
        for i in range(pnum):
            pb_1x2 = pgtnp_px2[i:i + 1]
            pe_1x2 = pgtnext_px2[i:i + 1]
            pnewnum = edgenum[i]
            wnp_kx1 = np.arange(edgenum[i], dtype=np.float32).reshape(-1, 1) / edgenum[i]
            pmids = pb_1x2 * (1 - wnp_kx1) + pe_1x2 * wnp_kx1
            psample.append(pmids)
        psamplenp = np.concatenate(psample, axis=0)
        return psamplenp


def testing_hull(poly_logit_i, class_prob_i, bbox_i):
    # TODO(synk): `testing_hull` is undefined in the reference; synthesize a
    # deterministic 4-corner hull from the thresholded poly_logits mask.
    mask = 1.0 / (1.0 + np.exp(-poly_logit_i)) > 0.5
    if not mask.any():
        r0, r1, c0, c1 = 0, 29, 0, 59
    else:
        rows = np.where(mask.any(axis=1))[0]
        cols = np.where(mask.any(axis=0))[0]
        r0, r1 = int(rows[0]), int(rows[-1])
        c0, c1 = int(cols[0]), int(cols[-1])
    if r1 <= r0:
        r1 = min(r0 + 1, 29)
    if c1 <= c0:
        c1 = min(c0 + 1, 59)
    # hull points as (x in [0,60), y in [0,30)) -- the convention get_hull expects
    return [[c0, r0], [c1, r0], [c1, r1], [c0, r1]]


# ------------------------------------------------------------------------- #
# Model constants                                                            #
# ------------------------------------------------------------------------- #
FEAT_H, FEAT_W = 30, 60           # cnn_feature_grids = [1, 129, 30, 60]
STATE_DIM = 129
N_POINTS = 1000                   # uniformsample target in the reference forward
N_ADJ = 4                         # normalized ring adjacency, implemented via rolls
COARSE_TO_FINE_STEPS = 2
GCN_HIDDEN = 128
F_RAW = STATE_DIM + 2             # 129 cnn features + 2 coords = 131
F_PAD = 256                       # node-feature dim padded to a 128-multiple
CONV_OUT_PAD = 256                # (129 features + 1 poly logit) padded to 256 lanes
OFF_PAD = 128                     # 2-wide offsets projected into a lane-dense 128


# ------------------------------------------------------------------------- #
# Pallas kernels                                                             #
# ------------------------------------------------------------------------- #
def _conv1x1_kernel(x_ref, w_ref, b_ref, o_ref):
    # 1x1 conv over 3 input channels expressed as 3 VPU FMAs (K=3 would waste
    # the MXU).  x: (M, 3), w: (3, Cout), b: (1, Cout) -> o: (M, Cout)
    x = x_ref[...]
    w = w_ref[...]
    acc = b_ref[...]
    for c in range(x_ref.shape[1]):
        acc = acc + x[:, c:c + 1] * w[c:c + 1, :]
    o_ref[...] = acc.astype(o_ref.dtype)


def conv1x1(x2d, w, b):
    M, K = x2d.shape
    Cout = w.shape[1]
    return pl.pallas_call(
        _conv1x1_kernel,
        out_shape=jax.ShapeDtypeStruct((M, Cout), jnp.float32),
        grid_spec=pltpu.PrefetchScalarGridSpec(
            num_scalar_prefetch=0,
            grid=(1,),
            in_specs=[pl.BlockSpec((M, K), lambda i: (0, 0)),
                      pl.BlockSpec((K, Cout), lambda i: (0, 0)),
                      pl.BlockSpec((1, Cout), lambda i: (0, 0))],
            out_specs=pl.BlockSpec((M, Cout), lambda i: (0, 0))),
        compiler_params=pltpu.CompilerParams(
            dimension_semantics=("arbitrary",)),
    )(x2d, w, b)


def _gcn_step_kernel(x_ref, wcat_ref, b_ref, wp_ref, bp_ref, o_ref):
    x = x_ref[0]                                  # (N, F_PAD) float32 node features
    n = x.shape[0]
    # Normalized ring adjacency (n_adj=4): 0.25 * sum of the 4 cyclic neighbors.
    # XLU rolls + VPU adds replace the former dense (N,N)@(N,F) MXU matmul.
    agg = 0.25 * (pltpu.roll(x, 1, 0) + pltpu.roll(x, n - 1, 0)
                  + pltpu.roll(x, 2, 0) + pltpu.roll(x, n - 2, 0))
    # Fused feature matmul: concat([x, agg]) @ concat([w0; w1]) -- one MXU pass.
    xa = jnp.concatenate([x, agg], axis=-1).astype(jnp.bfloat16)   # (N, 2*F_PAD)
    h = jnp.dot(xa, wcat_ref[...], preferred_element_type=jnp.float32) + b_ref[...]
    h = jnp.maximum(h, 0.0).astype(jnp.bfloat16)
    # Offset head padded to 128 output lanes so the writeback is lane-dense
    # (only the first 2 columns of wp/bp are non-zero).
    off = (jnp.dot(h, wp_ref[...], preferred_element_type=jnp.float32)
           + bp_ref[...])
    o_ref[0] = off.astype(o_ref.dtype)


def gcn_step(node_x, wcat, b, wp, bp):
    B, N, FP = node_x.shape
    H = wcat.shape[1]
    OUT = wp.shape[1]
    return pl.pallas_call(
        _gcn_step_kernel,
        out_shape=jax.ShapeDtypeStruct((B, N, OUT), jnp.float32),
        grid_spec=pltpu.PrefetchScalarGridSpec(
            num_scalar_prefetch=0,
            grid=(B,),
            in_specs=[pl.BlockSpec((1, N, FP), lambda b_: (b_, 0, 0)),
                      pl.BlockSpec((2 * FP, H), lambda b_: (0, 0)),
                      pl.BlockSpec((1, H), lambda b_: (0, 0)),
                      pl.BlockSpec((H, OUT), lambda b_: (0, 0)),
                      pl.BlockSpec((1, OUT), lambda b_: (0, 0))],
            out_specs=pl.BlockSpec((1, N, OUT), lambda b_: (b_, 0, 0))),
        compiler_params=pltpu.CompilerParams(
            dimension_semantics=("parallel",)),   # megacore batch sharding on v7x
    )(node_x, wcat, b, wp, bp)


# ------------------------------------------------------------------------- #
# Parameters                                                                 #
# ------------------------------------------------------------------------- #
def init_params(key):
    ks = jax.random.split(key, 4 + COARSE_TO_FINE_STEPS)
    # 1x1 conv backbone: 3 -> (129 feature channels + 1 poly-logit channel),
    # zero-padded to 256 output channels for lane-dense stores.
    w_conv_raw = 0.1 * jax.random.normal(ks[0], (3, STATE_DIM + 1), jnp.float32)
    b_conv_raw = 0.1 * jax.random.normal(ks[1], (1, STATE_DIM + 1), jnp.float32)
    w_conv = jnp.zeros((3, CONV_OUT_PAD), jnp.float32).at[:, :STATE_DIM + 1].set(w_conv_raw)
    b_conv = jnp.zeros((1, CONV_OUT_PAD), jnp.float32).at[:, :STATE_DIM + 1].set(b_conv_raw)
    params = {
        'w_conv': w_conv,
        'b_conv': b_conv,
        'w_cls': 0.1 * jax.random.normal(ks[2], (3, 3), jnp.float32),
        'b_cls': jnp.zeros((3,), jnp.float32),
        'gcn': [],
    }
    for s in range(COARSE_TO_FINE_STEPS):
        k0, k1, k2, k3, _ = jax.random.split(ks[4 + s], 5)
        w0 = 0.05 * jax.random.normal(k0, (F_RAW, GCN_HIDDEN), jnp.float32)
        w1 = 0.05 * jax.random.normal(k1, (F_RAW, GCN_HIDDEN), jnp.float32)
        w0p = jnp.zeros((F_PAD, GCN_HIDDEN), jnp.float32).at[:F_RAW].set(w0)
        w1p = jnp.zeros((F_PAD, GCN_HIDDEN), jnp.float32).at[:F_RAW].set(w1)
        wcat = jnp.concatenate([w0p, w1p], axis=0).astype(jnp.bfloat16)  # (512, 128)
        b = 0.05 * jax.random.normal(k2, (1, GCN_HIDDEN), jnp.float32)
        wp = 0.01 * jax.random.normal(k3, (GCN_HIDDEN, 2), jnp.float32)
        wp_pad = (jnp.zeros((GCN_HIDDEN, OFF_PAD), jnp.float32)
                  .at[:, :2].set(wp).astype(jnp.bfloat16))
        bp_pad = jnp.zeros((1, OFF_PAD), jnp.float32)
        params['gcn'].append({'wcat': wcat, 'b': b, 'wp': wp_pad, 'bp': bp_pad})
    return params


# ------------------------------------------------------------------------- #
# Jitted device programs                                                     #
# ------------------------------------------------------------------------- #
def sample_features(feat_nhwc, rows, cols):
    # feat_nhwc: (B, H, W, C); rows/cols: (B, N) int32 -> (B, N, C)
    B, H, W, C = feat_nhwc.shape
    flat = feat_nhwc.reshape(B, H * W, C)
    lin = rows * W + cols
    return jax.vmap(lambda f, i: jnp.take(f, i, axis=0))(flat, lin)


@jax.jit
def edge_forward(params, img_nchw):
    # --- edge_model (synthetic): 1x1 conv backbone via VPU FMAs (Pallas) ---
    B, C, H, W = img_nchw.shape
    x_nhwc = jnp.transpose(img_nchw, (0, 2, 3, 1))               # NHWC
    x2d = x_nhwc.reshape(B * H * W, C)
    conv_out = conv1x1(x2d, params['w_conv'], params['b_conv'])  # (M, 256)
    conv_out = conv_out.reshape(B, H, W, CONV_OUT_PAD)
    tg2 = conv_out[..., :STATE_DIM]                              # (B, 30, 60, 129)
    poly_logits = jnp.transpose(conv_out[..., STATE_DIM:STATE_DIM + 1],
                                (0, 3, 1, 2))                    # (B, 1, 30, 60)
    pooled = jnp.mean(x_nhwc, axis=(1, 2))                       # (B, 3)
    class_prob = jax.nn.softmax(pooled @ params['w_cls'] + params['b_cls'], axis=-1)
    return tg2, poly_logits, class_prob


@jax.jit
def gcn_forward(params, tg2, feature_hull, binary_hull):
    # Single compiled program covering both coarse-to-fine GCN steps
    # (feature gathers stay as XLA gathers fused between the two Pallas calls).
    # TODO(synk): the per-step gather could be moved inside the GCN kernel with
    # in-kernel jnp.take; kept in XLA here for lowering robustness.
    rows = jnp.clip(feature_hull[..., 0], 0, FEAT_H - 1)
    cols = jnp.clip(feature_hull[..., 1], 0, FEAT_W - 1)
    coords = binary_hull                                         # (B, N, 2)
    preds = []
    for step in range(COARSE_TO_FINE_STEPS):
        cnn_feat = sample_features(tg2, rows, cols)              # (B, N, 129)
        node_x = jnp.concatenate([cnn_feat, coords], axis=-1)    # (B, N, 131)
        node_x = jnp.pad(node_x,
                         ((0, 0), (0, 0), (0, F_PAD - node_x.shape[-1])))
        sw = params['gcn'][step]
        out = gcn_step(node_x, sw['wcat'], sw['b'], sw['wp'], sw['bp'])
        offsets = out[..., :2]
        coords = jnp.clip(coords + offsets, 0.0, 1.0)
        preds.append(coords)
        rows = jnp.clip(jnp.round(coords[..., 0] * (FEAT_H - 1)).astype(jnp.int32),
                        0, FEAT_H - 1)
        cols = jnp.clip(jnp.round(coords[..., 1] * (FEAT_W - 1)).astype(jnp.int32),
                        0, FEAT_W - 1)
    return tuple(preds)


# ------------------------------------------------------------------------- #
# Full forward (device conv -> host hull plumbing -> device GCN)             #
# ------------------------------------------------------------------------- #
def model_forward(params, img_nchw, bbox_np, dp):
    # TODO(synk): `dp` is consumed by the undefined polygnn5.PolyGNN; unused here.
    B = img_nchw.shape[0]
    tg2, poly_logits, class_prob = edge_forward(params, img_nchw)

    # --- hull extraction: host-side numpy, exactly like the reference forward ---
    poly_logits_np = np.asarray(jax.device_get(poly_logits))
    class_prob_np = np.asarray(jax.device_get(class_prob))
    new_list = []
    for i in range(B):
        hull1 = testing_hull(poly_logits_np[i, 0], class_prob_np[i], bbox_np[i])
        hull1 = uniformsample(np.asarray(hull1, np.float32), N_POINTS)
        new_list.append(hull1)
    new_list = np.asarray(new_list)

    original_hull, binary_hull, feature_hull = [], [], []
    for i in range(B):
        o_h, b_h, f_h = get_hull(new_list[i], bbox_np[i])
        original_hull.append(o_h)
        binary_hull.append(b_h)
        feature_hull.append(f_h)
    feature_hull_np = np.asarray(feature_hull, np.int32)          # (B, N, 2) [row, col]
    binary_hull_np = np.asarray(binary_hull, np.float32)          # (B, N, 2) [y/30, x/60]
    original_hull_np = np.asarray(original_hull, np.int32)

    # --- PolyGNN (synthetic, coarse_to_fine_steps=2): one jitted program ---
    preds = gcn_forward(params, tg2,
                        jnp.asarray(feature_hull_np),
                        jnp.asarray(binary_hull_np))

    output_dict = {
        'pred_polys': list(preds),
        'feature_hull': jnp.asarray(feature_hull_np),
        'original_hull': jnp.asarray(original_hull_np),
        'binary_hull': jnp.asarray(binary_hull_np),
    }
    return output_dict, poly_logits, class_prob


# ------------------------------------------------------------------------- #
if __name__ == "__main__":
    key = jax.random.PRNGKey(0)
    k_param, k_img = jax.random.split(key)

    params = init_params(k_param)
    img = jax.random.normal(k_img, (2, 3, FEAT_H, FEAT_W), jnp.float32)  # NCHW
    bbox = np.array([[0, 0, 120, 60],
                     [10, 5, 90, 45]], dtype=np.float32)                 # (B, 4)
    dp = jnp.zeros((2, 1), jnp.float32)

    output_dict, poly_logits, class_prob = model_forward(params, img, bbox, dp)

    jax.block_until_ready(output_dict['pred_polys'][-1])
    jax.block_until_ready(poly_logits)
    jax.block_until_ready(class_prob)

    assert output_dict['pred_polys'][-1].shape == (2, N_POINTS, 2)
    assert poly_logits.shape == (2, 1, FEAT_H, FEAT_W)
    assert class_prob.shape == (2, 3)
    print("KERNEL_OK")
</pallas_src>

<mosaic_0001>
module attributes {stable_mosaic.version = 11 : i64} {
  func.func @_conv1x1_kernel(%arg0: i32, %arg1: memref<3600x3xf32, #tpu.memory_space<vmem>>, %arg2: memref<3x256xf32, #tpu.memory_space<vmem>>, %arg3: memref<1x256xf32, #tpu.memory_space<vmem>>, %arg4: memref<3600x256xf32, #tpu.memory_space<vmem>>) attributes {dimension_semantics = [#tpu.dimension_semantics<arbitrary>], iteration_bounds = array<i64: 1>, scalar_prefetch = 0 : i64, scratch_operands = 0 : i64, tpu.core_type = #tpu.core_type<tc>, window_params = [{pipeline_mode = #tpu.pipeline_mode<synchronous>, transform_indices = @transform_0, window_bounds = array<i64: 3600, 3>}, {pipeline_mode = #tpu.pipeline_mode<synchronous>, transform_indices = @transform_1, window_bounds = array<i64: 3, 256>}, {pipeline_mode = #tpu.pipeline_mode<synchronous>, transform_indices = @transform_2, window_bounds = array<i64: 1, 256>}, {pipeline_mode = #tpu.pipeline_mode<synchronous>, transform_indices = @transform_3, window_bounds = array<i64: 3600, 256>}]} {
    %c0 = arith.constant 0 : index
    %c0_0 = arith.constant 0 : index
    %0 = vector.load %arg1[%c0, %c0_0] : memref<3600x3xf32, #tpu.memory_space<vmem>>, vector<3600x3xf32>
    %c0_1 = arith.constant 0 : index
    %c0_2 = arith.constant 0 : index
    %1 = vector.load %arg2[%c0_1, %c0_2] : memref<3x256xf32, #tpu.memory_space<vmem>>, vector<3x256xf32>
    %c0_3 = arith.constant 0 : index
    %c0_4 = arith.constant 0 : index
    %2 = vector.load %arg3[%c0_3, %c0_4] : memref<1x256xf32, #tpu.memory_space<vmem>>, vector<1x256xf32>
    %3 = vector.extract_strided_slice %0 {offsets = [0, 0], sizes = [3600, 1], strides = [1, 1]} : vector<3600x3xf32> to vector<3600x1xf32>
    %4 = vector.extract_strided_slice %1 {offsets = [0, 0], sizes = [1, 256], strides = [1, 1]} : vector<3x256xf32> to vector<1x256xf32>
    %5 = vector.broadcast %3 : vector<3600x1xf32> to vector<3600x256xf32>
    %6 = vector.broadcast %4 : vector<1x256xf32> to vector<3600x256xf32>
    %7 = arith.mulf %5, %6 : vector<3600x256xf32>
    %8 = vector.broadcast %2 : vector<1x256xf32> to vector<3600x256xf32>
    %9 = arith.addf %8, %7 : vector<3600x256xf32>
    %10 = vector.extract_strided_slice %0 {offsets = [0, 1], sizes = [3600, 1], strides = [1, 1]} : vector<3600x3xf32> to vector<3600x1xf32>
    %11 = vector.extract_strided_slice %1 {offsets = [1, 0], sizes = [1, 256], strides = [1, 1]} : vector<3x256xf32> to vector<1x256xf32>
    %12 = vector.broadcast %10 : vector<3600x1xf32> to vector<3600x256xf32>
    %13 = vector.broadcast %11 : vector<1x256xf32> to vector<3600x256xf32>
    %14 = arith.mulf %12, %13 : vector<3600x256xf32>
    %15 = arith.addf %9, %14 : vector<3600x256xf32>
    %16 = vector.extract_strided_slice %0 {offsets = [0, 2], sizes = [3600, 1], strides = [1, 1]} : vector<3600x3xf32> to vector<3600x1xf32>
    %17 = vector.extract_strided_slice %1 {offsets = [2, 0], sizes = [1, 256], strides = [1, 1]} : vector<3x256xf32> to vector<1x256xf32>
    %18 = vector.broadcast %16 : vector<3600x1xf32> to vector<3600x256xf32>
    %19 = vector.broadcast %17 : vector<1x256xf32> to vector<3600x256xf32>
    %20 = arith.mulf %18, %19 : vector<3600x256xf32>
    %21 = arith.addf %15, %20 : vector<3600x256xf32>
    %c0_5 = arith.constant 0 : index
    %c0_6 = arith.constant 0 : index
    %22 = vector.load %arg4[%c0_5, %c0_6] : memref<3600x256xf32, #tpu.memory_space<vmem>>, vector<3600x256xf32>
    tpu.vector_store %arg4[%c0_5, %c0_6], %21 {strides = array<i32>} : memref<3600x256xf32, #tpu.memory_space<vmem>>, vector<3600x256xf32>,
    return
  }
  func.func @transform_0(%arg0: i32) -> (i32, i32) {
    %c0_i32 = arith.constant 0 : i32
    %c0_i32_0 = arith.constant 0 : i32
    %c0_i32_1 = arith.constant 0 : i32
    return %c0_i32, %c0_i32_0 : i32, i32
  }
  func.func @transform_1(%arg0: i32) -> (i32, i32) {
    %c0_i32 = arith.constant 0 : i32
    %c0_i32_0 = arith.constant 0 : i32
    %c0_i32_1 = arith.constant 0 : i32
    return %c0_i32, %c0_i32_0 : i32, i32
  }
  func.func @transform_2(%arg0: i32) -> (i32, i32) {
    %c0_i32 = arith.constant 0 : i32
    %c0_i32_0 = arith.constant 0 : i32
    %c0_i32_1 = arith.constant 0 : i32
    return %c0_i32, %c0_i32_0 : i32, i32
  }
  func.func @transform_3(%arg0: i32) -> (i32, i32) {
    %c0_i32 = arith.constant 0 : i32
    %c0_i32_0 = arith.constant 0 : i32
    %c0_i32_1 = arith.constant 0 : i32
    return %c0_i32, %c0_i32_0 : i32, i32
  }
}

</mosaic_0001>

<llo_original>
// kernel: edge_forward.1
$region0: #{edge_forward.1}
  #allocation0 [shape = 'u32[]', space=smem, size = 0x4, offset = 0x4, fixed_abs, tag = 'smem constant byte address 0x4 - core index']
  #allocation1 [shape = 'u32[144,128]{1,0:T(1,128)}', space=vmem, size = 0x12000, scoped, tag = 'internal scratch']
  %s0 = inlined_call_operand.vmem [shape: f32[3600,3], index: 0, kind: input, shape index: {}]
  %s1 = inlined_call_operand.hbm [shape: f32[3,256], index: 1, kind: input, shape index: {}]
  %s2 = inlined_call_operand.hbm [shape: f32[1,256], index: 2, kind: input, shape index: {}]
  %s3 = inlined_call_operand.vmem [shape: f32[3600,256], index: 3, kind: output, shape index: {}]
  %s4 = sld [smem:[#allocation0]]
  $region30: #{edge_forward.1} parent=0
    _
  %s6 = ssub.s32 1, %s4
  %s7 = scalar_select 0, %s6, %s4
  $region1: #{edge_forward.1} parent=0
    #allocation2 [shape = 'u8[4096]{0}', space=vmem, size = 0x1000, scoped, tag = 'input window, operand 1, single buffered']
    #allocation3 [shape = 's32[1]{0}', space=sflag, size = 0x4, scoped, tag = 'scoped memory for edge_forward.1']
    #allocation4 [shape = 'u8[1024]{0}', space=vmem, size = 0x400, scoped, tag = 'input window, operand 2, single buffered']
    #allocation5 [shape = 's32[1]{0}', space=sflag, size = 0x4, scoped, tag = 'scoped memory for edge_forward.1']
    %8 = vsyncpa [#allocation3], 0
    %9 = vsyncpa [#allocation5], 0
    // Predicated region
    $region2: #{edge_forward.1} parent=1 // pred_check
      _
    $region3: #{edge_forward.1} parent=1 // pred_check_branch
      %11 = sbr.rel (0) target = $region5
    $region4: #{edge_forward.1} parent=1 // pred_region
      _
    $region5: #{edge_forward.1} parent=1 // pred_fallthru
      _
    // Predicated region
    $region6: #{edge_forward.1} parent=1 // pred_check
      _
    $region7: #{edge_forward.1} parent=1 // pred_check_branch
      %13 = sbr.rel (0) target = $region9
    $region8: #{edge_forward.1} parent=1 // pred_region
      %s15 = ssub.s32 128, 128
      %16 = vsyncadd [#allocation3], %s15
      %s18 = sshll.u32 [#allocation2], 4
      %s19 = int_to_ptr.vmem [resolvable:$true] %s18
      %21 = dma.hbm_to_vmem [thread:$0]  %s1, 128, %s19, [#allocation3]
    $region9: #{edge_forward.1} parent=1 // pred_fallthru
      _
    // Predicated region
    $region10: #{edge_forward.1} parent=1 // pred_check
      _
    $region11: #{edge_forward.1} parent=1 // pred_check_branch
      %23 = sbr.rel (0) target = $region13
    $region12: #{edge_forward.1} parent=1 // pred_region
      %s25 = ssub.s32 32, 32
      %26 = vsyncadd [#allocation5], %s25
      %s28 = sshll.u32 [#allocation4], 4
      %s29 = int_to_ptr.vmem [resolvable:$true] %s28
      %31 = dma.hbm_to_vmem [thread:$0]  %s2, 32, %s29, [#allocation5]
    $region13: #{edge_forward.1} parent=1 // pred_fallthru
      _
    // Predicated region
    $region14: #{edge_forward.1} parent=1 // pred_check
      _
    $region15: #{edge_forward.1} parent=1 // pred_check_branch
      %33 = sbr.rel (0) target = $region17
    $region16: #{edge_forward.1} parent=1 // pred_region
      %34 = dma.done [#allocation3], 128
    $region17: #{edge_forward.1} parent=1 // pred_fallthru
      _
    // Predicated region
    $region18: #{edge_forward.1} parent=1 // pred_check
      _
    $region19: #{edge_forward.1} parent=1 // pred_check_branch
      %36 = sbr.rel (0) target = $region21
    $region20: #{edge_forward.1} parent=1 // pred_region
      %37 = dma.done [#allocation5], 32
    $region21: #{edge_forward.1} parent=1 // pred_fallthru
      _
    %v38 = vld [vmem:[%s0] sm:$0xff]
    %v39 = vld [vmem:[%s0 + $0x8] sm:$0xff]
    %v40 = vld [vmem:[%s0 + $0x10] sm:$0xff]
    %v41 = vld [vmem:[%s0 + $0x18] sm:$0xff]
    %v42 = vld [vmem:[%s0 + $0x20] sm:$0xff]
    %v43 = vld [vmem:[%s0 + $0x28] sm:$0xff]
    %v44 = vld [vmem:[%s0 + $0x30] sm:$0xff]
    %v45 = vld [vmem:[%s0 + $0x38] sm:$0xff]
    %v46 = vld [vmem:[%s0 + $0x40] sm:$0xff]
    %v47 = vld [vmem:[%s0 + $0x48] sm:$0xff]
    %v48 = vld [vmem:[%s0 + $0x50] sm:$0xff]
    %v49 = vld [vmem:[%s0 + $0x58] sm:$0xff]
    %v50 = vld [vmem:[%s0 + $0x60] sm:$0xff]
    %v51 = vld [vmem:[%s0 + $0x68] sm:$0xff]
    %v52 = vld [vmem:[%s0 + $0x70] sm:$0xff]
    %v53 = vld [vmem:[%s0 + $0x78] sm:$0xff]
    %v54 = vld [vmem:[%s0 + $0x80] sm:$0xff]
    %v55 = vld [vmem:[%s0 + $0x88] sm:$0xff]
    %v56 = vld [vmem:[%s0 + $0x90] sm:$0xff]
    %v57 = vld [vmem:[%s0 + $0x98] sm:$0xff]
    %v58 = vld [vmem:[%s0 + $0xa0] sm:$0xff]
    %v59 = vld [vmem:[%s0 + $0xa8] sm:$0xff]
    %v60 = vld [vmem:[%s0 + $0xb0] sm:$0xff]
    %v61 = vld [vmem:[%s0 + $0xb8] sm:$0xff]
    %v62 = vld [vmem:[%s0 + $0xc0] sm:$0xff]
    %v63 = vld [vmem:[%s0 + $0xc8] sm:$0xff]
    %v64 = vld [vmem:[%s0 + $0xd0] sm:$0xff]
    %v65 = vld [vmem:[%s0 + $0xd8] sm:$0xff]
    %v66 = vld [vmem:[%s0 + $0xe0] sm:$0xff]
    %v67 = vld [vmem:[%s0 + $0xe8] sm:$0xff]
    %v68 = vld [vmem:[%s0 + $0xf0] sm:$0xff]
    %v69 = vld [vmem:[%s0 + $0xf8] sm:$0xff]
    %v70 = vld [vmem:[%s0 + $0x100] sm:$0xff]
    %v71 = vld [vmem:[%s0 + $0x108] sm:$0xff]
    %v72 = vld [vmem:[%s0 + $0x110] sm:$0xff]
    %v73 = vld [vmem:[%s0 + $0x118] sm:$0xff]
    %v74 = vld [vmem:[%s0 + $0x120] sm:$0xff]
    %v75 = vld [vmem:[%s0 + $0x128] sm:$0xff]
    %v76 = vld [vmem:[%s0 + $0x130] sm:$0xff]
    %v77 = vld [vmem:[%s0 + $0x138] sm:$0xff]
    %v78 = vld [vmem:[%s0 + $0x140] sm:$0xff]
    %v79 = vld [vmem:[%s0 + $0x148] sm:$0xff]
    %v80 = vld [vmem:[%s0 + $0x150] sm:$0xff]
    %v81 = vld [vmem:[%s0 + $0x158] sm:$0xff]
    %v82 = vld [vmem:[%s0 + $0x160] sm:$0xff]
    %v83 = vld [vmem:[%s0 + $0x168] sm:$0xff]
    %v84 = vld [vmem:[%s0 + $0x170] sm:$0xff]
    %v85 = vld [vmem:[%s0 + $0x178] sm:$0xff]
    %v86 = vld [vmem:[%s0 + $0x180] sm:$0xff]
    %v87 = vld [vmem:[%s0 + $0x188] sm:$0xff]
    %v88 = vld [vmem:[%s0 + $0x190] sm:$0xff]
    %v89 = vld [vmem:[%s0 + $0x198] sm:$0xff]
    %v90 = vld [vmem:[%s0 + $0x1a0] sm:$0xff]
    %v91 = vld [vmem:[%s0 + $0x1a8] sm:$0xff]
    %v92 = vld [vmem:[%s0 + $0x1b0] sm:$0xff]
    %v93 = vld [vmem:[%s0 + $0x1b8] sm:$0xff]
    %v94 = vld [vmem:[%s0 + $0x1c0] sm:$0xff]
    %v95 = vld [vmem:[%s0 + $0x1c8] sm:$0xff]
    %v96 = vld [vmem:[%s0 + $0x1d0] sm:$0xff]
    %v97 = vld [vmem:[%s0 + $0x1d8] sm:$0xff]
    %v98 = vld [vmem:[%s0 + $0x1e0] sm:$0xff]
    %v99 = vld [vmem:[%s0 + $0x1e8] sm:$0xff]
    %v100 = vld [vmem:[%s0 + $0x1f0] sm:$0xff]
    %v101 = vld [vmem:[%s0 + $0x1f8] sm:$0xff]
    %v102 = vld [vmem:[%s0 + $0x200] sm:$0xff]
    %v103 = vld [vmem:[%s0 + $0x208] sm:$0xff]
    %v104 = vld [vmem:[%s0 + $0x210] sm:$0xff]
    %v105 = vld [vmem:[%s0 + $0x218] sm:$0xff]
    %v106 = vld [vmem:[%s0 + $0x220] sm:$0xff]
    %v107 = vld [vmem:[%s0 + $0x228] sm:$0xff]
    %v108 = vld [vmem:[%s0 + $0x230] sm:$0xff]
    %v109 = vld [vmem:[%s0 + $0x238] sm:$0xff]
    %v110 = vld [vmem:[%s0 + $0x240] sm:$0xff]
    %v111 = vld [vmem:[%s0 + $0x248] sm:$0xff]
    %v112 = vld [vmem:[%s0 + $0x250] sm:$0xff]
    %v113 = vld [vmem:[%s0 + $0x258] sm:$0xff]
    %v114 = vld [vmem:[%s0 + $0x260] sm:$0xff]
    %v115 = vld [vmem:[%s0 + $0x268] sm:$0xff]
    %v116 = vld [vmem:[%s0 + $0x270] sm:$0xff]
    %v117 = vld [vmem:[%s0 + $0x278] sm:$0xff]
    %v118 = vld [vmem:[%s0 + $0x280] sm:$0xff]
    %v119 = vld [vmem:[%s0 + $0x288] sm:$0xff]
    %v120 = vld [vmem:[%s0 + $0x290] sm:$0xff]
    %v121 = vld [vmem:[%s0 + $0x298] sm:$0xff]
    %v122 = vld [vmem:[%s0 + $0x2a0] sm:$0xff]
    %v123 = vld [vmem:[%s0 + $0x2a8] sm:$0xff]
    %v124 = vld [vmem:[%s0 + $0x2b0] sm:$0xff]
    %v125 = vld [vmem:[%s0 + $0x2b8] sm:$0xff]
    %v126 = vld [vmem:[%s0 + $0x2c0] sm:$0xff]
    %v127 = vld [vmem:[%s0 + $0x2c8] sm:$0xff]
    %v128 = vld [vmem:[%s0 + $0x2d0] sm:$0xff]
    %v129 = vld [vmem:[%s0 + $0x2d8] sm:$0xff]
    %v130 = vld [vmem:[%s0 + $0x2e0] sm:$0xff]
    %v131 = vld [vmem:[%s0 + $0x2e8] sm:$0xff]
    %v132 = vld [vmem:[%s0 + $0x2f0] sm:$0xff]
    %v133 = vld [vmem:[%s0 + $0x2f8] sm:$0xff]
    %v134 = vld [vmem:[%s0 + $0x300] sm:$0xff]
    %v135 = vld [vmem:[%s0 + $0x308] sm:$0xff]
    %v136 = vld [vmem:[%s0 + $0x310] sm:$0xff]
    %v137 = vld [vmem:[%s0 + $0x318] sm:$0xff]
    %v138 = vld [vmem:[%s0 + $0x320] sm:$0xff]
    %v139 = vld [vmem:[%s0 + $0x328] sm:$0xff]
    %v140 = vld [vmem:[%s0 + $0x330] sm:$0xff]
    %v141 = vld [vmem:[%s0 + $0x338] sm:$0xff]
    %v142 = vld [vmem:[%s0 + $0x340] sm:$0xff]
    %v143 = vld [vmem:[%s0 + $0x348] sm:$0xff]
    %v144 = vld [vmem:[%s0 + $0x350] sm:$0xff]
    %v145 = vld [vmem:[%s0 + $0x358] sm:$0xff]
    %v146 = vld [vmem:[%s0 + $0x360] sm:$0xff]
    %v147 = vld [vmem:[%s0 + $0x368] sm:$0xff]
    %v148 = vld [vmem:[%s0 + $0x370] sm:$0xff]
    %v149 = vld [vmem:[%s0 + $0x378] sm:$0xff]
    %v150 = vld [vmem:[%s0 + $0x380] sm:$0xff]
    %v151 = vld [vmem:[%s0 + $0x388] sm:$0xff]
    %v152 = vld [vmem:[%s0 + $0x390] sm:$0xff]
    %v153 = vld [vmem:[%s0 + $0x398] sm:$0xff]
    %v154 = vld [vmem:[%s0 + $0x3a0] sm:$0xff]
    %v155 = vld [vmem:[%s0 + $0x3a8] sm:$0xff]
    %v156 = vld [vmem:[%s0 + $0x3b0] sm:$0xff]
    %v157 = vld [vmem:[%s0 + $0x3b8] sm:$0xff]
    %v158 = vld [vmem:[%s0 + $0x3c0] sm:$0xff]
    %v159 = vld [vmem:[%s0 + $0x3c8] sm:$0xff]
    %v160 = vld [vmem:[%s0 + $0x3d0] sm:$0xff]
    %v161 = vld [vmem:[%s0 + $0x3d8] sm:$0xff]
    %v162 = vld [vmem:[%s0 + $0x3e0] sm:$0xff]
    %v163 = vld [vmem:[%s0 + $0x3e8] sm:$0xff]
    %v164 = vld [vmem:[%s0 + $0x3f0] sm:$0xff]
    %v165 = vld [vmem:[%s0 + $0x3f8] sm:$0xff]
    %v166 = vld [vmem:[%s0 + $0x400] sm:$0xff]
    %v167 = vld [vmem:[%s0 + $0x408] sm:$0xff]
    %v168 = vld [vmem:[%s0 + $0x410] sm:$0xff]
    %v169 = vld [vmem:[%s0 + $0x418] sm:$0xff]
    %v170 = vld [vmem:[%s0 + $0x420] sm:$0xff]
    %v171 = vld [vmem:[%s0 + $0x428] sm:$0xff]
    %v172 = vld [vmem:[%s0 + $0x430] sm:$0xff]
    %v173 = vld [vmem:[%s0 + $0x438] sm:$0xff]
    %v174 = vld [vmem:[%s0 + $0x440] sm:$0xff]
    %v175 = vld [vmem:[%s0 + $0x448] sm:$0xff]
    %v176 = vld [vmem:[%s0 + $0x450] sm:$0xff]
    %v177 = vld [vmem:[%s0 + $0x458] sm:$0xff]
    %v178 = vld [vmem:[%s0 + $0x460] sm:$0xff]
    %v179 = vld [vmem:[%s0 + $0x468] sm:$0xff]
    %v180 = vld [vmem:[%s0 + $0x470] sm:$0xff]
    %v181 = vld [vmem:[%s0 + $0x478] sm:$0xff]
    %v182 = vld [vmem:[%s0 + $0x480] sm:$0xff]
    %v183 = vld [vmem:[%s0 + $0x488] sm:$0xff]
    %v184 = vld [vmem:[%s0 + $0x490] sm:$0xff]
    %v185 = vld [vmem:[%s0 + $0x498] sm:$0xff]
    %v186 = vld [vmem:[%s0 + $0x4a0] sm:$0xff]
    %v187 = vld [vmem:[%s0 + $0x4a8] sm:$0xff]
    %v188 = vld [vmem:[%s0 + $0x4b0] sm:$0xff]
    %v189 = vld [vmem:[%s0 + $0x4b8] sm:$0xff]
    %v190 = vld [vmem:[%s0 + $0x4c0] sm:$0xff]
    %v191 = vld [vmem:[%s0 + $0x4c8] sm:$0xff]
    %v192 = vld [vmem:[%s0 + $0x4d0] sm:$0xff]
    %v193 = vld [vmem:[%s0 + $0x4d8] sm:$0xff]
    %v194 = vld [vmem:[%s0 + $0x4e0] sm:$0xff]
    %v195 = vld [vmem:[%s0 + $0x4e8] sm:$0xff]
    %v196 = vld [vmem:[%s0 + $0x4f0] sm:$0xff]
    %v197 = vld [vmem:[%s0 + $0x4f8] sm:$0xff]
    %v198 = vld [vmem:[%s0 + $0x500] sm:$0xff]
    %v199 = vld [vmem:[%s0 + $0x508] sm:$0xff]
    %v200 = vld [vmem:[%s0 + $0x510] sm:$0xff]
    %v201 = vld [vmem:[%s0 + $0x518] sm:$0xff]
    %v202 = vld [vmem:[%s0 + $0x520] sm:$0xff]
    %v203 = vld [vmem:[%s0 + $0x528] sm:$0xff]
    %v204 = vld [vmem:[%s0 + $0x530] sm:$0xff]
    %v205 = vld [vmem:[%s0 + $0x538] sm:$0xff]
    %v206 = vld [vmem:[%s0 + $0x540] sm:$0xff]
    %v207 = vld [vmem:[%s0 + $0x548] sm:$0xff]
    %v208 = vld [vmem:[%s0 + $0x550] sm:$0xff]
    %v209 = vld [vmem:[%s0 + $0x558] sm:$0xff]
    %v210 = vld [vmem:[%s0 + $0x560] sm:$0xff]
    %v211 = vld [vmem:[%s0 + $0x568] sm:$0xff]
    %v212 = vld [vmem:[%s0 + $0x570] sm:$0xff]
    %v213 = vld [vmem:[%s0 + $0x578] sm:$0xff]
    %v214 = vld [vmem:[%s0 + $0x580] sm:$0xff]
    %v215 = vld [vmem:[%s0 + $0x588] sm:$0xff]
    %v216 = vld [vmem:[%s0 + $0x590] sm:$0xff]
    %v217 = vld [vmem:[%s0 + $0x598] sm:$0xff]
    %v218 = vld [vmem:[%s0 + $0x5a0] sm:$0xff]
    %v219 = vld [vmem:[%s0 + $0x5a8] sm:$0xff]
    %v220 = vld [vmem:[%s0 + $0x5b0] sm:$0xff]
    %v221 = vld [vmem:[%s0 + $0x5b8] sm:$0xff]
    %v222 = vld [vmem:[%s0 + $0x5c0] sm:$0xff]
    %v223 = vld [vmem:[%s0 + $0x5c8] sm:$0xff]
    %v224 = vld [vmem:[%s0 + $0x5d0] sm:$0xff]
    %v225 = vld [vmem:[%s0 + $0x5d8] sm:$0xff]
    %v226 = vld [vmem:[%s0 + $0x5e0] sm:$0xff]
    %v227 = vld [vmem:[%s0 + $0x5e8] sm:$0xff]
    %v228 = vld [vmem:[%s0 + $0x5f0] sm:$0xff]
    %v229 = vld [vmem:[%s0 + $0x5f8] sm:$0xff]
    %v230 = vld [vmem:[%s0 + $0x600] sm:$0xff]
    %v231 = vld [vmem:[%s0 + $0x608] sm:$0xff]
    %v232 = vld [vmem:[%s0 + $0x610] sm:$0xff]
    %v233 = vld [vmem:[%s0 + $0x618] sm:$0xff]
    %v234 = vld [vmem:[%s0 + $0x620] sm:$0xff]
    %v235 = vld [vmem:[%s0 + $0x628] sm:$0xff]
    %v236 = vld [vmem:[%s0 + $0x630] sm:$0xff]
    %v237 = vld [vmem:[%s0 + $0x638] sm:$0xff]
    %v238 = vld [vmem:[%s0 + $0x640] sm:$0xff]
    %v239 = vld [vmem:[%s0 + $0x648] sm:$0xff]
    %v240 = vld [vmem:[%s0 + $0x650] sm:$0xff]
    %v241 = vld [vmem:[%s0 + $0x658] sm:$0xff]
    %v242 = vld [vmem:[%s0 + $0x660] sm:$0xff]
    %v243 = vld [vmem:[%s0 + $0x668] sm:$0xff]
    %v244 = vld [vmem:[%s0 + $0x670] sm:$0xff]
    %v245 = vld [vmem:[%s0 + $0x678] sm:$0xff]
    %v246 = vld [vmem:[%s0 + $0x680] sm:$0xff]
    %v247 = vld [vmem:[%s0 + $0x688] sm:$0xff]
    %v248 = vld [vmem:[%s0 + $0x690] sm:$0xff]
    %v249 = vld [vmem:[%s0 + $0x698] sm:$0xff]
    %v250 = vld [vmem:[%s0 + $0x6a0] sm:$0xff]
    %v251 = vld [vmem:[%s0 + $0x6a8] sm:$0xff]
    %v252 = vld [vmem:[%s0 + $0x6b0] sm:$0xff]
    %v253 = vld [vmem:[%s0 + $0x6b8] sm:$0xff]
    %v254 = vld [vmem:[%s0 + $0x6c0] sm:$0xff]
    %v255 = vld [vmem:[%s0 + $0x6c8] sm:$0xff]
    %v256 = vld [vmem:[%s0 + $0x6d0] sm:$0xff]
    %v257 = vld [vmem:[%s0 + $0x6d8] sm:$0xff]
    %v258 = vld [vmem:[%s0 + $0x6e0] sm:$0xff]
    %v259 = vld [vmem:[%s0 + $0x6e8] sm:$0xff]
    %v260 = vld [vmem:[%s0 + $0x6f0] sm:$0xff]
    %v261 = vld [vmem:[%s0 + $0x6f8] sm:$0xff]
    %v262 = vld [vmem:[%s0 + $0x700] sm:$0xff]
    %v263 = vld [vmem:[%s0 + $0x708] sm:$0xff]
    %v264 = vld [vmem:[%s0 + $0x710] sm:$0xff]
    %v265 = vld [vmem:[%s0 + $0x718] sm:$0xff]
    %v266 = vld [vmem:[%s0 + $0x720] sm:$0xff]
    %v267 = vld [vmem:[%s0 + $0x728] sm:$0xff]
    %v268 = vld [vmem:[%s0 + $0x730] sm:$0xff]
    %v269 = vld [vmem:[%s0 + $0x738] sm:$0xff]
    %v270 = vld [vmem:[%s0 + $0x740] sm:$0xff]
    %v271 = vld [vmem:[%s0 + $0x748] sm:$0xff]
    %v272 = vld [vmem:[%s0 + $0x750] sm:$0xff]
    %v273 = vld [vmem:[%s0 + $0x758] sm:$0xff]
    %v274 = vld [vmem:[%s0 + $0x760] sm:$0xff]
    %v275 = vld [vmem:[%s0 + $0x768] sm:$0xff]
    %v276 = vld [vmem:[%s0 + $0x770] sm:$0xff]
    %v277 = vld [vmem:[%s0 + $0x778] sm:$0xff]
    %v278 = vld [vmem:[%s0 + $0x780] sm:$0xff]
    %v279 = vld [vmem:[%s0 + $0x788] sm:$0xff]
    %v280 = vld [vmem:[%s0 + $0x790] sm:$0xff]
    %v281 = vld [vmem:[%s0 + $0x798] sm:$0xff]
    %v282 = vld [vmem:[%s0 + $0x7a0] sm:$0xff]
    %v283 = vld [vmem:[%s0 + $0x7a8] sm:$0xff]
    %v284 = vld [vmem:[%s0 + $0x7b0] sm:$0xff]
    %v285 = vld [vmem:[%s0 + $0x7b8] sm:$0xff]
    %v286 = vld [vmem:[%s0 + $0x7c0] sm:$0xff]
    %v287 = vld [vmem:[%s0 + $0x7c8] sm:$0xff]
    %v288 = vld [vmem:[%s0 + $0x7d0] sm:$0xff]
    %v289 = vld [vmem:[%s0 + $0x7d8] sm:$0xff]
    %v290 = vld [vmem:[%s0 + $0x7e0] sm:$0xff]
    %v291 = vld [vmem:[%s0 + $0x7e8] sm:$0xff]
    %v292 = vld [vmem:[%s0 + $0x7f0] sm:$0xff]
    %v293 = vld [vmem:[%s0 + $0x7f8] sm:$0xff]
    %v294 = vld [vmem:[%s0 + $0x800] sm:$0xff]
    %v295 = vld [vmem:[%s0 + $0x808] sm:$0xff]
    %v296 = vld [vmem:[%s0 + $0x810] sm:$0xff]
    %v297 = vld [vmem:[%s0 + $0x818] sm:$0xff]
    %v298 = vld [vmem:[%s0 + $0x820] sm:$0xff]
    %v299 = vld [vmem:[%s0 + $0x828] sm:$0xff]
    %v300 = vld [vmem:[%s0 + $0x830] sm:$0xff]
    %v301 = vld [vmem:[%s0 + $0x838] sm:$0xff]
    %v302 = vld [vmem:[%s0 + $0x840] sm:$0xff]
    %v303 = vld [vmem:[%s0 + $0x848] sm:$0xff]
    %v304 = vld [vmem:[%s0 + $0x850] sm:$0xff]
    %v305 = vld [vmem:[%s0 + $0x858] sm:$0xff]
    %v306 = vld [vmem:[%s0 + $0x860] sm:$0xff]
    %v307 = vld [vmem:[%s0 + $0x868] sm:$0xff]
    %v308 = vld [vmem:[%s0 + $0x870] sm:$0xff]
    %v309 = vld [vmem:[%s0 + $0x878] sm:$0xff]
    %v310 = vld [vmem:[%s0 + $0x880] sm:$0xff]
    %v311 = vld [vmem:[%s0 + $0x888] sm:$0xff]
    %v312 = vld [vmem:[%s0 + $0x890] sm:$0xff]
    %v313 = vld [vmem:[%s0 + $0x898] sm:$0xff]
    %v314 = vld [vmem:[%s0 + $0x8a0] sm:$0xff]
    %v315 = vld [vmem:[%s0 + $0x8a8] sm:$0xff]
    %v316 = vld [vmem:[%s0 + $0x8b0] sm:$0xff]
    %v317 = vld [vmem:[%s0 + $0x8b8] sm:$0xff]
    %v318 = vld [vmem:[%s0 + $0x8c0] sm:$0xff]
    %v319 = vld [vmem:[%s0 + $0x8c8] sm:$0xff]
    %v320 = vld [vmem:[%s0 + $0x8d0] sm:$0xff]
    %v321 = vld [vmem:[%s0 + $0x8d8] sm:$0xff]
    %v322 = vld [vmem:[%s0 + $0x8e0] sm:$0xff]
    %v323 = vld [vmem:[%s0 + $0x8e8] sm:$0xff]
    %v324 = vld [vmem:[%s0 + $0x8f0] sm:$0xff]
    %v325 = vld [vmem:[%s0 + $0x8f8] sm:$0xff]
    %v326 = vld [vmem:[%s0 + $0x900] sm:$0xff]
    %v327 = vld [vmem:[%s0 + $0x908] sm:$0xff]
    %v328 = vld [vmem:[%s0 + $0x910] sm:$0xff]
    %v329 = vld [vmem:[%s0 + $0x918] sm:$0xff]
    %v330 = vld [vmem:[%s0 + $0x920] sm:$0xff]
    %v331 = vld [vmem:[%s0 + $0x928] sm:$0xff]
    %v332 = vld [vmem:[%s0 + $0x930] sm:$0xff]
    %v333 = vld [vmem:[%s0 + $0x938] sm:$0xff]
    %v334 = vld [vmem:[%s0 + $0x940] sm:$0xff]
    %v335 = vld [vmem:[%s0 + $0x948] sm:$0xff]
    %v336 = vld [vmem:[%s0 + $0x950] sm:$0xff]
    %v337 = vld [vmem:[%s0 + $0x958] sm:$0xff]
    %v338 = vld [vmem:[%s0 + $0x960] sm:$0xff]
    %v339 = vld [vmem:[%s0 + $0x968] sm:$0xff]
    %v340 = vld [vmem:[%s0 + $0x970] sm:$0xff]
    %v341 = vld [vmem:[%s0 + $0x978] sm:$0xff]
    %v342 = vld [vmem:[%s0 + $0x980] sm:$0xff]
    %v343 = vld [vmem:[%s0 + $0x988] sm:$0xff]
    %v344 = vld [vmem:[%s0 + $0x990] sm:$0xff]
    %v345 = vld [vmem:[%s0 + $0x998] sm:$0xff]
    %v346 = vld [vmem:[%s0 + $0x9a0] sm:$0xff]
    %v347 = vld [vmem:[%s0 + $0x9a8] sm:$0xff]
    %v348 = vld [vmem:[%s0 + $0x9b0] sm:$0xff]
    %v349 = vld [vmem:[%s0 + $0x9b8] sm:$0xff]
    %v350 = vld [vmem:[%s0 + $0x9c0] sm:$0xff]
    %v351 = vld [vmem:[%s0 + $0x9c8] sm:$0xff]
    %v352 = vld [vmem:[%s0 + $0x9d0] sm:$0xff]
    %v353 = vld [vmem:[%s0 + $0x9d8] sm:$0xff]
    %v354 = vld [vmem:[%s0 + $0x9e0] sm:$0xff]
    %v355 = vld [vmem:[%s0 + $0x9e8] sm:$0xff]
    %v356 = vld [vmem:[%s0 + $0x9f0] sm:$0xff]
    %v357 = vld [vmem:[%s0 + $0x9f8] sm:$0xff]
    %v358 = vld [vmem:[%s0 + $0xa00] sm:$0xff]
    %v359 = vld [vmem:[%s0 + $0xa08] sm:$0xff]
    %v360 = vld [vmem:[%s0 + $0xa10] sm:$0xff]
    %v361 = vld [vmem:[%s0 + $0xa18] sm:$0xff]
    %v362 = vld [vmem:[%s0 + $0xa20] sm:$0xff]
    %v363 = vld [vmem:[%s0 + $0xa28] sm:$0xff]
    %v364 = vld [vmem:[%s0 + $0xa30] sm:$0xff]
    %v365 = vld [vmem:[%s0 + $0xa38] sm:$0xff]
    %v366 = vld [vmem:[%s0 + $0xa40] sm:$0xff]
    %v367 = vld [vmem:[%s0 + $0xa48] sm:$0xff]
    %v368 = vld [vmem:[%s0 + $0xa50] sm:$0xff]
    %v369 = vld [vmem:[%s0 + $0xa58] sm:$0xff]
    %v370 = vld [vmem:[%s0 + $0xa60] sm:$0xff]
    %v371 = vld [vmem:[%s0 + $0xa68] sm:$0xff]
    %v372 = vld [vmem:[%s0 + $0xa70] sm:$0xff]
    %v373 = vld [vmem:[%s0 + $0xa78] sm:$0xff]
    %v374 = vld [vmem:[%s0 + $0xa80] sm:$0xff]
    %v375 = vld [vmem:[%s0 + $0xa88] sm:$0xff]
    %v376 = vld [vmem:[%s0 + $0xa90] sm:$0xff]
    %v377 = vld [vmem:[%s0 + $0xa98] sm:$0xff]
    %v378 = vld [vmem:[%s0 + $0xaa0] sm:$0xff]
    %v379 = vld [vmem:[%s0 + $0xaa8] sm:$0xff]
    %v380 = vld [vmem:[%s0 + $0xab0] sm:$0xff]
    %v381 = vld [vmem:[%s0 + $0xab8] sm:$0xff]
    %v382 = vld [vmem:[%s0 + $0xac0] sm:$0xff]
    %v383 = vld [vmem:[%s0 + $0xac8] sm:$0xff]
    %v384 = vld [vmem:[%s0 + $0xad0] sm:$0xff]
    %v385 = vld [vmem:[%s0 + $0xad8] sm:$0xff]
    %v386 = vld [vmem:[%s0 + $0xae0] sm:$0xff]
    %v387 = vld [vmem:[%s0 + $0xae8] sm:$0xff]
    %v388 = vld [vmem:[%s0 + $0xaf0] sm:$0xff]
    %v389 = vld [vmem:[%s0 + $0xaf8] sm:$0xff]
    %v390 = vld [vmem:[%s0 + $0xb00] sm:$0xff]
    %v391 = vld [vmem:[%s0 + $0xb08] sm:$0xff]
    %v392 = vld [vmem:[%s0 + $0xb10] sm:$0xff]
    %v393 = vld [vmem:[%s0 + $0xb18] sm:$0xff]
    %v394 = vld [vmem:[%s0 + $0xb20] sm:$0xff]
    %v395 = vld [vmem:[%s0 + $0xb28] sm:$0xff]
    %v396 = vld [vmem:[%s0 + $0xb30] sm:$0xff]
    %v397 = vld [vmem:[%s0 + $0xb38] sm:$0xff]
    %v398 = vld [vmem:[%s0 + $0xb40] sm:$0xff]
    %v399 = vld [vmem:[%s0 + $0xb48] sm:$0xff]
    %v400 = vld [vmem:[%s0 + $0xb50] sm:$0xff]
    %v401 = vld [vmem:[%s0 + $0xb58] sm:$0xff]
    %v402 = vld [vmem:[%s0 + $0xb60] sm:$0xff]
    %v403 = vld [vmem:[%s0 + $0xb68] sm:$0xff]
    %v404 = vld [vmem:[%s0 + $0xb70] sm:$0xff]
    %v405 = vld [vmem:[%s0 + $0xb78] sm:$0xff]
    %v406 = vld [vmem:[%s0 + $0xb80] sm:$0xff]
    %v407 = vld [vmem:[%s0 + $0xb88] sm:$0xff]
    %v408 = vld [vmem:[%s0 + $0xb90] sm:$0xff]
    %v409 = vld [vmem:[%s0 + $0xb98] sm:$0xff]
    %v410 = vld [vmem:[%s0 + $0xba0] sm:$0xff]
    %v411 = vld [vmem:[%s0 + $0xba8] sm:$0xff]
    %v412 = vld [vmem:[%s0 + $0xbb0] sm:$0xff]
    %v413 = vld [vmem:[%s0 + $0xbb8] sm:$0xff]
    %v414 = vld [vmem:[%s0 + $0xbc0] sm:$0xff]
    %v415 = vld [vmem:[%s0 + $0xbc8] sm:$0xff]
    %v416 = vld [vmem:[%s0 + $0xbd0] sm:$0xff]
    %v417 = vld [vmem:[%s0 + $0xbd8] sm:$0xff]
    %v418 = vld [vmem:[%s0 + $0xbe0] sm:$0xff]
    %v419 = vld [vmem:[%s0 + $0xbe8] sm:$0xff]
    %v420 = vld [vmem:[%s0 + $0xbf0] sm:$0xff]
    %v421 = vld [vmem:[%s0 + $0xbf8] sm:$0xff]
    %v422 = vld [vmem:[%s0 + $0xc00] sm:$0xff]
    %v423 = vld [vmem:[%s0 + $0xc08] sm:$0xff]
    %v424 = vld [vmem:[%s0 + $0xc10] sm:$0xff]
    %v425 = vld [vmem:[%s0 + $0xc18] sm:$0xff]
    %v426 = vld [vmem:[%s0 + $0xc20] sm:$0xff]
    %v427 = vld [vmem:[%s0 + $0xc28] sm:$0xff]
    %v428 = vld [vmem:[%s0 + $0xc30] sm:$0xff]
    %v429 = vld [vmem:[%s0 + $0xc38] sm:$0xff]
    %v430 = vld [vmem:[%s0 + $0xc40] sm:$0xff]
    %v431 = vld [vmem:[%s0 + $0xc48] sm:$0xff]
    %v432 = vld [vmem:[%s0 + $0xc50] sm:$0xff]
    %v433 = vld [vmem:[%s0 + $0xc58] sm:$0xff]
    %v434 = vld [vmem:[%s0 + $0xc60] sm:$0xff]
    %v435 = vld [vmem:[%s0 + $0xc68] sm:$0xff]
    %v436 = vld [vmem:[%s0 + $0xc70] sm:$0xff]
    %v437 = vld [vmem:[%s0 + $0xc78] sm:$0xff]
    %v438 = vld [vmem:[%s0 + $0xc80] sm:$0xff]
    %v439 = vld [vmem:[%s0 + $0xc88] sm:$0xff]
    %v440 = vld [vmem:[%s0 + $0xc90] sm:$0xff]
    %v441 = vld [vmem:[%s0 + $0xc98] sm:$0xff]
    %v442 = vld [vmem:[%s0 + $0xca0] sm:$0xff]
    %v443 = vld [vmem:[%s0 + $0xca8] sm:$0xff]
    %v444 = vld [vmem:[%s0 + $0xcb0] sm:$0xff]
    %v445 = vld [vmem:[%s0 + $0xcb8] sm:$0xff]
    %v446 = vld [vmem:[%s0 + $0xcc0] sm:$0xff]
    %v447 = vld [vmem:[%s0 + $0xcc8] sm:$0xff]
    %v448 = vld [vmem:[%s0 + $0xcd0] sm:$0xff]
    %v449 = vld [vmem:[%s0 + $0xcd8] sm:$0xff]
    %v450 = vld [vmem:[%s0 + $0xce0] sm:$0xff]
    %v451 = vld [vmem:[%s0 + $0xce8] sm:$0xff]
    %v452 = vld [vmem:[%s0 + $0xcf0] sm:$0xff]
    %v453 = vld [vmem:[%s0 + $0xcf8] sm:$0xff]
    %v454 = vld [vmem:[%s0 + $0xd00] sm:$0xff]
    %v455 = vld [vmem:[%s0 + $0xd08] sm:$0xff]
    %v456 = vld [vmem:[%s0 + $0xd10] sm:$0xff]
    %v457 = vld [vmem:[%s0 + $0xd18] sm:$0xff]
    %v458 = vld [vmem:[%s0 + $0xd20] sm:$0xff]
    %v459 = vld [vmem:[%s0 + $0xd28] sm:$0xff]
    %v460 = vld [vmem:[%s0 + $0xd30] sm:$0xff]
    %v461 = vld [vmem:[%s0 + $0xd38] sm:$0xff]
    %v462 = vld [vmem:[%s0 + $0xd40] sm:$0xff]
    %v463 = vld [vmem:[%s0 + $0xd48] sm:$0xff]
    %v464 = vld [vmem:[%s0 + $0xd50] sm:$0xff]
    %v465 = vld [vmem:[%s0 + $0xd58] sm:$0xff]
    %v466 = vld [vmem:[%s0 + $0xd60] sm:$0xff]
    %v467 = vld [vmem:[%s0 + $0xd68] sm:$0xff]
    %v468 = vld [vmem:[%s0 + $0xd70] sm:$0xff]
    %v469 = vld [vmem:[%s0 + $0xd78] sm:$0xff]
    %v470 = vld [vmem:[%s0 + $0xd80] sm:$0xff]
    %v471 = vld [vmem:[%s0 + $0xd88] sm:$0xff]
    %v472 = vld [vmem:[%s0 + $0xd90] sm:$0xff]
    %v473 = vld [vmem:[%s0 + $0xd98] sm:$0xff]
    %v474 = vld [vmem:[%s0 + $0xda0] sm:$0xff]
    %v475 = vld [vmem:[%s0 + $0xda8] sm:$0xff]
    %v476 = vld [vmem:[%s0 + $0xdb0] sm:$0xff]
    %v477 = vld [vmem:[%s0 + $0xdb8] sm:$0xff]
    %v478 = vld [vmem:[%s0 + $0xdc0] sm:$0xff]
    %v479 = vld [vmem:[%s0 + $0xdc8] sm:$0xff]
    %v480 = vld [vmem:[%s0 + $0xdd0] sm:$0xff]
    %v481 = vld [vmem:[%s0 + $0xdd8] sm:$0xff]
    %v482 = vld [vmem:[%s0 + $0xde0] sm:$0xff]
    %v483 = vld [vmem:[%s0 + $0xde8] sm:$0xff]
    %v484 = vld [vmem:[%s0 + $0xdf0] sm:$0xff]
    %v485 = vld [vmem:[%s0 + $0xdf8] sm:$0xff]
    %v486 = vld [vmem:[%s0 + $0xe00] sm:$0xff]
    %v487 = vld [vmem:[%s0 + $0xe08] sm:$0xff]
    %v488 = vld [vmem:[#allocation2] sm:$0x77]
    %v489 = vld [vmem:[#allocation4] sm:$0x3]
    %491 = vset.pattern.permute.xlu0 0
    %492 = vperm.xlu0 %491, %v38
    %v493 = vpop.permute.xlu0 %492
    %496 = vset.pattern.permute.xlu0 0
    %497 = vperm.xlu0 %496, %v39
    %v498 = vpop.permute.xlu0 %497
    %501 = vset.pattern.permute.xlu0 0
    %502 = vperm.xlu0 %501, %v40
    %v503 = vpop.permute.xlu0 %502
    %506 = vset.pattern.permute.xlu0 0
    %507 = vperm.xlu0 %506, %v41
    %v508 = vpop.permute.xlu0 %507
    %511 = vset.pattern.permute.xlu0 0
    %512 = vperm.xlu0 %511, %v42
    %v513 = vpop.permute.xlu0 %512
    %516 = vset.pattern.permute.xlu0 0
    %517 = vperm.xlu0 %516, %v43
    %v518 = vpop.permute.xlu0 %517
    %521 = vset.pattern.permute.xlu0 0
    %522 = vperm.xlu0 %521, %v44
    %v523 = vpop.permute.xlu0 %522
    %526 = vset.pattern.permute.xlu0 0
    %527 = vperm.xlu0 %526, %v45
    %v528 = vpop.permute.xlu0 %527
    %531 = vset.pattern.permute.xlu0 0
    %532 = vperm.xlu0 %531, %v46
    %v533 = vpop.permute.xlu0 %532
    %536 = vset.pattern.permute.xlu0 0
    %537 = vperm.xlu0 %536, %v47
    %v538 = vpop.permute.xlu0 %537
    %541 = vset.pattern.permute.xlu0 0
    %542 = vperm.xlu0 %541, %v48
    %v543 = vpop.permute.xlu0 %542
    %546 = vset.pattern.permute.xlu0 0
    %547 = vperm.xlu0 %546, %v49
    %v548 = vpop.permute.xlu0 %547
    %551 = vset.pattern.permute.xlu0 0
    %552 = vperm.xlu0 %551, %v50
    %v553 = vpop.permute.xlu0 %552
    %556 = vset.pattern.permute.xlu0 0
    %557 = vperm.xlu0 %556, %v51
    %v558 = vpop.permute.xlu0 %557
    %561 = vset.pattern.permute.xlu0 0
    %562 = vperm.xlu0 %561, %v52
    %v563 = vpop.permute.xlu0 %562
    %566 = vset.pattern.permute.xlu0 0
    %567 = vperm.xlu0 %566, %v53
    %v568 = vpop.permute.xlu0 %567
    %571 = vset.pattern.permute.xlu0 0
    %572 = vperm.xlu0 %571, %v54
    %v573 = vpop.permute.xlu0 %572
    %576 = vset.pattern.permute.xlu0 0
    %577 = vperm.xlu0 %576, %v55
    %v578 = vpop.permute.xlu0 %577
    %581 = vset.pattern.permute.xlu0 0
    %582 = vperm.xlu0 %581, %v56
    %v583 = vpop.permute.xlu0 %582
    %586 = vset.pattern.permute.xlu0 0
    %587 = vperm.xlu0 %586, %v57
    %v588 = vpop.permute.xlu0 %587
    %591 = vset.pattern.permute.xlu0 0
    %592 = vperm.xlu0 %591, %v58
    %v593 = vpop.permute.xlu0 %592
    %596 = vset.pattern.permute.xlu0 0
    %597 = vperm.xlu0 %596, %v59
    %v598 = vpop.permute.xlu0 %597
    %601 = vset.pattern.permute.xlu0 0
    %602 = vperm.xlu0 %601, %v60
    %v603 = vpop.permute.xlu0 %602
    %606 = vset.pattern.permute.xlu0 0
    %607 = vperm.xlu0 %606, %v61
    %v608 = vpop.permute.xlu0 %607
    %611 = vset.pattern.permute.xlu0 0
    %612 = vperm.xlu0 %611, %v62
    %v613 = vpop.permute.xlu0 %612
    %616 = vset.pattern.permute.xlu0 0
    %617 = vperm.xlu0 %616, %v63
    %v618 = vpop.permute.xlu0 %617
    %621 = vset.pattern.permute.xlu0 0
    %622 = vperm.xlu0 %621, %v64
    %v623 = vpop.permute.xlu0 %622
    %626 = vset.pattern.permute.xlu0 0
    %627 = vperm.xlu0 %626, %v65
    %v628 = vpop.permute.xlu0 %627
    %631 = vset.pattern.permute.xlu0 0
    %632 = vperm.xlu0 %631, %v66
    %v633 = vpop.permute.xlu0 %632
    %636 = vset.pattern.permute.xlu0 0
    %637 = vperm.xlu0 %636, %v67
    %v638 = vpop.permute.xlu0 %637
    %641 = vset.pattern.permute.xlu0 0
    %642 = vperm.xlu0 %641, %v68
    %v643 = vpop.permute.xlu0 %642
    %646 = vset.pattern.permute.xlu0 0
    %647 = vperm.xlu0 %646, %v69
    %v648 = vpop.permute.xlu0 %647
    %651 = vset.pattern.permute.xlu0 0
    %652 = vperm.xlu0 %651, %v70
    %v653 = vpop.permute.xlu0 %652
    %656 = vset.pattern.permute.xlu0 0
    %657 = vperm.xlu0 %656, %v71
    %v658 = vpop.permute.xlu0 %657
    %661 = vset.pattern.permute.xlu0 0
    %662 = vperm.xlu0 %661, %v72
    %v663 = vpop.permute.xlu0 %662
    %666 = vset.pattern.permute.xlu0 0
    %667 = vperm.xlu0 %666, %v73
    %v668 = vpop.permute.xlu0 %667
    %671 = vset.pattern.permute.xlu0 0
    %672 = vperm.xlu0 %671, %v74
    %v673 = vpop.permute.xlu0 %672
    %676 = vset.pattern.permute.xlu0 0
    %677 = vperm.xlu0 %676, %v75
    %v678 = vpop.permute.xlu0 %677
    %681 = vset.pattern.permute.xlu0 0
    %682 = vperm.xlu0 %681, %v76
    %v683 = vpop.permute.xlu0 %682
    %686 = vset.pattern.permute.xlu0 0
    %687 = vperm.xlu0 %686, %v77
    %v688 = vpop.permute.xlu0 %687
    %691 = vset.pattern.permute.xlu0 0
    %692 = vperm.xlu0 %691, %v78
    %v693 = vpop.permute.xlu0 %692
    %696 = vset.pattern.permute.xlu0 0
    %697 = vperm.xlu0 %696, %v79
    %v698 = vpop.permute.xlu0 %697
    %701 = vset.pattern.permute.xlu0 0
    %702 = vperm.xlu0 %701, %v80
    %v703 = vpop.permute.xlu0 %702
    %706 = vset.pattern.permute.xlu0 0
    %707 = vperm.xlu0 %706, %v81
    %v708 = vpop.permute.xlu0 %707
    %711 = vset.pattern.permute.xlu0 0
    %712 = vperm.xlu0 %711, %v82
    %v713 = vpop.permute.xlu0 %712
    %716 = vset.pattern.permute.xlu0 0
    %717 = vperm.xlu0 %716, %v83
    %v718 = vpop.permute.xlu0 %717
    %721 = vset.pattern.permute.xlu0 0
    %722 = vperm.xlu0 %721, %v84
    %v723 = vpop.permute.xlu0 %722
    %726 = vset.pattern.permute.xlu0 0
    %727 = vperm.xlu0 %726, %v85
    %v728 = vpop.permute.xlu0 %727
    %731 = vset.pattern.permute.xlu0 0
    %732 = vperm.xlu0 %731, %v86
    %v733 = vpop.permute.xlu0 %732
    %736 = vset.pattern.permute.xlu0 0
    %737 = vperm.xlu0 %736, %v87
    %v738 = vpop.permute.xlu0 %737
    %741 = vset.pattern.permute.xlu0 0
    %742 = vperm.xlu0 %741, %v88
    %v743 = vpop.permute.xlu0 %742
    %746 = vset.pattern.permute.xlu0 0
    %747 = vperm.xlu0 %746, %v89
    %v748 = vpop.permute.xlu0 %747
    %751 = vset.pattern.permute.xlu0 0
    %752 = vperm.xlu0 %751, %v90
    %v753 = vpop.permute.xlu0 %752
    %756 = vset.pattern.permute.xlu0 0
    %757 = vperm.xlu0 %756, %v91
    %v758 = vpop.permute.xlu0 %757
    %761 = vset.pattern.permute.xlu0 0
    %762 = vperm.xlu0 %761, %v92
    %v763 = vpop.permute.xlu0 %762
    %766 = vset.pattern.permute.xlu0 0
    %767 = vperm.xlu0 %766, %v93
    %v768 = vpop.permute.xlu0 %767
    %771 = vset.pattern.permute.xlu0 0
    %772 = vperm.xlu0 %771, %v94
    %v773 = vpop.permute.xlu0 %772
    %776 = vset.pattern.permute.xlu0 0
    %777 = vperm.xlu0 %776, %v95
    %v778 = vpop.permute.xlu0 %777
    %781 = vset.pattern.permute.xlu0 0
    %782 = vperm.xlu0 %781, %v96
    %v783 = vpop.permute.xlu0 %782
    %786 = vset.pattern.permute.xlu0 0
    %787 = vperm.xlu0 %786, %v97
    %v788 = vpop.permute.xlu0 %787
    %791 = vset.pattern.permute.xlu0 0
    %792 = vperm.xlu0 %791, %v98
    %v793 = vpop.permute.xlu0 %792
    %796 = vset.pattern.permute.xlu0 0
    %797 = vperm.xlu0 %796, %v99
    %v798 = vpop.permute.xlu0 %797
    %801 = vset.pattern.permute.xlu0 0
    %802 = vperm.xlu0 %801, %v100
    %v803 = vpop.permute.xlu0 %802
    %806 = vset.pattern.permute.xlu0 0
    %807 = vperm.xlu0 %806, %v101
    %v808 = vpop.permute.xlu0 %807
    %811 = vset.pattern.permute.xlu0 0
    %812 = vperm.xlu0 %811, %v102
    %v813 = vpop.permute.xlu0 %812
    %816 = vset.pattern.permute.xlu0 0
    %817 = vperm.xlu0 %816, %v103
    %v818 = vpop.permute.xlu0 %817
    %821 = vset.pattern.permute.xlu0 0
    %822 = vperm.xlu0 %821, %v104
    %v823 = vpop.permute.xlu0 %822
    %826 = vset.pattern.permute.xlu0 0
    %827 = vperm.xlu0 %826, %v105
    %v828 = vpop.permute.xlu0 %827
    %831 = vset.pattern.permute.xlu0 0
    %832 = vperm.xlu0 %831, %v106
    %v833 = vpop.permute.xlu0 %832
    %836 = vset.pattern.permute.xlu0 0
    %837 = vperm.xlu0 %836, %v107
    %v838 = vpop.permute.xlu0 %837
    %841 = vset.pattern.permute.xlu0 0
    %842 = vperm.xlu0 %841, %v108
    %v843 = vpop.permute.xlu0 %842
    %846 = vset.pattern.permute.xlu0 0
    %847 = vperm.xlu0 %846, %v109
    %v848 = vpop.permute.xlu0 %847
    %851 = vset.pattern.permute.xlu0 0
    %852 = vperm.xlu0 %851, %v110
    %v853 = vpop.permute.xlu0 %852
    %856 = vset.pattern.permute.xlu0 0
    %857 = vperm.xlu0 %856, %v111
    %v858 = vpop.permute.xlu0 %857
    %861 = vset.pattern.permute.xlu0 0
    %862 = vperm.xlu0 %861, %v112
    %v863 = vpop.permute.xlu0 %862
    %866 = vset.pattern.permute.xlu0 0
    %867 = vperm.xlu0 %866, %v113
    %v868 = vpop.permute.xlu0 %867
    %871 = vset.pattern.permute.xlu0 0
    %872 = vperm.xlu0 %871, %v114
    %v873 = vpop.permute.xlu0 %872
    %876 = vset.pattern.permute.xlu0 0
    %877 = vperm.xlu0 %876, %v115
    %v878 = vpop.permute.xlu0 %877
    %881 = vset.pattern.permute.xlu0 0
    %882 = vperm.xlu0 %881, %v116
    %v883 = vpop.permute.xlu0 %882
    %886 = vset.pattern.permute.xlu0 0
    %887 = vperm.xlu0 %886, %v117
    %v888 = vpop.permute.xlu0 %887
    %891 = vset.pattern.permute.xlu0 0
    %892 = vperm.xlu0 %891, %v118
    %v893 = vpop.permute.xlu0 %892
    %896 = vset.pattern.permute.xlu0 0
    %897 = vperm.xlu0 %896, %v119
    %v898 = vpop.permute.xlu0 %897
    %901 = vset.pattern.permute.xlu0 0
    %902 = vperm.xlu0 %901, %v120
    %v903 = vpop.permute.xlu0 %902
    %906 = vset.pattern.permute.xlu0 0
    %907 = vperm.xlu0 %906, %v121
    %v908 = vpop.permute.xlu0 %907
    %911 = vset.pattern.permute.xlu0 0
    %912 = vperm.xlu0 %911, %v122
    %v913 = vpop.permute.xlu0 %912
    %916 = vset.pattern.permute.xlu0 0
    %917 = vperm.xlu0 %916, %v123
    %v918 = vpop.permute.xlu0 %917
    %921 = vset.pattern.permute.xlu0 0
    %922 = vperm.xlu0 %921, %v124
    %v923 = vpop.permute.xlu0 %922
    %926 = vset.pattern.permute.xlu0 0
    %927 = vperm.xlu0 %926, %v125
    %v928 = vpop.permute.xlu0 %927
    %931 = vset.pattern.permute.xlu0 0
    %932 = vperm.xlu0 %931, %v126
    %v933 = vpop.permute.xlu0 %932
    %936 = vset.pattern.permute.xlu0 0
    %937 = vperm.xlu0 %936, %v127
    %v938 = vpop.permute.xlu0 %937
    %941 = vset.pattern.permute.xlu0 0
    %942 = vperm.xlu0 %941, %v128
    %v943 = vpop.permute.xlu0 %942
    %946 = vset.pattern.permute.xlu0 0
    %947 = vperm.xlu0 %946, %v129
    %v948 = vpop.permute.xlu0 %947
    %951 = vset.pattern.permute.xlu0 0
    %952 = vperm.xlu0 %951, %v130
    %v953 = vpop.permute.xlu0 %952
    %956 = vset.pattern.permute.xlu0 0
    %957 = vperm.xlu0 %956, %v131
    %v958 = vpop.permute.xlu0 %957
    %961 = vset.pattern.permute.xlu0 0
    %962 = vperm.xlu0 %961, %v132
    %v963 = vpop.permute.xlu0 %962
    %966 = vset.pattern.permute.xlu0 0
    %967 = vperm.xlu0 %966, %v133
    %v968 = vpop.permute.xlu0 %967
    %971 = vset.pattern.permute.xlu0 0
    %972 = vperm.xlu0 %971, %v134
    %v973 = vpop.permute.xlu0 %972
    %976 = vset.pattern.permute.xlu0 0
    %977 = vperm.xlu0 %976, %v135
    %v978 = vpop.permute.xlu0 %977
    %981 = vset.pattern.permute.xlu0 0
    %982 = vperm.xlu0 %981, %v136
    %v983 = vpop.permute.xlu0 %982
    %986 = vset.pattern.permute.xlu0 0
    %987 = vperm.xlu0 %986, %v137
    %v988 = vpop.permute.xlu0 %987
    %991 = vset.pattern.permute.xlu0 0
    %992 = vperm.xlu0 %991, %v138
    %v993 = vpop.permute.xlu0 %992
    %996 = vset.pattern.permute.xlu0 0
    %997 = vperm.xlu0 %996, %v139
    %v998 = vpop.permute.xlu0 %997
    %1001 = vset.pattern.permute.xlu0 0
    %1002 = vperm.xlu0 %1001, %v140
    %v1003 = vpop.permute.xlu0 %1002
    %1006 = vset.pattern.permute.xlu0 0
    %1007 = vperm.xlu0 %1006, %v141
    %v1008 = vpop.permute.xlu0 %1007
    %1011 = vset.pattern.permute.xlu0 0
    %1012 = vperm.xlu0 %1011, %v142
    %v1013 = vpop.permute.xlu0 %1012
    %1016 = vset.pattern.permute.xlu0 0
    %1017 = vperm.xlu0 %1016, %v143
    %v1018 = vpop.permute.xlu0 %1017
    %1021 = vset.pattern.permute.xlu0 0
    %1022 = vperm.xlu0 %1021, %v144
    %v1023 = vpop.permute.xlu0 %1022
    %1026 = vset.pattern.permute.xlu0 0
    %1027 = vperm.xlu0 %1026, %v145
    %v1028 = vpop.permute.xlu0 %1027
    %1031 = vset.pattern.permute.xlu0 0
    %1032 = vperm.xlu0 %1031, %v146
    %v1033 = vpop.permute.xlu0 %1032
    %1036 = vset.pattern.permute.xlu0 0
    %1037 = vperm.xlu0 %1036, %v147
    %v1038 = vpop.permute.xlu0 %1037
    %1041 = vset.pattern.permute.xlu0 0
    %1042 = vperm.xlu0 %1041, %v148
    %v1043 = vpop.permute.xlu0 %1042
    %1046 = vset.pattern.permute.xlu0 0
    %1047 = vperm.xlu0 %1046, %v149
    %v1048 = vpop.permute.xlu0 %1047
    %1051 = vset.pattern.permute.xlu0 0
    %1052 = vperm.xlu0 %1051, %v150
    %v1053 = vpop.permute.xlu0 %1052
    %1056 = vset.pattern.permute.xlu0 0
    %1057 = vperm.xlu0 %1056, %v151
    %v1058 = vpop.permute.xlu0 %1057
    %1061 = vset.pattern.permute.xlu0 0
    %1062 = vperm.xlu0 %1061, %v152
    %v1063 = vpop.permute.xlu0 %1062
    %1066 = vset.pattern.permute.xlu0 0
    %1067 = vperm.xlu0 %1066, %v153
    %v1068 = vpop.permute.xlu0 %1067
    %1071 = vset.pattern.permute.xlu0 0
    %1072 = vperm.xlu0 %1071, %v154
    %v1073 = vpop.permute.xlu0 %1072
    %1076 = vset.pattern.permute.xlu0 0
    %1077 = vperm.xlu0 %1076, %v155
    %v1078 = vpop.permute.xlu0 %1077
    %1081 = vset.pattern.permute.xlu0 0
    %1082 = vperm.xlu0 %1081, %v156
    %v1083 = vpop.permute.xlu0 %1082
    %1086 = vset.pattern.permute.xlu0 0
    %1087 = vperm.xlu0 %1086, %v157
    %v1088 = vpop.permute.xlu0 %1087
    %1091 = vset.pattern.permute.xlu0 0
    %1092 = vperm.xlu0 %1091, %v158
    %v1093 = vpop.permute.xlu0 %1092
    %1096 = vset.pattern.permute.xlu0 0
    %1097 = vperm.xlu0 %1096, %v159
    %v1098 = vpop.permute.xlu0 %1097
    %1101 = vset.pattern.permute.xlu0 0
    %1102 = vperm.xlu0 %1101, %v160
    %v1103 = vpop.permute.xlu0 %1102
    %1106 = vset.pattern.permute.xlu0 0
    %1107 = vperm.xlu0 %1106, %v161
    %v1108 = vpop.permute.xlu0 %1107
    %1111 = vset.pattern.permute.xlu0 0
    %1112 = vperm.xlu0 %1111, %v162
    %v1113 = vpop.permute.xlu0 %1112
    %1116 = vset.pattern.permute.xlu0 0
    %1117 = vperm.xlu0 %1116, %v163
    %v1118 = vpop.permute.xlu0 %1117
    %1121 = vset.pattern.permute.xlu0 0
    %1122 = vperm.xlu0 %1121, %v164
    %v1123 = vpop.permute.xlu0 %1122
    %1126 = vset.pattern.permute.xlu0 0
    %1127 = vperm.xlu0 %1126, %v165
    %v1128 = vpop.permute.xlu0 %1127
    %1131 = vset.pattern.permute.xlu0 0
    %1132 = vperm.xlu0 %1131, %v166
    %v1133 = vpop.permute.xlu0 %1132
    %1136 = vset.pattern.permute.xlu0 0
    %1137 = vperm.xlu0 %1136, %v167
    %v1138 = vpop.permute.xlu0 %1137
    %1141 = vset.pattern.permute.xlu0 0
    %1142 = vperm.xlu0 %1141, %v168
    %v1143 = vpop.permute.xlu0 %1142
    %1146 = vset.pattern.permute.xlu0 0
    %1147 = vperm.xlu0 %1146, %v169
    %v1148 = vpop.permute.xlu0 %1147
    %1151 = vset.pattern.permute.xlu0 0
    %1152 = vperm.xlu0 %1151, %v170
    %v1153 = vpop.permute.xlu0 %1152
    %1156 = vset.pattern.permute.xlu0 0
    %1157 = vperm.xlu0 %1156, %v171
    %v1158 = vpop.permute.xlu0 %1157
    %1161 = vset.pattern.permute.xlu0 0
    %1162 = vperm.xlu0 %1161, %v172
    %v1163 = vpop.permute.xlu0 %1162
    %1166 = vset.pattern.permute.xlu0 0
    %1167 = vperm.xlu0 %1166, %v173
    %v1168 = vpop.permute.xlu0 %1167
    %1171 = vset.pattern.permute.xlu0 0
    %1172 = vperm.xlu0 %1171, %v174
    %v1173 = vpop.permute.xlu0 %1172
    %1176 = vset.pattern.permute.xlu0 0
    %1177 = vperm.xlu0 %1176, %v175
    %v1178 = vpop.permute.xlu0 %1177
    %1181 = vset.pattern.permute.xlu0 0
    %1182 = vperm.xlu0 %1181, %v176
    %v1183 = vpop.permute.xlu0 %1182
    %1186 = vset.pattern.permute.xlu0 0
    %1187 = vperm.xlu0 %1186, %v177
    %v1188 = vpop.permute.xlu0 %1187
    %1191 = vset.pattern.permute.xlu0 0
    %1192 = vperm.xlu0 %1191, %v178
    %v1193 = vpop.permute.xlu0 %1192
    %1196 = vset.pattern.permute.xlu0 0
    %1197 = vperm.xlu0 %1196, %v179
    %v1198 = vpop.permute.xlu0 %1197
    %1201 = vset.pattern.permute.xlu0 0
    %1202 = vperm.xlu0 %1201, %v180
    %v1203 = vpop.permute.xlu0 %1202
    %1206 = vset.pattern.permute.xlu0 0
    %1207 = vperm.xlu0 %1206, %v181
    %v1208 = vpop.permute.xlu0 %1207
    %1211 = vset.pattern.permute.xlu0 0
    %1212 = vperm.xlu0 %1211, %v182
    %v1213 = vpop.permute.xlu0 %1212
    %1216 = vset.pattern.permute.xlu0 0
    %1217 = vperm.xlu0 %1216, %v183
    %v1218 = vpop.permute.xlu0 %1217
    %1221 = vset.pattern.permute.xlu0 0
    %1222 = vperm.xlu0 %1221, %v184
    %v1223 = vpop.permute.xlu0 %1222
    %1226 = vset.pattern.permute.xlu0 0
    %1227 = vperm.xlu0 %1226, %v185
    %v1228 = vpop.permute.xlu0 %1227
    %1231 = vset.pattern.permute.xlu0 0
    %1232 = vperm.xlu0 %1231, %v186
    %v1233 = vpop.permute.xlu0 %1232
    %1236 = vset.pattern.permute.xlu0 0
    %1237 = vperm.xlu0 %1236, %v187
    %v1238 = vpop.permute.xlu0 %1237
    %1241 = vset.pattern.permute.xlu0 0
    %1242 = vperm.xlu0 %1241, %v188
    %v1243 = vpop.permute.xlu0 %1242
    %1246 = vset.pattern.permute.xlu0 0
    %1247 = vperm.xlu0 %1246, %v189
    %v1248 = vpop.permute.xlu0 %1247
    %1251 = vset.pattern.permute.xlu0 0
    %1252 = vperm.xlu0 %1251, %v190
    %v1253 = vpop.permute.xlu0 %1252
    %1256 = vset.pattern.permute.xlu0 0
    %1257 = vperm.xlu0 %1256, %v191
    %v1258 = vpop.permute.xlu0 %1257
    %1261 = vset.pattern.permute.xlu0 0
    %1262 = vperm.xlu0 %1261, %v192
    %v1263 = vpop.permute.xlu0 %1262
    %1266 = vset.pattern.permute.xlu0 0
    %1267 = vperm.xlu0 %1266, %v193
    %v1268 = vpop.permute.xlu0 %1267
    %1271 = vset.pattern.permute.xlu0 0
    %1272 = vperm.xlu0 %1271, %v194
    %v1273 = vpop.permute.xlu0 %1272
    %1276 = vset.pattern.permute.xlu0 0
    %1277 = vperm.xlu0 %1276, %v195
    %v1278 = vpop.permute.xlu0 %1277
    %1281 = vset.pattern.permute.xlu0 0
    %1282 = vperm.xlu0 %1281, %v196
    %v1283 = vpop.permute.xlu0 %1282
    %1286 = vset.pattern.permute.xlu0 0
    %1287 = vperm.xlu0 %1286, %v197
    %v1288 = vpop.permute.xlu0 %1287
    %1291 = vset.pattern.permute.xlu0 0
    %1292 = vperm.xlu0 %1291, %v198
    %v1293 = vpop.permute.xlu0 %1292
    %1296 = vset.pattern.permute.xlu0 0
    %1297 = vperm.xlu0 %1296, %v199
    %v1298 = vpop.permute.xlu0 %1297
    %1301 = vset.pattern.permute.xlu0 0
    %1302 = vperm.xlu0 %1301, %v200
    %v1303 = vpop.permute.xlu0 %1302
    %1306 = vset.pattern.permute.xlu0 0
    %1307 = vperm.xlu0 %1306, %v201
    %v1308 = vpop.permute.xlu0 %1307
    %1311 = vset.pattern.permute.xlu0 0
    %1312 = vperm.xlu0 %1311, %v202
    %v1313 = vpop.permute.xlu0 %1312
    %1316 = vset.pattern.permute.xlu0 0
    %1317 = vperm.xlu0 %1316, %v203
    %v1318 = vpop.permute.xlu0 %1317
    %1321 = vset.pattern.permute.xlu0 0
    %1322 = vperm.xlu0 %1321, %v204
    %v1323 = vpop.permute.xlu0 %1322
    %1326 = vset.pattern.permute.xlu0 0
    %1327 = vperm.xlu0 %1326, %v205
    %v1328 = vpop.permute.xlu0 %1327
    %1331 = vset.pattern.permute.xlu0 0
    %1332 = vperm.xlu0 %1331, %v206
    %v1333 = vpop.permute.xlu0 %1332
    %1336 = vset.pattern.permute.xlu0 0
    %1337 = vperm.xlu0 %1336, %v207
    %v1338 = vpop.permute.xlu0 %1337
    %1341 = vset.pattern.permute.xlu0 0
    %1342 = vperm.xlu0 %1341, %v208
    %v1343 = vpop.permute.xlu0 %1342
    %1346 = vset.pattern.permute.xlu0 0
    %1347 = vperm.xlu0 %1346, %v209
    %v1348 = vpop.permute.xlu0 %1347
    %1351 = vset.pattern.permute.xlu0 0
    %1352 = vperm.xlu0 %1351, %v210
    %v1353 = vpop.permute.xlu0 %1352
    %1356 = vset.pattern.permute.xlu0 0
    %1357 = vperm.xlu0 %1356, %v211
    %v1358 = vpop.permute.xlu0 %1357
    %1361 = vset.pattern.permute.xlu0 0
    %1362 = vperm.xlu0 %1361, %v212
    %v1363 = vpop.permute.xlu0 %1362
    %1366 = vset.pattern.permute.xlu0 0
    %1367 = vperm.xlu0 %1366, %v213
    %v1368 = vpop.permute.xlu0 %1367
    %1371 = vset.pattern.permute.xlu0 0
    %1372 = vperm.xlu0 %1371, %v214
    %v1373 = vpop.permute.xlu0 %1372
    %1376 = vset.pattern.permute.xlu0 0
    %1377 = vperm.xlu0 %1376, %v215
    %v1378 = vpop.permute.xlu0 %1377
    %1381 = vset.pattern.permute.xlu0 0
    %1382 = vperm.xlu0 %1381, %v216
    %v1383 = vpop.permute.xlu0 %1382
    %1386 = vset.pattern.permute.xlu0 0
    %1387 = vperm.xlu0 %1386, %v217
    %v1388 = vpop.permute.xlu0 %1387
    %1391 = vset.pattern.permute.xlu0 0
    %1392 = vperm.xlu0 %1391, %v218
    %v1393 = vpop.permute.xlu0 %1392
    %1396 = vset.pattern.permute.xlu0 0
    %1397 = vperm.xlu0 %1396, %v219
    %v1398 = vpop.permute.xlu0 %1397
    %1401 = vset.pattern.permute.xlu0 0
    %1402 = vperm.xlu0 %1401, %v220
    %v1403 = vpop.permute.xlu0 %1402
    %1406 = vset.pattern.permute.xlu0 0
    %1407 = vperm.xlu0 %1406, %v221
    %v1408 = vpop.permute.xlu0 %1407
    %1411 = vset.pattern.permute.xlu0 0
    %1412 = vperm.xlu0 %1411, %v222
    %v1413 = vpop.permute.xlu0 %1412
    %1416 = vset.pattern.permute.xlu0 0
    %1417 = vperm.xlu0 %1416, %v223
    %v1418 = vpop.permute.xlu0 %1417
    %1421 = vset.pattern.permute.xlu0 0
    %1422 = vperm.xlu0 %1421, %v224
    %v1423 = vpop.permute.xlu0 %1422
    %1426 = vset.pattern.permute.xlu0 0
    %1427 = vperm.xlu0 %1426, %v225
    %v1428 = vpop.permute.xlu0 %1427
    %1431 = vset.pattern.permute.xlu0 0
    %1432 = vperm.xlu0 %1431, %v226
    %v1433 = vpop.permute.xlu0 %1432
    %1436 = vset.pattern.permute.xlu0 0
    %1437 = vperm.xlu0 %1436, %v227
    %v1438 = vpop.permute.xlu0 %1437
    %1441 = vset.pattern.permute.xlu0 0
    %1442 = vperm.xlu0 %1441, %v228
    %v1443 = vpop.permute.xlu0 %1442
    %1446 = vset.pattern.permute.xlu0 0
    %1447 = vperm.xlu0 %1446, %v229
    %v1448 = vpop.permute.xlu0 %1447
    %1451 = vset.pattern.permute.xlu0 0
    %1452 = vperm.xlu0 %1451, %v230
    %v1453 = vpop.permute.xlu0 %1452
    %1456 = vset.pattern.permute.xlu0 0
    %1457 = vperm.xlu0 %1456, %v231
    %v1458 = vpop.permute.xlu0 %1457
    %1461 = vset.pattern.permute.xlu0 0
    %1462 = vperm.xlu0 %1461, %v232
    %v1463 = vpop.permute.xlu0 %1462
    %1466 = vset.pattern.permute.xlu0 0
    %1467 = vperm.xlu0 %1466, %v233
    %v1468 = vpop.permute.xlu0 %1467
    %1471 = vset.pattern.permute.xlu0 0
    %1472 = vperm.xlu0 %1471, %v234
    %v1473 = vpop.permute.xlu0 %1472
    %1476 = vset.pattern.permute.xlu0 0
    %1477 = vperm.xlu0 %1476, %v235
    %v1478 = vpop.permute.xlu0 %1477
    %1481 = vset.pattern.permute.xlu0 0
    %1482 = vperm.xlu0 %1481, %v236
    %v1483 = vpop.permute.xlu0 %1482
    %1486 = vset.pattern.permute.xlu0 0
    %1487 = vperm.xlu0 %1486, %v237
    %v1488 = vpop.permute.xlu0 %1487
    %1491 = vset.pattern.permute.xlu0 0
    %1492 = vperm.xlu0 %1491, %v238
    %v1493 = vpop.permute.xlu0 %1492
    %1496 = vset.pattern.permute.xlu0 0
    %1497 = vperm.xlu0 %1496, %v239
    %v1498 = vpop.permute.xlu0 %1497
    %1501 = vset.pattern.permute.xlu0 0
    %1502 = vperm.xlu0 %1501, %v240
    %v1503 = vpop.permute.xlu0 %1502
    %1506 = vset.pattern.permute.xlu0 0
    %1507 = vperm.xlu0 %1506, %v241
    %v1508 = vpop.permute.xlu0 %1507
    %1511 = vset.pattern.permute.xlu0 0
    %1512 = vperm.xlu0 %1511, %v242
    %v1513 = vpop.permute.xlu0 %1512
    %1516 = vset.pattern.permute.xlu0 0
    %1517 = vperm.xlu0 %1516, %v243
    %v1518 = vpop.permute.xlu0 %1517
    %1521 = vset.pattern.permute.xlu0 0
    %1522 = vperm.xlu0 %1521, %v244
    %v1523 = vpop.permute.xlu0 %1522
    %1526 = vset.pattern.permute.xlu0 0
    %1527 = vperm.xlu0 %1526, %v245
    %v1528 = vpop.permute.xlu0 %1527
    %1531 = vset.pattern.permute.xlu0 0
    %1532 = vperm.xlu0 %1531, %v246
    %v1533 = vpop.permute.xlu0 %1532
    %1536 = vset.pattern.permute.xlu0 0
    %1537 = vperm.xlu0 %1536, %v247
    %v1538 = vpop.permute.xlu0 %1537
    %1541 = vset.pattern.permute.xlu0 0
    %1542 = vperm.xlu0 %1541, %v248
    %v1543 = vpop.permute.xlu0 %1542
    %1546 = vset.pattern.permute.xlu0 0
    %1547 = vperm.xlu0 %1546, %v249
    %v1548 = vpop.permute.xlu0 %1547
    %1551 = vset.pattern.permute.xlu0 0
    %1552 = vperm.xlu0 %1551, %v250
    %v1553 = vpop.permute.xlu0 %1552
    %1556 = vset.pattern.permute.xlu0 0
    %1557 = vperm.xlu0 %1556, %v251
    %v1558 = vpop.permute.xlu0 %1557
    %1561 = vset.pattern.permute.xlu0 0
    %1562 = vperm.xlu0 %1561, %v252
    %v1563 = vpop.permute.xlu0 %1562
    %1566 = vset.pattern.permute.xlu0 0
    %1567 = vperm.xlu0 %1566, %v253
    %v1568 = vpop.permute.xlu0 %1567
    %1571 = vset.pattern.permute.xlu0 0
    %1572 = vperm.xlu0 %1571, %v254
    %v1573 = vpop.permute.xlu0 %1572
    %1576 = vset.pattern.permute.xlu0 0
    %1577 = vperm.xlu0 %1576, %v255
    %v1578 = vpop.permute.xlu0 %1577
    %1581 = vset.pattern.permute.xlu0 0
    %1582 = vperm.xlu0 %1581, %v256
    %v1583 = vpop.permute.xlu0 %1582
    %1586 = vset.pattern.permute.xlu0 0
    %1587 = vperm.xlu0 %1586, %v257
    %v1588 = vpop.permute.xlu0 %1587
    %1591 = vset.pattern.permute.xlu0 0
    %1592 = vperm.xlu0 %1591, %v258
    %v1593 = vpop.permute.xlu0 %1592
    %1596 = vset.pattern.permute.xlu0 0
    %1597 = vperm.xlu0 %1596, %v259
    %v1598 = vpop.permute.xlu0 %1597
    %1601 = vset.pattern.permute.xlu0 0
    %1602 = vperm.xlu0 %1601, %v260
    %v1603 = vpop.permute.xlu0 %1602
    %1606 = vset.pattern.permute.xlu0 0
    %1607 = vperm.xlu0 %1606, %v261
    %v1608 = vpop.permute.xlu0 %1607
    %1611 = vset.pattern.permute.xlu0 0
    %1612 = vperm.xlu0 %1611, %v262
    %v1613 = vpop.permute.xlu0 %1612
    %1616 = vset.pattern.permute.xlu0 0
    %1617 = vperm.xlu0 %1616, %v263
    %v1618 = vpop.permute.xlu0 %1617
    %1621 = vset.pattern.permute.xlu0 0
    %1622 = vperm.xlu0 %1621, %v264
    %v1623 = vpop.permute.xlu0 %1622
    %1626 = vset.pattern.permute.xlu0 0
    %1627 = vperm.xlu0 %1626, %v265
    %v1628 = vpop.permute.xlu0 %1627
    %1631 = vset.pattern.permute.xlu0 0
    %1632 = vperm.xlu0 %1631, %v266
    %v1633 = vpop.permute.xlu0 %1632
    %1636 = vset.pattern.permute.xlu0 0
    %1637 = vperm.xlu0 %1636, %v267
    %v1638 = vpop.permute.xlu0 %1637
    %1641 = vset.pattern.permute.xlu0 0
    %1642 = vperm.xlu0 %1641, %v268
    %v1643 = vpop.permute.xlu0 %1642
    %1646 = vset.pattern.permute.xlu0 0
    %1647 = vperm.xlu0 %1646, %v269
    %v1648 = vpop.permute.xlu0 %1647
    %1651 = vset.pattern.permute.xlu0 0
    %1652 = vperm.xlu0 %1651, %v270
    %v1653 = vpop.permute.xlu0 %1652
    %1656 = vset.pattern.permute.xlu0 0
    %1657 = vperm.xlu0 %1656, %v271
    %v1658 = vpop.permute.xlu0 %1657
    %1661 = vset.pattern.permute.xlu0 0
    %1662 = vperm.xlu0 %1661, %v272
    %v1663 = vpop.permute.xlu0 %1662
    %1666 = vset.pattern.permute.xlu0 0
    %1667 = vperm.xlu0 %1666, %v273
    %v1668 = vpop.permute.xlu0 %1667
    %1671 = vset.pattern.permute.xlu0 0
    %1672 = vperm.xlu0 %1671, %v274
    %v1673 = vpop.permute.xlu0 %1672
    %1676 = vset.pattern.permute.xlu0 0
    %1677 = vperm.xlu0 %1676, %v275
    %v1678 = vpop.permute.xlu0 %1677
    %1681 = vset.pattern.permute.xlu0 0
    %1682 = vperm.xlu0 %1681, %v276
    %v1683 = vpop.permute.xlu0 %1682
    %1686 = vset.pattern.permute.xlu0 0
    %1687 = vperm.xlu0 %1686, %v277
    %v1688 = vpop.permute.xlu0 %1687
    %1691 = vset.pattern.permute.xlu0 0
    %1692 = vperm.xlu0 %1691, %v278
    %v1693 = vpop.permute.xlu0 %1692
    %1696 = vset.pattern.permute.xlu0 0
    %1697 = vperm.xlu0 %1696, %v279
    %v1698 = vpop.permute.xlu0 %1697
    %1701 = vset.pattern.permute.xlu0 0
    %1702 = vperm.xlu0 %1701, %v280
    %v1703 = vpop.permute.xlu0 %1702
    %1706 = vset.pattern.permute.xlu0 0
    %1707 = vperm.xlu0 %1706, %v281
    %v1708 = vpop.permute.xlu0 %1707
    %1711 = vset.pattern.permute.xlu0 0
    %1712 = vperm.xlu0 %1711, %v282
    %v1713 = vpop.permute.xlu0 %1712
    %1716 = vset.pattern.permute.xlu0 0
    %1717 = vperm.xlu0 %1716, %v283
    %v1718 = vpop.permute.xlu0 %1717
    %1721 = vset.pattern.permute.xlu0 0
    %1722 = vperm.xlu0 %1721, %v284
    %v1723 = vpop.permute.xlu0 %1722
    %1726 = vset.pattern.permute.xlu0 0
    %1727 = vperm.xlu0 %1726, %v285
    %v1728 = vpop.permute.xlu0 %1727
    %1731 = vset.pattern.permute.xlu0 0
    %1732 = vperm.xlu0 %1731, %v286
    %v1733 = vpop.permute.xlu0 %1732
    %1736 = vset.pattern.permute.xlu0 0
    %1737 = vperm.xlu0 %1736, %v287
    %v1738 = vpop.permute.xlu0 %1737
    %1741 = vset.pattern.permute.xlu0 0
    %1742 = vperm.xlu0 %1741, %v288
    %v1743 = vpop.permute.xlu0 %1742
    %1746 = vset.pattern.permute.xlu0 0
    %1747 = vperm.xlu0 %1746, %v289
    %v1748 = vpop.permute.xlu0 %1747
    %1751 = vset.pattern.permute.xlu0 0
    %1752 = vperm.xlu0 %1751, %v290
    %v1753 = vpop.permute.xlu0 %1752
    %1756 = vset.pattern.permute.xlu0 0
    %1757 = vperm.xlu0 %1756, %v291
    %v1758 = vpop.permute.xlu0 %1757
    %1761 = vset.pattern.permute.xlu0 0
    %1762 = vperm.xlu0 %1761, %v292
    %v1763 = vpop.permute.xlu0 %1762
    %1766 = vset.pattern.permute.xlu0 0
    %1767 = vperm.xlu0 %1766, %v293
    %v1768 = vpop.permute.xlu0 %1767
    %1771 = vset.pattern.permute.xlu0 0
    %1772 = vperm.xlu0 %1771, %v294
    %v1773 = vpop.permute.xlu0 %1772
    %1776 = vset.pattern.permute.xlu0 0
    %1777 = vperm.xlu0 %1776, %v295
    %v1778 = vpop.permute.xlu0 %1777
    %1781 = vset.pattern.permute.xlu0 0
    %1782 = vperm.xlu0 %1781, %v296
    %v1783 = vpop.permute.xlu0 %1782
    %1786 = vset.pattern.permute.xlu0 0
    %1787 = vperm.xlu0 %1786, %v297
    %v1788 = vpop.permute.xlu0 %1787
    %1791 = vset.pattern.permute.xlu0 0
    %1792 = vperm.xlu0 %1791, %v298
    %v1793 = vpop.permute.xlu0 %1792
    %1796 = vset.pattern.permute.xlu0 0
    %1797 = vperm.xlu0 %1796, %v299
    %v1798 = vpop.permute.xlu0 %1797
    %1801 = vset.pattern.permute.xlu0 0
    %1802 = vperm.xlu0 %1801, %v300
    %v1803 = vpop.permute.xlu0 %1802
    %1806 = vset.pattern.permute.xlu0 0
    %1807 = vperm.xlu0 %1806, %v301
    %v1808 = vpop.permute.xlu0 %1807
    %1811 = vset.pattern.permute.xlu0 0
    %1812 = vperm.xlu0 %1811, %v302
    %v1813 = vpop.permute.xlu0 %1812
    %1816 = vset.pattern.permute.xlu0 0
    %1817 = vperm.xlu0 %1816, %v303
    %v1818 = vpop.permute.xlu0 %1817
    %1821 = vset.pattern.permute.xlu0 0
    %1822 = vperm.xlu0 %1821, %v304
    %v1823 = vpop.permute.xlu0 %1822
    %1826 = vset.pattern.permute.xlu0 0
    %1827 = vperm.xlu0 %1826, %v305
    %v1828 = vpop.permute.xlu0 %1827
    %1831 = vset.pattern.permute.xlu0 0
    %1832 = vperm.xlu0 %1831, %v306
    %v1833 = vpop.permute.xlu0 %1832
    %1836 = vset.pattern.permute.xlu0 0
    %1837 = vperm.xlu0 %1836, %v307
    %v1838 = vpop.permute.xlu0 %1837
    %1841 = vset.pattern.permute.xlu0 0
    %1842 = vperm.xlu0 %1841, %v308
    %v1843 = vpop.permute.xlu0 %1842
    %1846 = vset.pattern.permute.xlu0 0
    %1847 = vperm.xlu0 %1846, %v309
    %v1848 = vpop.permute.xlu0 %1847
    %1851 = vset.pattern.permute.xlu0 0
    %1852 = vperm.xlu0 %1851, %v310
    %v1853 = vpop.permute.xlu0 %1852
    %1856 = vset.pattern.permute.xlu0 0
    %1857 = vperm.xlu0 %1856, %v311
    %v1858 = vpop.permute.xlu0 %1857
    %1861 = vset.pattern.permute.xlu0 0
    %1862 = vperm.xlu0 %1861, %v312
    %v1863 = vpop.permute.xlu0 %1862
    %1866 = vset.pattern.permute.xlu0 0
    %1867 = vperm.xlu0 %1866, %v313
    %v1868 = vpop.permute.xlu0 %1867
    %1871 = vset.pattern.permute.xlu0 0
    %1872 = vperm.xlu0 %1871, %v314
    %v1873 = vpop.permute.xlu0 %1872
    %1876 = vset.pattern.permute.xlu0 0
    %1877 = vperm.xlu0 %1876, %v315
    %v1878 = vpop.permute.xlu0 %1877
    %1881 = vset.pattern.permute.xlu0 0
    %1882 = vperm.xlu0 %1881, %v316
    %v1883 = vpop.permute.xlu0 %1882
    %1886 = vset.pattern.permute.xlu0 0
    %1887 = vperm.xlu0 %1886, %v317
    %v1888 = vpop.permute.xlu0 %1887
    %1891 = vset.pattern.permute.xlu0 0
    %1892 = vperm.xlu0 %1891, %v318
    %v1893 = vpop.permute.xlu0 %1892
    %1896 = vset.pattern.permute.xlu0 0
    %1897 = vperm.xlu0 %1896, %v319
    %v1898 = vpop.permute.xlu0 %1897
    %1901 = vset.pattern.permute.xlu0 0
    %1902 = vperm.xlu0 %1901, %v320
    %v1903 = vpop.permute.xlu0 %1902
    %1906 = vset.pattern.permute.xlu0 0
    %1907 = vperm.xlu0 %1906, %v321
    %v1908 = vpop.permute.xlu0 %1907
    %1911 = vset.pattern.permute.xlu0 0
    %1912 = vperm.xlu0 %1911, %v322
    %v1913 = vpop.permute.xlu0 %1912
    %1916 = vset.pattern.permute.xlu0 0
    %1917 = vperm.xlu0 %1916, %v323
    %v1918 = vpop.permute.xlu0 %1917
    %1921 = vset.pattern.permute.xlu0 0
    %1922 = vperm.xlu0 %1921, %v324
    %v1923 = vpop.permute.xlu0 %1922
    %1926 = vset.pattern.permute.xlu0 0
    %1927 = vperm.xlu0 %1926, %v325
    %v1928 = vpop.permute.xlu0 %1927
    %1931 = vset.pattern.permute.xlu0 0
    %1932 = vperm.xlu0 %1931, %v326
    %v1933 = vpop.permute.xlu0 %1932
    %1936 = vset.pattern.permute.xlu0 0
    %1937 = vperm.xlu0 %1936, %v327
    %v1938 = vpop.permute.xlu0 %1937
    %1941 = vset.pattern.permute.xlu0 0
    %1942 = vperm.xlu0 %1941, %v328
    %v1943 = vpop.permute.xlu0 %1942
    %1946 = vset.pattern.permute.xlu0 0
    %1947 = vperm.xlu0 %1946, %v329
    %v1948 = vpop.permute.xlu0 %1947
    %1951 = vset.pattern.permute.xlu0 0
    %1952 = vperm.xlu0 %1951, %v330
    %v1953 = vpop.permute.xlu0 %1952
    %1956 = vset.pattern.permute.xlu0 0
    %1957 = vperm.xlu0 %1956, %v331
    %v1958 = vpop.permute.xlu0 %1957
    %1961 = vset.pattern.permute.xlu0 0
    %1962 = vperm.xlu0 %1961, %v332
    %v1963 = vpop.permute.xlu0 %1962
    %1966 = vset.pattern.permute.xlu0 0
    %1967 = vperm.xlu0 %1966, %v333
    %v1968 = vpop.permute.xlu0 %1967
    %1971 = vset.pattern.permute.xlu0 0
    %1972 = vperm.xlu0 %1971, %v334
    %v1973 = vpop.permute.xlu0 %1972
    %1976 = vset.pattern.permute.xlu0 0
    %1977 = vperm.xlu0 %1976, %v335
    %v1978 = vpop.permute.xlu0 %1977
    %1981 = vset.pattern.permute.xlu0 0
    %1982 = vperm.xlu0 %1981, %v336
    %v1983 = vpop.permute.xlu0 %1982
    %1986 = vset.pattern.permute.xlu0 0
    %1987 = vperm.xlu0 %1986, %v337
    %v1988 = vpop.permute.xlu0 %1987
    %1991 = vset.pattern.permute.xlu0 0
    %1992 = vperm.xlu0 %1991, %v338
    %v1993 = vpop.permute.xlu0 %1992
    %1996 = vset.pattern.permute.xlu0 0
    %1997 = vperm.xlu0 %1996, %v339
    %v1998 = vpop.permute.xlu0 %1997
    %2001 = vset.pattern.permute.xlu0 0
    %2002 = vperm.xlu0 %2001, %v340
    %v2003 = vpop.permute.xlu0 %2002
    %2006 = vset.pattern.permute.xlu0 0
    %2007 = vperm.xlu0 %2006, %v341
    %v2008 = vpop.permute.xlu0 %2007
    %2011 = vset.pattern.permute.xlu0 0
    %2012 = vperm.xlu0 %2011, %v342
    %v2013 = vpop.permute.xlu0 %2012
    %2016 = vset.pattern.permute.xlu0 0
    %2017 = vperm.xlu0 %2016, %v343
    %v2018 = vpop.permute.xlu0 %2017
    %2021 = vset.pattern.permute.xlu0 0
    %2022 = vperm.xlu0 %2021, %v344
    %v2023 = vpop.permute.xlu0 %2022
    %2026 = vset.pattern.permute.xlu0 0
    %2027 = vperm.xlu0 %2026, %v345
    %v2028 = vpop.permute.xlu0 %2027
    %2031 = vset.pattern.permute.xlu0 0
    %2032 = vperm.xlu0 %2031, %v346
    %v2033 = vpop.permute.xlu0 %2032
    %2036 = vset.pattern.permute.xlu0 0
    %2037 = vperm.xlu0 %2036, %v347
    %v2038 = vpop.permute.xlu0 %2037
    %2041 = vset.pattern.permute.xlu0 0
    %2042 = vperm.xlu0 %2041, %v348
    %v2043 = vpop.permute.xlu0 %2042
    %2046 = vset.pattern.permute.xlu0 0
    %2047 = vperm.xlu0 %2046, %v349
    %v2048 = vpop.permute.xlu0 %2047
    %2051 = vset.pattern.permute.xlu0 0
    %2052 = vperm.xlu0 %2051, %v350
    %v2053 = vpop.permute.xlu0 %2052
    %2056 = vset.pattern.permute.xlu0 0
    %2057 = vperm.xlu0 %2056, %v351
    %v2058 = vpop.permute.xlu0 %2057
    %2061 = vset.pattern.permute.xlu0 0
    %2062 = vperm.xlu0 %2061, %v352
    %v2063 = vpop.permute.xlu0 %2062
    %2066 = vset.pattern.permute.xlu0 0
    %2067 = vperm.xlu0 %2066, %v353
    %v2068 = vpop.permute.xlu0 %2067
    %2071 = vset.pattern.permute.xlu0 0
    %2072 = vperm.xlu0 %2071, %v354
    %v2073 = vpop.permute.xlu0 %2072
    %2076 = vset.pattern.permute.xlu0 0
    %2077 = vperm.xlu0 %2076, %v355
    %v2078 = vpop.permute.xlu0 %2077
    %2081 = vset.pattern.permute.xlu0 0
    %2082 = vperm.xlu0 %2081, %v356
    %v2083 = vpop.permute.xlu0 %2082
    %2086 = vset.pattern.permute.xlu0 0
    %2087 = vperm.xlu0 %2086, %v357
    %v2088 = vpop.permute.xlu0 %2087
    %2091 = vset.pattern.permute.xlu0 0
    %2092 = vperm.xlu0 %2091, %v358
    %v2093 = vpop.permute.xlu0 %2092
    %2096 = vset.pattern.permute.xlu0 0
    %2097 = vperm.xlu0 %2096, %v359
    %v2098 = vpop.permute.xlu0 %2097
    %2101 = vset.pattern.permute.xlu0 0
    %2102 = vperm.xlu0 %2101, %v360
    %v2103 = vpop.permute.xlu0 %2102
    %2106 = vset.pattern.permute.xlu0 0
    %2107 = vperm.xlu0 %2106, %v361
    %v2108 = vpop.permute.xlu0 %2107
    %2111 = vset.pattern.permute.xlu0 0
    %2112 = vperm.xlu0 %2111, %v362
    %v2113 = vpop.permute.xlu0 %2112
    %2116 = vset.pattern.permute.xlu0 0
    %2117 = vperm.xlu0 %2116, %v363
    %v2118 = vpop.permute.xlu0 %2117
    %2121 = vset.pattern.permute.xlu0 0
    %2122 = vperm.xlu0 %2121, %v364
    %v2123 = vpop.permute.xlu0 %2122
    %2126 = vset.pattern.permute.xlu0 0
    %2127 = vperm.xlu0 %2126, %v365
    %v2128 = vpop.permute.xlu0 %2127
    %2131 = vset.pattern.permute.xlu0 0
    %2132 = vperm.xlu0 %2131, %v366
    %v2133 = vpop.permute.xlu0 %2132
    %2136 = vset.pattern.permute.xlu0 0
    %2137 = vperm.xlu0 %2136, %v367
    %v2138 = vpop.permute.xlu0 %2137
    %2141 = vset.pattern.permute.xlu0 0
    %2142 = vperm.xlu0 %2141, %v368
    %v2143 = vpop.permute.xlu0 %2142
    %2146 = vset.pattern.permute.xlu0 0
    %2147 = vperm.xlu0 %2146, %v369
    %v2148 = vpop.permute.xlu0 %2147
    %2151 = vset.pattern.permute.xlu0 0
    %2152 = vperm.xlu0 %2151, %v370
    %v2153 = vpop.permute.xlu0 %2152
    %2156 = vset.pattern.permute.xlu0 0
    %2157 = vperm.xlu0 %2156, %v371
    %v2158 = vpop.permute.xlu0 %2157
    %2161 = vset.pattern.permute.xlu0 0
    %2162 = vperm.xlu0 %2161, %v372
    %v2163 = vpop.permute.xlu0 %2162
    %2166 = vset.pattern.permute.xlu0 0
    %2167 = vperm.xlu0 %2166, %v373
    %v2168 = vpop.permute.xlu0 %2167
    %2171 = vset.pattern.permute.xlu0 0
    %2172 = vperm.xlu0 %2171, %v374
    %v2173 = vpop.permute.xlu0 %2172
    %2176 = vset.pattern.permute.xlu0 0
    %2177 = vperm.xlu0 %2176, %v375
    %v2178 = vpop.permute.xlu0 %2177
    %2181 = vset.pattern.permute.xlu0 0
    %2182 = vperm.xlu0 %2181, %v376
    %v2183 = vpop.permute.xlu0 %2182
    %2186 = vset.pattern.permute.xlu0 0
    %2187 = vperm.xlu0 %2186, %v377
    %v2188 = vpop.permute.xlu0 %2187
    %2191 = vset.pattern.permute.xlu0 0
    %2192 = vperm.xlu0 %2191, %v378
    %v2193 = vpop.permute.xlu0 %2192
    %2196 = vset.pattern.permute.xlu0 0
    %2197 = vperm.xlu0 %2196, %v379
    %v2198 = vpop.permute.xlu0 %2197
    %2201 = vset.pattern.permute.xlu0 0
    %2202 = vperm.xlu0 %2201, %v380
    %v2203 = vpop.permute.xlu0 %2202
    %2206 = vset.pattern.permute.xlu0 0
    %2207 = vperm.xlu0 %2206, %v381
    %v2208 = vpop.permute.xlu0 %2207
    %2211 = vset.pattern.permute.xlu0 0
    %2212 = vperm.xlu0 %2211, %v382
    %v2213 = vpop.permute.xlu0 %2212
    %2216 = vset.pattern.permute.xlu0 0
    %2217 = vperm.xlu0 %2216, %v383
    %v2218 = vpop.permute.xlu0 %2217
    %2221 = vset.pattern.permute.xlu0 0
    %2222 = vperm.xlu0 %2221, %v384
    %v2223 = vpop.permute.xlu0 %2222
    %2226 = vset.pattern.permute.xlu0 0
    %2227 = vperm.xlu0 %2226, %v385
    %v2228 = vpop.permute.xlu0 %2227
    %2231 = vset.pattern.permute.xlu0 0
    %2232 = vperm.xlu0 %2231, %v386
    %v2233 = vpop.permute.xlu0 %2232
    %2236 = vset.pattern.permute.xlu0 0
    %2237 = vperm.xlu0 %2236, %v387
    %v2238 = vpop.permute.xlu0 %2237
    %2241 = vset.pattern.permute.xlu0 0
    %2242 = vperm.xlu0 %2241, %v388
    %v2243 = vpop.permute.xlu0 %2242
    %2246 = vset.pattern.permute.xlu0 0
    %2247 = vperm.xlu0 %2246, %v389
    %v2248 = vpop.permute.xlu0 %2247
    %2251 = vset.pattern.permute.xlu0 0
    %2252 = vperm.xlu0 %2251, %v390
    %v2253 = vpop.permute.xlu0 %2252
    %2256 = vset.pattern.permute.xlu0 0
    %2257 = vperm.xlu0 %2256, %v391
    %v2258 = vpop.permute.xlu0 %2257
    %2261 = vset.pattern.permute.xlu0 0
    %2262 = vperm.xlu0 %2261, %v392
    %v2263 = vpop.permute.xlu0 %2262
    %2266 = vset.pattern.permute.xlu0 0
    %2267 = vperm.xlu0 %2266, %v393
    %v2268 = vpop.permute.xlu0 %2267
    %2271 = vset.pattern.permute.xlu0 0
    %2272 = vperm.xlu0 %2271, %v394
    %v2273 = vpop.permute.xlu0 %2272
    %2276 = vset.pattern.permute.xlu0 0
    %2277 = vperm.xlu0 %2276, %v395
    %v2278 = vpop.permute.xlu0 %2277
    %2281 = vset.pattern.permute.xlu0 0
    %2282 = vperm.xlu0 %2281, %v396
    %v2283 = vpop.permute.xlu0 %2282
    %2286 = vset.pattern.permute.xlu0 0
    %2287 = vperm.xlu0 %2286, %v397
    %v2288 = vpop.permute.xlu0 %2287
    %2291 = vset.pattern.permute.xlu0 0
    %2292 = vperm.xlu0 %2291, %v398
    %v2293 = vpop.permute.xlu0 %2292
    %2296 = vset.pattern.permute.xlu0 0
    %2297 = vperm.xlu0 %2296, %v399
    %v2298 = vpop.permute.xlu0 %2297
    %2301 = vset.pattern.permute.xlu0 0
    %2302 = vperm.xlu0 %2301, %v400
    %v2303 = vpop.permute.xlu0 %2302
    %2306 = vset.pattern.permute.xlu0 0
    %2307 = vperm.xlu0 %2306, %v401
    %v2308 = vpop.permute.xlu0 %2307
    %2311 = vset.pattern.permute.xlu0 0
    %2312 = vperm.xlu0 %2311, %v402
    %v2313 = vpop.permute.xlu0 %2312
    %2316 = vset.pattern.permute.xlu0 0
    %2317 = vperm.xlu0 %2316, %v403
    %v2318 = vpop.permute.xlu0 %2317
    %2321 = vset.pattern.permute.xlu0 0
    %2322 = vperm.xlu0 %2321, %v404
    %v2323 = vpop.permute.xlu0 %2322
    %2326 = vset.pattern.permute.xlu0 0
    %2327 = vperm.xlu0 %2326, %v405
    %v2328 = vpop.permute.xlu0 %2327
    %2331 = vset.pattern.permute.xlu0 0
    %2332 = vperm.xlu0 %2331, %v406
    %v2333 = vpop.permute.xlu0 %2332
    %2336 = vset.pattern.permute.xlu0 0
    %2337 = vperm.xlu0 %2336, %v407
    %v2338 = vpop.permute.xlu0 %2337
    %2341 = vset.pattern.permute.xlu0 0
    %2342 = vperm.xlu0 %2341, %v408
    %v2343 = vpop.permute.xlu0 %2342
    %2346 = vset.pattern.permute.xlu0 0
    %2347 = vperm.xlu0 %2346, %v409
    %v2348 = vpop.permute.xlu0 %2347
    %2351 = vset.pattern.permute.xlu0 0
    %2352 = vperm.xlu0 %2351, %v410
    %v2353 = vpop.permute.xlu0 %2352
    %2356 = vset.pattern.permute.xlu0 0
    %2357 = vperm.xlu0 %2356, %v411
    %v2358 = vpop.permute.xlu0 %2357
    %2361 = vset.pattern.permute.xlu0 0
    %2362 = vperm.xlu0 %2361, %v412
    %v2363 = vpop.permute.xlu0 %2362
    %2366 = vset.pattern.permute.xlu0 0
    %2367 = vperm.xlu0 %2366, %v413
    %v2368 = vpop.permute.xlu0 %2367
    %2371 = vset.pattern.permute.xlu0 0
    %2372 = vperm.xlu0 %2371, %v414
    %v2373 = vpop.permute.xlu0 %2372
    %2376 = vset.pattern.permute.xlu0 0
    %2377 = vperm.xlu0 %2376, %v415
    %v2378 = vpop.permute.xlu0 %2377
    %2381 = vset.pattern.permute.xlu0 0
    %2382 = vperm.xlu0 %2381, %v416
    %v2383 = vpop.permute.xlu0 %2382
    %2386 = vset.pattern.permute.xlu0 0
    %2387 = vperm.xlu0 %2386, %v417
    %v2388 = vpop.permute.xlu0 %2387
    %2391 = vset.pattern.permute.xlu0 0
    %2392 = vperm.xlu0 %2391, %v418
    %v2393 = vpop.permute.xlu0 %2392
    %2396 = vset.pattern.permute.xlu0 0
    %2397 = vperm.xlu0 %2396, %v419
    %v2398 = vpop.permute.xlu0 %2397
    %2401 = vset.pattern.permute.xlu0 0
    %2402 = vperm.xlu0 %2401, %v420
    %v2403 = vpop.permute.xlu0 %2402
    %2406 = vset.pattern.permute.xlu0 0
    %2407 = vperm.xlu0 %2406, %v421
    %v2408 = vpop.permute.xlu0 %2407
    %2411 = vset.pattern.permute.xlu0 0
    %2412 = vperm.xlu0 %2411, %v422
    %v2413 = vpop.permute.xlu0 %2412
    %2416 = vset.pattern.permute.xlu0 0
    %2417 = vperm.xlu0 %2416, %v423
    %v2418 = vpop.permute.xlu0 %2417
    %2421 = vset.pattern.permute.xlu0 0
    %2422 = vperm.xlu0 %2421, %v424
    %v2423 = vpop.permute.xlu0 %2422
    %2426 = vset.pattern.permute.xlu0 0
    %2427 = vperm.xlu0 %2426, %v425
    %v2428 = vpop.permute.xlu0 %2427
    %2431 = vset.pattern.permute.xlu0 0
    %2432 = vperm.xlu0 %2431, %v426
    %v2433 = vpop.permute.xlu0 %2432
    %2436 = vset.pattern.permute.xlu0 0
    %2437 = vperm.xlu0 %2436, %v427
    %v2438 = vpop.permute.xlu0 %2437
    %2441 = vset.pattern.permute.xlu0 0
    %2442 = vperm.xlu0 %2441, %v428
    %v2443 = vpop.permute.xlu0 %2442
    %2446 = vset.pattern.permute.xlu0 0
    %2447 = vperm.xlu0 %2446, %v429
    %v2448 = vpop.permute.xlu0 %2447
    %2451 = vset.pattern.permute.xlu0 0
    %2452 = vperm.xlu0 %2451, %v430
    %v2453 = vpop.permute.xlu0 %2452
    %2456 = vset.pattern.permute.xlu0 0
    %2457 = vperm.xlu0 %2456, %v431
    %v2458 = vpop.permute.xlu0 %2457
    %2461 = vset.pattern.permute.xlu0 0
    %2462 = vperm.xlu0 %2461, %v432
    %v2463 = vpop.permute.xlu0 %2462
    %2466 = vset.pattern.permute.xlu0 0
    %2467 = vperm.xlu0 %2466, %v433
    %v2468 = vpop.permute.xlu0 %2467
    %2471 = vset.pattern.permute.xlu0 0
    %2472 = vperm.xlu0 %2471, %v434
    %v2473 = vpop.permute.xlu0 %2472
    %2476 = vset.pattern.permute.xlu0 0
    %2477 = vperm.xlu0 %2476, %v435
    %v2478 = vpop.permute.xlu0 %2477
    %2481 = vset.pattern.permute.xlu0 0
    %2482 = vperm.xlu0 %2481, %v436
    %v2483 = vpop.permute.xlu0 %2482
    %2486 = vset.pattern.permute.xlu0 0
    %2487 = vperm.xlu0 %2486, %v437
    %v2488 = vpop.permute.xlu0 %2487
    %2491 = vset.pattern.permute.xlu0 0
    %2492 = vperm.xlu0 %2491, %v438
    %v2493 = vpop.permute.xlu0 %2492
    %2496 = vset.pattern.permute.xlu0 0
    %2497 = vperm.xlu0 %2496, %v439
    %v2498 = vpop.permute.xlu0 %2497
    %2501 = vset.pattern.permute.xlu0 0
    %2502 = vperm.xlu0 %2501, %v440
    %v2503 = vpop.permute.xlu0 %2502
    %2506 = vset.pattern.permute.xlu0 0
    %2507 = vperm.xlu0 %2506, %v441
    %v2508 = vpop.permute.xlu0 %2507
    %2511 = vset.pattern.permute.xlu0 0
    %2512 = vperm.xlu0 %2511, %v442
    %v2513 = vpop.permute.xlu0 %2512
    %2516 = vset.pattern.permute.xlu0 0
    %2517 = vperm.xlu0 %2516, %v443
    %v2518 = vpop.permute.xlu0 %2517
    %2521 = vset.pattern.permute.xlu0 0
    %2522 = vperm.xlu0 %2521, %v444
    %v2523 = vpop.permute.xlu0 %2522
    %2526 = vset.pattern.permute.xlu0 0
    %2527 = vperm.xlu0 %2526, %v445
    %v2528 = vpop.permute.xlu0 %2527
    %2531 = vset.pattern.permute.xlu0 0
    %2532 = vperm.xlu0 %2531, %v446
    %v2533 = vpop.permute.xlu0 %2532
    %2536 = vset.pattern.permute.xlu0 0
    %2537 = vperm.xlu0 %2536, %v447
    %v2538 = vpop.permute.xlu0 %2537
    %2541 = vset.pattern.permute.xlu0 0
    %2542 = vperm.xlu0 %2541, %v448
    %v2543 = vpop.permute.xlu0 %2542
    %2546 = vset.pattern.permute.xlu0 0
    %2547 = vperm.xlu0 %2546, %v449
    %v2548 = vpop.permute.xlu0 %2547
    %2551 = vset.pattern.permute.xlu0 0
    %2552 = vperm.xlu0 %2551, %v450
    %v2553 = vpop.permute.xlu0 %2552
    %2556 = vset.pattern.permute.xlu0 0
    %2557 = vperm.xlu0 %2556, %v451
    %v2558 = vpop.permute.xlu0 %2557
    %2561 = vset.pattern.permute.xlu0 0
    %2562 = vperm.xlu0 %2561, %v452
    %v2563 = vpop.permute.xlu0 %2562
    %2566 = vset.pattern.permute.xlu0 0
    %2567 = vperm.xlu0 %2566, %v453
    %v2568 = vpop.permute.xlu0 %2567
    %2571 = vset.pattern.permute.xlu0 0
    %2572 = vperm.xlu0 %2571, %v454
    %v2573 = vpop.permute.xlu0 %2572
    %2576 = vset.pattern.permute.xlu0 0
    %2577 = vperm.xlu0 %2576, %v455
    %v2578 = vpop.permute.xlu0 %2577
    %2581 = vset.pattern.permute.xlu0 0
    %2582 = vperm.xlu0 %2581, %v456
    %v2583 = vpop.permute.xlu0 %2582
    %2586 = vset.pattern.permute.xlu0 0
    %2587 = vperm.xlu0 %2586, %v457
    %v2588 = vpop.permute.xlu0 %2587
    %2591 = vset.pattern.permute.xlu0 0
    %2592 = vperm.xlu0 %2591, %v458
    %v2593 = vpop.permute.xlu0 %2592
    %2596 = vset.pattern.permute.xlu0 0
    %2597 = vperm.xlu0 %2596, %v459
    %v2598 = vpop.permute.xlu0 %2597
    %2601 = vset.pattern.permute.xlu0 0
    %2602 = vperm.xlu0 %2601, %v460
    %v2603 = vpop.permute.xlu0 %2602
    %2606 = vset.pattern.permute.xlu0 0
    %2607 = vperm.xlu0 %2606, %v461
    %v2608 = vpop.permute.xlu0 %2607
    %2611 = vset.pattern.permute.xlu0 0
    %2612 = vperm.xlu0 %2611, %v462
    %v2613 = vpop.permute.xlu0 %2612
    %2616 = vset.pattern.permute.xlu0 0
    %2617 = vperm.xlu0 %2616, %v463
    %v2618 = vpop.permute.xlu0 %2617
    %2621 = vset.pattern.permute.xlu0 0
    %2622 = vperm.xlu0 %2621, %v464
    %v2623 = vpop.permute.xlu0 %2622
    %2626 = vset.pattern.permute.xlu0 0
    %2627 = vperm.xlu0 %2626, %v465
    %v2628 = vpop.permute.xlu0 %2627
    %2631 = vset.pattern.permute.xlu0 0
    %2632 = vperm.xlu0 %2631, %v466
    %v2633 = vpop.permute.xlu0 %2632
    %2636 = vset.pattern.permute.xlu0 0
    %2637 = vperm.xlu0 %2636, %v467
    %v2638 = vpop.permute.xlu0 %2637
    %2641 = vset.pattern.permute.xlu0 0
    %2642 = vperm.xlu0 %2641, %v468
    %v2643 = vpop.permute.xlu0 %2642
    %2646 = vset.pattern.permute.xlu0 0
    %2647 = vperm.xlu0 %2646, %v469
    %v2648 = vpop.permute.xlu0 %2647
    %2651 = vset.pattern.permute.xlu0 0
    %2652 = vperm.xlu0 %2651, %v470
    %v2653 = vpop.permute.xlu0 %2652
    %2656 = vset.pattern.permute.xlu0 0
    %2657 = vperm.xlu0 %2656, %v471
    %v2658 = vpop.permute.xlu0 %2657
    %2661 = vset.pattern.permute.xlu0 0
    %2662 = vperm.xlu0 %2661, %v472
    %v2663 = vpop.permute.xlu0 %2662
    %2666 = vset.pattern.permute.xlu0 0
    %2667 = vperm.xlu0 %2666, %v473
    %v2668 = vpop.permute.xlu0 %2667
    %2671 = vset.pattern.permute.xlu0 0
    %2672 = vperm.xlu0 %2671, %v474
    %v2673 = vpop.permute.xlu0 %2672
    %2676 = vset.pattern.permute.xlu0 0
    %2677 = vperm.xlu0 %2676, %v475
    %v2678 = vpop.permute.xlu0 %2677
    %2681 = vset.pattern.permute.xlu0 0
    %2682 = vperm.xlu0 %2681, %v476
    %v2683 = vpop.permute.xlu0 %2682
    %2686 = vset.pattern.permute.xlu0 0
    %2687 = vperm.xlu0 %2686, %v477
    %v2688 = vpop.permute.xlu0 %2687
    %2691 = vset.pattern.permute.xlu0 0
    %2692 = vperm.xlu0 %2691, %v478
    %v2693 = vpop.permute.xlu0 %2692
    %2696 = vset.pattern.permute.xlu0 0
    %2697 = vperm.xlu0 %2696, %v479
    %v2698 = vpop.permute.xlu0 %2697
    %2701 = vset.pattern.permute.xlu0 0
    %2702 = vperm.xlu0 %2701, %v480
    %v2703 = vpop.permute.xlu0 %2702
    %2706 = vset.pattern.permute.xlu0 0
    %2707 = vperm.xlu0 %2706, %v481
    %v2708 = vpop.permute.xlu0 %2707
    %2711 = vset.pattern.permute.xlu0 0
    %2712 = vperm.xlu0 %2711, %v482
    %v2713 = vpop.permute.xlu0 %2712
    %2716 = vset.pattern.permute.xlu0 0
    %2717 = vperm.xlu0 %2716, %v483
    %v2718 = vpop.permute.xlu0 %2717
    %2721 = vset.pattern.permute.xlu0 0
    %2722 = vperm.xlu0 %2721, %v484
    %v2723 = vpop.permute.xlu0 %2722
    %2726 = vset.pattern.permute.xlu0 0
    %2727 = vperm.xlu0 %2726, %v485
    %v2728 = vpop.permute.xlu0 %2727
    %2731 = vset.pattern.permute.xlu0 0
    %2732 = vperm.xlu0 %2731, %v486
    %v2733 = vpop.permute.xlu0 %2732
    %2736 = vset.pattern.permute.xlu0 0
    %2737 = vperm.xlu0 %2736, %v487
    %v2738 = vpop.permute.xlu0 %2737
    %v2741 = vlaneseq
    %v2742 = vshrl.u32 %v2741, 7
    %v2743 = vsub.s32 0, %v2742
    %v2744 = vrot.slane %v488, %v2743
    %v2745 = vlaneseq
    %v2746 = vshrl.u32 %v2745, 7
    %v2747 = vsub.s32 4, %v2746
    %v2748 = vrot.slane %v488, %v2747
    %v2751 = vlaneseq
    %v2752 = vshrl.u32 %v2751, 7
    %v2753 = vsub.s32 0, %v2752
    %v2754 = vrot.slane %v2744, %v2753
    %v2755 = vlaneseq
    %v2756 = vshrl.u32 %v2755, 7
    %v2757 = vsub.s32 0, %v2756
    %v2758 = vrot.slane %v2748, %v2757
    %v2759 = vmul.f32 %v493, %v2754
    %v2760 = vmul.f32 %v493, %v2758
    %v2761 = vmul.f32 %v498, %v2754
    %v2762 = vmul.f32 %v498, %v2758
    %v2763 = vmul.f32 %v503, %v2754
    %v2764 = vmul.f32 %v503, %v2758
    %v2765 = vmul.f32 %v508, %v2754
    %v2766 = vmul.f32 %v508, %v2758
    %v2767 = vmul.f32 %v513, %v2754
    %v2768 = vmul.f32 %v513, %v2758
    %v2769 = vmul.f32 %v518, %v2754
    %v2770 = vmul.f32 %v518, %v2758
    %v2771 = vmul.f32 %v523, %v2754
    %v2772 = vmul.f32 %v523, %v2758
    %v2773 = vmul.f32 %v528, %v2754
    %v2774 = vmul.f32 %v528, %v2758
    %v2775 = vmul.f32 %v533, %v2754
    %v2776 = vmul.f32 %v533, %v2758
    %v2777 = vmul.f32 %v538, %v2754
    %v2778 = vmul.f32 %v538, %v2758
    %v2779 = vmul.f32 %v543, %v2754
    %v2780 = vmul.f32 %v543, %v2758
    %v2781 = vmul.f32 %v548, %v2754
    %v2782 = vmul.f32 %v548, %v2758
    %v2783 = vmul.f32 %v553, %v2754
    %v2784 = vmul.f32 %v553, %v2758
    %v2785 = vmul.f32 %v558, %v2754
    %v2786 = vmul.f32 %v558, %v2758
    %v2787 = vmul.f32 %v563, %v2754
    %v2788 = vmul.f32 %v563, %v2758
    %v2789 = vmul.f32 %v568, %v2754
    %v2790 = vmul.f32 %v568, %v2758
    %v2791 = vmul.f32 %v573, %v2754
    %v2792 = vmul.f32 %v573, %v2758
    %v2793 = vmul.f32 %v578, %v2754
    %v2794 = vmul.f32 %v578, %v2758
    %v2795 = vmul.f32 %v583, %v2754
    %v2796 = vmul.f32 %v583, %v2758
    %v2797 = vmul.f32 %v588, %v2754
    %v2798 = vmul.f32 %v588, %v2758
    %v2799 = vmul.f32 %v593, %v2754
    %v2800 = vmul.f32 %v593, %v2758
    %v2801 = vmul.f32 %v598, %v2754
    %v2802 = vmul.f32 %v598, %v2758
    %v2803 = vmul.f32 %v603, %v2754
    %v2804 = vmul.f32 %v603, %v2758
    %v2805 = vmul.f32 %v608, %v2754
    %v2806 = vmul.f32 %v608, %v2758
    %v2807 = vmul.f32 %v613, %v2754
    %v2808 = vmul.f32 %v613, %v2758
    %v2809 = vmul.f32 %v618, %v2754
    %v2810 = vmul.f32 %v618, %v2758
    %v2811 = vmul.f32 %v623, %v2754
    %v2812 = vmul.f32 %v623, %v2758
    %v2813 = vmul.f32 %v628, %v2754
    %v2814 = vmul.f32 %v628, %v2758
    %v2815 = vmul.f32 %v633, %v2754
    %v2816 = vmul.f32 %v633, %v2758
    %v2817 = vmul.f32 %v638, %v2754
    %v2818 = vmul.f32 %v638, %v2758
    %v2819 = vmul.f32 %v643, %v2754
    %v2820 = vmul.f32 %v643, %v2758
    %v2821 = vmul.f32 %v648, %v2754
    %v2822 = vmul.f32 %v648, %v2758
    %v2823 = vmul.f32 %v653, %v2754
    %v2824 = vmul.f32 %v653, %v2758
    %v2825 = vmul.f32 %v658, %v2754
    %v2826 = vmul.f32 %v658, %v2758
    %v2827 = vmul.f32 %v663, %v2754
    %v2828 = vmul.f32 %v663, %v2758
    %v2829 = vmul.f32 %v668, %v2754
    %v2830 = vmul.f32 %v668, %v2758
    %v2831 = vmul.f32 %v673, %v2754
    %v2832 = vmul.f32 %v673, %v2758
    %v2833 = vmul.f32 %v678, %v2754
    %v2834 = vmul.f32 %v678, %v2758
    %v2835 = vmul.f32 %v683, %v2754
    %v2836 = vmul.f32 %v683, %v2758
    %v2837 = vmul.f32 %v688, %v2754
    %v2838 = vmul.f32 %v688, %v2758
    %v2839 = vmul.f32 %v693, %v2754
    %v2840 = vmul.f32 %v693, %v2758
    %v2841 = vmul.f32 %v698, %v2754
    %v2842 = vmul.f32 %v698, %v2758
    %v2843 = vmul.f32 %v703, %v2754
    %v2844 = vmul.f32 %v703, %v2758
    %v2845 = vmul.f32 %v708, %v2754
    %v2846 = vmul.f32 %v708, %v2758
    %v2847 = vmul.f32 %v713, %v2754
    %v2848 = vmul.f32 %v713, %v2758
    %v2849 = vmul.f32 %v718, %v2754
    %v2850 = vmul.f32 %v718, %v2758
    %v2851 = vmul.f32 %v723, %v2754
    %v2852 = vmul.f32 %v723, %v2758
    %v2853 = vmul.f32 %v728, %v2754
    %v2854 = vmul.f32 %v728, %v2758
    %v2855 = vmul.f32 %v733, %v2754
    %v2856 = vmul.f32 %v733, %v2758
    %v2857 = vmul.f32 %v738, %v2754
    %v2858 = vmul.f32 %v738, %v2758
    %v2859 = vmul.f32 %v743, %v2754
    %v2860 = vmul.f32 %v743, %v2758
    %v2861 = vmul.f32 %v748, %v2754
    %v2862 = vmul.f32 %v748, %v2758
    %v2863 = vmul.f32 %v753, %v2754
    %v2864 = vmul.f32 %v753, %v2758
    %v2865 = vmul.f32 %v758, %v2754
    %v2866 = vmul.f32 %v758, %v2758
    %v2867 = vmul.f32 %v763, %v2754
    %v2868 = vmul.f32 %v763, %v2758
    %v2869 = vmul.f32 %v768, %v2754
    %v2870 = vmul.f32 %v768, %v2758
    %v2871 = vmul.f32 %v773, %v2754
    %v2872 = vmul.f32 %v773, %v2758
    %v2873 = vmul.f32 %v778, %v2754
    %v2874 = vmul.f32 %v778, %v2758
    %v2875 = vmul.f32 %v783, %v2754
    %v2876 = vmul.f32 %v783, %v2758
    %v2877 = vmul.f32 %v788, %v2754
    %v2878 = vmul.f32 %v788, %v2758
    %v2879 = vmul.f32 %v793, %v2754
    %v2880 = vmul.f32 %v793, %v2758
    %v2881 = vmul.f32 %v798, %v2754
    %v2882 = vmul.f32 %v798, %v2758
    %v2883 = vmul.f32 %v803, %v2754
    %v2884 = vmul.f32 %v803, %v2758
    %v2885 = vmul.f32 %v808, %v2754
    %v2886 = vmul.f32 %v808, %v2758
    %v2887 = vmul.f32 %v813, %v2754
    %v2888 = vmul.f32 %v813, %v2758
    %v2889 = vmul.f32 %v818, %v2754
    %v2890 = vmul.f32 %v818, %v2758
    %v2891 = vmul.f32 %v823, %v2754
    %v2892 = vmul.f32 %v823, %v2758
    %v2893 = vmul.f32 %v828, %v2754
    %v2894 = vmul.f32 %v828, %v2758
    %v2895 = vmul.f32 %v833, %v2754
    %v2896 = vmul.f32 %v833, %v2758
    %v2897 = vmul.f32 %v838, %v2754
    %v2898 = vmul.f32 %v838, %v2758
    %v2899 = vmul.f32 %v843, %v2754
    %v2900 = vmul.f32 %v843, %v2758
    %v2901 = vmul.f32 %v848, %v2754
    %v2902 = vmul.f32 %v848, %v2758
    %v2903 = vmul.f32 %v853, %v2754
    %v2904 = vmul.f32 %v853, %v2758
    %v2905 = vmul.f32 %v858, %v2754
    %v2906 = vmul.f32 %v858, %v2758
    %v2907 = vmul.f32 %v863, %v2754
    %v2908 = vmul.f32 %v863, %v2758
    %v2909 = vmul.f32 %v868, %v2754
    %v2910 = vmul.f32 %v868, %v2758
    %v2911 = vmul.f32 %v873, %v2754
    %v2912 = vmul.f32 %v873, %v2758
    %v2913 = vmul.f32 %v878, %v2754
    %v2914 = vmul.f32 %v878, %v2758
    %v2915 = vmul.f32 %v883, %v2754
    %v2916 = vmul.f32 %v883, %v2758
    %v2917 = vmul.f32 %v888, %v2754
    %v2918 = vmul.f32 %v888, %v2758
    %v2919 = vmul.f32 %v893, %v2754
    %v2920 = vmul.f32 %v893, %v2758
    %v2921 = vmul.f32 %v898, %v2754
    %v2922 = vmul.f32 %v898, %v2758
    %v2923 = vmul.f32 %v903, %v2754
    %v2924 = vmul.f32 %v903, %v2758
    %v2925 = vmul.f32 %v908, %v2754
    %v2926 = vmul.f32 %v908, %v2758
    %v2927 = vmul.f32 %v913, %v2754
    %v2928 = vmul.f32 %v913, %v2758
    %v2929 = vmul.f32 %v918, %v2754
    %v2930 = vmul.f32 %v918, %v2758
    %v2931 = vmul.f32 %v923, %v2754
    %v2932 = vmul.f32 %v923, %v2758
    %v2933 = vmul.f32 %v928, %v2754
    %v2934 = vmul.f32 %v928, %v2758
    %v2935 = vmul.f32 %v933, %v2754
    %v2936 = vmul.f32 %v933, %v2758
    %v2937 = vmul.f32 %v938, %v2754
    %v2938 = vmul.f32 %v938, %v2758
    %v2939 = vmul.f32 %v943, %v2754
    %v2940 = vmul.f32 %v943, %v2758
    %v2941 = vmul.f32 %v948, %v2754
    %v2942 = vmul.f32 %v948, %v2758
    %v2943 = vmul.f32 %v953, %v2754
    %v2944 = vmul.f32 %v953, %v2758
    %v2945 = vmul.f32 %v958, %v2754
    %v2946 = vmul.f32 %v958, %v2758
    %v2947 = vmul.f32 %v963, %v2754
    %v2948 = vmul.f32 %v963, %v2758
    %v2949 = vmul.f32 %v968, %v2754
    %v2950 = vmul.f32 %v968, %v2758
    %v2951 = vmul.f32 %v973, %v2754
    %v2952 = vmul.f32 %v973, %v2758
    %v2953 = vmul.f32 %v978, %v2754
    %v2954 = vmul.f32 %v978, %v2758
    %v2955 = vmul.f32 %v983, %v2754
    %v2956 = vmul.f32 %v983, %v2758
    %v2957 = vmul.f32 %v988, %v2754
    %v2958 = vmul.f32 %v988, %v2758
    %v2959 = vmul.f32 %v993, %v2754
    %v2960 = vmul.f32 %v993, %v2758
    %v2961 = vmul.f32 %v998, %v2754
    %v2962 = vmul.f32 %v998, %v2758
    %v2963 = vmul.f32 %v1003, %v2754
    %v2964 = vmul.f32 %v1003, %v2758
    %v2965 = vmul.f32 %v1008, %v2754
    %v2966 = vmul.f32 %v1008, %v2758
    %v2967 = vmul.f32 %v1013, %v2754
    %v2968 = vmul.f32 %v1013, %v2758
    %v2969 = vmul.f32 %v1018, %v2754
    %v2970 = vmul.f32 %v1018, %v2758
    %v2971 = vmul.f32 %v1023, %v2754
    %v2972 = vmul.f32 %v1023, %v2758
    %v2973 = vmul.f32 %v1028, %v2754
    %v2974 = vmul.f32 %v1028, %v2758
    %v2975 = vmul.f32 %v1033, %v2754
    %v2976 = vmul.f32 %v1033, %v2758
    %v2977 = vmul.f32 %v1038, %v2754
    %v2978 = vmul.f32 %v1038, %v2758
    %v2979 = vmul.f32 %v1043, %v2754
    %v2980 = vmul.f32 %v1043, %v2758
    %v2981 = vmul.f32 %v1048, %v2754
    %v2982 = vmul.f32 %v1048, %v2758
    %v2983 = vmul.f32 %v1053, %v2754
    %v2984 = vmul.f32 %v1053, %v2758
    %v2985 = vmul.f32 %v1058, %v2754
    %v2986 = vmul.f32 %v1058, %v2758
    %v2987 = vmul.f32 %v1063, %v2754
    %v2988 = vmul.f32 %v1063, %v2758
    %v2989 = vmul.f32 %v1068, %v2754
    %v2990 = vmul.f32 %v1068, %v2758
    %v2991 = vmul.f32 %v1073, %v2754
    %v2992 = vmul.f32 %v1073, %v2758
    %v2993 = vmul.f32 %v1078, %v2754
    %v2994 = vmul.f32 %v1078, %v2758
    %v2995 = vmul.f32 %v1083, %v2754
    %v2996 = vmul.f32 %v1083, %v2758
    %v2997 = vmul.f32 %v1088, %v2754
    %v2998 = vmul.f32 %v1088, %v2758
    %v2999 = vmul.f32 %v1093, %v2754
    %v3000 = vmul.f32 %v1093, %v2758
    %v3001 = vmul.f32 %v1098, %v2754
    %v3002 = vmul.f32 %v1098, %v2758
    %v3003 = vmul.f32 %v1103, %v2754
    %v3004 = vmul.f32 %v1103, %v2758
    %v3005 = vmul.f32 %v1108, %v2754
    %v3006 = vmul.f32 %v1108, %v2758
    %v3007 = vmul.f32 %v1113, %v2754
    %v3008 = vmul.f32 %v1113, %v2758
    %v3009 = vmul.f32 %v1118, %v2754
    %v3010 = vmul.f32 %v1118, %v2758
    %v3011 = vmul.f32 %v1123, %v2754
    %v3012 = vmul.f32 %v1123, %v2758
    %v3013 = vmul.f32 %v1128, %v2754
    %v3014 = vmul.f32 %v1128, %v2758
    %v3015 = vmul.f32 %v1133, %v2754
    %v3016 = vmul.f32 %v1133, %v2758
    %v3017 = vmul.f32 %v1138, %v2754
    %v3018 = vmul.f32 %v1138, %v2758
    %v3019 = vmul.f32 %v1143, %v2754
    %v3020 = vmul.f32 %v1143, %v2758
    %v3021 = vmul.f32 %v1148, %v2754
    %v3022 = vmul.f32 %v1148, %v2758
    %v3023 = vmul.f32 %v1153, %v2754
    %v3024 = vmul.f32 %v1153, %v2758
    %v3025 = vmul.f32 %v1158, %v2754
    %v3026 = vmul.f32 %v1158, %v2758
    %v3027 = vmul.f32 %v1163, %v2754
    %v3028 = vmul.f32 %v1163, %v2758
    %v3029 = vmul.f32 %v1168, %v2754
    %v3030 = vmul.f32 %v1168, %v2758
    %v3031 = vmul.f32 %v1173, %v2754
    %v3032 = vmul.f32 %v1173, %v2758
    %v3033 = vmul.f32 %v1178, %v2754
    %v3034 = vmul.f32 %v1178, %v2758
    %v3035 = vmul.f32 %v1183, %v2754
    %v3036 = vmul.f32 %v1183, %v2758
    %v3037 = vmul.f32 %v1188, %v2754
    %v3038 = vmul.f32 %v1188, %v2758
    %v3039 = vmul.f32 %v1193, %v2754
    %v3040 = vmul.f32 %v1193, %v2758
    %v3041 = vmul.f32 %v1198, %v2754
    %v3042 = vmul.f32 %v1198, %v2758
    %v3043 = vmul.f32 %v1203, %v2754
    %v3044 = vmul.f32 %v1203, %v2758
    %v3045 = vmul.f32 %v1208, %v2754
    %v3046 = vmul.f32 %v1208, %v2758
    %v3047 = vmul.f32 %v1213, %v2754
    %v3048 = vmul.f32 %v1213, %v2758
    %v3049 = vmul.f32 %v1218, %v2754
    %v3050 = vmul.f32 %v1218, %v2758
    %v3051 = vmul.f32 %v1223, %v2754
    %v3052 = vmul.f32 %v1223, %v2758
    %v3053 = vmul.f32 %v1228, %v2754
    %v3054 = vmul.f32 %v1228, %v2758
    %v3055 = vmul.f32 %v1233, %v2754
    %v3056 = vmul.f32 %v1233, %v2758
    %v3057 = vmul.f32 %v1238, %v2754
    %v3058 = vmul.f32 %v1238, %v2758
    %v3059 = vmul.f32 %v1243, %v2754
    %v3060 = vmul.f32 %v1243, %v2758
    %v3061 = vmul.f32 %v1248, %v2754
    %v3062 = vmul.f32 %v1248, %v2758
    %v3063 = vmul.f32 %v1253, %v2754
    %v3064 = vmul.f32 %v1253, %v2758
    %v3065 = vmul.f32 %v1258, %v2754
    %v3066 = vmul.f32 %v1258, %v2758
    %v3067 = vmul.f32 %v1263, %v2754
    %v3068 = vmul.f32 %v1263, %v2758
    %v3069 = vmul.f32 %v1268, %v2754
    %v3070 = vmul.f32 %v1268, %v2758
    %v3071 = vmul.f32 %v1273, %v2754
    %v3072 = vmul.f32 %v1273, %v2758
    %v3073 = vmul.f32 %v1278, %v2754
    %v3074 = vmul.f32 %v1278, %v2758
    %v3075 = vmul.f32 %v1283, %v2754
    %v3076 = vmul.f32 %v1283, %v2758
    %v3077 = vmul.f32 %v1288, %v2754
    %v3078 = vmul.f32 %v1288, %v2758
    %v3079 = vmul.f32 %v1293, %v2754
    %v3080 = vmul.f32 %v1293, %v2758
    %v3081 = vmul.f32 %v1298, %v2754
    %v3082 = vmul.f32 %v1298, %v2758
    %v3083 = vmul.f32 %v1303, %v2754
    %v3084 = vmul.f32 %v1303, %v2758
    %v3085 = vmul.f32 %v1308, %v2754
    %v3086 = vmul.f32 %v1308, %v2758
    %v3087 = vmul.f32 %v1313, %v2754
    %v3088 = vmul.f32 %v1313, %v2758
    %v3089 = vmul.f32 %v1318, %v2754
    %v3090 = vmul.f32 %v1318, %v2758
    %v3091 = vmul.f32 %v1323, %v2754
    %v3092 = vmul.f32 %v1323, %v2758
    %v3093 = vmul.f32 %v1328, %v2754
    %v3094 = vmul.f32 %v1328, %v2758
    %v3095 = vmul.f32 %v1333, %v2754
    %v3096 = vmul.f32 %v1333, %v2758
    %v3097 = vmul.f32 %v1338, %v2754
    %v3098 = vmul.f32 %v1338, %v2758
    %v3099 = vmul.f32 %v1343, %v2754
    %v3100 = vmul.f32 %v1343, %v2758
    %v3101 = vmul.f32 %v1348, %v2754
    %v3102 = vmul.f32 %v1348, %v2758
    %v3103 = vmul.f32 %v1353, %v2754
    %v3104 = vmul.f32 %v1353, %v2758
    %v3105 = vmul.f32 %v1358, %v2754
    %v3106 = vmul.f32 %v1358, %v2758
    %v3107 = vmul.f32 %v1363, %v2754
    %v3108 = vmul.f32 %v1363, %v2758
    %v3109 = vmul.f32 %v1368, %v2754
    %v3110 = vmul.f32 %v1368, %v2758
    %v3111 = vmul.f32 %v1373, %v2754
    %v3112 = vmul.f32 %v1373, %v2758
    %v3113 = vmul.f32 %v1378, %v2754
    %v3114 = vmul.f32 %v1378, %v2758
    %v3115 = vmul.f32 %v1383, %v2754
    %v3116 = vmul.f32 %v1383, %v2758
    %v3117 = vmul.f32 %v1388, %v2754
    %v3118 = vmul.f32 %v1388, %v2758
    %v3119 = vmul.f32 %v1393, %v2754
    %v3120 = vmul.f32 %v1393, %v2758
    %v3121 = vmul.f32 %v1398, %v2754
    %v3122 = vmul.f32 %v1398, %v2758
    %v3123 = vmul.f32 %v1403, %v2754
    %v3124 = vmul.f32 %v1403, %v2758
    %v3125 = vmul.f32 %v1408, %v2754
    %v3126 = vmul.f32 %v1408, %v2758
    %v3127 = vmul.f32 %v1413, %v2754
    %v3128 = vmul.f32 %v1413, %v2758
    %v3129 = vmul.f32 %v1418, %v2754
    %v3130 = vmul.f32 %v1418, %v2758
    %v3131 = vmul.f32 %v1423, %v2754
    %v3132 = vmul.f32 %v1423, %v2758
    %v3133 = vmul.f32 %v1428, %v2754
    %v3134 = vmul.f32 %v1428, %v2758
    %v3135 = vmul.f32 %v1433, %v2754
    %v3136 = vmul.f32 %v1433, %v2758
    %v3137 = vmul.f32 %v1438, %v2754
    %v3138 = vmul.f32 %v1438, %v2758
    %v3139 = vmul.f32 %v1443, %v2754
    %v3140 = vmul.f32 %v1443, %v2758
    %v3141 = vmul.f32 %v1448, %v2754
    %v3142 = vmul.f32 %v1448, %v2758
    %v3143 = vmul.f32 %v1453, %v2754
    %v3144 = vmul.f32 %v1453, %v2758
    %v3145 = vmul.f32 %v1458, %v2754
    %v3146 = vmul.f32 %v1458, %v2758
    %v3147 = vmul.f32 %v1463, %v2754
    %v3148 = vmul.f32 %v1463, %v2758
    %v3149 = vmul.f32 %v1468, %v2754
    %v3150 = vmul.f32 %v1468, %v2758
    %v3151 = vmul.f32 %v1473, %v2754
    %v3152 = vmul.f32 %v1473, %v2758
    %v3153 = vmul.f32 %v1478, %v2754
    %v3154 = vmul.f32 %v1478, %v2758
    %v3155 = vmul.f32 %v1483, %v2754
    %v3156 = vmul.f32 %v1483, %v2758
    %v3157 = vmul.f32 %v1488, %v2754
    %v3158 = vmul.f32 %v1488, %v2758
    %v3159 = vmul.f32 %v1493, %v2754
    %v3160 = vmul.f32 %v1493, %v2758
    %v3161 = vmul.f32 %v1498, %v2754
    %v3162 = vmul.f32 %v1498, %v2758
    %v3163 = vmul.f32 %v1503, %v2754
    %v3164 = vmul.f32 %v1503, %v2758
    %v3165 = vmul.f32 %v1508, %v2754
    %v3166 = vmul.f32 %v1508, %v2758
    %v3167 = vmul.f32 %v1513, %v2754
    %v3168 = vmul.f32 %v1513, %v2758
    %v3169 = vmul.f32 %v1518, %v2754
    %v3170 = vmul.f32 %v1518, %v2758
    %v3171 = vmul.f32 %v1523, %v2754
    %v3172 = vmul.f32 %v1523, %v2758
    %v3173 = vmul.f32 %v1528, %v2754
    %v3174 = vmul.f32 %v1528, %v2758
    %v3175 = vmul.f32 %v1533, %v2754
    %v3176 = vmul.f32 %v1533, %v2758
    %v3177 = vmul.f32 %v1538, %v2754
    %v3178 = vmul.f32 %v1538, %v2758
    %v3179 = vmul.f32 %v1543, %v2754
    %v3180 = vmul.f32 %v1543, %v2758
    %v3181 = vmul.f32 %v1548, %v2754
    %v3182 = vmul.f32 %v1548, %v2758
    %v3183 = vmul.f32 %v1553, %v2754
    %v3184 = vmul.f32 %v1553, %v2758
    %v3185 = vmul.f32 %v1558, %v2754
    %v3186 = vmul.f32 %v1558, %v2758
    %v3187 = vmul.f32 %v1563, %v2754
    %v3188 = vmul.f32 %v1563, %v2758
    %v3189 = vmul.f32 %v1568, %v2754
    %v3190 = vmul.f32 %v1568, %v2758
    %v3191 = vmul.f32 %v1573, %v2754
    %v3192 = vmul.f32 %v1573, %v2758
    %v3193 = vmul.f32 %v1578, %v2754
    %v3194 = vmul.f32 %v1578, %v2758
    %v3195 = vmul.f32 %v1583, %v2754
    %v3196 = vmul.f32 %v1583, %v2758
    %v3197 = vmul.f32 %v1588, %v2754
    %v3198 = vmul.f32 %v1588, %v2758
    %v3199 = vmul.f32 %v1593, %v2754
    %v3200 = vmul.f32 %v1593, %v2758
    %v3201 = vmul.f32 %v1598, %v2754
    %v3202 = vmul.f32 %v1598, %v2758
    %v3203 = vmul.f32 %v1603, %v2754
    %v3204 = vmul.f32 %v1603, %v2758
    %v3205 = vmul.f32 %v1608, %v2754
    %v3206 = vmul.f32 %v1608, %v2758
    %v3207 = vmul.f32 %v1613, %v2754
    %v3208 = vmul.f32 %v1613, %v2758
    %v3209 = vmul.f32 %v1618, %v2754
    %v3210 = vmul.f32 %v1618, %v2758
    %v3211 = vmul.f32 %v1623, %v2754
    %v3212 = vmul.f32 %v1623, %v2758
    %v3213 = vmul.f32 %v1628, %v2754
    %v3214 = vmul.f32 %v1628, %v2758
    %v3215 = vmul.f32 %v1633, %v2754
    %v3216 = vmul.f32 %v1633, %v2758
    %v3217 = vmul.f32 %v1638, %v2754
    %v3218 = vmul.f32 %v1638, %v2758
    %v3219 = vmul.f32 %v1643, %v2754
    %v3220 = vmul.f32 %v1643, %v2758
    %v3221 = vmul.f32 %v1648, %v2754
    %v3222 = vmul.f32 %v1648, %v2758
    %v3223 = vmul.f32 %v1653, %v2754
    %v3224 = vmul.f32 %v1653, %v2758
    %v3225 = vmul.f32 %v1658, %v2754
    %v3226 = vmul.f32 %v1658, %v2758
    %v3227 = vmul.f32 %v1663, %v2754
    %v3228 = vmul.f32 %v1663, %v2758
    %v3229 = vmul.f32 %v1668, %v2754
    %v3230 = vmul.f32 %v1668, %v2758
    %v3231 = vmul.f32 %v1673, %v2754
    %v3232 = vmul.f32 %v1673, %v2758
    %v3233 = vmul.f32 %v1678, %v2754
    %v3234 = vmul.f32 %v1678, %v2758
    %v3235 = vmul.f32 %v1683, %v2754
    %v3236 = vmul.f32 %v1683, %v2758
    %v3237 = vmul.f32 %v1688, %v2754
    %v3238 = vmul.f32 %v1688, %v2758
    %v3239 = vmul.f32 %v1693, %v2754
    %v3240 = vmul.f32 %v1693, %v2758
    %v3241 = vmul.f32 %v1698, %v2754
    %v3242 = vmul.f32 %v1698, %v2758
    %v3243 = vmul.f32 %v1703, %v2754
    %v3244 = vmul.f32 %v1703, %v2758
    %v3245 = vmul.f32 %v1708, %v2754
    %v3246 = vmul.f32 %v1708, %v2758
    %v3247 = vmul.f32 %v1713, %v2754
    %v3248 = vmul.f32 %v1713, %v2758
    %v3249 = vmul.f32 %v1718, %v2754
    %v3250 = vmul.f32 %v1718, %v2758
    %v3251 = vmul.f32 %v1723, %v2754
    %v3252 = vmul.f32 %v1723, %v2758
    %v3253 = vmul.f32 %v1728, %v2754
    %v3254 = vmul.f32 %v1728, %v2758
    %v3255 = vmul.f32 %v1733, %v2754
    %v3256 = vmul.f32 %v1733, %v2758
    %v3257 = vmul.f32 %v1738, %v2754
    %v3258 = vmul.f32 %v1738, %v2758
    %v3259 = vmul.f32 %v1743, %v2754
    %v3260 = vmul.f32 %v1743, %v2758
    %v3261 = vmul.f32 %v1748, %v2754
    %v3262 = vmul.f32 %v1748, %v2758
    %v3263 = vmul.f32 %v1753, %v2754
    %v3264 = vmul.f32 %v1753, %v2758
    %v3265 = vmul.f32 %v1758, %v2754
    %v3266 = vmul.f32 %v1758, %v2758
    %v3267 = vmul.f32 %v1763, %v2754
    %v3268 = vmul.f32 %v1763, %v2758
    %v3269 = vmul.f32 %v1768, %v2754
    %v3270 = vmul.f32 %v1768, %v2758
    %v3271 = vmul.f32 %v1773, %v2754
    %v3272 = vmul.f32 %v1773, %v2758
    %v3273 = vmul.f32 %v1778, %v2754
    %v3274 = vmul.f32 %v1778, %v2758
    %v3275 = vmul.f32 %v1783, %v2754
    %v3276 = vmul.f32 %v1783, %v2758
    %v3277 = vmul.f32 %v1788, %v2754
    %v3278 = vmul.f32 %v1788, %v2758
    %v3279 = vmul.f32 %v1793, %v2754
    %v3280 = vmul.f32 %v1793, %v2758
    %v3281 = vmul.f32 %v1798, %v2754
    %v3282 = vmul.f32 %v1798, %v2758
    %v3283 = vmul.f32 %v1803, %v2754
    %v3284 = vmul.f32 %v1803, %v2758
    %v3285 = vmul.f32 %v1808, %v2754
    %v3286 = vmul.f32 %v1808, %v2758
    %v3287 = vmul.f32 %v1813, %v2754
    %v3288 = vmul.f32 %v1813, %v2758
    %v3289 = vmul.f32 %v1818, %v2754
    %v3290 = vmul.f32 %v1818, %v2758
    %v3291 = vmul.f32 %v1823, %v2754
    %v3292 = vmul.f32 %v1823, %v2758
    %v3293 = vmul.f32 %v1828, %v2754
    %v3294 = vmul.f32 %v1828, %v2758
    %v3295 = vmul.f32 %v1833, %v2754
    %v3296 = vmul.f32 %v1833, %v2758
    %v3297 = vmul.f32 %v1838, %v2754
    %v3298 = vmul.f32 %v1838, %v2758
    %v3299 = vmul.f32 %v1843, %v2754
    %v3300 = vmul.f32 %v1843, %v2758
    %v3301 = vmul.f32 %v1848, %v2754
    %v3302 = vmul.f32 %v1848, %v2758
    %v3303 = vmul.f32 %v1853, %v2754
    %v3304 = vmul.f32 %v1853, %v2758
    %v3305 = vmul.f32 %v1858, %v2754
    %v3306 = vmul.f32 %v1858, %v2758
    %v3307 = vmul.f32 %v1863, %v2754
    %v3308 = vmul.f32 %v1863, %v2758
    %v3309 = vmul.f32 %v1868, %v2754
    %v3310 = vmul.f32 %v1868, %v2758
    %v3311 = vmul.f32 %v1873, %v2754
    %v3312 = vmul.f32 %v1873, %v2758
    %v3313 = vmul.f32 %v1878, %v2754
    %v3314 = vmul.f32 %v1878, %v2758
    %v3315 = vmul.f32 %v1883, %v2754
    %v3316 = vmul.f32 %v1883, %v2758
    %v3317 = vmul.f32 %v1888, %v2754
    %v3318 = vmul.f32 %v1888, %v2758
    %v3319 = vmul.f32 %v1893, %v2754
    %v3320 = vmul.f32 %v1893, %v2758
    %v3321 = vmul.f32 %v1898, %v2754
    %v3322 = vmul.f32 %v1898, %v2758
    %v3323 = vmul.f32 %v1903, %v2754
    %v3324 = vmul.f32 %v1903, %v2758
    %v3325 = vmul.f32 %v1908, %v2754
    %v3326 = vmul.f32 %v1908, %v2758
    %v3327 = vmul.f32 %v1913, %v2754
    %v3328 = vmul.f32 %v1913, %v2758
    %v3329 = vmul.f32 %v1918, %v2754
    %v3330 = vmul.f32 %v1918, %v2758
    %v3331 = vmul.f32 %v1923, %v2754
    %v3332 = vmul.f32 %v1923, %v2758
    %v3333 = vmul.f32 %v1928, %v2754
    %v3334 = vmul.f32 %v1928, %v2758
    %v3335 = vmul.f32 %v1933, %v2754
    %v3336 = vmul.f32 %v1933, %v2758
    %v3337 = vmul.f32 %v1938, %v2754
    %v3338 = vmul.f32 %v1938, %v2758
    %v3339 = vmul.f32 %v1943, %v2754
    %v3340 = vmul.f32 %v1943, %v2758
    %v3341 = vmul.f32 %v1948, %v2754
    %v3342 = vmul.f32 %v1948, %v2758
    %v3343 = vmul.f32 %v1953, %v2754
    %v3344 = vmul.f32 %v1953, %v2758
    %v3345 = vmul.f32 %v1958, %v2754
    %v3346 = vmul.f32 %v1958, %v2758
    %v3347 = vmul.f32 %v1963, %v2754
    %v3348 = vmul.f32 %v1963, %v2758
    %v3349 = vmul.f32 %v1968, %v2754
    %v3350 = vmul.f32 %v1968, %v2758
    %v3351 = vmul.f32 %v1973, %v2754
    %v3352 = vmul.f32 %v1973, %v2758
    %v3353 = vmul.f32 %v1978, %v2754
    %v3354 = vmul.f32 %v1978, %v2758
    %v3355 = vmul.f32 %v1983, %v2754
    %v3356 = vmul.f32 %v1983, %v2758
    %v3357 = vmul.f32 %v1988, %v2754
    %v3358 = vmul.f32 %v1988, %v2758
    %v3359 = vmul.f32 %v1993, %v2754
    %v3360 = vmul.f32 %v1993, %v2758
    %v3361 = vmul.f32 %v1998, %v2754
    %v3362 = vmul.f32 %v1998, %v2758
    %v3363 = vmul.f32 %v2003, %v2754
    %v3364 = vmul.f32 %v2003, %v2758
    %v3365 = vmul.f32 %v2008, %v2754
    %v3366 = vmul.f32 %v2008, %v2758
    %v3367 = vmul.f32 %v2013, %v2754
    %v3368 = vmul.f32 %v2013, %v2758
    %v3369 = vmul.f32 %v2018, %v2754
    %v3370 = vmul.f32 %v2018, %v2758
    %v3371 = vmul.f32 %v2023, %v2754
    %v3372 = vmul.f32 %v2023, %v2758
    %v3373 = vmul.f32 %v2028, %v2754
    %v3374 = vmul.f32 %v2028, %v2758
    %v3375 = vmul.f32 %v2033, %v2754
    %v3376 = vmul.f32 %v2033, %v2758
    %v3377 = vmul.f32 %v2038, %v2754
    %v3378 = vmul.f32 %v2038, %v2758
    %v3379 = vmul.f32 %v2043, %v2754
    %v3380 = vmul.f32 %v2043, %v2758
    %v3381 = vmul.f32 %v2048, %v2754
    %v3382 = vmul.f32 %v2048, %v2758
    %v3383 = vmul.f32 %v2053, %v2754
    %v3384 = vmul.f32 %v2053, %v2758
    %v3385 = vmul.f32 %v2058, %v2754
    %v3386 = vmul.f32 %v2058, %v2758
    %v3387 = vmul.f32 %v2063, %v2754
    %v3388 = vmul.f32 %v2063, %v2758
    %v3389 = vmul.f32 %v2068, %v2754
    %v3390 = vmul.f32 %v2068, %v2758
    %v3391 = vmul.f32 %v2073, %v2754
    %v3392 = vmul.f32 %v2073, %v2758
    %v3393 = vmul.f32 %v2078, %v2754
    %v3394 = vmul.f32 %v2078, %v2758
    %v3395 = vmul.f32 %v2083, %v2754
    %v3396 = vmul.f32 %v2083, %v2758
    %v3397 = vmul.f32 %v2088, %v2754
    %v3398 = vmul.f32 %v2088, %v2758
    %v3399 = vmul.f32 %v2093, %v2754
    %v3400 = vmul.f32 %v2093, %v2758
    %v3401 = vmul.f32 %v2098, %v2754
    %v3402 = vmul.f32 %v2098, %v2758
    %v3403 = vmul.f32 %v2103, %v2754
    %v3404 = vmul.f32 %v2103, %v2758
    %v3405 = vmul.f32 %v2108, %v2754
    %v3406 = vmul.f32 %v2108, %v2758
    %v3407 = vmul.f32 %v2113, %v2754
    %v3408 = vmul.f32 %v2113, %v2758
    %v3409 = vmul.f32 %v2118, %v2754
    %v3410 = vmul.f32 %v2118, %v2758
    %v3411 = vmul.f32 %v2123, %v2754
    %v3412 = vmul.f32 %v2123, %v2758
    %v3413 = vmul.f32 %v2128, %v2754
    %v3414 = vmul.f32 %v2128, %v2758
    %v3415 = vmul.f32 %v2133, %v2754
    %v3416 = vmul.f32 %v2133, %v2758
    %v3417 = vmul.f32 %v2138, %v2754
    %v3418 = vmul.f32 %v2138, %v2758
    %v3419 = vmul.f32 %v2143, %v2754
    %v3420 = vmul.f32 %v2143, %v2758
    %v3421 = vmul.f32 %v2148, %v2754
    %v3422 = vmul.f32 %v2148, %v2758
    %v3423 = vmul.f32 %v2153, %v2754
    %v3424 = vmul.f32 %v2153, %v2758
    %v3425 = vmul.f32 %v2158, %v2754
    %v3426 = vmul.f32 %v2158, %v2758
    %v3427 = vmul.f32 %v2163, %v2754
    %v3428 = vmul.f32 %v2163, %v2758
    %v3429 = vmul.f32 %v2168, %v2754
    %v3430 = vmul.f32 %v2168, %v2758
    %v3431 = vmul.f32 %v2173, %v2754
    %v3432 = vmul.f32 %v2173, %v2758
    %v3433 = vmul.f32 %v2178, %v2754
    %v3434 = vmul.f32 %v2178, %v2758
    %v3435 = vmul.f32 %v2183, %v2754
    %v3436 = vmul.f32 %v2183, %v2758
    %v3437 = vmul.f32 %v2188, %v2754
    %v3438 = vmul.f32 %v2188, %v2758
    %v3439 = vmul.f32 %v2193, %v2754
    %v3440 = vmul.f32 %v2193, %v2758
    %v3441 = vmul.f32 %v2198, %v2754
    %v3442 = vmul.f32 %v2198, %v2758
    %v3443 = vmul.f32 %v2203, %v2754
    %v3444 = vmul.f32 %v2203, %v2758
    %v3445 = vmul.f32 %v2208, %v2754
    %v3446 = vmul.f32 %v2208, %v2758
    %v3447 = vmul.f32 %v2213, %v2754
    %v3448 = vmul.f32 %v2213, %v2758
    %v3449 = vmul.f32 %v2218, %v2754
    %v3450 = vmul.f32 %v2218, %v2758
    %v3451 = vmul.f32 %v2223, %v2754
    %v3452 = vmul.f32 %v2223, %v2758
    %v3453 = vmul.f32 %v2228, %v2754
    %v3454 = vmul.f32 %v2228, %v2758
    %v3455 = vmul.f32 %v2233, %v2754
    %v3456 = vmul.f32 %v2233, %v2758
    %v3457 = vmul.f32 %v2238, %v2754
    %v3458 = vmul.f32 %v2238, %v2758
    %v3459 = vmul.f32 %v2243, %v2754
    %v3460 = vmul.f32 %v2243, %v2758
    %v3461 = vmul.f32 %v2248, %v2754
    %v3462 = vmul.f32 %v2248, %v2758
    %v3463 = vmul.f32 %v2253, %v2754
    %v3464 = vmul.f32 %v2253, %v2758
    %v3465 = vmul.f32 %v2258, %v2754
    %v3466 = vmul.f32 %v2258, %v2758
    %v3467 = vmul.f32 %v2263, %v2754
    %v3468 = vmul.f32 %v2263, %v2758
    %v3469 = vmul.f32 %v2268, %v2754
    %v3470 = vmul.f32 %v2268, %v2758
    %v3471 = vmul.f32 %v2273, %v2754
    %v3472 = vmul.f32 %v2273, %v2758
    %v3473 = vmul.f32 %v2278, %v2754
    %v3474 = vmul.f32 %v2278, %v2758
    %v3475 = vmul.f32 %v2283, %v2754
    %v3476 = vmul.f32 %v2283, %v2758
    %v3477 = vmul.f32 %v2288, %v2754
    %v3478 = vmul.f32 %v2288, %v2758
    %v3479 = vmul.f32 %v2293, %v2754
    %v3480 = vmul.f32 %v2293, %v2758
    %v3481 = vmul.f32 %v2298, %v2754
    %v3482 = vmul.f32 %v2298, %v2758
    %v3483 = vmul.f32 %v2303, %v2754
    %v3484 = vmul.f32 %v2303, %v2758
    %v3485 = vmul.f32 %v2308, %v2754
    %v3486 = vmul.f32 %v2308, %v2758
    %v3487 = vmul.f32 %v2313, %v2754
    %v3488 = vmul.f32 %v2313, %v2758
    %v3489 = vmul.f32 %v2318, %v2754
    %v3490 = vmul.f32 %v2318, %v2758
    %v3491 = vmul.f32 %v2323, %v2754
    %v3492 = vmul.f32 %v2323, %v2758
    %v3493 = vmul.f32 %v2328, %v2754
    %v3494 = vmul.f32 %v2328, %v2758
    %v3495 = vmul.f32 %v2333, %v2754
    %v3496 = vmul.f32 %v2333, %v2758
    %v3497 = vmul.f32 %v2338, %v2754
    %v3498 = vmul.f32 %v2338, %v2758
    %v3499 = vmul.f32 %v2343, %v2754
    %v3500 = vmul.f32 %v2343, %v2758
    %v3501 = vmul.f32 %v2348, %v2754
    %v3502 = vmul.f32 %v2348, %v2758
    %v3503 = vmul.f32 %v2353, %v2754
    %v3504 = vmul.f32 %v2353, %v2758
    %v3505 = vmul.f32 %v2358, %v2754
    %v3506 = vmul.f32 %v2358, %v2758
    %v3507 = vmul.f32 %v2363, %v2754
    %v3508 = vmul.f32 %v2363, %v2758
    %v3509 = vmul.f32 %v2368, %v2754
    %v3510 = vmul.f32 %v2368, %v2758
    %v3511 = vmul.f32 %v2373, %v2754
    %v3512 = vmul.f32 %v2373, %v2758
    %v3513 = vmul.f32 %v2378, %v2754
    %v3514 = vmul.f32 %v2378, %v2758
    %v3515 = vmul.f32 %v2383, %v2754
    %v3516 = vmul.f32 %v2383, %v2758
    %v3517 = vmul.f32 %v2388, %v2754
    %v3518 = vmul.f32 %v2388, %v2758
    %v3519 = vmul.f32 %v2393, %v2754
    %v3520 = vmul.f32 %v2393, %v2758
    %v3521 = vmul.f32 %v2398, %v2754
    %v3522 = vmul.f32 %v2398, %v2758
    %v3523 = vmul.f32 %v2403, %v2754
    %v3524 = vmul.f32 %v2403, %v2758
    %v3525 = vmul.f32 %v2408, %v2754
    %v3526 = vmul.f32 %v2408, %v2758
    %v3527 = vmul.f32 %v2413, %v2754
    %v3528 = vmul.f32 %v2413, %v2758
    %v3529 = vmul.f32 %v2418, %v2754
    %v3530 = vmul.f32 %v2418, %v2758
    %v3531 = vmul.f32 %v2423, %v2754
    %v3532 = vmul.f32 %v2423, %v2758
    %v3533 = vmul.f32 %v2428, %v2754
    %v3534 = vmul.f32 %v2428, %v2758
    %v3535 = vmul.f32 %v2433, %v2754
    %v3536 = vmul.f32 %v2433, %v2758
    %v3537 = vmul.f32 %v2438, %v2754
    %v3538 = vmul.f32 %v2438, %v2758
    %v3539 = vmul.f32 %v2443, %v2754
    %v3540 = vmul.f32 %v2443, %v2758
    %v3541 = vmul.f32 %v2448, %v2754
    %v3542 = vmul.f32 %v2448, %v2758
    %v3543 = vmul.f32 %v2453, %v2754
    %v3544 = vmul.f32 %v2453, %v2758
    %v3545 = vmul.f32 %v2458, %v2754
    %v3546 = vmul.f32 %v2458, %v2758
    %v3547 = vmul.f32 %v2463, %v2754
    %v3548 = vmul.f32 %v2463, %v2758
    %v3549 = vmul.f32 %v2468, %v2754
    %v3550 = vmul.f32 %v2468, %v2758
    %v3551 = vmul.f32 %v2473, %v2754
    %v3552 = vmul.f32 %v2473, %v2758
    %v3553 = vmul.f32 %v2478, %v2754
    %v3554 = vmul.f32 %v2478, %v2758
    %v3555 = vmul.f32 %v2483, %v2754
    %v3556 = vmul.f32 %v2483, %v2758
    %v3557 = vmul.f32 %v2488, %v2754
    %v3558 = vmul.f32 %v2488, %v2758
    %v3559 = vmul.f32 %v2493, %v2754
    %v3560 = vmul.f32 %v2493, %v2758
    %v3561 = vmul.f32 %v2498, %v2754
    %v3562 = vmul.f32 %v2498, %v2758
    %v3563 = vmul.f32 %v2503, %v2754
    %v3564 = vmul.f32 %v2503, %v2758
    %v3565 = vmul.f32 %v2508, %v2754
    %v3566 = vmul.f32 %v2508, %v2758
    %v3567 = vmul.f32 %v2513, %v2754
    %v3568 = vmul.f32 %v2513, %v2758
    %v3569 = vmul.f32 %v2518, %v2754
    %v3570 = vmul.f32 %v2518, %v2758
    %v3571 = vmul.f32 %v2523, %v2754
    %v3572 = vmul.f32 %v2523, %v2758
    %v3573 = vmul.f32 %v2528, %v2754
    %v3574 = vmul.f32 %v2528, %v2758
    %v3575 = vmul.f32 %v2533, %v2754
    %v3576 = vmul.f32 %v2533, %v2758
    %v3577 = vmul.f32 %v2538, %v2754
    %v3578 = vmul.f32 %v2538, %v2758
    %v3579 = vmul.f32 %v2543, %v2754
    %v3580 = vmul.f32 %v2543, %v2758
    %v3581 = vmul.f32 %v2548, %v2754
    %v3582 = vmul.f32 %v2548, %v2758
    %v3583 = vmul.f32 %v2553, %v2754
    %v3584 = vmul.f32 %v2553, %v2758
    %v3585 = vmul.f32 %v2558, %v2754
    %v3586 = vmul.f32 %v2558, %v2758
    %v3587 = vmul.f32 %v2563, %v2754
    %v3588 = vmul.f32 %v2563, %v2758
    %v3589 = vmul.f32 %v2568, %v2754
    %v3590 = vmul.f32 %v2568, %v2758
    %v3591 = vmul.f32 %v2573, %v2754
    %v3592 = vmul.f32 %v2573, %v2758
    %v3593 = vmul.f32 %v2578, %v2754
    %v3594 = vmul.f32 %v2578, %v2758
    %v3595 = vmul.f32 %v2583, %v2754
    %v3596 = vmul.f32 %v2583, %v2758
    %v3597 = vmul.f32 %v2588, %v2754
    %v3598 = vmul.f32 %v2588, %v2758
    %v3599 = vmul.f32 %v2593, %v2754
    %v3600 = vmul.f32 %v2593, %v2758
    %v3601 = vmul.f32 %v2598, %v2754
    %v3602 = vmul.f32 %v2598, %v2758
    %v3603 = vmul.f32 %v2603, %v2754
    %v3604 = vmul.f32 %v2603, %v2758
    %v3605 = vmul.f32 %v2608, %v2754
    %v3606 = vmul.f32 %v2608, %v2758
    %v3607 = vmul.f32 %v2613, %v2754
    %v3608 = vmul.f32 %v2613, %v2758
    %v3609 = vmul.f32 %v2618, %v2754
    %v3610 = vmul.f32 %v2618, %v2758
    %v3611 = vmul.f32 %v2623, %v2754
    %v3612 = vmul.f32 %v2623, %v2758
    %v3613 = vmul.f32 %v2628, %v2754
    %v3614 = vmul.f32 %v2628, %v2758
    %v3615 = vmul.f32 %v2633, %v2754
    %v3616 = vmul.f32 %v2633, %v2758
    %v3617 = vmul.f32 %v2638, %v2754
    %v3618 = vmul.f32 %v2638, %v2758
    %v3619 = vmul.f32 %v2643, %v2754
    %v3620 = vmul.f32 %v2643, %v2758
    %v3621 = vmul.f32 %v2648, %v2754
    %v3622 = vmul.f32 %v2648, %v2758
    %v3623 = vmul.f32 %v2653, %v2754
    %v3624 = vmul.f32 %v2653, %v2758
    %v3625 = vmul.f32 %v2658, %v2754
    %v3626 = vmul.f32 %v2658, %v2758
    %v3627 = vmul.f32 %v2663, %v2754
    %v3628 = vmul.f32 %v2663, %v2758
    %v3629 = vmul.f32 %v2668, %v2754
    %v3630 = vmul.f32 %v2668, %v2758
    %v3631 = vmul.f32 %v2673, %v2754
    %v3632 = vmul.f32 %v2673, %v2758
    %v3633 = vmul.f32 %v2678, %v2754
    %v3634 = vmul.f32 %v2678, %v2758
    %v3635 = vmul.f32 %v2683, %v2754
    %v3636 = vmul.f32 %v2683, %v2758
    %v3637 = vmul.f32 %v2688, %v2754
    %v3638 = vmul.f32 %v2688, %v2758
    %v3639 = vmul.f32 %v2693, %v2754
    %v3640 = vmul.f32 %v2693, %v2758
    %v3641 = vmul.f32 %v2698, %v2754
    %v3642 = vmul.f32 %v2698, %v2758
    %v3643 = vmul.f32 %v2703, %v2754
    %v3644 = vmul.f32 %v2703, %v2758
    %v3645 = vmul.f32 %v2708, %v2754
    %v3646 = vmul.f32 %v2708, %v2758
    %v3647 = vmul.f32 %v2713, %v2754
    %v3648 = vmul.f32 %v2713, %v2758
    %v3649 = vmul.f32 %v2718, %v2754
    %v3650 = vmul.f32 %v2718, %v2758
    %v3651 = vmul.f32 %v2723, %v2754
    %v3652 = vmul.f32 %v2723, %v2758
    %v3653 = vmul.f32 %v2728, %v2754
    %v3654 = vmul.f32 %v2728, %v2758
    %v3655 = vmul.f32 %v2733, %v2754
    %v3656 = vmul.f32 %v2733, %v2758
    %v3657 = vmul.f32 %v2738, %v2754
    %v3658 = vmul.f32 %v2738, %v2758
    %v3660 = vlaneseq
    %v3661 = vshrl.u32 %v3660, 7
    %v3662 = vsub.s32 0, %v3661
    %v3663 = vrot.slane %v489, %v3662
    %v3664 = vlaneseq
    %v3665 = vshrl.u32 %v3664, 7
    %v3666 = vsub.s32 1, %v3665
    %v3667 = vrot.slane %v489, %v3666
    %v3670 = vadd.f32 %v3663, %v2759
    %v3671 = vadd.f32 %v3667, %v2760
    %v3672 = vadd.f32 %v3663, %v2761
    %v3673 = vadd.f32 %v3667, %v2762
    %v3674 = vadd.f32 %v3663, %v2763
    %v3675 = vadd.f32 %v3667, %v2764
    %v3676 = vadd.f32 %v3663, %v2765
    %v3677 = vadd.f32 %v3667, %v2766
    %v3678 = vadd.f32 %v3663, %v2767
    %v3679 = vadd.f32 %v3667, %v2768
    %v3680 = vadd.f32 %v3663, %v2769
    %v3681 = vadd.f32 %v3667, %v2770
    %v3682 = vadd.f32 %v3663, %v2771
    %v3683 = vadd.f32 %v3667, %v2772
    %v3684 = vadd.f32 %v3663, %v2773
    %v3685 = vadd.f32 %v3667, %v2774
    %v3686 = vadd.f32 %v3663, %v2775
    %v3687 = vadd.f32 %v3667, %v2776
    %v3688 = vadd.f32 %v3663, %v2777
    %v3689 = vadd.f32 %v3667, %v2778
    %v3690 = vadd.f32 %v3663, %v2779
    %v3691 = vadd.f32 %v3667, %v2780
    %v3692 = vadd.f32 %v3663, %v2781
    %v3693 = vadd.f32 %v3667, %v2782
    %v3694 = vadd.f32 %v3663, %v2783
    %v3695 = vadd.f32 %v3667, %v2784
    %v3696 = vadd.f32 %v3663, %v2785
    %v3697 = vadd.f32 %v3667, %v2786
    %v3698 = vadd.f32 %v3663, %v2787
    %v3699 = vadd.f32 %v3667, %v2788
    %v3700 = vadd.f32 %v3663, %v2789
    %v3701 = vadd.f32 %v3667, %v2790
    %v3702 = vadd.f32 %v3663, %v2791
    %v3703 = vadd.f32 %v3667, %v2792
    %v3704 = vadd.f32 %v3663, %v2793
    %v3705 = vadd.f32 %v3667, %v2794
    %v3706 = vadd.f32 %v3663, %v2795
    %v3707 = vadd.f32 %v3667, %v2796
    %v3708 = vadd.f32 %v3663, %v2797
    %v3709 = vadd.f32 %v3667, %v2798
    %v3710 = vadd.f32 %v3663, %v2799
    %v3711 = vadd.f32 %v3667, %v2800
    %v3712 = vadd.f32 %v3663, %v2801
    %v3713 = vadd.f32 %v3667, %v2802
    %v3714 = vadd.f32 %v3663, %v2803
    %v3715 = vadd.f32 %v3667, %v2804
    %v3716 = vadd.f32 %v3663, %v2805
    %v3717 = vadd.f32 %v3667, %v2806
    %v3718 = vadd.f32 %v3663, %v2807
    %v3719 = vadd.f32 %v3667, %v2808
    %v3720 = vadd.f32 %v3663, %v2809
    %v3721 = vadd.f32 %v3667, %v2810
    %v3722 = vadd.f32 %v3663, %v2811
    %v3723 = vadd.f32 %v3667, %v2812
    %v3724 = vadd.f32 %v3663, %v2813
    %v3725 = vadd.f32 %v3667, %v2814
    %v3726 = vadd.f32 %v3663, %v2815
    %v3727 = vadd.f32 %v3667, %v2816
    %v3728 = vadd.f32 %v3663, %v2817
    %v3729 = vadd.f32 %v3667, %v2818
    %v3730 = vadd.f32 %v3663, %v2819
    %v3731 = vadd.f32 %v3667, %v2820
    %v3732 = vadd.f32 %v3663, %v2821
    %v3733 = vadd.f32 %v3667, %v2822
    %v3734 = vadd.f32 %v3663, %v2823
    %v3735 = vadd.f32 %v3667, %v2824
    %v3736 = vadd.f32 %v3663, %v2825
    %v3737 = vadd.f32 %v3667, %v2826
    %v3738 = vadd.f32 %v3663, %v2827
    %v3739 = vadd.f32 %v3667, %v2828
    %v3740 = vadd.f32 %v3663, %v2829
    %v3741 = vadd.f32 %v3667, %v2830
    %v3742 = vadd.f32 %v3663, %v2831
    %v3743 = vadd.f32 %v3667, %v2832
    %v3744 = vadd.f32 %v3663, %v2833
    %v3745 = vadd.f32 %v3667, %v2834
    %v3746 = vadd.f32 %v3663, %v2835
    %v3747 = vadd.f32 %v3667, %v2836
    %v3748 = vadd.f32 %v3663, %v2837
    %v3749 = vadd.f32 %v3667, %v2838
    %v3750 = vadd.f32 %v3663, %v2839
    %v3751 = vadd.f32 %v3667, %v2840
    %v3752 = vadd.f32 %v3663, %v2841
    %v3753 = vadd.f32 %v3667, %v2842
    %v3754 = vadd.f32 %v3663, %v2843
    %v3755 = vadd.f32 %v3667, %v2844
    %v3756 = vadd.f32 %v3663, %v2845
    %v3757 = vadd.f32 %v3667, %v2846
    %v3758 = vadd.f32 %v3663, %v2847
    %v3759 = vadd.f32 %v3667, %v2848
    %v3760 = vadd.f32 %v3663, %v2849
    %v3761 = vadd.f32 %v3667, %v2850
    %v3762 = vadd.f32 %v3663, %v2851
    %v3763 = vadd.f32 %v3667, %v2852
    %v3764 = vadd.f32 %v3663, %v2853
    %v3765 = vadd.f32 %v3667, %v2854
    %v3766 = vadd.f32 %v3663, %v2855
    %v3767 = vadd.f32 %v3667, %v2856
    %v3768 = vadd.f32 %v3663, %v2857
    %v3769 = vadd.f32 %v3667, %v2858
    %v3770 = vadd.f32 %v3663, %v2859
    %v3771 = vadd.f32 %v3667, %v2860
    %v3772 = vadd.f32 %v3663, %v2861
    %v3773 = vadd.f32 %v3667, %v2862
    %v3774 = vadd.f32 %v3663, %v2863
    %v3775 = vadd.f32 %v3667, %v2864
    %v3776 = vadd.f32 %v3663, %v2865
    %v3777 = vadd.f32 %v3667, %v2866
    %v3778 = vadd.f32 %v3663, %v2867
    %v3779 = vadd.f32 %v3667, %v2868
    %v3780 = vadd.f32 %v3663, %v2869
    %v3781 = vadd.f32 %v3667, %v2870
    %v3782 = vadd.f32 %v3663, %v2871
    %v3783 = vadd.f32 %v3667, %v2872
    %v3784 = vadd.f32 %v3663, %v2873
    %v3785 = vadd.f32 %v3667, %v2874
    %v3786 = vadd.f32 %v3663, %v2875
    %v3787 = vadd.f32 %v3667, %v2876
    %v3788 = vadd.f32 %v3663, %v2877
    %v3789 = vadd.f32 %v3667, %v2878
    %v3790 = vadd.f32 %v3663, %v2879
    %v3791 = vadd.f32 %v3667, %v2880
    %v3792 = vadd.f32 %v3663, %v2881
    %v3793 = vadd.f32 %v3667, %v2882
    %v3794 = vadd.f32 %v3663, %v2883
    %v3795 = vadd.f32 %v3667, %v2884
    %v3796 = vadd.f32 %v3663, %v2885
    %v3797 = vadd.f32 %v3667, %v2886
    %v3798 = vadd.f32 %v3663, %v2887
    %v3799 = vadd.f32 %v3667, %v2888
    %v3800 = vadd.f32 %v3663, %v2889
    %v3801 = vadd.f32 %v3667, %v2890
    %v3802 = vadd.f32 %v3663, %v2891
    %v3803 = vadd.f32 %v3667, %v2892
    %v3804 = vadd.f32 %v3663, %v2893
    %v3805 = vadd.f32 %v3667, %v2894
    %v3806 = vadd.f32 %v3663, %v2895
    %v3807 = vadd.f32 %v3667, %v2896
    %v3808 = vadd.f32 %v3663, %v2897
    %v3809 = vadd.f32 %v3667, %v2898
    %v3810 = vadd.f32 %v3663, %v2899
    %v3811 = vadd.f32 %v3667, %v2900
    %v3812 = vadd.f32 %v3663, %v2901
    %v3813 = vadd.f32 %v3667, %v2902
    %v3814 = vadd.f32 %v3663, %v2903
    %v3815 = vadd.f32 %v3667, %v2904
    %v3816 = vadd.f32 %v3663, %v2905
    %v3817 = vadd.f32 %v3667, %v2906
    %v3818 = vadd.f32 %v3663, %v2907
    %v3819 = vadd.f32 %v3667, %v2908
    %v3820 = vadd.f32 %v3663, %v2909
    %v3821 = vadd.f32 %v3667, %v2910
    %v3822 = vadd.f32 %v3663, %v2911
    %v3823 = vadd.f32 %v3667, %v2912
    %v3824 = vadd.f32 %v3663, %v2913
    %v3825 = vadd.f32 %v3667, %v2914
    %v3826 = vadd.f32 %v3663, %v2915
    %v3827 = vadd.f32 %v3667, %v2916
    %v3828 = vadd.f32 %v3663, %v2917
    %v3829 = vadd.f32 %v3667, %v2918
    %v3830 = vadd.f32 %v3663, %v2919
    %v3831 = vadd.f32 %v3667, %v2920
    %v3832 = vadd.f32 %v3663, %v2921
    %v3833 = vadd.f32 %v3667, %v2922
    %v3834 = vadd.f32 %v3663, %v2923
    %v3835 = vadd.f32 %v3667, %v2924
    %v3836 = vadd.f32 %v3663, %v2925
    %v3837 = vadd.f32 %v3667, %v2926
    %v3838 = vadd.f32 %v3663, %v2927
    %v3839 = vadd.f32 %v3667, %v2928
    %v3840 = vadd.f32 %v3663, %v2929
    %v3841 = vadd.f32 %v3667, %v2930
    %v3842 = vadd.f32 %v3663, %v2931
    %v3843 = vadd.f32 %v3667, %v2932
    %v3844 = vadd.f32 %v3663, %v2933
    %v3845 = vadd.f32 %v3667, %v2934
    %v3846 = vadd.f32 %v3663, %v2935
    %v3847 = vadd.f32 %v3667, %v2936
    %v3848 = vadd.f32 %v3663, %v2937
    %v3849 = vadd.f32 %v3667, %v2938
    %v3850 = vadd.f32 %v3663, %v2939
    %v3851 = vadd.f32 %v3667, %v2940
    %v3852 = vadd.f32 %v3663, %v2941
    %v3853 = vadd.f32 %v3667, %v2942
    %v3854 = vadd.f32 %v3663, %v2943
    %v3855 = vadd.f32 %v3667, %v2944
    %v3856 = vadd.f32 %v3663, %v2945
    %v3857 = vadd.f32 %v3667, %v2946
    %v3858 = vadd.f32 %v3663, %v2947
    %v3859 = vadd.f32 %v3667, %v2948
    %v3860 = vadd.f32 %v3663, %v2949
    %v3861 = vadd.f32 %v3667, %v2950
    %v3862 = vadd.f32 %v3663, %v2951
    %v3863 = vadd.f32 %v3667, %v2952
    %v3864 = vadd.f32 %v3663, %v2953
    %v3865 = vadd.f32 %v3667, %v2954
    %v3866 = vadd.f32 %v3663, %v2955
    %v3867 = vadd.f32 %v3667, %v2956
    %v3868 = vadd.f32 %v3663, %v2957
    %v3869 = vadd.f32 %v3667, %v2958
    %v3870 = vadd.f32 %v3663, %v2959
    %v3871 = vadd.f32 %v3667, %v2960
    %v3872 = vadd.f32 %v3663, %v2961
    %v3873 = vadd.f32 %v3667, %v2962
    %v3874 = vadd.f32 %v3663, %v2963
    %v3875 = vadd.f32 %v3667, %v2964
    %v3876 = vadd.f32 %v3663, %v2965
    %v3877 = vadd.f32 %v3667, %v2966
    %v3878 = vadd.f32 %v3663, %v2967
    %v3879 = vadd.f32 %v3667, %v2968
    %v3880 = vadd.f32 %v3663, %v2969
    %v3881 = vadd.f32 %v3667, %v2970
    %v3882 = vadd.f32 %v3663, %v2971
    %v3883 = vadd.f32 %v3667, %v2972
    %v3884 = vadd.f32 %v3663, %v2973
    %v3885 = vadd.f32 %v3667, %v2974
    %v3886 = vadd.f32 %v3663, %v2975
    %v3887 = vadd.f32 %v3667, %v2976
    %v3888 = vadd.f32 %v3663, %v2977
    %v3889 = vadd.f32 %v3667, %v2978
    %v3890 = vadd.f32 %v3663, %v2979
    %v3891 = vadd.f32 %v3667, %v2980
    %v3892 = vadd.f32 %v3663, %v2981
    %v3893 = vadd.f32 %v3667, %v2982
    %v3894 = vadd.f32 %v3663, %v2983
    %v3895 = vadd.f32 %v3667, %v2984
    %v3896 = vadd.f32 %v3663, %v2985
    %v3897 = vadd.f32 %v3667, %v2986
    %v3898 = vadd.f32 %v3663, %v2987
    %v3899 = vadd.f32 %v3667, %v2988
    %v3900 = vadd.f32 %v3663, %v2989
    %v3901 = vadd.f32 %v3667, %v2990
    %v3902 = vadd.f32 %v3663, %v2991
    %v3903 = vadd.f32 %v3667, %v2992
    %v3904 = vadd.f32 %v3663, %v2993
    %v3905 = vadd.f32 %v3667, %v2994
    %v3906 = vadd.f32 %v3663, %v2995
    %v3907 = vadd.f32 %v3667, %v2996
    %v3908 = vadd.f32 %v3663, %v2997
    %v3909 = vadd.f32 %v3667, %v2998
    %v3910 = vadd.f32 %v3663, %v2999
    %v3911 = vadd.f32 %v3667, %v3000
    %v3912 = vadd.f32 %v3663, %v3001
    %v3913 = vadd.f32 %v3667, %v3002
    %v3914 = vadd.f32 %v3663, %v3003
    %v3915 = vadd.f32 %v3667, %v3004
    %v3916 = vadd.f32 %v3663, %v3005
    %v3917 = vadd.f32 %v3667, %v3006
    %v3918 = vadd.f32 %v3663, %v3007
    %v3919 = vadd.f32 %v3667, %v3008
    %v3920 = vadd.f32 %v3663, %v3009
    %v3921 = vadd.f32 %v3667, %v3010
    %v3922 = vadd.f32 %v3663, %v3011
    %v3923 = vadd.f32 %v3667, %v3012
    %v3924 = vadd.f32 %v3663, %v3013
    %v3925 = vadd.f32 %v3667, %v3014
    %v3926 = vadd.f32 %v3663, %v3015
    %v3927 = vadd.f32 %v3667, %v3016
    %v3928 = vadd.f32 %v3663, %v3017
    %v3929 = vadd.f32 %v3667, %v3018
    %v3930 = vadd.f32 %v3663, %v3019
    %v3931 = vadd.f32 %v3667, %v3020
    %v3932 = vadd.f32 %v3663, %v3021
    %v3933 = vadd.f32 %v3667, %v3022
    %v3934 = vadd.f32 %v3663, %v3023
    %v3935 = vadd.f32 %v3667, %v3024
    %v3936 = vadd.f32 %v3663, %v3025
    %v3937 = vadd.f32 %v3667, %v3026
    %v3938 = vadd.f32 %v3663, %v3027
    %v3939 = vadd.f32 %v3667, %v3028
    %v3940 = vadd.f32 %v3663, %v3029
    %v3941 = vadd.f32 %v3667, %v3030
    %v3942 = vadd.f32 %v3663, %v3031
    %v3943 = vadd.f32 %v3667, %v3032
    %v3944 = vadd.f32 %v3663, %v3033
    %v3945 = vadd.f32 %v3667, %v3034
    %v3946 = vadd.f32 %v3663, %v3035
    %v3947 = vadd.f32 %v3667, %v3036
    %v3948 = vadd.f32 %v3663, %v3037
    %v3949 = vadd.f32 %v3667, %v3038
    %v3950 = vadd.f32 %v3663, %v3039
    %v3951 = vadd.f32 %v3667, %v3040
    %v3952 = vadd.f32 %v3663, %v3041
    %v3953 = vadd.f32 %v3667, %v3042
    %v3954 = vadd.f32 %v3663, %v3043
    %v3955 = vadd.f32 %v3667, %v3044
    %v3956 = vadd.f32 %v3663, %v3045
    %v3957 = vadd.f32 %v3667, %v3046
    %v3958 = vadd.f32 %v3663, %v3047
    %v3959 = vadd.f32 %v3667, %v3048
    %v3960 = vadd.f32 %v3663, %v3049
    %v3961 = vadd.f32 %v3667, %v3050
    %v3962 = vadd.f32 %v3663, %v3051
    %v3963 = vadd.f32 %v3667, %v3052
    %v3964 = vadd.f32 %v3663, %v3053
    %v3965 = vadd.f32 %v3667, %v3054
    %v3966 = vadd.f32 %v3663, %v3055
    %v3967 = vadd.f32 %v3667, %v3056
    %v3968 = vadd.f32 %v3663, %v3057
    %v3969 = vadd.f32 %v3667, %v3058
    %v3970 = vadd.f32 %v3663, %v3059
    %v3971 = vadd.f32 %v3667, %v3060
    %v3972 = vadd.f32 %v3663, %v3061
    %v3973 = vadd.f32 %v3667, %v3062
    %v3974 = vadd.f32 %v3663, %v3063
    %v3975 = vadd.f32 %v3667, %v3064
    %v3976 = vadd.f32 %v3663, %v3065
    %v3977 = vadd.f32 %v3667, %v3066
    %v3978 = vadd.f32 %v3663, %v3067
    %v3979 = vadd.f32 %v3667, %v3068
    %v3980 = vadd.f32 %v3663, %v3069
    %v3981 = vadd.f32 %v3667, %v3070
    %v3982 = vadd.f32 %v3663, %v3071
    %v3983 = vadd.f32 %v3667, %v3072
    %v3984 = vadd.f32 %v3663, %v3073
    %v3985 = vadd.f32 %v3667, %v3074
    %v3986 = vadd.f32 %v3663, %v3075
    %v3987 = vadd.f32 %v3667, %v3076
    %v3988 = vadd.f32 %v3663, %v3077
    %v3989 = vadd.f32 %v3667, %v3078
    %v3990 = vadd.f32 %v3663, %v3079
    %v3991 = vadd.f32 %v3667, %v3080
    %v3992 = vadd.f32 %v3663, %v3081
    %v3993 = vadd.f32 %v3667, %v3082
    %v3994 = vadd.f32 %v3663, %v3083
    %v3995 = vadd.f32 %v3667, %v3084
    %v3996 = vadd.f32 %v3663, %v3085
    %v3997 = vadd.f32 %v3667, %v3086
    %v3998 = vadd.f32 %v3663, %v3087
    %v3999 = vadd.f32 %v3667, %v3088
    %v4000 = vadd.f32 %v3663, %v3089
    %v4001 = vadd.f32 %v3667, %v3090
    %v4002 = vadd.f32 %v3663, %v3091
    %v4003 = vadd.f32 %v3667, %v3092
    %v4004 = vadd.f32 %v3663, %v3093
    %v4005 = vadd.f32 %v3667, %v3094
    %v4006 = vadd.f32 %v3663, %v3095
    %v4007 = vadd.f32 %v3667, %v3096
    %v4008 = vadd.f32 %v3663, %v3097
    %v4009 = vadd.f32 %v3667, %v3098
    %v4010 = vadd.f32 %v3663, %v3099
    %v4011 = vadd.f32 %v3667, %v3100
    %v4012 = vadd.f32 %v3663, %v3101
    %v4013 = vadd.f32 %v3667, %v3102
    %v4014 = vadd.f32 %v3663, %v3103
    %v4015 = vadd.f32 %v3667, %v3104
    %v4016 = vadd.f32 %v3663, %v3105
    %v4017 = vadd.f32 %v3667, %v3106
    %v4018 = vadd.f32 %v3663, %v3107
    %v4019 = vadd.f32 %v3667, %v3108
    %v4020 = vadd.f32 %v3663, %v3109
    %v4021 = vadd.f32 %v3667, %v3110
    %v4022 = vadd.f32 %v3663, %v3111
    %v4023 = vadd.f32 %v3667, %v3112
    %v4024 = vadd.f32 %v3663, %v3113
    %v4025 = vadd.f32 %v3667, %v3114
    %v4026 = vadd.f32 %v3663, %v3115
    %v4027 = vadd.f32 %v3667, %v3116
    %v4028 = vadd.f32 %v3663, %v3117
    %v4029 = vadd.f32 %v3667, %v3118
    %v4030 = vadd.f32 %v3663, %v3119
    %v4031 = vadd.f32 %v3667, %v3120
    %v4032 = vadd.f32 %v3663, %v3121
    %v4033 = vadd.f32 %v3667, %v3122
    %v4034 = vadd.f32 %v3663, %v3123
    %v4035 = vadd.f32 %v3667, %v3124
    %v4036 = vadd.f32 %v3663, %v3125
    %v4037 = vadd.f32 %v3667, %v3126
    %v4038 = vadd.f32 %v3663, %v3127
    %v4039 = vadd.f32 %v3667, %v3128
    %v4040 = vadd.f32 %v3663, %v3129
    %v4041 = vadd.f32 %v3667, %v3130
    %v4042 = vadd.f32 %v3663, %v3131
    %v4043 = vadd.f32 %v3667, %v3132
    %v4044 = vadd.f32 %v3663, %v3133
    %v4045 = vadd.f32 %v3667, %v3134
    %v4046 = vadd.f32 %v3663, %v3135
    %v4047 = vadd.f32 %v3667, %v3136
    %v4048 = vadd.f32 %v3663, %v3137
    %v4049 = vadd.f32 %v3667, %v3138
    %v4050 = vadd.f32 %v3663, %v3139
    %v4051 = vadd.f32 %v3667, %v3140
    %v4052 = vadd.f32 %v3663, %v3141
    %v4053 = vadd.f32 %v3667, %v3142
    %v4054 = vadd.f32 %v3663, %v3143
    %v4055 = vadd.f32 %v3667, %v3144
    %v4056 = vadd.f32 %v3663, %v3145
    %v4057 = vadd.f32 %v3667, %v3146
    %v4058 = vadd.f32 %v3663, %v3147
    %v4059 = vadd.f32 %v3667, %v3148
    %v4060 = vadd.f32 %v3663, %v3149
    %v4061 = vadd.f32 %v3667, %v3150
    %v4062 = vadd.f32 %v3663, %v3151
    %v4063 = vadd.f32 %v3667, %v3152
    %v4064 = vadd.f32 %v3663, %v3153
    %v4065 = vadd.f32 %v3667, %v3154
    %v4066 = vadd.f32 %v3663, %v3155
    %v4067 = vadd.f32 %v3667, %v3156
    %v4068 = vadd.f32 %v3663, %v3157
    %v4069 = vadd.f32 %v3667, %v3158
    %v4070 = vadd.f32 %v3663, %v3159
    %v4071 = vadd.f32 %v3667, %v3160
    %v4072 = vadd.f32 %v3663, %v3161
    %v4073 = vadd.f32 %v3667, %v3162
    %v4074 = vadd.f32 %v3663, %v3163
    %v4075 = vadd.f32 %v3667, %v3164
    %v4076 = vadd.f32 %v3663, %v3165
    %v4077 = vadd.f32 %v3667, %v3166
    %v4078 = vadd.f32 %v3663, %v3167
    %v4079 = vadd.f32 %v3667, %v3168
    %v4080 = vadd.f32 %v3663, %v3169
    %v4081 = vadd.f32 %v3667, %v3170
    %v4082 = vadd.f32 %v3663, %v3171
    %v4083 = vadd.f32 %v3667, %v3172
    %v4084 = vadd.f32 %v3663, %v3173
    %v4085 = vadd.f32 %v3667, %v3174
    %v4086 = vadd.f32 %v3663, %v3175
    %v4087 = vadd.f32 %v3667, %v3176
    %v4088 = vadd.f32 %v3663, %v3177
    %v4089 = vadd.f32 %v3667, %v3178
    %v4090 = vadd.f32 %v3663, %v3179
    %v4091 = vadd.f32 %v3667, %v3180
    %v4092 = vadd.f32 %v3663, %v3181
    %v4093 = vadd.f32 %v3667, %v3182
    %v4094 = vadd.f32 %v3663, %v3183
    %v4095 = vadd.f32 %v3667, %v3184
    %v4096 = vadd.f32 %v3663, %v3185
    %v4097 = vadd.f32 %v3667, %v3186
    %v4098 = vadd.f32 %v3663, %v3187
    %v4099 = vadd.f32 %v3667, %v3188
    %v4100 = vadd.f32 %v3663, %v3189
    %v4101 = vadd.f32 %v3667, %v3190
    %v4102 = vadd.f32 %v3663, %v3191
    %v4103 = vadd.f32 %v3667, %v3192
    %v4104 = vadd.f32 %v3663, %v3193
    %v4105 = vadd.f32 %v3667, %v3194
    %v4106 = vadd.f32 %v3663, %v3195
    %v4107 = vadd.f32 %v3667, %v3196
    %v4108 = vadd.f32 %v3663, %v3197
    %v4109 = vadd.f32 %v3667, %v3198
    %v4110 = vadd.f32 %v3663, %v3199
    %v4111 = vadd.f32 %v3667, %v3200
    %v4112 = vadd.f32 %v3663, %v3201
    %v4113 = vadd.f32 %v3667, %v3202
    %v4114 = vadd.f32 %v3663, %v3203
    %v4115 = vadd.f32 %v3667, %v3204
    %v4116 = vadd.f32 %v3663, %v3205
    %v4117 = vadd.f32 %v3667, %v3206
    %v4118 = vadd.f32 %v3663, %v3207
    %v4119 = vadd.f32 %v3667, %v3208
    %v4120 = vadd.f32 %v3663, %v3209
    %v4121 = vadd.f32 %v3667, %v3210
    %v4122 = vadd.f32 %v3663, %v3211
    %v4123 = vadd.f32 %v3667, %v3212
    %v4124 = vadd.f32 %v3663, %v3213
    %v4125 = vadd.f32 %v3667, %v3214
    %v4126 = vadd.f32 %v3663, %v3215
    %v4127 = vadd.f32 %v3667, %v3216
    %v4128 = vadd.f32 %v3663, %v3217
    %v4129 = vadd.f32 %v3667, %v3218
    %v4130 = vadd.f32 %v3663, %v3219
    %v4131 = vadd.f32 %v3667, %v3220
    %v4132 = vadd.f32 %v3663, %v3221
    %v4133 = vadd.f32 %v3667, %v3222
    %v4134 = vadd.f32 %v3663, %v3223
    %v4135 = vadd.f32 %v3667, %v3224
    %v4136 = vadd.f32 %v3663, %v3225
    %v4137 = vadd.f32 %v3667, %v3226
    %v4138 = vadd.f32 %v3663, %v3227
    %v4139 = vadd.f32 %v3667, %v3228
    %v4140 = vadd.f32 %v3663, %v3229
    %v4141 = vadd.f32 %v3667, %v3230
    %v4142 = vadd.f32 %v3663, %v3231
    %v4143 = vadd.f32 %v3667, %v3232
    %v4144 = vadd.f32 %v3663, %v3233
    %v4145 = vadd.f32 %v3667, %v3234
    %v4146 = vadd.f32 %v3663, %v3235
    %v4147 = vadd.f32 %v3667, %v3236
    %v4148 = vadd.f32 %v3663, %v3237
    %v4149 = vadd.f32 %v3667, %v3238
    %v4150 = vadd.f32 %v3663, %v3239
    %v4151 = vadd.f32 %v3667, %v3240
    %v4152 = vadd.f32 %v3663, %v3241
    %v4153 = vadd.f32 %v3667, %v3242
    %v4154 = vadd.f32 %v3663, %v3243
    %v4155 = vadd.f32 %v3667, %v3244
    %v4156 = vadd.f32 %v3663, %v3245
    %v4157 = vadd.f32 %v3667, %v3246
    %v4158 = vadd.f32 %v3663, %v3247
    %v4159 = vadd.f32 %v3667, %v3248
    %v4160 = vadd.f32 %v3663, %v3249
    %v4161 = vadd.f32 %v3667, %v3250
    %v4162 = vadd.f32 %v3663, %v3251
    %v4163 = vadd.f32 %v3667, %v3252
    %v4164 = vadd.f32 %v3663, %v3253
    %v4165 = vadd.f32 %v3667, %v3254
    %v4166 = vadd.f32 %v3663, %v3255
    %v4167 = vadd.f32 %v3667, %v3256
    %v4168 = vadd.f32 %v3663, %v3257
    %v4169 = vadd.f32 %v3667, %v3258
    %v4170 = vadd.f32 %v3663, %v3259
    %v4171 = vadd.f32 %v3667, %v3260
    %v4172 = vadd.f32 %v3663, %v3261
    %v4173 = vadd.f32 %v3667, %v3262
    %v4174 = vadd.f32 %v3663, %v3263
    %v4175 = vadd.f32 %v3667, %v3264
    %v4176 = vadd.f32 %v3663, %v3265
    %v4177 = vadd.f32 %v3667, %v3266
    %v4178 = vadd.f32 %v3663, %v3267
    %v4179 = vadd.f32 %v3667, %v3268
    %v4180 = vadd.f32 %v3663, %v3269
    %v4181 = vadd.f32 %v3667, %v3270
    %v4182 = vadd.f32 %v3663, %v3271
    %v4183 = vadd.f32 %v3667, %v3272
    %v4184 = vadd.f32 %v3663, %v3273
    %v4185 = vadd.f32 %v3667, %v3274
    %v4186 = vadd.f32 %v3663, %v3275
    %v4187 = vadd.f32 %v3667, %v3276
    %v4188 = vadd.f32 %v3663, %v3277
    %v4189 = vadd.f32 %v3667, %v3278
    %v4190 = vadd.f32 %v3663, %v3279
    %v4191 = vadd.f32 %v3667, %v3280
    %v4192 = vadd.f32 %v3663, %v3281
    %v4193 = vadd.f32 %v3667, %v3282
    %v4194 = vadd.f32 %v3663, %v3283
    %v4195 = vadd.f32 %v3667, %v3284
    %v4196 = vadd.f32 %v3663, %v3285
    %v4197 = vadd.f32 %v3667, %v3286
    %v4198 = vadd.f32 %v3663, %v3287
    %v4199 = vadd.f32 %v3667, %v3288
    %v4200 = vadd.f32 %v3663, %v3289
    %v4201 = vadd.f32 %v3667, %v3290
    %v4202 = vadd.f32 %v3663, %v3291
    %v4203 = vadd.f32 %v3667, %v3292
    %v4204 = vadd.f32 %v3663, %v3293
    %v4205 = vadd.f32 %v3667, %v3294
    %v4206 = vadd.f32 %v3663, %v3295
    %v4207 = vadd.f32 %v3667, %v3296
    %v4208 = vadd.f32 %v3663, %v3297
    %v4209 = vadd.f32 %v3667, %v3298
    %v4210 = vadd.f32 %v3663, %v3299
    %v4211 = vadd.f32 %v3667, %v3300
    %v4212 = vadd.f32 %v3663, %v3301
    %v4213 = vadd.f32 %v3667, %v3302
    %v4214 = vadd.f32 %v3663, %v3303
    %v4215 = vadd.f32 %v3667, %v3304
    %v4216 = vadd.f32 %v3663, %v3305
    %v4217 = vadd.f32 %v3667, %v3306
    %v4218 = vadd.f32 %v3663, %v3307
    %v4219 = vadd.f32 %v3667, %v3308
    %v4220 = vadd.f32 %v3663, %v3309
    %v4221 = vadd.f32 %v3667, %v3310
    %v4222 = vadd.f32 %v3663, %v3311
    %v4223 = vadd.f32 %v3667, %v3312
    %v4224 = vadd.f32 %v3663, %v3313
    %v4225 = vadd.f32 %v3667, %v3314
    %v4226 = vadd.f32 %v3663, %v3315
    %v4227 = vadd.f32 %v3667, %v3316
    %v4228 = vadd.f32 %v3663, %v3317
    %v4229 = vadd.f32 %v3667, %v3318
    %v4230 = vadd.f32 %v3663, %v3319
    %v4231 = vadd.f32 %v3667, %v3320
    %v4232 = vadd.f32 %v3663, %v3321
    %v4233 = vadd.f32 %v3667, %v3322
    %v4234 = vadd.f32 %v3663, %v3323
    %v4235 = vadd.f32 %v3667, %v3324
    %v4236 = vadd.f32 %v3663, %v3325
    %v4237 = vadd.f32 %v3667, %v3326
    %v4238 = vadd.f32 %v3663, %v3327
    %v4239 = vadd.f32 %v3667, %v3328
    %v4240 = vadd.f32 %v3663, %v3329
    %v4241 = vadd.f32 %v3667, %v3330
    %v4242 = vadd.f32 %v3663, %v3331
    %v4243 = vadd.f32 %v3667, %v3332
    %v4244 = vadd.f32 %v3663, %v3333
    %v4245 = vadd.f32 %v3667, %v3334
    %v4246 = vadd.f32 %v3663, %v3335
    %v4247 = vadd.f32 %v3667, %v3336
    %v4248 = vadd.f32 %v3663, %v3337
    %v4249 = vadd.f32 %v3667, %v3338
    %v4250 = vadd.f32 %v3663, %v3339
    %v4251 = vadd.f32 %v3667, %v3340
    %v4252 = vadd.f32 %v3663, %v3341
    %v4253 = vadd.f32 %v3667, %v3342
    %v4254 = vadd.f32 %v3663, %v3343
    %v4255 = vadd.f32 %v3667, %v3344
    %v4256 = vadd.f32 %v3663, %v3345
    %v4257 = vadd.f32 %v3667, %v3346
    %v4258 = vadd.f32 %v3663, %v3347
    %v4259 = vadd.f32 %v3667, %v3348
    %v4260 = vadd.f32 %v3663, %v3349
    %v4261 = vadd.f32 %v3667, %v3350
    %v4262 = vadd.f32 %v3663, %v3351
    %v4263 = vadd.f32 %v3667, %v3352
    %v4264 = vadd.f32 %v3663, %v3353
    %v4265 = vadd.f32 %v3667, %v3354
    %v4266 = vadd.f32 %v3663, %v3355
    %v4267 = vadd.f32 %v3667, %v3356
    %v4268 = vadd.f32 %v3663, %v3357
    %v4269 = vadd.f32 %v3667, %v3358
    %v4270 = vadd.f32 %v3663, %v3359
    %v4271 = vadd.f32 %v3667, %v3360
    %v4272 = vadd.f32 %v3663, %v3361
    %v4273 = vadd.f32 %v3667, %v3362
    %v4274 = vadd.f32 %v3663, %v3363
    %v4275 = vadd.f32 %v3667, %v3364
    %v4276 = vadd.f32 %v3663, %v3365
    %v4277 = vadd.f32 %v3667, %v3366
    %v4278 = vadd.f32 %v3663, %v3367
    %v4279 = vadd.f32 %v3667, %v3368
    %v4280 = vadd.f32 %v3663, %v3369
    %v4281 = vadd.f32 %v3667, %v3370
    %v4282 = vadd.f32 %v3663, %v3371
    %v4283 = vadd.f32 %v3667, %v3372
    %v4284 = vadd.f32 %v3663, %v3373
    %v4285 = vadd.f32 %v3667, %v3374
    %v4286 = vadd.f32 %v3663, %v3375
    %v4287 = vadd.f32 %v3667, %v3376
    %v4288 = vadd.f32 %v3663, %v3377
    %v4289 = vadd.f32 %v3667, %v3378
    %v4290 = vadd.f32 %v3663, %v3379
    %v4291 = vadd.f32 %v3667, %v3380
    %v4292 = vadd.f32 %v3663, %v3381
    %v4293 = vadd.f32 %v3667, %v3382
    %v4294 = vadd.f32 %v3663, %v3383
    %v4295 = vadd.f32 %v3667, %v3384
    %v4296 = vadd.f32 %v3663, %v3385
    %v4297 = vadd.f32 %v3667, %v3386
    %v4298 = vadd.f32 %v3663, %v3387
    %v4299 = vadd.f32 %v3667, %v3388
    %v4300 = vadd.f32 %v3663, %v3389
    %v4301 = vadd.f32 %v3667, %v3390
    %v4302 = vadd.f32 %v3663, %v3391
    %v4303 = vadd.f32 %v3667, %v3392
    %v4304 = vadd.f32 %v3663, %v3393
    %v4305 = vadd.f32 %v3667, %v3394
    %v4306 = vadd.f32 %v3663, %v3395
    %v4307 = vadd.f32 %v3667, %v3396
    %v4308 = vadd.f32 %v3663, %v3397
    %v4309 = vadd.f32 %v3667, %v3398
    %v4310 = vadd.f32 %v3663, %v3399
    %v4311 = vadd.f32 %v3667, %v3400
    %v4312 = vadd.f32 %v3663, %v3401
    %v4313 = vadd.f32 %v3667, %v3402
    %v4314 = vadd.f32 %v3663, %v3403
    %v4315 = vadd.f32 %v3667, %v3404
    %v4316 = vadd.f32 %v3663, %v3405
    %v4317 = vadd.f32 %v3667, %v3406
    %v4318 = vadd.f32 %v3663, %v3407
    %v4319 = vadd.f32 %v3667, %v3408
    %v4320 = vadd.f32 %v3663, %v3409
    %v4321 = vadd.f32 %v3667, %v3410
    %v4322 = vadd.f32 %v3663, %v3411
    %v4323 = vadd.f32 %v3667, %v3412
    %v4324 = vadd.f32 %v3663, %v3413
    %v4325 = vadd.f32 %v3667, %v3414
    %v4326 = vadd.f32 %v3663, %v3415
    %v4327 = vadd.f32 %v3667, %v3416
    %v4328 = vadd.f32 %v3663, %v3417
    %v4329 = vadd.f32 %v3667, %v3418
    %v4330 = vadd.f32 %v3663, %v3419
    %v4331 = vadd.f32 %v3667, %v3420
    %v4332 = vadd.f32 %v3663, %v3421
    %v4333 = vadd.f32 %v3667, %v3422
    %v4334 = vadd.f32 %v3663, %v3423
    %v4335 = vadd.f32 %v3667, %v3424
    %v4336 = vadd.f32 %v3663, %v3425
    %v4337 = vadd.f32 %v3667, %v3426
    %v4338 = vadd.f32 %v3663, %v3427
    %v4339 = vadd.f32 %v3667, %v3428
    %v4340 = vadd.f32 %v3663, %v3429
    %v4341 = vadd.f32 %v3667, %v3430
    %v4342 = vadd.f32 %v3663, %v3431
    %v4343 = vadd.f32 %v3667, %v3432
    %v4344 = vadd.f32 %v3663, %v3433
    %v4345 = vadd.f32 %v3667, %v3434
    %v4346 = vadd.f32 %v3663, %v3435
    %v4347 = vadd.f32 %v3667, %v3436
    %v4348 = vadd.f32 %v3663, %v3437
    %v4349 = vadd.f32 %v3667, %v3438
    %v4350 = vadd.f32 %v3663, %v3439
    %v4351 = vadd.f32 %v3667, %v3440
    %v4352 = vadd.f32 %v3663, %v3441
    %v4353 = vadd.f32 %v3667, %v3442
    %v4354 = vadd.f32 %v3663, %v3443
    %v4355 = vadd.f32 %v3667, %v3444
    %v4356 = vadd.f32 %v3663, %v3445
    %v4357 = vadd.f32 %v3667, %v3446
    %v4358 = vadd.f32 %v3663, %v3447
    %v4359 = vadd.f32 %v3667, %v3448
    %v4360 = vadd.f32 %v3663, %v3449
    %v4361 = vadd.f32 %v3667, %v3450
    %v4362 = vadd.f32 %v3663, %v3451
    %v4363 = vadd.f32 %v3667, %v3452
    %v4364 = vadd.f32 %v3663, %v3453
    %v4365 = vadd.f32 %v3667, %v3454
    %v4366 = vadd.f32 %v3663, %v3455
    %v4367 = vadd.f32 %v3667, %v3456
    %v4368 = vadd.f32 %v3663, %v3457
    %v4369 = vadd.f32 %v3667, %v3458
    %v4370 = vadd.f32 %v3663, %v3459
    %v4371 = vadd.f32 %v3667, %v3460
    %v4372 = vadd.f32 %v3663, %v3461
    %v4373 = vadd.f32 %v3667, %v3462
    %v4374 = vadd.f32 %v3663, %v3463
    %v4375 = vadd.f32 %v3667, %v3464
    %v4376 = vadd.f32 %v3663, %v3465
    %v4377 = vadd.f32 %v3667, %v3466
    %v4378 = vadd.f32 %v3663, %v3467
    %v4379 = vadd.f32 %v3667, %v3468
    %v4380 = vadd.f32 %v3663, %v3469
    %v4381 = vadd.f32 %v3667, %v3470
    %v4382 = vadd.f32 %v3663, %v3471
    %v4383 = vadd.f32 %v3667, %v3472
    %v4384 = vadd.f32 %v3663, %v3473
    %v4385 = vadd.f32 %v3667, %v3474
    %v4386 = vadd.f32 %v3663, %v3475
    %v4387 = vadd.f32 %v3667, %v3476
    %v4388 = vadd.f32 %v3663, %v3477
    %v4389 = vadd.f32 %v3667, %v3478
    %v4390 = vadd.f32 %v3663, %v3479
    %v4391 = vadd.f32 %v3667, %v3480
    %v4392 = vadd.f32 %v3663, %v3481
    %v4393 = vadd.f32 %v3667, %v3482
    %v4394 = vadd.f32 %v3663, %v3483
    %v4395 = vadd.f32 %v3667, %v3484
    %v4396 = vadd.f32 %v3663, %v3485
    %v4397 = vadd.f32 %v3667, %v3486
    %v4398 = vadd.f32 %v3663, %v3487
    %v4399 = vadd.f32 %v3667, %v3488
    %v4400 = vadd.f32 %v3663, %v3489
    %v4401 = vadd.f32 %v3667, %v3490
    %v4402 = vadd.f32 %v3663, %v3491
    %v4403 = vadd.f32 %v3667, %v3492
    %v4404 = vadd.f32 %v3663, %v3493
    %v4405 = vadd.f32 %v3667, %v3494
    %v4406 = vadd.f32 %v3663, %v3495
    %v4407 = vadd.f32 %v3667, %v3496
    %v4408 = vadd.f32 %v3663, %v3497
    %v4409 = vadd.f32 %v3667, %v3498
    %v4410 = vadd.f32 %v3663, %v3499
    %v4411 = vadd.f32 %v3667, %v3500
    %v4412 = vadd.f32 %v3663, %v3501
    %v4413 = vadd.f32 %v3667, %v3502
    %v4414 = vadd.f32 %v3663, %v3503
    %v4415 = vadd.f32 %v3667, %v3504
    %v4416 = vadd.f32 %v3663, %v3505
    %v4417 = vadd.f32 %v3667, %v3506
    %v4418 = vadd.f32 %v3663, %v3507
    %v4419 = vadd.f32 %v3667, %v3508
    %v4420 = vadd.f32 %v3663, %v3509
    %v4421 = vadd.f32 %v3667, %v3510
    %v4422 = vadd.f32 %v3663, %v3511
    %v4423 = vadd.f32 %v3667, %v3512
    %v4424 = vadd.f32 %v3663, %v3513
    %v4425 = vadd.f32 %v3667, %v3514
    %v4426 = vadd.f32 %v3663, %v3515
    %v4427 = vadd.f32 %v3667, %v3516
    %v4428 = vadd.f32 %v3663, %v3517
    %v4429 = vadd.f32 %v3667, %v3518
    %v4430 = vadd.f32 %v3663, %v3519
    %v4431 = vadd.f32 %v3667, %v3520
    %v4432 = vadd.f32 %v3663, %v3521
    %v4433 = vadd.f32 %v3667, %v3522
    %v4434 = vadd.f32 %v3663, %v3523
    %v4435 = vadd.f32 %v3667, %v3524
    %v4436 = vadd.f32 %v3663, %v3525
    %v4437 = vadd.f32 %v3667, %v3526
    %v4438 = vadd.f32 %v3663, %v3527
    %v4439 = vadd.f32 %v3667, %v3528
    %v4440 = vadd.f32 %v3663, %v3529
    %v4441 = vadd.f32 %v3667, %v3530
    %v4442 = vadd.f32 %v3663, %v3531
    %v4443 = vadd.f32 %v3667, %v3532
    %v4444 = vadd.f32 %v3663, %v3533
    %v4445 = vadd.f32 %v3667, %v3534
    %v4446 = vadd.f32 %v3663, %v3535
    %v4447 = vadd.f32 %v3667, %v3536
    %v4448 = vadd.f32 %v3663, %v3537
    %v4449 = vadd.f32 %v3667, %v3538
    %v4450 = vadd.f32 %v3663, %v3539
    %v4451 = vadd.f32 %v3667, %v3540
    %v4452 = vadd.f32 %v3663, %v3541
    %v4453 = vadd.f32 %v3667, %v3542
    %v4454 = vadd.f32 %v3663, %v3543
    %v4455 = vadd.f32 %v3667, %v3544
    %v4456 = vadd.f32 %v3663, %v3545
    %v4457 = vadd.f32 %v3667, %v3546
    %v4458 = vadd.f32 %v3663, %v3547
    %v4459 = vadd.f32 %v3667, %v3548
    %v4460 = vadd.f32 %v3663, %v3549
    %v4461 = vadd.f32 %v3667, %v3550
    %v4462 = vadd.f32 %v3663, %v3551
    %v4463 = vadd.f32 %v3667, %v3552
    %v4464 = vadd.f32 %v3663, %v3553
    %v4465 = vadd.f32 %v3667, %v3554
    %v4466 = vadd.f32 %v3663, %v3555
    %v4467 = vadd.f32 %v3667, %v3556
    %v4468 = vadd.f32 %v3663, %v3557
    %v4469 = vadd.f32 %v3667, %v3558
    %v4470 = vadd.f32 %v3663, %v3559
    %v4471 = vadd.f32 %v3667, %v3560
    %v4472 = vadd.f32 %v3663, %v3561
    %v4473 = vadd.f32 %v3667, %v3562
    %v4474 = vadd.f32 %v3663, %v3563
    %v4475 = vadd.f32 %v3667, %v3564
    %v4476 = vadd.f32 %v3663, %v3565
    %v4477 = vadd.f32 %v3667, %v3566
    %v4478 = vadd.f32 %v3663, %v3567
    %v4479 = vadd.f32 %v3667, %v3568
    %v4480 = vadd.f32 %v3663, %v3569
    %v4481 = vadd.f32 %v3667, %v3570
    %v4482 = vadd.f32 %v3663, %v3571
    %v4483 = vadd.f32 %v3667, %v3572
    %v4484 = vadd.f32 %v3663, %v3573
    %v4485 = vadd.f32 %v3667, %v3574
    %v4486 = vadd.f32 %v3663, %v3575
    %v4487 = vadd.f32 %v3667, %v3576
    %v4488 = vadd.f32 %v3663, %v3577
    %v4489 = vadd.f32 %v3667, %v3578
    %v4490 = vadd.f32 %v3663, %v3579
    %v4491 = vadd.f32 %v3667, %v3580
    %v4492 = vadd.f32 %v3663, %v3581
    %v4493 = vadd.f32 %v3667, %v3582
    %v4494 = vadd.f32 %v3663, %v3583
    %v4495 = vadd.f32 %v3667, %v3584
    %v4496 = vadd.f32 %v3663, %v3585
    %v4497 = vadd.f32 %v3667, %v3586
    %v4498 = vadd.f32 %v3663, %v3587
    %v4499 = vadd.f32 %v3667, %v3588
    %v4500 = vadd.f32 %v3663, %v3589
    %v4501 = vadd.f32 %v3667, %v3590
    %v4502 = vadd.f32 %v3663, %v3591
    %v4503 = vadd.f32 %v3667, %v3592
    %v4504 = vadd.f32 %v3663, %v3593
    %v4505 = vadd.f32 %v3667, %v3594
    %v4506 = vadd.f32 %v3663, %v3595
    %v4507 = vadd.f32 %v3667, %v3596
    %v4508 = vadd.f32 %v3663, %v3597
    %v4509 = vadd.f32 %v3667, %v3598
    %v4510 = vadd.f32 %v3663, %v3599
    %v4511 = vadd.f32 %v3667, %v3600
    %v4512 = vadd.f32 %v3663, %v3601
    %v4513 = vadd.f32 %v3667, %v3602
    %v4514 = vadd.f32 %v3663, %v3603
    %v4515 = vadd.f32 %v3667, %v3604
    %v4516 = vadd.f32 %v3663, %v3605
    %v4517 = vadd.f32 %v3667, %v3606
    %v4518 = vadd.f32 %v3663, %v3607
    %v4519 = vadd.f32 %v3667, %v3608
    %v4520 = vadd.f32 %v3663, %v3609
    %v4521 = vadd.f32 %v3667, %v3610
    %v4522 = vadd.f32 %v3663, %v3611
    %v4523 = vadd.f32 %v3667, %v3612
    %v4524 = vadd.f32 %v3663, %v3613
    %v4525 = vadd.f32 %v3667, %v3614
    %v4526 = vadd.f32 %v3663, %v3615
    %v4527 = vadd.f32 %v3667, %v3616
    %v4528 = vadd.f32 %v3663, %v3617
    %v4529 = vadd.f32 %v3667, %v3618
    %v4530 = vadd.f32 %v3663, %v3619
    %v4531 = vadd.f32 %v3667, %v3620
    %v4532 = vadd.f32 %v3663, %v3621
    %v4533 = vadd.f32 %v3667, %v3622
    %v4534 = vadd.f32 %v3663, %v3623
    %v4535 = vadd.f32 %v3667, %v3624
    %v4536 = vadd.f32 %v3663, %v3625
    %v4537 = vadd.f32 %v3667, %v3626
    %v4538 = vadd.f32 %v3663, %v3627
    %v4539 = vadd.f32 %v3667, %v3628
    %v4540 = vadd.f32 %v3663, %v3629
    %v4541 = vadd.f32 %v3667, %v3630
    %v4542 = vadd.f32 %v3663, %v3631
    %v4543 = vadd.f32 %v3667, %v3632
    %v4544 = vadd.f32 %v3663, %v3633
    %v4545 = vadd.f32 %v3667, %v3634
    %v4546 = vadd.f32 %v3663, %v3635
    %v4547 = vadd.f32 %v3667, %v3636
    %v4548 = vadd.f32 %v3663, %v3637
    %v4549 = vadd.f32 %v3667, %v3638
    %v4550 = vadd.f32 %v3663, %v3639
    %v4551 = vadd.f32 %v3667, %v3640
    %v4552 = vadd.f32 %v3663, %v3641
    %v4553 = vadd.f32 %v3667, %v3642
    %v4554 = vadd.f32 %v3663, %v3643
    %v4555 = vadd.f32 %v3667, %v3644
    %v4556 = vadd.f32 %v3663, %v3645
    %v4557 = vadd.f32 %v3667, %v3646
    %v4558 = vadd.f32 %v3663, %v3647
    %v4559 = vadd.f32 %v3667, %v3648
    %v4560 = vadd.f32 %v3663, %v3649
    %v4561 = vadd.f32 %v3667, %v3650
    %v4562 = vadd.f32 %v3663, %v3651
    %v4563 = vadd.f32 %v3667, %v3652
    %v4564 = vadd.f32 %v3663, %v3653
    %v4565 = vadd.f32 %v3667, %v3654
    %v4566 = vadd.f32 %v3663, %v3655
    %v4567 = vadd.f32 %v3667, %v3656
    %v4568 = vadd.f32 %v3663, %v3657
    %v4569 = vadd.f32 %v3667, %v3658
    %4570 = vset.pattern.permute.xlu0 1
    %4571 = vperm.xlu0 %4570, %v38
    %v4572 = vpop.permute.xlu0 %4571
    %4574 = vset.pattern.permute.xlu0 1
    %4575 = vperm.xlu0 %4574, %v39
    %v4576 = vpop.permute.xlu0 %4575
    %4578 = vset.pattern.permute.xlu0 1
    %4579 = vperm.xlu0 %4578, %v40
    %v4580 = vpop.permute.xlu0 %4579
    %4582 = vset.pattern.permute.xlu0 1
    %4583 = vperm.xlu0 %4582, %v41
    %v4584 = vpop.permute.xlu0 %4583
    %4586 = vset.pattern.permute.xlu0 1
    %4587 = vperm.xlu0 %4586, %v42
    %v4588 = vpop.permute.xlu0 %4587
    %4590 = vset.pattern.permute.xlu0 1
    %4591 = vperm.xlu0 %4590, %v43
    %v4592 = vpop.permute.xlu0 %4591
    %4594 = vset.pattern.permute.xlu0 1
    %4595 = vperm.xlu0 %4594, %v44
    %v4596 = vpop.permute.xlu0 %4595
    %4598 = vset.pattern.permute.xlu0 1
    %4599 = vperm.xlu0 %4598, %v45
    %v4600 = vpop.permute.xlu0 %4599
    %4602 = vset.pattern.permute.xlu0 1
    %4603 = vperm.xlu0 %4602, %v46
    %v4604 = vpop.permute.xlu0 %4603
    %4606 = vset.pattern.permute.xlu0 1
    %4607 = vperm.xlu0 %4606, %v47
    %v4608 = vpop.permute.xlu0 %4607
    %4610 = vset.pattern.permute.xlu0 1
    %4611 = vperm.xlu0 %4610, %v48
    %v4612 = vpop.permute.xlu0 %4611
    %4614 = vset.pattern.permute.xlu0 1
    %4615 = vperm.xlu0 %4614, %v49
    %v4616 = vpop.permute.xlu0 %4615
    %4618 = vset.pattern.permute.xlu0 1
    %4619 = vperm.xlu0 %4618, %v50
    %v4620 = vpop.permute.xlu0 %4619
    %4622 = vset.pattern.permute.xlu0 1
    %4623 = vperm.xlu0 %4622, %v51
    %v4624 = vpop.permute.xlu0 %4623
    %4626 = vset.pattern.permute.xlu0 1
    %4627 = vperm.xlu0 %4626, %v52
    %v4628 = vpop.permute.xlu0 %4627
    %4630 = vset.pattern.permute.xlu0 1
    %4631 = vperm.xlu0 %4630, %v53
    %v4632 = vpop.permute.xlu0 %4631
    %4634 = vset.pattern.permute.xlu0 1
    %4635 = vperm.xlu0 %4634, %v54
    %v4636 = vpop.permute.xlu0 %4635
    %4638 = vset.pattern.permute.xlu0 1
    %4639 = vperm.xlu0 %4638, %v55
    %v4640 = vpop.permute.xlu0 %4639
    %4642 = vset.pattern.permute.xlu0 1
    %4643 = vperm.xlu0 %4642, %v56
    %v4644 = vpop.permute.xlu0 %4643
    %4646 = vset.pattern.permute.xlu0 1
    %4647 = vperm.xlu0 %4646, %v57
    %v4648 = vpop.permute.xlu0 %4647
    %4650 = vset.pattern.permute.xlu0 1
    %4651 = vperm.xlu0 %4650, %v58
    %v4652 = vpop.permute.xlu0 %4651
    %4654 = vset.pattern.permute.xlu0 1
    %4655 = vperm.xlu0 %4654, %v59
    %v4656 = vpop.permute.xlu0 %4655
    %4658 = vset.pattern.permute.xlu0 1
    %4659 = vperm.xlu0 %4658, %v60
    %v4660 = vpop.permute.xlu0 %4659
    %4662 = vset.pattern.permute.xlu0 1
    %4663 = vperm.xlu0 %4662, %v61
    %v4664 = vpop.permute.xlu0 %4663
    %4666 = vset.pattern.permute.xlu0 1
    %4667 = vperm.xlu0 %4666, %v62
    %v4668 = vpop.permute.xlu0 %4667
    %4670 = vset.pattern.permute.xlu0 1
    %4671 = vperm.xlu0 %4670, %v63
    %v4672 = vpop.permute.xlu0 %4671
    %4674 = vset.pattern.permute.xlu0 1
    %4675 = vperm.xlu0 %4674, %v64
    %v4676 = vpop.permute.xlu0 %4675
    %4678 = vset.pattern.permute.xlu0 1
    %4679 = vperm.xlu0 %4678, %v65
    %v4680 = vpop.permute.xlu0 %4679
    %4682 = vset.pattern.permute.xlu0 1
    %4683 = vperm.xlu0 %4682, %v66
    %v4684 = vpop.permute.xlu0 %4683
    %4686 = vset.pattern.permute.xlu0 1
    %4687 = vperm.xlu0 %4686, %v67
    %v4688 = vpop.permute.xlu0 %4687
    %4690 = vset.pattern.permute.xlu0 1
    %4691 = vperm.xlu0 %4690, %v68
    %v4692 = vpop.permute.xlu0 %4691
    %4694 = vset.pattern.permute.xlu0 1
    %4695 = vperm.xlu0 %4694, %v69
    %v4696 = vpop.permute.xlu0 %4695
    %4698 = vset.pattern.permute.xlu0 1
    %4699 = vperm.xlu0 %4698, %v70
    %v4700 = vpop.permute.xlu0 %4699
    %4702 = vset.pattern.permute.xlu0 1
    %4703 = vperm.xlu0 %4702, %v71
    %v4704 = vpop.permute.xlu0 %4703
    %4706 = vset.pattern.permute.xlu0 1
    %4707 = vperm.xlu0 %4706, %v72
    %v4708 = vpop.permute.xlu0 %4707
    %4710 = vset.pattern.permute.xlu0 1
    %4711 = vperm.xlu0 %4710, %v73
    %v4712 = vpop.permute.xlu0 %4711
    %4714 = vset.pattern.permute.xlu0 1
    %4715 = vperm.xlu0 %4714, %v74
    %v4716 = vpop.permute.xlu0 %4715
    %4718 = vset.pattern.permute.xlu0 1
    %4719 = vperm.xlu0 %4718, %v75
    %v4720 = vpop.permute.xlu0 %4719
    %4722 = vset.pattern.permute.xlu0 1
    %4723 = vperm.xlu0 %4722, %v76
    %v4724 = vpop.permute.xlu0 %4723
    %4726 = vset.pattern.permute.xlu0 1
    %4727 = vperm.xlu0 %4726, %v77
    %v4728 = vpop.permute.xlu0 %4727
    %4730 = vset.pattern.permute.xlu0 1
    %4731 = vperm.xlu0 %4730, %v78
    %v4732 = vpop.permute.xlu0 %4731
    %4734 = vset.pattern.permute.xlu0 1
    %4735 = vperm.xlu0 %4734, %v79
    %v4736 = vpop.permute.xlu0 %4735
    %4738 = vset.pattern.permute.xlu0 1
    %4739 = vperm.xlu0 %4738, %v80
    %v4740 = vpop.permute.xlu0 %4739
    %4742 = vset.pattern.permute.xlu0 1
    %4743 = vperm.xlu0 %4742, %v81
    %v4744 = vpop.permute.xlu0 %4743
    %4746 = vset.pattern.permute.xlu0 1
    %4747 = vperm.xlu0 %4746, %v82
    %v4748 = vpop.permute.xlu0 %4747
    %4750 = vset.pattern.permute.xlu0 1
    %4751 = vperm.xlu0 %4750, %v83
    %v4752 = vpop.permute.xlu0 %4751
    %4754 = vset.pattern.permute.xlu0 1
    %4755 = vperm.xlu0 %4754, %v84
    %v4756 = vpop.permute.xlu0 %4755
    %4758 = vset.pattern.permute.xlu0 1
    %4759 = vperm.xlu0 %4758, %v85
    %v4760 = vpop.permute.xlu0 %4759
    %4762 = vset.pattern.permute.xlu0 1
    %4763 = vperm.xlu0 %4762, %v86
    %v4764 = vpop.permute.xlu0 %4763
    %4766 = vset.pattern.permute.xlu0 1
    %4767 = vperm.xlu0 %4766, %v87
    %v4768 = vpop.permute.xlu0 %4767
    %4770 = vset.pattern.permute.xlu0 1
    %4771 = vperm.xlu0 %4770, %v88
    %v4772 = vpop.permute.xlu0 %4771
    %4774 = vset.pattern.permute.xlu0 1
    %4775 = vperm.xlu0 %4774, %v89
    %v4776 = vpop.permute.xlu0 %4775
    %4778 = vset.pattern.permute.xlu0 1
    %4779 = vperm.xlu0 %4778, %v90
    %v4780 = vpop.permute.xlu0 %4779
    %4782 = vset.pattern.permute.xlu0 1
    %4783 = vperm.xlu0 %4782, %v91
    %v4784 = vpop.permute.xlu0 %4783
    %4786 = vset.pattern.permute.xlu0 1
    %4787 = vperm.xlu0 %4786, %v92
    %v4788 = vpop.permute.xlu0 %4787
    %4790 = vset.pattern.permute.xlu0 1
    %4791 = vperm.xlu0 %4790, %v93
    %v4792 = vpop.permute.xlu0 %4791
    %4794 = vset.pattern.permute.xlu0 1
    %4795 = vperm.xlu0 %4794, %v94
    %v4796 = vpop.permute.xlu0 %4795
    %4798 = vset.pattern.permute.xlu0 1
    %4799 = vperm.xlu0 %4798, %v95
    %v4800 = vpop.permute.xlu0 %4799
    %4802 = vset.pattern.permute.xlu0 1
    %4803 = vperm.xlu0 %4802, %v96
    %v4804 = vpop.permute.xlu0 %4803
    %4806 = vset.pattern.permute.xlu0 1
    %4807 = vperm.xlu0 %4806, %v97
    %v4808 = vpop.permute.xlu0 %4807
    %4810 = vset.pattern.permute.xlu0 1
    %4811 = vperm.xlu0 %4810, %v98
    %v4812 = vpop.permute.xlu0 %4811
    %4814 = vset.pattern.permute.xlu0 1
    %4815 = vperm.xlu0 %4814, %v99
    %v4816 = vpop.permute.xlu0 %4815
    %4818 = vset.pattern.permute.xlu0 1
    %4819 = vperm.xlu0 %4818, %v100
    %v4820 = vpop.permute.xlu0 %4819
    %4822 = vset.pattern.permute.xlu0 1
    %4823 = vperm.xlu0 %4822, %v101
    %v4824 = vpop.permute.xlu0 %4823
    %4826 = vset.pattern.permute.xlu0 1
    %4827 = vperm.xlu0 %4826, %v102
    %v4828 = vpop.permute.xlu0 %4827
    %4830 = vset.pattern.permute.xlu0 1
    %4831 = vperm.xlu0 %4830, %v103
    %v4832 = vpop.permute.xlu0 %4831
    %4834 = vset.pattern.permute.xlu0 1
    %4835 = vperm.xlu0 %4834, %v104
    %v4836 = vpop.permute.xlu0 %4835
    %4838 = vset.pattern.permute.xlu0 1
    %4839 = vperm.xlu0 %4838, %v105
    %v4840 = vpop.permute.xlu0 %4839
    %4842 = vset.pattern.permute.xlu0 1
    %4843 = vperm.xlu0 %4842, %v106
    %v4844 = vpop.permute.xlu0 %4843
    %4846 = vset.pattern.permute.xlu0 1
    %4847 = vperm.xlu0 %4846, %v107
    %v4848 = vpop.permute.xlu0 %4847
    %4850 = vset.pattern.permute.xlu0 1
    %4851 = vperm.xlu0 %4850, %v108
    %v4852 = vpop.permute.xlu0 %4851
    %4854 = vset.pattern.permute.xlu0 1
    %4855 = vperm.xlu0 %4854, %v109
    %v4856 = vpop.permute.xlu0 %4855
    %4858 = vset.pattern.permute.xlu0 1
    %4859 = vperm.xlu0 %4858, %v110
    %v4860 = vpop.permute.xlu0 %4859
    %4862 = vset.pattern.permute.xlu0 1
    %4863 = vperm.xlu0 %4862, %v111
    %v4864 = vpop.permute.xlu0 %4863
    %4866 = vset.pattern.permute.xlu0 1
    %4867 = vperm.xlu0 %4866, %v112
    %v4868 = vpop.permute.xlu0 %4867
    %4870 = vset.pattern.permute.xlu0 1
    %4871 = vperm.xlu0 %4870, %v113
    %v4872 = vpop.permute.xlu0 %4871
    %4874 = vset.pattern.permute.xlu0 1
    %4875 = vperm.xlu0 %4874, %v114
    %v4876 = vpop.permute.xlu0 %4875
    %4878 = vset.pattern.permute.xlu0 1
    %4879 = vperm.xlu0 %4878, %v115
    %v4880 = vpop.permute.xlu0 %4879
    %4882 = vset.pattern.permute.xlu0 1
    %4883 = vperm.xlu0 %4882, %v116
    %v4884 = vpop.permute.xlu0 %4883
    %4886 = vset.pattern.permute.xlu0 1
    %4887 = vperm.xlu0 %4886, %v117
    %v4888 = vpop.permute.xlu0 %4887
    %4890 = vset.pattern.permute.xlu0 1
    %4891 = vperm.xlu0 %4890, %v118
    %v4892 = vpop.permute.xlu0 %4891
    %4894 = vset.pattern.permute.xlu0 1
    %4895 = vperm.xlu0 %4894, %v119
    %v4896 = vpop.permute.xlu0 %4895
    %4898 = vset.pattern.permute.xlu0 1
    %4899 = vperm.xlu0 %4898, %v120
    %v4900 = vpop.permute.xlu0 %4899
    %4902 = vset.pattern.permute.xlu0 1
    %4903 = vperm.xlu0 %4902, %v121
    %v4904 = vpop.permute.xlu0 %4903
    %4906 = vset.pattern.permute.xlu0 1
    %4907 = vperm.xlu0 %4906, %v122
    %v4908 = vpop.permute.xlu0 %4907
    %4910 = vset.pattern.permute.xlu0 1
    %4911 = vperm.xlu0 %4910, %v123
    %v4912 = vpop.permute.xlu0 %4911
    %4914 = vset.pattern.permute.xlu0 1
    %4915 = vperm.xlu0 %4914, %v124
    %v4916 = vpop.permute.xlu0 %4915
    %4918 = vset.pattern.permute.xlu0 1
    %4919 = vperm.xlu0 %4918, %v125
    %v4920 = vpop.permute.xlu0 %4919
    %4922 = vset.pattern.permute.xlu0 1
    %4923 = vperm.xlu0 %4922, %v126
    %v4924 = vpop.permute.xlu0 %4923
    %4926 = vset.pattern.permute.xlu0 1
    %4927 = vperm.xlu0 %4926, %v127
    %v4928 = vpop.permute.xlu0 %4927
    %4930 = vset.pattern.permute.xlu0 1
    %4931 = vperm.xlu0 %4930, %v128
    %v4932 = vpop.permute.xlu0 %4931
    %4934 = vset.pattern.permute.xlu0 1
    %4935 = vperm.xlu0 %4934, %v129
    %v4936 = vpop.permute.xlu0 %4935
    %4938 = vset.pattern.permute.xlu0 1
    %4939 = vperm.xlu0 %4938, %v130
    %v4940 = vpop.permute.xlu0 %4939
    %4942 = vset.pattern.permute.xlu0 1
    %4943 = vperm.xlu0 %4942, %v131
    %v4944 = vpop.permute.xlu0 %4943
    %4946 = vset.pattern.permute.xlu0 1
    %4947 = vperm.xlu0 %4946, %v132
    %v4948 = vpop.permute.xlu0 %4947
    %4950 = vset.pattern.permute.xlu0 1
    %4951 = vperm.xlu0 %4950, %v133
    %v4952 = vpop.permute.xlu0 %4951
    %4954 = vset.pattern.permute.xlu0 1
    %4955 = vperm.xlu0 %4954, %v134
    %v4956 = vpop.permute.xlu0 %4955
    %4958 = vset.pattern.permute.xlu0 1
    %4959 = vperm.xlu0 %4958, %v135
    %v4960 = vpop.permute.xlu0 %4959
    %4962 = vset.pattern.permute.xlu0 1
    %4963 = vperm.xlu0 %4962, %v136
    %v4964 = vpop.permute.xlu0 %4963
    %4966 = vset.pattern.permute.xlu0 1
    %4967 = vperm.xlu0 %4966, %v137
    %v4968 = vpop.permute.xlu0 %4967
    %4970 = vset.pattern.permute.xlu0 1
    %4971 = vperm.xlu0 %4970, %v138
    %v4972 = vpop.permute.xlu0 %4971
    %4974 = vset.pattern.permute.xlu0 1
    %4975 = vperm.xlu0 %4974, %v139
    %v4976 = vpop.permute.xlu0 %4975
    %4978 = vset.pattern.permute.xlu0 1
    %4979 = vperm.xlu0 %4978, %v140
    %v4980 = vpop.permute.xlu0 %4979
    %4982 = vset.pattern.permute.xlu0 1
    %4983 = vperm.xlu0 %4982, %v141
    %v4984 = vpop.permute.xlu0 %4983
    %4986 = vset.pattern.permute.xlu0 1
    %4987 = vperm.xlu0 %4986, %v142
    %v4988 = vpop.permute.xlu0 %4987
    %4990 = vset.pattern.permute.xlu0 1
    %4991 = vperm.xlu0 %4990, %v143
    %v4992 = vpop.permute.xlu0 %4991
    %4994 = vset.pattern.permute.xlu0 1
    %4995 = vperm.xlu0 %4994, %v144
    %v4996 = vpop.permute.xlu0 %4995
    %4998 = vset.pattern.permute.xlu0 1
    %4999 = vperm.xlu0 %4998, %v145
    %v5000 = vpop.permute.xlu0 %4999
    %5002 = vset.pattern.permute.xlu0 1
    %5003 = vperm.xlu0 %5002, %v146
    %v5004 = vpop.permute.xlu0 %5003
    %5006 = vset.pattern.permute.xlu0 1
    %5007 = vperm.xlu0 %5006, %v147
    %v5008 = vpop.permute.xlu0 %5007
    %5010 = vset.pattern.permute.xlu0 1
    %5011 = vperm.xlu0 %5010, %v148
    %v5012 = vpop.permute.xlu0 %5011
    %5014 = vset.pattern.permute.xlu0 1
    %5015 = vperm.xlu0 %5014, %v149
    %v5016 = vpop.permute.xlu0 %5015
    %5018 = vset.pattern.permute.xlu0 1
    %5019 = vperm.xlu0 %5018, %v150
    %v5020 = vpop.permute.xlu0 %5019
    %5022 = vset.pattern.permute.xlu0 1
    %5023 = vperm.xlu0 %5022, %v151
    %v5024 = vpop.permute.xlu0 %5023
    %5026 = vset.pattern.permute.xlu0 1
    %5027 = vperm.xlu0 %5026, %v152
    %v5028 = vpop.permute.xlu0 %5027
    %5030 = vset.pattern.permute.xlu0 1
    %5031 = vperm.xlu0 %5030, %v153
    %v5032 = vpop.permute.xlu0 %5031
    %5034 = vset.pattern.permute.xlu0 1
    %5035 = vperm.xlu0 %5034, %v154
    %v5036 = vpop.permute.xlu0 %5035
    %5038 = vset.pattern.permute.xlu0 1
    %5039 = vperm.xlu0 %5038, %v155
    %v5040 = vpop.permute.xlu0 %5039
    %5042 = vset.pattern.permute.xlu0 1
    %5043 = vperm.xlu0 %5042, %v156
    %v5044 = vpop.permute.xlu0 %5043
    %5046 = vset.pattern.permute.xlu0 1
    %5047 = vperm.xlu0 %5046, %v157
    %v5048 = vpop.permute.xlu0 %5047
    %5050 = vset.pattern.permute.xlu0 1
    %5051 = vperm.xlu0 %5050, %v158
    %v5052 = vpop.permute.xlu0 %5051
    %5054 = vset.pattern.permute.xlu0 1
    %5055 = vperm.xlu0 %5054, %v159
    %v5056 = vpop.permute.xlu0 %5055
    %5058 = vset.pattern.permute.xlu0 1
    %5059 = vperm.xlu0 %5058, %v160
    %v5060 = vpop.permute.xlu0 %5059
    %5062 = vset.pattern.permute.xlu0 1
    %5063 = vperm.xlu0 %5062, %v161
    %v5064 = vpop.permute.xlu0 %5063
    %5066 = vset.pattern.permute.xlu0 1
    %5067 = vperm.xlu0 %5066, %v162
    %v5068 = vpop.permute.xlu0 %5067
    %5070 = vset.pattern.permute.xlu0 1
    %5071 = vperm.xlu0 %5070, %v163
    %v5072 = vpop.permute.xlu0 %5071
    %5074 = vset.pattern.permute.xlu0 1
    %5075 = vperm.xlu0 %5074, %v164
    %v5076 = vpop.permute.xlu0 %5075
    %5078 = vset.pattern.permute.xlu0 1
    %5079 = vperm.xlu0 %5078, %v165
    %v5080 = vpop.permute.xlu0 %5079
    %5082 = vset.pattern.permute.xlu0 1
    %5083 = vperm.xlu0 %5082, %v166
    %v5084 = vpop.permute.xlu0 %5083
    %5086 = vset.pattern.permute.xlu0 1
    %5087 = vperm.xlu0 %5086, %v167
    %v5088 = vpop.permute.xlu0 %5087
    %5090 = vset.pattern.permute.xlu0 1
    %5091 = vperm.xlu0 %5090, %v168
    %v5092 = vpop.permute.xlu0 %5091
    %5094 = vset.pattern.permute.xlu0 1
    %5095 = vperm.xlu0 %5094, %v169
    %v5096 = vpop.permute.xlu0 %5095
    %5098 = vset.pattern.permute.xlu0 1
    %5099 = vperm.xlu0 %5098, %v170
    %v5100 = vpop.permute.xlu0 %5099
    %5102 = vset.pattern.permute.xlu0 1
    %5103 = vperm.xlu0 %5102, %v171
    %v5104 = vpop.permute.xlu0 %5103
    %5106 = vset.pattern.permute.xlu0 1
    %5107 = vperm.xlu0 %5106, %v172
    %v5108 = vpop.permute.xlu0 %5107
    %5110 = vset.pattern.permute.xlu0 1
    %5111 = vperm.xlu0 %5110, %v173
    %v5112 = vpop.permute.xlu0 %5111
    %5114 = vset.pattern.permute.xlu0 1
    %5115 = vperm.xlu0 %5114, %v174
    %v5116 = vpop.permute.xlu0 %5115
    %5118 = vset.pattern.permute.xlu0 1
    %5119 = vperm.xlu0 %5118, %v175
    %v5120 = vpop.permute.xlu0 %5119
    %5122 = vset.pattern.permute.xlu0 1
    %5123 = vperm.xlu0 %5122, %v176
    %v5124 = vpop.permute.xlu0 %5123
    %5126 = vset.pattern.permute.xlu0 1
    %5127 = vperm.xlu0 %5126, %v177
    %v5128 = vpop.permute.xlu0 %5127
    %5130 = vset.pattern.permute.xlu0 1
    %5131 = vperm.xlu0 %5130, %v178
    %v5132 = vpop.permute.xlu0 %5131
    %5134 = vset.pattern.permute.xlu0 1
    %5135 = vperm.xlu0 %5134, %v179
    %v5136 = vpop.permute.xlu0 %5135
    %5138 = vset.pattern.permute.xlu0 1
    %5139 = vperm.xlu0 %5138, %v180
    %v5140 = vpop.permute.xlu0 %5139
    %5142 = vset.pattern.permute.xlu0 1
    %5143 = vperm.xlu0 %5142, %v181
    %v5144 = vpop.permute.xlu0 %5143
    %5146 = vset.pattern.permute.xlu0 1
    %5147 = vperm.xlu0 %5146, %v182
    %v5148 = vpop.permute.xlu0 %5147
    %5150 = vset.pattern.permute.xlu0 1
    %5151 = vperm.xlu0 %5150, %v183
    %v5152 = vpop.permute.xlu0 %5151
    %5154 = vset.pattern.permute.xlu0 1
    %5155 = vperm.xlu0 %5154, %v184
    %v5156 = vpop.permute.xlu0 %5155
    %5158 = vset.pattern.permute.xlu0 1
    %5159 = vperm.xlu0 %5158, %v185
    %v5160 = vpop.permute.xlu0 %5159
    %5162 = vset.pattern.permute.xlu0 1
    %5163 = vperm.xlu0 %5162, %v186
    %v5164 = vpop.permute.xlu0 %5163
    %5166 = vset.pattern.permute.xlu0 1
    %5167 = vperm.xlu0 %5166, %v187
    %v5168 = vpop.permute.xlu0 %5167
    %5170 = vset.pattern.permute.xlu0 1
    %5171 = vperm.xlu0 %5170, %v188
    %v5172 = vpop.permute.xlu0 %5171
    %5174 = vset.pattern.permute.xlu0 1
    %5175 = vperm.xlu0 %5174, %v189
    %v5176 = vpop.permute.xlu0 %5175
    %5178 = vset.pattern.permute.xlu0 1
    %5179 = vperm.xlu0 %5178, %v190
    %v5180 = vpop.permute.xlu0 %5179
    %5182 = vset.pattern.permute.xlu0 1
    %5183 = vperm.xlu0 %5182, %v191
    %v5184 = vpop.permute.xlu0 %5183
    %5186 = vset.pattern.permute.xlu0 1
    %5187 = vperm.xlu0 %5186, %v192
    %v5188 = vpop.permute.xlu0 %5187
    %5190 = vset.pattern.permute.xlu0 1
    %5191 = vperm.xlu0 %5190, %v193
    %v5192 = vpop.permute.xlu0 %5191
    %5194 = vset.pattern.permute.xlu0 1
    %5195 = vperm.xlu0 %5194, %v194
    %v5196 = vpop.permute.xlu0 %5195
    %5198 = vset.pattern.permute.xlu0 1
    %5199 = vperm.xlu0 %5198, %v195
    %v5200 = vpop.permute.xlu0 %5199
    %5202 = vset.pattern.permute.xlu0 1
    %5203 = vperm.xlu0 %5202, %v196
    %v5204 = vpop.permute.xlu0 %5203
    %5206 = vset.pattern.permute.xlu0 1
    %5207 = vperm.xlu0 %5206, %v197
    %v5208 = vpop.permute.xlu0 %5207
    %5210 = vset.pattern.permute.xlu0 1
    %5211 = vperm.xlu0 %5210, %v198
    %v5212 = vpop.permute.xlu0 %5211
    %5214 = vset.pattern.permute.xlu0 1
    %5215 = vperm.xlu0 %5214, %v199
    %v5216 = vpop.permute.xlu0 %5215
    %5218 = vset.pattern.permute.xlu0 1
    %5219 = vperm.xlu0 %5218, %v200
    %v5220 = vpop.permute.xlu0 %5219
    %5222 = vset.pattern.permute.xlu0 1
    %5223 = vperm.xlu0 %5222, %v201
    %v5224 = vpop.permute.xlu0 %5223
    %5226 = vset.pattern.permute.xlu0 1
    %5227 = vperm.xlu0 %5226, %v202
    %v5228 = vpop.permute.xlu0 %5227
    %5230 = vset.pattern.permute.xlu0 1
    %5231 = vperm.xlu0 %5230, %v203
    %v5232 = vpop.permute.xlu0 %5231
    %5234 = vset.pattern.permute.xlu0 1
    %5235 = vperm.xlu0 %5234, %v204
    %v5236 = vpop.permute.xlu0 %5235
    %5238 = vset.pattern.permute.xlu0 1
    %5239 = vperm.xlu0 %5238, %v205
    %v5240 = vpop.permute.xlu0 %5239
    %5242 = vset.pattern.permute.xlu0 1
    %5243 = vperm.xlu0 %5242, %v206
    %v5244 = vpop.permute.xlu0 %5243
    %5246 = vset.pattern.permute.xlu0 1
    %5247 = vperm.xlu0 %5246, %v207
    %v5248 = vpop.permute.xlu0 %5247
    %5250 = vset.pattern.permute.xlu0 1
    %5251 = vperm.xlu0 %5250, %v208
    %v5252 = vpop.permute.xlu0 %5251
    %5254 = vset.pattern.permute.xlu0 1
    %5255 = vperm.xlu0 %5254, %v209
    %v5256 = vpop.permute.xlu0 %5255
    %5258 = vset.pattern.permute.xlu0 1
    %5259 = vperm.xlu0 %5258, %v210
    %v5260 = vpop.permute.xlu0 %5259
    %5262 = vset.pattern.permute.xlu0 1
    %5263 = vperm.xlu0 %5262, %v211
    %v5264 = vpop.permute.xlu0 %5263
    %5266 = vset.pattern.permute.xlu0 1
    %5267 = vperm.xlu0 %5266, %v212
    %v5268 = vpop.permute.xlu0 %5267
    %5270 = vset.pattern.permute.xlu0 1
    %5271 = vperm.xlu0 %5270, %v213
    %v5272 = vpop.permute.xlu0 %5271
    %5274 = vset.pattern.permute.xlu0 1
    %5275 = vperm.xlu0 %5274, %v214
    %v5276 = vpop.permute.xlu0 %5275
    %5278 = vset.pattern.permute.xlu0 1
    %5279 = vperm.xlu0 %5278, %v215
    %v5280 = vpop.permute.xlu0 %5279
    %5282 = vset.pattern.permute.xlu0 1
    %5283 = vperm.xlu0 %5282, %v216
    %v5284 = vpop.permute.xlu0 %5283
    %5286 = vset.pattern.permute.xlu0 1
    %5287 = vperm.xlu0 %5286, %v217
    %v5288 = vpop.permute.xlu0 %5287
    %5290 = vset.pattern.permute.xlu0 1
    %5291 = vperm.xlu0 %5290, %v218
    %v5292 = vpop.permute.xlu0 %5291
    %5294 = vset.pattern.permute.xlu0 1
    %5295 = vperm.xlu0 %5294, %v219
    %v5296 = vpop.permute.xlu0 %5295
    %5298 = vset.pattern.permute.xlu0 1
    %5299 = vperm.xlu0 %5298, %v220
    %v5300 = vpop.permute.xlu0 %5299
    %5302 = vset.pattern.permute.xlu0 1
    %5303 = vperm.xlu0 %5302, %v221
    %v5304 = vpop.permute.xlu0 %5303
    %5306 = vset.pattern.permute.xlu0 1
    %5307 = vperm.xlu0 %5306, %v222
    %v5308 = vpop.permute.xlu0 %5307
    %5310 = vset.pattern.permute.xlu0 1
    %5311 = vperm.xlu0 %5310, %v223
    %v5312 = vpop.permute.xlu0 %5311
    %5314 = vset.pattern.permute.xlu0 1
    %5315 = vperm.xlu0 %5314, %v224
    %v5316 = vpop.permute.xlu0 %5315
    %5318 = vset.pattern.permute.xlu0 1
    %5319 = vperm.xlu0 %5318, %v225
    %v5320 = vpop.permute.xlu0 %5319
    %5322 = vset.pattern.permute.xlu0 1
    %5323 = vperm.xlu0 %5322, %v226
    %v5324 = vpop.permute.xlu0 %5323
    %5326 = vset.pattern.permute.xlu0 1
    %5327 = vperm.xlu0 %5326, %v227
    %v5328 = vpop.permute.xlu0 %5327
    %5330 = vset.pattern.permute.xlu0 1
    %5331 = vperm.xlu0 %5330, %v228
    %v5332 = vpop.permute.xlu0 %5331
    %5334 = vset.pattern.permute.xlu0 1
    %5335 = vperm.xlu0 %5334, %v229
    %v5336 = vpop.permute.xlu0 %5335
    %5338 = vset.pattern.permute.xlu0 1
    %5339 = vperm.xlu0 %5338, %v230
    %v5340 = vpop.permute.xlu0 %5339
    %5342 = vset.pattern.permute.xlu0 1
    %5343 = vperm.xlu0 %5342, %v231
    %v5344 = vpop.permute.xlu0 %5343
    %5346 = vset.pattern.permute.xlu0 1
    %5347 = vperm.xlu0 %5346, %v232
    %v5348 = vpop.permute.xlu0 %5347
    %5350 = vset.pattern.permute.xlu0 1
    %5351 = vperm.xlu0 %5350, %v233
    %v5352 = vpop.permute.xlu0 %5351
    %5354 = vset.pattern.permute.xlu0 1
    %5355 = vperm.xlu0 %5354, %v234
    %v5356 = vpop.permute.xlu0 %5355
    %5358 = vset.pattern.permute.xlu0 1
    %5359 = vperm.xlu0 %5358, %v235
    %v5360 = vpop.permute.xlu0 %5359
    %5362 = vset.pattern.permute.xlu0 1
    %5363 = vperm.xlu0 %5362, %v236
    %v5364 = vpop.permute.xlu0 %5363
    %5366 = vset.pattern.permute.xlu0 1
    %5367 = vperm.xlu0 %5366, %v237
    %v5368 = vpop.permute.xlu0 %5367
    %5370 = vset.pattern.permute.xlu0 1
    %5371 = vperm.xlu0 %5370, %v238
    %v5372 = vpop.permute.xlu0 %5371
    %5374 = vset.pattern.permute.xlu0 1
    %5375 = vperm.xlu0 %5374, %v239
    %v5376 = vpop.permute.xlu0 %5375
    %5378 = vset.pattern.permute.xlu0 1
    %5379 = vperm.xlu0 %5378, %v240
    %v5380 = vpop.permute.xlu0 %5379
    %5382 = vset.pattern.permute.xlu0 1
    %5383 = vperm.xlu0 %5382, %v241
    %v5384 = vpop.permute.xlu0 %5383
    %5386 = vset.pattern.permute.xlu0 1
    %5387 = vperm.xlu0 %5386, %v242
    %v5388 = vpop.permute.xlu0 %5387
    %5390 = vset.pattern.permute.xlu0 1
    %5391 = vperm.xlu0 %5390, %v243
    %v5392 = vpop.permute.xlu0 %5391
    %5394 = vset.pattern.permute.xlu0 1
    %5395 = vperm.xlu0 %5394, %v244
    %v5396 = vpop.permute.xlu0 %5395
    %5398 = vset.pattern.permute.xlu0 1
    %5399 = vperm.xlu0 %5398, %v245
    %v5400 = vpop.permute.xlu0 %5399
    %5402 = vset.pattern.permute.xlu0 1
    %5403 = vperm.xlu0 %5402, %v246
    %v5404 = vpop.permute.xlu0 %5403
    %5406 = vset.pattern.permute.xlu0 1
    %5407 = vperm.xlu0 %5406, %v247
    %v5408 = vpop.permute.xlu0 %5407
    %5410 = vset.pattern.permute.xlu0 1
    %5411 = vperm.xlu0 %5410, %v248
    %v5412 = vpop.permute.xlu0 %5411
    %5414 = vset.pattern.permute.xlu0 1
    %5415 = vperm.xlu0 %5414, %v249
    %v5416 = vpop.permute.xlu0 %5415
    %5418 = vset.pattern.permute.xlu0 1
    %5419 = vperm.xlu0 %5418, %v250
    %v5420 = vpop.permute.xlu0 %5419
    %5422 = vset.pattern.permute.xlu0 1
    %5423 = vperm.xlu0 %5422, %v251
    %v5424 = vpop.permute.xlu0 %5423
    %5426 = vset.pattern.permute.xlu0 1
    %5427 = vperm.xlu0 %5426, %v252
    %v5428 = vpop.permute.xlu0 %5427
    %5430 = vset.pattern.permute.xlu0 1
    %5431 = vperm.xlu0 %5430, %v253
    %v5432 = vpop.permute.xlu0 %5431
    %5434 = vset.pattern.permute.xlu0 1
    %5435 = vperm.xlu0 %5434, %v254
    %v5436 = vpop.permute.xlu0 %5435
    %5438 = vset.pattern.permute.xlu0 1
    %5439 = vperm.xlu0 %5438, %v255
    %v5440 = vpop.permute.xlu0 %5439
    %5442 = vset.pattern.permute.xlu0 1
    %5443 = vperm.xlu0 %5442, %v256
    %v5444 = vpop.permute.xlu0 %5443
    %5446 = vset.pattern.permute.xlu0 1
    %5447 = vperm.xlu0 %5446, %v257
    %v5448 = vpop.permute.xlu0 %5447
    %5450 = vset.pattern.permute.xlu0 1
    %5451 = vperm.xlu0 %5450, %v258
    %v5452 = vpop.permute.xlu0 %5451
    %5454 = vset.pattern.permute.xlu0 1
    %5455 = vperm.xlu0 %5454, %v259
    %v5456 = vpop.permute.xlu0 %5455
    %5458 = vset.pattern.permute.xlu0 1
    %5459 = vperm.xlu0 %5458, %v260
    %v5460 = vpop.permute.xlu0 %5459
    %5462 = vset.pattern.permute.xlu0 1
    %5463 = vperm.xlu0 %5462, %v261
    %v5464 = vpop.permute.xlu0 %5463
    %5466 = vset.pattern.permute.xlu0 1
    %5467 = vperm.xlu0 %5466, %v262
    %v5468 = vpop.permute.xlu0 %5467
    %5470 = vset.pattern.permute.xlu0 1
    %5471 = vperm.xlu0 %5470, %v263
    %v5472 = vpop.permute.xlu0 %5471
    %5474 = vset.pattern.permute.xlu0 1
    %5475 = vperm.xlu0 %5474, %v264
    %v5476 = vpop.permute.xlu0 %5475
    %5478 = vset.pattern.permute.xlu0 1
    %5479 = vperm.xlu0 %5478, %v265
    %v5480 = vpop.permute.xlu0 %5479
    %5482 = vset.pattern.permute.xlu0 1
    %5483 = vperm.xlu0 %5482, %v266
    %v5484 = vpop.permute.xlu0 %5483
    %5486 = vset.pattern.permute.xlu0 1
    %5487 = vperm.xlu0 %5486, %v267
    %v5488 = vpop.permute.xlu0 %5487
    %5490 = vset.pattern.permute.xlu0 1
    %5491 = vperm.xlu0 %5490, %v268
    %v5492 = vpop.permute.xlu0 %5491
    %5494 = vset.pattern.permute.xlu0 1
    %5495 = vperm.xlu0 %5494, %v269
    %v5496 = vpop.permute.xlu0 %5495
    %5498 = vset.pattern.permute.xlu0 1
    %5499 = vperm.xlu0 %5498, %v270
    %v5500 = vpop.permute.xlu0 %5499
    %5502 = vset.pattern.permute.xlu0 1
    %5503 = vperm.xlu0 %5502, %v271
    %v5504 = vpop.permute.xlu0 %5503
    %5506 = vset.pattern.permute.xlu0 1
    %5507 = vperm.xlu0 %5506, %v272
    %v5508 = vpop.permute.xlu0 %5507
    %5510 = vset.pattern.permute.xlu0 1
    %5511 = vperm.xlu0 %5510, %v273
    %v5512 = vpop.permute.xlu0 %5511
    %5514 = vset.pattern.permute.xlu0 1
    %5515 = vperm.xlu0 %5514, %v274
    %v5516 = vpop.permute.xlu0 %5515
    %5518 = vset.pattern.permute.xlu0 1
    %5519 = vperm.xlu0 %5518, %v275
    %v5520 = vpop.permute.xlu0 %5519
    %5522 = vset.pattern.permute.xlu0 1
    %5523 = vperm.xlu0 %5522, %v276
    %v5524 = vpop.permute.xlu0 %5523
    %5526 = vset.pattern.permute.xlu0 1
    %5527 = vperm.xlu0 %5526, %v277
    %v5528 = vpop.permute.xlu0 %5527
    %5530 = vset.pattern.permute.xlu0 1
    %5531 = vperm.xlu0 %5530, %v278
    %v5532 = vpop.permute.xlu0 %5531
    %5534 = vset.pattern.permute.xlu0 1
    %5535 = vperm.xlu0 %5534, %v279
    %v5536 = vpop.permute.xlu0 %5535
    %5538 = vset.pattern.permute.xlu0 1
    %5539 = vperm.xlu0 %5538, %v280
    %v5540 = vpop.permute.xlu0 %5539
    %5542 = vset.pattern.permute.xlu0 1
    %5543 = vperm.xlu0 %5542, %v281
    %v5544 = vpop.permute.xlu0 %5543
    %5546 = vset.pattern.permute.xlu0 1
    %5547 = vperm.xlu0 %5546, %v282
    %v5548 = vpop.permute.xlu0 %5547
    %5550 = vset.pattern.permute.xlu0 1
    %5551 = vperm.xlu0 %5550, %v283
    %v5552 = vpop.permute.xlu0 %5551
    %5554 = vset.pattern.permute.xlu0 1
    %5555 = vperm.xlu0 %5554, %v284
    %v5556 = vpop.permute.xlu0 %5555
    %5558 = vset.pattern.permute.xlu0 1
    %5559 = vperm.xlu0 %5558, %v285
    %v5560 = vpop.permute.xlu0 %5559
    %5562 = vset.pattern.permute.xlu0 1
    %5563 = vperm.xlu0 %5562, %v286
    %v5564 = vpop.permute.xlu0 %5563
    %5566 = vset.pattern.permute.xlu0 1
    %5567 = vperm.xlu0 %5566, %v287
    %v5568 = vpop.permute.xlu0 %5567
    %5570 = vset.pattern.permute.xlu0 1
    %5571 = vperm.xlu0 %5570, %v288
    %v5572 = vpop.permute.xlu0 %5571
    %5574 = vset.pattern.permute.xlu0 1
    %5575 = vperm.xlu0 %5574, %v289
    %v5576 = vpop.permute.xlu0 %5575
    %5578 = vset.pattern.permute.xlu0 1
    %5579 = vperm.xlu0 %5578, %v290
    %v5580 = vpop.permute.xlu0 %5579
    %5582 = vset.pattern.permute.xlu0 1
    %5583 = vperm.xlu0 %5582, %v291
    %v5584 = vpop.permute.xlu0 %5583
    %5586 = vset.pattern.permute.xlu0 1
    %5587 = vperm.xlu0 %5586, %v292
    %v5588 = vpop.permute.xlu0 %5587
    %5590 = vset.pattern.permute.xlu0 1
    %5591 = vperm.xlu0 %5590, %v293
    %v5592 = vpop.permute.xlu0 %5591
    %5594 = vset.pattern.permute.xlu0 1
    %5595 = vperm.xlu0 %5594, %v294
    %v5596 = vpop.permute.xlu0 %5595
    %5598 = vset.pattern.permute.xlu0 1
    %5599 = vperm.xlu0 %5598, %v295
    %v5600 = vpop.permute.xlu0 %5599
    %5602 = vset.pattern.permute.xlu0 1
    %5603 = vperm.xlu0 %5602, %v296
    %v5604 = vpop.permute.xlu0 %5603
    %5606 = vset.pattern.permute.xlu0 1
    %5607 = vperm.xlu0 %5606, %v297
    %v5608 = vpop.permute.xlu0 %5607
    %5610 = vset.pattern.permute.xlu0 1
    %5611 = vperm.xlu0 %5610, %v298
    %v5612 = vpop.permute.xlu0 %5611
    %5614 = vset.pattern.permute.xlu0 1
    %5615 = vperm.xlu0 %5614, %v299
    %v5616 = vpop.permute.xlu0 %5615
    %5618 = vset.pattern.permute.xlu0 1
    %5619 = vperm.xlu0 %5618, %v300
    %v5620 = vpop.permute.xlu0 %5619
    %5622 = vset.pattern.permute.xlu0 1
    %5623 = vperm.xlu0 %5622, %v301
    %v5624 = vpop.permute.xlu0 %5623
    %5626 = vset.pattern.permute.xlu0 1
    %5627 = vperm.xlu0 %5626, %v302
    %v5628 = vpop.permute.xlu0 %5627
    %5630 = vset.pattern.permute.xlu0 1
    %5631 = vperm.xlu0 %5630, %v303
    %v5632 = vpop.permute.xlu0 %5631
    %5634 = vset.pattern.permute.xlu0 1
    %5635 = vperm.xlu0 %5634, %v304
    %v5636 = vpop.permute.xlu0 %5635
    %5638 = vset.pattern.permute.xlu0 1
    %5639 = vperm.xlu0 %5638, %v305
    %v5640 = vpop.permute.xlu0 %5639
    %5642 = vset.pattern.permute.xlu0 1
    %5643 = vperm.xlu0 %5642, %v306
    %v5644 = vpop.permute.xlu0 %5643
    %5646 = vset.pattern.permute.xlu0 1
    %5647 = vperm.xlu0 %5646, %v307
    %v5648 = vpop.permute.xlu0 %5647
    %5650 = vset.pattern.permute.xlu0 1
    %5651 = vperm.xlu0 %5650, %v308
    %v5652 = vpop.permute.xlu0 %5651
    %5654 = vset.pattern.permute.xlu0 1
    %5655 = vperm.xlu0 %5654, %v309
    %v5656 = vpop.permute.xlu0 %5655
    %5658 = vset.pattern.permute.xlu0 1
    %5659 = vperm.xlu0 %5658, %v310
    %v5660 = vpop.permute.xlu0 %5659
    %5662 = vset.pattern.permute.xlu0 1
    %5663 = vperm.xlu0 %5662, %v311
    %v5664 = vpop.permute.xlu0 %5663
    %5666 = vset.pattern.permute.xlu0 1
    %5667 = vperm.xlu0 %5666, %v312
    %v5668 = vpop.permute.xlu0 %5667
    %5670 = vset.pattern.permute.xlu0 1
    %5671 = vperm.xlu0 %5670, %v313
    %v5672 = vpop.permute.xlu0 %5671
    %5674 = vset.pattern.permute.xlu0 1
    %5675 = vperm.xlu0 %5674, %v314
    %v5676 = vpop.permute.xlu0 %5675
    %5678 = vset.pattern.permute.xlu0 1
    %5679 = vperm.xlu0 %5678, %v315
    %v5680 = vpop.permute.xlu0 %5679
    %5682 = vset.pattern.permute.xlu0 1
    %5683 = vperm.xlu0 %5682, %v316
    %v5684 = vpop.permute.xlu0 %5683
    %5686 = vset.pattern.permute.xlu0 1
    %5687 = vperm.xlu0 %5686, %v317
    %v5688 = vpop.permute.xlu0 %5687
    %5690 = vset.pattern.permute.xlu0 1
    %5691 = vperm.xlu0 %5690, %v318
    %v5692 = vpop.permute.xlu0 %5691
    %5694 = vset.pattern.permute.xlu0 1
    %5695 = vperm.xlu0 %5694, %v319
    %v5696 = vpop.permute.xlu0 %5695
    %5698 = vset.pattern.permute.xlu0 1
    %5699 = vperm.xlu0 %5698, %v320
    %v5700 = vpop.permute.xlu0 %5699
    %5702 = vset.pattern.permute.xlu0 1
    %5703 = vperm.xlu0 %5702, %v321
    %v5704 = vpop.permute.xlu0 %5703
    %5706 = vset.pattern.permute.xlu0 1
    %5707 = vperm.xlu0 %5706, %v322
    %v5708 = vpop.permute.xlu0 %5707
    %5710 = vset.pattern.permute.xlu0 1
    %5711 = vperm.xlu0 %5710, %v323
    %v5712 = vpop.permute.xlu0 %5711
    %5714 = vset.pattern.permute.xlu0 1
    %5715 = vperm.xlu0 %5714, %v324
    %v5716 = vpop.permute.xlu0 %5715
    %5718 = vset.pattern.permute.xlu0 1
    %5719 = vperm.xlu0 %5718, %v325
    %v5720 = vpop.permute.xlu0 %5719
    %5722 = vset.pattern.permute.xlu0 1
    %5723 = vperm.xlu0 %5722, %v326
    %v5724 = vpop.permute.xlu0 %5723
    %5726 = vset.pattern.permute.xlu0 1
    %5727 = vperm.xlu0 %5726, %v327
    %v5728 = vpop.permute.xlu0 %5727
    %5730 = vset.pattern.permute.xlu0 1
    %5731 = vperm.xlu0 %5730, %v328
    %v5732 = vpop.permute.xlu0 %5731
    %5734 = vset.pattern.permute.xlu0 1
    %5735 = vperm.xlu0 %5734, %v329
    %v5736 = vpop.permute.xlu0 %5735
    %5738 = vset.pattern.permute.xlu0 1
    %5739 = vperm.xlu0 %5738, %v330
    %v5740 = vpop.permute.xlu0 %5739
    %5742 = vset.pattern.permute.xlu0 1
    %5743 = vperm.xlu0 %5742, %v331
    %v5744 = vpop.permute.xlu0 %5743
    %5746 = vset.pattern.permute.xlu0 1
    %5747 = vperm.xlu0 %5746, %v332
    %v5748 = vpop.permute.xlu0 %5747
    %5750 = vset.pattern.permute.xlu0 1
    %5751 = vperm.xlu0 %5750, %v333
    %v5752 = vpop.permute.xlu0 %5751
    %5754 = vset.pattern.permute.xlu0 1
    %5755 = vperm.xlu0 %5754, %v334
    %v5756 = vpop.permute.xlu0 %5755
    %5758 = vset.pattern.permute.xlu0 1
    %5759 = vperm.xlu0 %5758, %v335
    %v5760 = vpop.permute.xlu0 %5759
    %5762 = vset.pattern.permute.xlu0 1
    %5763 = vperm.xlu0 %5762, %v336
    %v5764 = vpop.permute.xlu0 %5763
    %5766 = vset.pattern.permute.xlu0 1
    %5767 = vperm.xlu0 %5766, %v337
    %v5768 = vpop.permute.xlu0 %5767
    %5770 = vset.pattern.permute.xlu0 1
    %5771 = vperm.xlu0 %5770, %v338
    %v5772 = vpop.permute.xlu0 %5771
    %5774 = vset.pattern.permute.xlu0 1
    %5775 = vperm.xlu0 %5774, %v339
    %v5776 = vpop.permute.xlu0 %5775
    %5778 = vset.pattern.permute.xlu0 1
    %5779 = vperm.xlu0 %5778, %v340
    %v5780 = vpop.permute.xlu0 %5779
    %5782 = vset.pattern.permute.xlu0 1
    %5783 = vperm.xlu0 %5782, %v341
    %v5784 = vpop.permute.xlu0 %5783
    %5786 = vset.pattern.permute.xlu0 1
    %5787 = vperm.xlu0 %5786, %v342
    %v5788 = vpop.permute.xlu0 %5787
    %5790 = vset.pattern.permute.xlu0 1
    %5791 = vperm.xlu0 %5790, %v343
    %v5792 = vpop.permute.xlu0 %5791
    %5794 = vset.pattern.permute.xlu0 1
    %5795 = vperm.xlu0 %5794, %v344
    %v5796 = vpop.permute.xlu0 %5795
    %5798 = vset.pattern.permute.xlu0 1
    %5799 = vperm.xlu0 %5798, %v345
    %v5800 = vpop.permute.xlu0 %5799
    %5802 = vset.pattern.permute.xlu0 1
    %5803 = vperm.xlu0 %5802, %v346
    %v5804 = vpop.permute.xlu0 %5803
    %5806 = vset.pattern.permute.xlu0 1
    %5807 = vperm.xlu0 %5806, %v347
    %v5808 = vpop.permute.xlu0 %5807
    %5810 = vset.pattern.permute.xlu0 1
    %5811 = vperm.xlu0 %5810, %v348
    %v5812 = vpop.permute.xlu0 %5811
    %5814 = vset.pattern.permute.xlu0 1
    %5815 = vperm.xlu0 %5814, %v349
    %v5816 = vpop.permute.xlu0 %5815
    %5818 = vset.pattern.permute.xlu0 1
    %5819 = vperm.xlu0 %5818, %v350
    %v5820 = vpop.permute.xlu0 %5819
    %5822 = vset.pattern.permute.xlu0 1
    %5823 = vperm.xlu0 %5822, %v351
    %v5824 = vpop.permute.xlu0 %5823
    %5826 = vset.pattern.permute.xlu0 1
    %5827 = vperm.xlu0 %5826, %v352
    %v5828 = vpop.permute.xlu0 %5827
    %5830 = vset.pattern.permute.xlu0 1
    %5831 = vperm.xlu0 %5830, %v353
    %v5832 = vpop.permute.xlu0 %5831
    %5834 = vset.pattern.permute.xlu0 1
    %5835 = vperm.xlu0 %5834, %v354
    %v5836 = vpop.permute.xlu0 %5835
    %5838 = vset.pattern.permute.xlu0 1
    %5839 = vperm.xlu0 %5838, %v355
    %v5840 = vpop.permute.xlu0 %5839
    %5842 = vset.pattern.permute.xlu0 1
    %5843 = vperm.xlu0 %5842, %v356
    %v5844 = vpop.permute.xlu0 %5843
    %5846 = vset.pattern.permute.xlu0 1
    %5847 = vperm.xlu0 %5846, %v357
    %v5848 = vpop.permute.xlu0 %5847
    %5850 = vset.pattern.permute.xlu0 1
    %5851 = vperm.xlu0 %5850, %v358
    %v5852 = vpop.permute.xlu0 %5851
    %5854 = vset.pattern.permute.xlu0 1
    %5855 = vperm.xlu0 %5854, %v359
    %v5856 = vpop.permute.xlu0 %5855
    %5858 = vset.pattern.permute.xlu0 1
    %5859 = vperm.xlu0 %5858, %v360
    %v5860 = vpop.permute.xlu0 %5859
    %5862 = vset.pattern.permute.xlu0 1
    %5863 = vperm.xlu0 %5862, %v361
    %v5864 = vpop.permute.xlu0 %5863
    %5866 = vset.pattern.permute.xlu0 1
    %5867 = vperm.xlu0 %5866, %v362
    %v5868 = vpop.permute.xlu0 %5867
    %5870 = vset.pattern.permute.xlu0 1
    %5871 = vperm.xlu0 %5870, %v363
    %v5872 = vpop.permute.xlu0 %5871
    %5874 = vset.pattern.permute.xlu0 1
    %5875 = vperm.xlu0 %5874, %v364
    %v5876 = vpop.permute.xlu0 %5875
    %5878 = vset.pattern.permute.xlu0 1
    %5879 = vperm.xlu0 %5878, %v365
    %v5880 = vpop.permute.xlu0 %5879
    %5882 = vset.pattern.permute.xlu0 1
    %5883 = vperm.xlu0 %5882, %v366
    %v5884 = vpop.permute.xlu0 %5883
    %5886 = vset.pattern.permute.xlu0 1
    %5887 = vperm.xlu0 %5886, %v367
    %v5888 = vpop.permute.xlu0 %5887
    %5890 = vset.pattern.permute.xlu0 1
    %5891 = vperm.xlu0 %5890, %v368
    %v5892 = vpop.permute.xlu0 %5891
    %5894 = vset.pattern.permute.xlu0 1
    %5895 = vperm.xlu0 %5894, %v369
    %v5896 = vpop.permute.xlu0 %5895
    %5898 = vset.pattern.permute.xlu0 1
    %5899 = vperm.xlu0 %5898, %v370
    %v5900 = vpop.permute.xlu0 %5899
    %5902 = vset.pattern.permute.xlu0 1
    %5903 = vperm.xlu0 %5902, %v371
    %v5904 = vpop.permute.xlu0 %5903
    %5906 = vset.pattern.permute.xlu0 1
    %5907 = vperm.xlu0 %5906, %v372
    %v5908 = vpop.permute.xlu0 %5907
    %5910 = vset.pattern.permute.xlu0 1
    %5911 = vperm.xlu0 %5910, %v373
    %v5912 = vpop.permute.xlu0 %5911
    %5914 = vset.pattern.permute.xlu0 1
    %5915 = vperm.xlu0 %5914, %v374
    %v5916 = vpop.permute.xlu0 %5915
    %5918 = vset.pattern.permute.xlu0 1
    %5919 = vperm.xlu0 %5918, %v375
    %v5920 = vpop.permute.xlu0 %5919
    %5922 = vset.pattern.permute.xlu0 1
    %5923 = vperm.xlu0 %5922, %v376
    %v5924 = vpop.permute.xlu0 %5923
    %5926 = vset.pattern.permute.xlu0 1
    %5927 = vperm.xlu0 %5926, %v377
    %v5928 = vpop.permute.xlu0 %5927
    %5930 = vset.pattern.permute.xlu0 1
    %5931 = vperm.xlu0 %5930, %v378
    %v5932 = vpop.permute.xlu0 %5931
    %5934 = vset.pattern.permute.xlu0 1
    %5935 = vperm.xlu0 %5934, %v379
    %v5936 = vpop.permute.xlu0 %5935
    %5938 = vset.pattern.permute.xlu0 1
    %5939 = vperm.xlu0 %5938, %v380
    %v5940 = vpop.permute.xlu0 %5939
    %5942 = vset.pattern.permute.xlu0 1
    %5943 = vperm.xlu0 %5942, %v381
    %v5944 = vpop.permute.xlu0 %5943
    %5946 = vset.pattern.permute.xlu0 1
    %5947 = vperm.xlu0 %5946, %v382
    %v5948 = vpop.permute.xlu0 %5947
    %5950 = vset.pattern.permute.xlu0 1
    %5951 = vperm.xlu0 %5950, %v383
    %v5952 = vpop.permute.xlu0 %5951
    %5954 = vset.pattern.permute.xlu0 1
    %5955 = vperm.xlu0 %5954, %v384
    %v5956 = vpop.permute.xlu0 %5955
    %5958 = vset.pattern.permute.xlu0 1
    %5959 = vperm.xlu0 %5958, %v385
    %v5960 = vpop.permute.xlu0 %5959
    %5962 = vset.pattern.permute.xlu0 1
    %5963 = vperm.xlu0 %5962, %v386
    %v5964 = vpop.permute.xlu0 %5963
    %5966 = vset.pattern.permute.xlu0 1
    %5967 = vperm.xlu0 %5966, %v387
    %v5968 = vpop.permute.xlu0 %5967
    %5970 = vset.pattern.permute.xlu0 1
    %5971 = vperm.xlu0 %5970, %v388
    %v5972 = vpop.permute.xlu0 %5971
    %5974 = vset.pattern.permute.xlu0 1
    %5975 = vperm.xlu0 %5974, %v389
    %v5976 = vpop.permute.xlu0 %5975
    %5978 = vset.pattern.permute.xlu0 1
    %5979 = vperm.xlu0 %5978, %v390
    %v5980 = vpop.permute.xlu0 %5979
    %5982 = vset.pattern.permute.xlu0 1
    %5983 = vperm.xlu0 %5982, %v391
    %v5984 = vpop.permute.xlu0 %5983
    %5986 = vset.pattern.permute.xlu0 1
    %5987 = vperm.xlu0 %5986, %v392
    %v5988 = vpop.permute.xlu0 %5987
    %5990 = vset.pattern.permute.xlu0 1
    %5991 = vperm.xlu0 %5990, %v393
    %v5992 = vpop.permute.xlu0 %5991
    %5994 = vset.pattern.permute.xlu0 1
    %5995 = vperm.xlu0 %5994, %v394
    %v5996 = vpop.permute.xlu0 %5995
    %5998 = vset.pattern.permute.xlu0 1
    %5999 = vperm.xlu0 %5998, %v395
    %v6000 = vpop.permute.xlu0 %5999
    %6002 = vset.pattern.permute.xlu0 1
    %6003 = vperm.xlu0 %6002, %v396
    %v6004 = vpop.permute.xlu0 %6003
    %6006 = vset.pattern.permute.xlu0 1
    %6007 = vperm.xlu0 %6006, %v397
    %v6008 = vpop.permute.xlu0 %6007
    %6010 = vset.pattern.permute.xlu0 1
    %6011 = vperm.xlu0 %6010, %v398
    %v6012 = vpop.permute.xlu0 %6011
    %6014 = vset.pattern.permute.xlu0 1
    %6015 = vperm.xlu0 %6014, %v399
    %v6016 = vpop.permute.xlu0 %6015
    %6018 = vset.pattern.permute.xlu0 1
    %6019 = vperm.xlu0 %6018, %v400
    %v6020 = vpop.permute.xlu0 %6019
    %6022 = vset.pattern.permute.xlu0 1
    %6023 = vperm.xlu0 %6022, %v401
    %v6024 = vpop.permute.xlu0 %6023
    %6026 = vset.pattern.permute.xlu0 1
    %6027 = vperm.xlu0 %6026, %v402
    %v6028 = vpop.permute.xlu0 %6027
    %6030 = vset.pattern.permute.xlu0 1
    %6031 = vperm.xlu0 %6030, %v403
    %v6032 = vpop.permute.xlu0 %6031
    %6034 = vset.pattern.permute.xlu0 1
    %6035 = vperm.xlu0 %6034, %v404
    %v6036 = vpop.permute.xlu0 %6035
    %6038 = vset.pattern.permute.xlu0 1
    %6039 = vperm.xlu0 %6038, %v405
    %v6040 = vpop.permute.xlu0 %6039
    %6042 = vset.pattern.permute.xlu0 1
    %6043 = vperm.xlu0 %6042, %v406
    %v6044 = vpop.permute.xlu0 %6043
    %6046 = vset.pattern.permute.xlu0 1
    %6047 = vperm.xlu0 %6046, %v407
    %v6048 = vpop.permute.xlu0 %6047
    %6050 = vset.pattern.permute.xlu0 1
    %6051 = vperm.xlu0 %6050, %v408
    %v6052 = vpop.permute.xlu0 %6051
    %6054 = vset.pattern.permute.xlu0 1
    %6055 = vperm.xlu0 %6054, %v409
    %v6056 = vpop.permute.xlu0 %6055
    %6058 = vset.pattern.permute.xlu0 1
    %6059 = vperm.xlu0 %6058, %v410
    %v6060 = vpop.permute.xlu0 %6059
    %6062 = vset.pattern.permute.xlu0 1
    %6063 = vperm.xlu0 %6062, %v411
    %v6064 = vpop.permute.xlu0 %6063
    %6066 = vset.pattern.permute.xlu0 1
    %6067 = vperm.xlu0 %6066, %v412
    %v6068 = vpop.permute.xlu0 %6067
    %6070 = vset.pattern.permute.xlu0 1
    %6071 = vperm.xlu0 %6070, %v413
    %v6072 = vpop.permute.xlu0 %6071
    %6074 = vset.pattern.permute.xlu0 1
    %6075 = vperm.xlu0 %6074, %v414
    %v6076 = vpop.permute.xlu0 %6075
    %6078 = vset.pattern.permute.xlu0 1
    %6079 = vperm.xlu0 %6078, %v415
    %v6080 = vpop.permute.xlu0 %6079
    %6082 = vset.pattern.permute.xlu0 1
    %6083 = vperm.xlu0 %6082, %v416
    %v6084 = vpop.permute.xlu0 %6083
    %6086 = vset.pattern.permute.xlu0 1
    %6087 = vperm.xlu0 %6086, %v417
    %v6088 = vpop.permute.xlu0 %6087
    %6090 = vset.pattern.permute.xlu0 1
    %6091 = vperm.xlu0 %6090, %v418
    %v6092 = vpop.permute.xlu0 %6091
    %6094 = vset.pattern.permute.xlu0 1
    %6095 = vperm.xlu0 %6094, %v419
    %v6096 = vpop.permute.xlu0 %6095
    %6098 = vset.pattern.permute.xlu0 1
    %6099 = vperm.xlu0 %6098, %v420
    %v6100 = vpop.permute.xlu0 %6099
    %6102 = vset.pattern.permute.xlu0 1
    %6103 = vperm.xlu0 %6102, %v421
    %v6104 = vpop.permute.xlu0 %6103
    %6106 = vset.pattern.permute.xlu0 1
    %6107 = vperm.xlu0 %6106, %v422
    %v6108 = vpop.permute.xlu0 %6107
    %6110 = vset.pattern.permute.xlu0 1
    %6111 = vperm.xlu0 %6110, %v423
    %v6112 = vpop.permute.xlu0 %6111
    %6114 = vset.pattern.permute.xlu0 1
    %6115 = vperm.xlu0 %6114, %v424
    %v6116 = vpop.permute.xlu0 %6115
    %6118 = vset.pattern.permute.xlu0 1
    %6119 = vperm.xlu0 %6118, %v425
    %v6120 = vpop.permute.xlu0 %6119
    %6122 = vset.pattern.permute.xlu0 1
    %6123 = vperm.xlu0 %6122, %v426
    %v6124 = vpop.permute.xlu0 %6123
    %6126 = vset.pattern.permute.xlu0 1
    %6127 = vperm.xlu0 %6126, %v427
    %v6128 = vpop.permute.xlu0 %6127
    %6130 = vset.pattern.permute.xlu0 1
    %6131 = vperm.xlu0 %6130, %v428
    %v6132 = vpop.permute.xlu0 %6131
    %6134 = vset.pattern.permute.xlu0 1
    %6135 = vperm.xlu0 %6134, %v429
    %v6136 = vpop.permute.xlu0 %6135
    %6138 = vset.pattern.permute.xlu0 1
    %6139 = vperm.xlu0 %6138, %v430
    %v6140 = vpop.permute.xlu0 %6139
    %6142 = vset.pattern.permute.xlu0 1
    %6143 = vperm.xlu0 %6142, %v431
    %v6144 = vpop.permute.xlu0 %6143
    %6146 = vset.pattern.permute.xlu0 1
    %6147 = vperm.xlu0 %6146, %v432
    %v6148 = vpop.permute.xlu0 %6147
    %6150 = vset.pattern.permute.xlu0 1
    %6151 = vperm.xlu0 %6150, %v433
    %v6152 = vpop.permute.xlu0 %6151
    %6154 = vset.pattern.permute.xlu0 1
    %6155 = vperm.xlu0 %6154, %v434
    %v6156 = vpop.permute.xlu0 %6155
    %6158 = vset.pattern.permute.xlu0 1
    %6159 = vperm.xlu0 %6158, %v435
    %v6160 = vpop.permute.xlu0 %6159
    %6162 = vset.pattern.permute.xlu0 1
    %6163 = vperm.xlu0 %6162, %v436
    %v6164 = vpop.permute.xlu0 %6163
    %6166 = vset.pattern.permute.xlu0 1
    %6167 = vperm.xlu0 %6166, %v437
    %v6168 = vpop.permute.xlu0 %6167
    %6170 = vset.pattern.permute.xlu0 1
    %6171 = vperm.xlu0 %6170, %v438
    %v6172 = vpop.permute.xlu0 %6171
    %6174 = vset.pattern.permute.xlu0 1
    %6175 = vperm.xlu0 %6174, %v439
    %v6176 = vpop.permute.xlu0 %6175
    %6178 = vset.pattern.permute.xlu0 1
    %6179 = vperm.xlu0 %6178, %v440
    %v6180 = vpop.permute.xlu0 %6179
    %6182 = vset.pattern.permute.xlu0 1
    %6183 = vperm.xlu0 %6182, %v441
    %v6184 = vpop.permute.xlu0 %6183
    %6186 = vset.pattern.permute.xlu0 1
    %6187 = vperm.xlu0 %6186, %v442
    %v6188 = vpop.permute.xlu0 %6187
    %6190 = vset.pattern.permute.xlu0 1
    %6191 = vperm.xlu0 %6190, %v443
    %v6192 = vpop.permute.xlu0 %6191
    %6194 = vset.pattern.permute.xlu0 1
    %6195 = vperm.xlu0 %6194, %v444
    %v6196 = vpop.permute.xlu0 %6195
    %6198 = vset.pattern.permute.xlu0 1
    %6199 = vperm.xlu0 %6198, %v445
    %v6200 = vpop.permute.xlu0 %6199
    %6202 = vset.pattern.permute.xlu0 1
    %6203 = vperm.xlu0 %6202, %v446
    %v6204 = vpop.permute.xlu0 %6203
    %6206 = vset.pattern.permute.xlu0 1
    %6207 = vperm.xlu0 %6206, %v447
    %v6208 = vpop.permute.xlu0 %6207
    %6210 = vset.pattern.permute.xlu0 1
    %6211 = vperm.xlu0 %6210, %v448
    %v6212 = vpop.permute.xlu0 %6211
    %6214 = vset.pattern.permute.xlu0 1
    %6215 = vperm.xlu0 %6214, %v449
    %v6216 = vpop.permute.xlu0 %6215
    %6218 = vset.pattern.permute.xlu0 1
    %6219 = vperm.xlu0 %6218, %v450
    %v6220 = vpop.permute.xlu0 %6219
    %6222 = vset.pattern.permute.xlu0 1
    %6223 = vperm.xlu0 %6222, %v451
    %v6224 = vpop.permute.xlu0 %6223
    %6226 = vset.pattern.permute.xlu0 1
    %6227 = vperm.xlu0 %6226, %v452
    %v6228 = vpop.permute.xlu0 %6227
    %6230 = vset.pattern.permute.xlu0 1
    %6231 = vperm.xlu0 %6230, %v453
    %v6232 = vpop.permute.xlu0 %6231
    %6234 = vset.pattern.permute.xlu0 1
    %6235 = vperm.xlu0 %6234, %v454
    %v6236 = vpop.permute.xlu0 %6235
    %6238 = vset.pattern.permute.xlu0 1
    %6239 = vperm.xlu0 %6238, %v455
    %v6240 = vpop.permute.xlu0 %6239
    %6242 = vset.pattern.permute.xlu0 1
    %6243 = vperm.xlu0 %6242, %v456
    %v6244 = vpop.permute.xlu0 %6243
    %6246 = vset.pattern.permute.xlu0 1
    %6247 = vperm.xlu0 %6246, %v457
    %v6248 = vpop.permute.xlu0 %6247
    %6250 = vset.pattern.permute.xlu0 1
    %6251 = vperm.xlu0 %6250, %v458
    %v6252 = vpop.permute.xlu0 %6251
    %6254 = vset.pattern.permute.xlu0 1
    %6255 = vperm.xlu0 %6254, %v459
    %v6256 = vpop.permute.xlu0 %6255
    %6258 = vset.pattern.permute.xlu0 1
    %6259 = vperm.xlu0 %6258, %v460
    %v6260 = vpop.permute.xlu0 %6259
    %6262 = vset.pattern.permute.xlu0 1
    %6263 = vperm.xlu0 %6262, %v461
    %v6264 = vpop.permute.xlu0 %6263
    %6266 = vset.pattern.permute.xlu0 1
    %6267 = vperm.xlu0 %6266, %v462
    %v6268 = vpop.permute.xlu0 %6267
    %6270 = vset.pattern.permute.xlu0 1
    %6271 = vperm.xlu0 %6270, %v463
    %v6272 = vpop.permute.xlu0 %6271
    %6274 = vset.pattern.permute.xlu0 1
    %6275 = vperm.xlu0 %6274, %v464
    %v6276 = vpop.permute.xlu0 %6275
    %6278 = vset.pattern.permute.xlu0 1
    %6279 = vperm.xlu0 %6278, %v465
    %v6280 = vpop.permute.xlu0 %6279
    %6282 = vset.pattern.permute.xlu0 1
    %6283 = vperm.xlu0 %6282, %v466
    %v6284 = vpop.permute.xlu0 %6283
    %6286 = vset.pattern.permute.xlu0 1
    %6287 = vperm.xlu0 %6286, %v467
    %v6288 = vpop.permute.xlu0 %6287
    %6290 = vset.pattern.permute.xlu0 1
    %6291 = vperm.xlu0 %6290, %v468
    %v6292 = vpop.permute.xlu0 %6291
    %6294 = vset.pattern.permute.xlu0 1
    %6295 = vperm.xlu0 %6294, %v469
    %v6296 = vpop.permute.xlu0 %6295
    %6298 = vset.pattern.permute.xlu0 1
    %6299 = vperm.xlu0 %6298, %v470
    %v6300 = vpop.permute.xlu0 %6299
    %6302 = vset.pattern.permute.xlu0 1
    %6303 = vperm.xlu0 %6302, %v471
    %v6304 = vpop.permute.xlu0 %6303
    %6306 = vset.pattern.permute.xlu0 1
    %6307 = vperm.xlu0 %6306, %v472
    %v6308 = vpop.permute.xlu0 %6307
    %6310 = vset.pattern.permute.xlu0 1
    %6311 = vperm.xlu0 %6310, %v473
    %v6312 = vpop.permute.xlu0 %6311
    %6314 = vset.pattern.permute.xlu0 1
    %6315 = vperm.xlu0 %6314, %v474
    %v6316 = vpop.permute.xlu0 %6315
    %6318 = vset.pattern.permute.xlu0 1
    %6319 = vperm.xlu0 %6318, %v475
    %v6320 = vpop.permute.xlu0 %6319
    %6322 = vset.pattern.permute.xlu0 1
    %6323 = vperm.xlu0 %6322, %v476
    %v6324 = vpop.permute.xlu0 %6323
    %6326 = vset.pattern.permute.xlu0 1
    %6327 = vperm.xlu0 %6326, %v477
    %v6328 = vpop.permute.xlu0 %6327
    %6330 = vset.pattern.permute.xlu0 1
    %6331 = vperm.xlu0 %6330, %v478
    %v6332 = vpop.permute.xlu0 %6331
    %6334 = vset.pattern.permute.xlu0 1
    %6335 = vperm.xlu0 %6334, %v479
    %v6336 = vpop.permute.xlu0 %6335
    %6338 = vset.pattern.permute.xlu0 1
    %6339 = vperm.xlu0 %6338, %v480
    %v6340 = vpop.permute.xlu0 %6339
    %6342 = vset.pattern.permute.xlu0 1
    %6343 = vperm.xlu0 %6342, %v481
    %v6344 = vpop.permute.xlu0 %6343
    %6346 = vset.pattern.permute.xlu0 1
    %6347 = vperm.xlu0 %6346, %v482
    %v6348 = vpop.permute.xlu0 %6347
    %6350 = vset.pattern.permute.xlu0 1
    %6351 = vperm.xlu0 %6350, %v483
    %v6352 = vpop.permute.xlu0 %6351
    %6354 = vset.pattern.permute.xlu0 1
    %6355 = vperm.xlu0 %6354, %v484
    %v6356 = vpop.permute.xlu0 %6355
    %6358 = vset.pattern.permute.xlu0 1
    %6359 = vperm.xlu0 %6358, %v485
    %v6360 = vpop.permute.xlu0 %6359
    %6362 = vset.pattern.permute.xlu0 1
    %6363 = vperm.xlu0 %6362, %v486
    %v6364 = vpop.permute.xlu0 %6363
    %6366 = vset.pattern.permute.xlu0 1
    %6367 = vperm.xlu0 %6366, %v487
    %v6368 = vpop.permute.xlu0 %6367
    %v6370 = vlaneseq
    %v6371 = vshrl.u32 %v6370, 7
    %v6372 = vsub.s32 1, %v6371
    %v6373 = vrot.slane %v488, %v6372
    %v6374 = vlaneseq
    %v6375 = vshrl.u32 %v6374, 7
    %v6376 = vsub.s32 5, %v6375
    %v6377 = vrot.slane %v488, %v6376
    %v6380 = vlaneseq
    %v6381 = vshrl.u32 %v6380, 7
    %v6382 = vsub.s32 1, %v6381
    %v6383 = vrot.slane %v6373, %v6382
    %v6384 = vlaneseq
    %v6385 = vshrl.u32 %v6384, 7
    %v6386 = vsub.s32 1, %v6385
    %v6387 = vrot.slane %v6377, %v6386
    %v6388 = vmul.f32 %v4572, %v6383
    %v6389 = vmul.f32 %v4572, %v6387
    %v6390 = vmul.f32 %v4576, %v6383
    %v6391 = vmul.f32 %v4576, %v6387
    %v6392 = vmul.f32 %v4580, %v6383
    %v6393 = vmul.f32 %v4580, %v6387
    %v6394 = vmul.f32 %v4584, %v6383
    %v6395 = vmul.f32 %v4584, %v6387
    %v6396 = vmul.f32 %v4588, %v6383
    %v6397 = vmul.f32 %v4588, %v6387
    %v6398 = vmul.f32 %v4592, %v6383
    %v6399 = vmul.f32 %v4592, %v6387
    %v6400 = vmul.f32 %v4596, %v6383
    %v6401 = vmul.f32 %v4596, %v6387
    %v6402 = vmul.f32 %v4600, %v6383
    %v6403 = vmul.f32 %v4600, %v6387
    %v6404 = vmul.f32 %v4604, %v6383
    %v6405 = vmul.f32 %v4604, %v6387
    %v6406 = vmul.f32 %v4608, %v6383
    %v6407 = vmul.f32 %v4608, %v6387
    %v6408 = vmul.f32 %v4612, %v6383
    %v6409 = vmul.f32 %v4612, %v6387
    %v6410 = vmul.f32 %v4616, %v6383
    %v6411 = vmul.f32 %v4616, %v6387
    %v6412 = vmul.f32 %v4620, %v6383
    %v6413 = vmul.f32 %v4620, %v6387
    %v6414 = vmul.f32 %v4624, %v6383
    %v6415 = vmul.f32 %v4624, %v6387
    %v6416 = vmul.f32 %v4628, %v6383
    %v6417 = vmul.f32 %v4628, %v6387
    %v6418 = vmul.f32 %v4632, %v6383
    %v6419 = vmul.f32 %v4632, %v6387
    %v6420 = vmul.f32 %v4636, %v6383
    %v6421 = vmul.f32 %v4636, %v6387
    %v6422 = vmul.f32 %v4640, %v6383
    %v6423 = vmul.f32 %v4640, %v6387
    %v6424 = vmul.f32 %v4644, %v6383
    %v6425 = vmul.f32 %v4644, %v6387
    %v6426 = vmul.f32 %v4648, %v6383
    %v6427 = vmul.f32 %v4648, %v6387
    %v6428 = vmul.f32 %v4652, %v6383
    %v6429 = vmul.f32 %v4652, %v6387
    %v6430 = vmul.f32 %v4656, %v6383
    %v6431 = vmul.f32 %v4656, %v6387
    %v6432 = vmul.f32 %v4660, %v6383
    %v6433 = vmul.f32 %v4660, %v6387
    %v6434 = vmul.f32 %v4664, %v6383
    %v6435 = vmul.f32 %v4664, %v6387
    %v6436 = vmul.f32 %v4668, %v6383
    %v6437 = vmul.f32 %v4668, %v6387
    %v6438 = vmul.f32 %v4672, %v6383
    %v6439 = vmul.f32 %v4672, %v6387
    %v6440 = vmul.f32 %v4676, %v6383
    %v6441 = vmul.f32 %v4676, %v6387
    %v6442 = vmul.f32 %v4680, %v6383
    %v6443 = vmul.f32 %v4680, %v6387
    %v6444 = vmul.f32 %v4684, %v6383
    %v6445 = vmul.f32 %v4684, %v6387
    %v6446 = vmul.f32 %v4688, %v6383
    %v6447 = vmul.f32 %v4688, %v6387
    %v6448 = vmul.f32 %v4692, %v6383
    %v6449 = vmul.f32 %v4692, %v6387
    %v6450 = vmul.f32 %v4696, %v6383
    %v6451 = vmul.f32 %v4696, %v6387
    %v6452 = vmul.f32 %v4700, %v6383
    %v6453 = vmul.f32 %v4700, %v6387
    %v6454 = vmul.f32 %v4704, %v6383
    %v6455 = vmul.f32 %v4704, %v6387
    %v6456 = vmul.f32 %v4708, %v6383
    %v6457 = vmul.f32 %v4708, %v6387
    %v6458 = vmul.f32 %v4712, %v6383
    %v6459 = vmul.f32 %v4712, %v6387
    %v6460 = vmul.f32 %v4716, %v6383
    %v6461 = vmul.f32 %v4716, %v6387
    %v6462 = vmul.f32 %v4720, %v6383
    %v6463 = vmul.f32 %v4720, %v6387
    %v6464 = vmul.f32 %v4724, %v6383
    %v6465 = vmul.f32 %v4724, %v6387
    %v6466 = vmul.f32 %v4728, %v6383
    %v6467 = vmul.f32 %v4728, %v6387
    %v6468 = vmul.f32 %v4732, %v6383
    %v6469 = vmul.f32 %v4732, %v6387
    %v6470 = vmul.f32 %v4736, %v6383
    %v6471 = vmul.f32 %v4736, %v6387
    %v6472 = vmul.f32 %v4740, %v6383
    %v6473 = vmul.f32 %v4740, %v6387
    %v6474 = vmul.f32 %v4744, %v6383
    %v6475 = vmul.f32 %v4744, %v6387
    %v6476 = vmul.f32 %v4748, %v6383
    %v6477 = vmul.f32 %v4748, %v6387
    %v6478 = vmul.f32 %v4752, %v6383
    %v6479 = vmul.f32 %v4752, %v6387
    %v6480 = vmul.f32 %v4756, %v6383
    %v6481 = vmul.f32 %v4756, %v6387
    %v6482 = vmul.f32 %v4760, %v6383
    %v6483 = vmul.f32 %v4760, %v6387
    %v6484 = vmul.f32 %v4764, %v6383
    %v6485 = vmul.f32 %v4764, %v6387
    %v6486 = vmul.f32 %v4768, %v6383
    %v6487 = vmul.f32 %v4768, %v6387
    %v6488 = vmul.f32 %v4772, %v6383
    %v6489 = vmul.f32 %v4772, %v6387
    %v6490 = vmul.f32 %v4776, %v6383
    %v6491 = vmul.f32 %v4776, %v6387
    %v6492 = vmul.f32 %v4780, %v6383
    %v6493 = vmul.f32 %v4780, %v6387
    %v6494 = vmul.f32 %v4784, %v6383
    %v6495 = vmul.f32 %v4784, %v6387
    %v6496 = vmul.f32 %v4788, %v6383
    %v6497 = vmul.f32 %v4788, %v6387
    %v6498 = vmul.f32 %v4792, %v6383
    %v6499 = vmul.f32 %v4792, %v6387
    %v6500 = vmul.f32 %v4796, %v6383
    %v6501 = vmul.f32 %v4796, %v6387
    %v6502 = vmul.f32 %v4800, %v6383
    %v6503 = vmul.f32 %v4800, %v6387
    %v6504 = vmul.f32 %v4804, %v6383
    %v6505 = vmul.f32 %v4804, %v6387
    %v6506 = vmul.f32 %v4808, %v6383
    %v6507 = vmul.f32 %v4808, %v6387
    %v6508 = vmul.f32 %v4812, %v6383
    %v6509 = vmul.f32 %v4812, %v6387
    %v6510 = vmul.f32 %v4816, %v6383
    %v6511 = vmul.f32 %v4816, %v6387
    %v6512 = vmul.f32 %v4820, %v6383
    %v6513 = vmul.f32 %v4820, %v6387
    %v6514 = vmul.f32 %v4824, %v6383
    %v6515 = vmul.f32 %v4824, %v6387
    %v6516 = vmul.f32 %v4828, %v6383
    %v6517 = vmul.f32 %v4828, %v6387
    %v6518 = vmul.f32 %v4832, %v6383
    %v6519 = vmul.f32 %v4832, %v6387
    %v6520 = vmul.f32 %v4836, %v6383
    %v6521 = vmul.f32 %v4836, %v6387
    %v6522 = vmul.f32 %v4840, %v6383
    %v6523 = vmul.f32 %v4840, %v6387
    %v6524 = vmul.f32 %v4844, %v6383
    %v6525 = vmul.f32 %v4844, %v6387
    %v6526 = vmul.f32 %v4848, %v6383
    %v6527 = vmul.f32 %v4848, %v6387
    %v6528 = vmul.f32 %v4852, %v6383
    %v6529 = vmul.f32 %v4852, %v6387
    %v6530 = vmul.f32 %v4856, %v6383
    %v6531 = vmul.f32 %v4856, %v6387
    %v6532 = vmul.f32 %v4860, %v6383
    %v6533 = vmul.f32 %v4860, %v6387
    %v6534 = vmul.f32 %v4864, %v6383
    %v6535 = vmul.f32 %v4864, %v6387
    %v6536 = vmul.f32 %v4868, %v6383
    %v6537 = vmul.f32 %v4868, %v6387
    %v6538 = vmul.f32 %v4872, %v6383
    %v6539 = vmul.f32 %v4872, %v6387
    %v6540 = vmul.f32 %v4876, %v6383
    %v6541 = vmul.f32 %v4876, %v6387
    %v6542 = vmul.f32 %v4880, %v6383
    %v6543 = vmul.f32 %v4880, %v6387
    %v6544 = vmul.f32 %v4884, %v6383
    %v6545 = vmul.f32 %v4884, %v6387
    %v6546 = vmul.f32 %v4888, %v6383
    %v6547 = vmul.f32 %v4888, %v6387
    %v6548 = vmul.f32 %v4892, %v6383
    %v6549 = vmul.f32 %v4892, %v6387
    %v6550 = vmul.f32 %v4896, %v6383
    %v6551 = vmul.f32 %v4896, %v6387
    %v6552 = vmul.f32 %v4900, %v6383
    %v6553 = vmul.f32 %v4900, %v6387
    %v6554 = vmul.f32 %v4904, %v6383
    %v6555 = vmul.f32 %v4904, %v6387
    %v6556 = vmul.f32 %v4908, %v6383
    %v6557 = vmul.f32 %v4908, %v6387
    %v6558 = vmul.f32 %v4912, %v6383
    %v6559 = vmul.f32 %v4912, %v6387
    %v6560 = vmul.f32 %v4916, %v6383
    %v6561 = vmul.f32 %v4916, %v6387
    %v6562 = vmul.f32 %v4920, %v6383
    %v6563 = vmul.f32 %v4920, %v6387
    %v6564 = vmul.f32 %v4924, %v6383
    %v6565 = vmul.f32 %v4924, %v6387
    %v6566 = vmul.f32 %v4928, %v6383
    %v6567 = vmul.f32 %v4928, %v6387
    %v6568 = vmul.f32 %v4932, %v6383
    %v6569 = vmul.f32 %v4932, %v6387
    %v6570 = vmul.f32 %v4936, %v6383
    %v6571 = vmul.f32 %v4936, %v6387
    %v6572 = vmul.f32 %v4940, %v6383
    %v6573 = vmul.f32 %v4940, %v6387
    %v6574 = vmul.f32 %v4944, %v6383
    %v6575 = vmul.f32 %v4944, %v6387
    %v6576 = vmul.f32 %v4948, %v6383
    %v6577 = vmul.f32 %v4948, %v6387
    %v6578 = vmul.f32 %v4952, %v6383
    %v6579 = vmul.f32 %v4952, %v6387
    %v6580 = vmul.f32 %v4956, %v6383
    %v6581 = vmul.f32 %v4956, %v6387
    %v6582 = vmul.f32 %v4960, %v6383
    %v6583 = vmul.f32 %v4960, %v6387
    %v6584 = vmul.f32 %v4964, %v6383
    %v6585 = vmul.f32 %v4964, %v6387
    %v6586 = vmul.f32 %v4968, %v6383
    %v6587 = vmul.f32 %v4968, %v6387
    %v6588 = vmul.f32 %v4972, %v6383
    %v6589 = vmul.f32 %v4972, %v6387
    %v6590 = vmul.f32 %v4976, %v6383
    %v6591 = vmul.f32 %v4976, %v6387
    %v6592 = vmul.f32 %v4980, %v6383
    %v6593 = vmul.f32 %v4980, %v6387
    %v6594 = vmul.f32 %v4984, %v6383
    %v6595 = vmul.f32 %v4984, %v6387
    %v6596 = vmul.f32 %v4988, %v6383
    %v6597 = vmul.f32 %v4988, %v6387
    %v6598 = vmul.f32 %v4992, %v6383
    %v6599 = vmul.f32 %v4992, %v6387
    %v6600 = vmul.f32 %v4996, %v6383
    %v6601 = vmul.f32 %v4996, %v6387
    %v6602 = vmul.f32 %v5000, %v6383
    %v6603 = vmul.f32 %v5000, %v6387
    %v6604 = vmul.f32 %v5004, %v6383
    %v6605 = vmul.f32 %v5004, %v6387
    %v6606 = vmul.f32 %v5008, %v6383
    %v6607 = vmul.f32 %v5008, %v6387
    %v6608 = vmul.f32 %v5012, %v6383
    %v6609 = vmul.f32 %v5012, %v6387
    %v6610 = vmul.f32 %v5016, %v6383
    %v6611 = vmul.f32 %v5016, %v6387
    %v6612 = vmul.f32 %v5020, %v6383
    %v6613 = vmul.f32 %v5020, %v6387
    %v6614 = vmul.f32 %v5024, %v6383
    %v6615 = vmul.f32 %v5024, %v6387
    %v6616 = vmul.f32 %v5028, %v6383
    %v6617 = vmul.f32 %v5028, %v6387
    %v6618 = vmul.f32 %v5032, %v6383
    %v6619 = vmul.f32 %v5032, %v6387
    %v6620 = vmul.f32 %v5036, %v6383
    %v6621 = vmul.f32 %v5036, %v6387
    %v6622 = vmul.f32 %v5040, %v6383
    %v6623 = vmul.f32 %v5040, %v6387
    %v6624 = vmul.f32 %v5044, %v6383
    %v6625 = vmul.f32 %v5044, %v6387
    %v6626 = vmul.f32 %v5048, %v6383
    %v6627 = vmul.f32 %v5048, %v6387
    %v6628 = vmul.f32 %v5052, %v6383
    %v6629 = vmul.f32 %v5052, %v6387
    %v6630 = vmul.f32 %v5056, %v6383
    %v6631 = vmul.f32 %v5056, %v6387
    %v6632 = vmul.f32 %v5060, %v6383
    %v6633 = vmul.f32 %v5060, %v6387
    %v6634 = vmul.f32 %v5064, %v6383
    %v6635 = vmul.f32 %v5064, %v6387
    %v6636 = vmul.f32 %v5068, %v6383
    %v6637 = vmul.f32 %v5068, %v6387
    %v6638 = vmul.f32 %v5072, %v6383
    %v6639 = vmul.f32 %v5072, %v6387
    %v6640 = vmul.f32 %v5076, %v6383
    %v6641 = vmul.f32 %v5076, %v6387
    %v6642 = vmul.f32 %v5080, %v6383
    %v6643 = vmul.f32 %v5080, %v6387
    %v6644 = vmul.f32 %v5084, %v6383
    %v6645 = vmul.f32 %v5084, %v6387
    %v6646 = vmul.f32 %v5088, %v6383
    %v6647 = vmul.f32 %v5088, %v6387
    %v6648 = vmul.f32 %v5092, %v6383
    %v6649 = vmul.f32 %v5092, %v6387
    %v6650 = vmul.f32 %v5096, %v6383
    %v6651 = vmul.f32 %v5096, %v6387
    %v6652 = vmul.f32 %v5100, %v6383
    %v6653 = vmul.f32 %v5100, %v6387
    %v6654 = vmul.f32 %v5104, %v6383
    %v6655 = vmul.f32 %v5104, %v6387
    %v6656 = vmul.f32 %v5108, %v6383
    %v6657 = vmul.f32 %v5108, %v6387
    %v6658 = vmul.f32 %v5112, %v6383
    %v6659 = vmul.f32 %v5112, %v6387
    %v6660 = vmul.f32 %v5116, %v6383
    %v6661 = vmul.f32 %v5116, %v6387
    %v6662 = vmul.f32 %v5120, %v6383
    %v6663 = vmul.f32 %v5120, %v6387
    %v6664 = vmul.f32 %v5124, %v6383
    %v6665 = vmul.f32 %v5124, %v6387
    %v6666 = vmul.f32 %v5128, %v6383
    %v6667 = vmul.f32 %v5128, %v6387
    %v6668 = vmul.f32 %v5132, %v6383
    %v6669 = vmul.f32 %v5132, %v6387
    %v6670 = vmul.f32 %v5136, %v6383
    %v6671 = vmul.f32 %v5136, %v6387
    %v6672 = vmul.f32 %v5140, %v6383
    %v6673 = vmul.f32 %v5140, %v6387
    %v6674 = vmul.f32 %v5144, %v6383
    %v6675 = vmul.f32 %v5144, %v6387
    %v6676 = vmul.f32 %v5148, %v6383
    %v6677 = vmul.f32 %v5148, %v6387
    %v6678 = vmul.f32 %v5152, %v6383
    %v6679 = vmul.f32 %v5152, %v6387
    %v6680 = vmul.f32 %v5156, %v6383
    %v6681 = vmul.f32 %v5156, %v6387
    %v6682 = vmul.f32 %v5160, %v6383
    %v6683 = vmul.f32 %v5160, %v6387
    %v6684 = vmul.f32 %v5164, %v6383
    %v6685 = vmul.f32 %v5164, %v6387
    %v6686 = vmul.f32 %v5168, %v6383
    %v6687 = vmul.f32 %v5168, %v6387
    %v6688 = vmul.f32 %v5172, %v6383
    %v6689 = vmul.f32 %v5172, %v6387
    %v6690 = vmul.f32 %v5176, %v6383
    %v6691 = vmul.f32 %v5176, %v6387
    %v6692 = vmul.f32 %v5180, %v6383
    %v6693 = vmul.f32 %v5180, %v6387
    %v6694 = vmul.f32 %v5184, %v6383
    %v6695 = vmul.f32 %v5184, %v6387
    %v6696 = vmul.f32 %v5188, %v6383
    %v6697 = vmul.f32 %v5188, %v6387
    %v6698 = vmul.f32 %v5192, %v6383
    %v6699 = vmul.f32 %v5192, %v6387
    %v6700 = vmul.f32 %v5196, %v6383
    %v6701 = vmul.f32 %v5196, %v6387
    %v6702 = vmul.f32 %v5200, %v6383
    %v6703 = vmul.f32 %v5200, %v6387
    %v6704 = vmul.f32 %v5204, %v6383
    %v6705 = vmul.f32 %v5204, %v6387
    %v6706 = vmul.f32 %v5208, %v6383
    %v6707 = vmul.f32 %v5208, %v6387
    %v6708 = vmul.f32 %v5212, %v6383
    %v6709 = vmul.f32 %v5212, %v6387
    %v6710 = vmul.f32 %v5216, %v6383
    %v6711 = vmul.f32 %v5216, %v6387
    %v6712 = vmul.f32 %v5220, %v6383
    %v6713 = vmul.f32 %v5220, %v6387
    %v6714 = vmul.f32 %v5224, %v6383
    %v6715 = vmul.f32 %v5224, %v6387
    %v6716 = vmul.f32 %v5228, %v6383
    %v6717 = vmul.f32 %v5228, %v6387
    %v6718 = vmul.f32 %v5232, %v6383
    %v6719 = vmul.f32 %v5232, %v6387
    %v6720 = vmul.f32 %v5236, %v6383
    %v6721 = vmul.f32 %v5236, %v6387
    %v6722 = vmul.f32 %v5240, %v6383
    %v6723 = vmul.f32 %v5240, %v6387
    %v6724 = vmul.f32 %v5244, %v6383
    %v6725 = vmul.f32 %v5244, %v6387
    %v6726 = vmul.f32 %v5248, %v6383
    %v6727 = vmul.f32 %v5248, %v6387
    %v6728 = vmul.f32 %v5252, %v6383
    %v6729 = vmul.f32 %v5252, %v6387
    %v6730 = vmul.f32 %v5256, %v6383
    %v6731 = vmul.f32 %v5256, %v6387
    %v6732 = vmul.f32 %v5260, %v6383
    %v6733 = vmul.f32 %v5260, %v6387
    %v6734 = vmul.f32 %v5264, %v6383
    %v6735 = vmul.f32 %v5264, %v6387
    %v6736 = vmul.f32 %v5268, %v6383
    %v6737 = vmul.f32 %v5268, %v6387
    %v6738 = vmul.f32 %v5272, %v6383
    %v6739 = vmul.f32 %v5272, %v6387
    %v6740 = vmul.f32 %v5276, %v6383
    %v6741 = vmul.f32 %v5276, %v6387
    %v6742 = vmul.f32 %v5280, %v6383
    %v6743 = vmul.f32 %v5280, %v6387
    %v6744 = vmul.f32 %v5284, %v6383
    %v6745 = vmul.f32 %v5284, %v6387
    %v6746 = vmul.f32 %v5288, %v6383
    %v6747 = vmul.f32 %v5288, %v6387
    %v6748 = vmul.f32 %v5292, %v6383
    %v6749 = vmul.f32 %v5292, %v6387
    %v6750 = vmul.f32 %v5296, %v6383
    %v6751 = vmul.f32 %v5296, %v6387
    %v6752 = vmul.f32 %v5300, %v6383
    %v6753 = vmul.f32 %v5300, %v6387
    %v6754 = vmul.f32 %v5304, %v6383
    %v6755 = vmul.f32 %v5304, %v6387
    %v6756 = vmul.f32 %v5308, %v6383
    %v6757 = vmul.f32 %v5308, %v6387
    %v6758 = vmul.f32 %v5312, %v6383
    %v6759 = vmul.f32 %v5312, %v6387
    %v6760 = vmul.f32 %v5316, %v6383
    %v6761 = vmul.f32 %v5316, %v6387
    %v6762 = vmul.f32 %v5320, %v6383
    %v6763 = vmul.f32 %v5320, %v6387
    %v6764 = vmul.f32 %v5324, %v6383
    %v6765 = vmul.f32 %v5324, %v6387
    %v6766 = vmul.f32 %v5328, %v6383
    %v6767 = vmul.f32 %v5328, %v6387
    %v6768 = vmul.f32 %v5332, %v6383
    %v6769 = vmul.f32 %v5332, %v6387
    %v6770 = vmul.f32 %v5336, %v6383
    %v6771 = vmul.f32 %v5336, %v6387
    %v6772 = vmul.f32 %v5340, %v6383
    %v6773 = vmul.f32 %v5340, %v6387
    %v6774 = vmul.f32 %v5344, %v6383
    %v6775 = vmul.f32 %v5344, %v6387
    %v6776 = vmul.f32 %v5348, %v6383
    %v6777 = vmul.f32 %v5348, %v6387
    %v6778 = vmul.f32 %v5352, %v6383
    %v6779 = vmul.f32 %v5352, %v6387
    %v6780 = vmul.f32 %v5356, %v6383
    %v6781 = vmul.f32 %v5356, %v6387
    %v6782 = vmul.f32 %v5360, %v6383
    %v6783 = vmul.f32 %v5360, %v6387
    %v6784 = vmul.f32 %v5364, %v6383
    %v6785 = vmul.f32 %v5364, %v6387
    %v6786 = vmul.f32 %v5368, %v6383
    %v6787 = vmul.f32 %v5368, %v6387
    %v6788 = vmul.f32 %v5372, %v6383
    %v6789 = vmul.f32 %v5372, %v6387
    %v6790 = vmul.f32 %v5376, %v6383
    %v6791 = vmul.f32 %v5376, %v6387
    %v6792 = vmul.f32 %v5380, %v6383
    %v6793 = vmul.f32 %v5380, %v6387
    %v6794 = vmul.f32 %v5384, %v6383
    %v6795 = vmul.f32 %v5384, %v6387
    %v6796 = vmul.f32 %v5388, %v6383
    %v6797 = vmul.f32 %v5388, %v6387
    %v6798 = vmul.f32 %v5392, %v6383
    %v6799 = vmul.f32 %v5392, %v6387
    %v6800 = vmul.f32 %v5396, %v6383
    %v6801 = vmul.f32 %v5396, %v6387
    %v6802 = vmul.f32 %v5400, %v6383
    %v6803 = vmul.f32 %v5400, %v6387
    %v6804 = vmul.f32 %v5404, %v6383
    %v6805 = vmul.f32 %v5404, %v6387
    %v6806 = vmul.f32 %v5408, %v6383
    %v6807 = vmul.f32 %v5408, %v6387
    %v6808 = vmul.f32 %v5412, %v6383
    %v6809 = vmul.f32 %v5412, %v6387
    %v6810 = vmul.f32 %v5416, %v6383
    %v6811 = vmul.f32 %v5416, %v6387
    %v6812 = vmul.f32 %v5420, %v6383
    %v6813 = vmul.f32 %v5420, %v6387
    %v6814 = vmul.f32 %v5424, %v6383
    %v6815 = vmul.f32 %v5424, %v6387
    %v6816 = vmul.f32 %v5428, %v6383
    %v6817 = vmul.f32 %v5428, %v6387
    %v6818 = vmul.f32 %v5432, %v6383
    %v6819 = vmul.f32 %v5432, %v6387
    %v6820 = vmul.f32 %v5436, %v6383
    %v6821 = vmul.f32 %v5436, %v6387
    %v6822 = vmul.f32 %v5440, %v6383
    %v6823 = vmul.f32 %v5440, %v6387
    %v6824 = vmul.f32 %v5444, %v6383
    %v6825 = vmul.f32 %v5444, %v6387
    %v6826 = vmul.f32 %v5448, %v6383
    %v6827 = vmul.f32 %v5448, %v6387
    %v6828 = vmul.f32 %v5452, %v6383
    %v6829 = vmul.f32 %v5452, %v6387
    %v6830 = vmul.f32 %v5456, %v6383
    %v6831 = vmul.f32 %v5456, %v6387
    %v6832 = vmul.f32 %v5460, %v6383
    %v6833 = vmul.f32 %v5460, %v6387
    %v6834 = vmul.f32 %v5464, %v6383
    %v6835 = vmul.f32 %v5464, %v6387
    %v6836 = vmul.f32 %v5468, %v6383
    %v6837 = vmul.f32 %v5468, %v6387
    %v6838 = vmul.f32 %v5472, %v6383
    %v6839 = vmul.f32 %v5472, %v6387
    %v6840 = vmul.f32 %v5476, %v6383
    %v6841 = vmul.f32 %v5476, %v6387
    %v6842 = vmul.f32 %v5480, %v6383
    %v6843 = vmul.f32 %v5480, %v6387
    %v6844 = vmul.f32 %v5484, %v6383
    %v6845 = vmul.f32 %v5484, %v6387
    %v6846 = vmul.f32 %v5488, %v6383
    %v6847 = vmul.f32 %v5488, %v6387
    %v6848 = vmul.f32 %v5492, %v6383
    %v6849 = vmul.f32 %v5492, %v6387
    %v6850 = vmul.f32 %v5496, %v6383
    %v6851 = vmul.f32 %v5496, %v6387
    %v6852 = vmul.f32 %v5500, %v6383
    %v6853 = vmul.f32 %v5500, %v6387
    %v6854 = vmul.f32 %v5504, %v6383
    %v6855 = vmul.f32 %v5504, %v6387
    %v6856 = vmul.f32 %v5508, %v6383
    %v6857 = vmul.f32 %v5508, %v6387
    %v6858 = vmul.f32 %v5512, %v6383
    %v6859 = vmul.f32 %v5512, %v6387
    %v6860 = vmul.f32 %v5516, %v6383
    %v6861 = vmul.f32 %v5516, %v6387
    %v6862 = vmul.f32 %v5520, %v6383
    %v6863 = vmul.f32 %v5520, %v6387
    %v6864 = vmul.f32 %v5524, %v6383
    %v6865 = vmul.f32 %v5524, %v6387
    %v6866 = vmul.f32 %v5528, %v6383
    %v6867 = vmul.f32 %v5528, %v6387
    %v6868 = vmul.f32 %v5532, %v6383
    %v6869 = vmul.f32 %v5532, %v6387
    %v6870 = vmul.f32 %v5536, %v6383
    %v6871 = vmul.f32 %v5536, %v6387
    %v6872 = vmul.f32 %v5540, %v6383
    %v6873 = vmul.f32 %v5540, %v6387
    %v6874 = vmul.f32 %v5544, %v6383
    %v6875 = vmul.f32 %v5544, %v6387
    %v6876 = vmul.f32 %v5548, %v6383
    %v6877 = vmul.f32 %v5548, %v6387
    %v6878 = vmul.f32 %v5552, %v6383
    %v6879 = vmul.f32 %v5552, %v6387
    %v6880 = vmul.f32 %v5556, %v6383
    %v6881 = vmul.f32 %v5556, %v6387
    %v6882 = vmul.f32 %v5560, %v6383
    %v6883 = vmul.f32 %v5560, %v6387
    %v6884 = vmul.f32 %v5564, %v6383
    %v6885 = vmul.f32 %v5564, %v6387
    %v6886 = vmul.f32 %v5568, %v6383
    %v6887 = vmul.f32 %v5568, %v6387
    %v6888 = vmul.f32 %v5572, %v6383
    %v6889 = vmul.f32 %v5572, %v6387
    %v6890 = vmul.f32 %v5576, %v6383
    %v6891 = vmul.f32 %v5576, %v6387
    %v6892 = vmul.f32 %v5580, %v6383
    %v6893 = vmul.f32 %v5580, %v6387
    %v6894 = vmul.f32 %v5584, %v6383
    %v6895 = vmul.f32 %v5584, %v6387
    %v6896 = vmul.f32 %v5588, %v6383
    %v6897 = vmul.f32 %v5588, %v6387
    %v6898 = vmul.f32 %v5592, %v6383
    %v6899 = vmul.f32 %v5592, %v6387
    %v6900 = vmul.f32 %v5596, %v6383
    %v6901 = vmul.f32 %v5596, %v6387
    %v6902 = vmul.f32 %v5600, %v6383
    %v6903 = vmul.f32 %v5600, %v6387
    %v6904 = vmul.f32 %v5604, %v6383
    %v6905 = vmul.f32 %v5604, %v6387
    %v6906 = vmul.f32 %v5608, %v6383
    %v6907 = vmul.f32 %v5608, %v6387
    %v6908 = vmul.f32 %v5612, %v6383
    %v6909 = vmul.f32 %v5612, %v6387
    %v6910 = vmul.f32 %v5616, %v6383
    %v6911 = vmul.f32 %v5616, %v6387
    %v6912 = vmul.f32 %v5620, %v6383
    %v6913 = vmul.f32 %v5620, %v6387
    %v6914 = vmul.f32 %v5624, %v6383
    %v6915 = vmul.f32 %v5624, %v6387
    %v6916 = vmul.f32 %v5628, %v6383
    %v6917 = vmul.f32 %v5628, %v6387
    %v6918 = vmul.f32 %v5632, %v6383
    %v6919 = vmul.f32 %v5632, %v6387
    %v6920 = vmul.f32 %v5636, %v6383
    %v6921 = vmul.f32 %v5636, %v6387
    %v6922 = vmul.f32 %v5640, %v6383
    %v6923 = vmul.f32 %v5640, %v6387
    %v6924 = vmul.f32 %v5644, %v6383
    %v6925 = vmul.f32 %v5644, %v6387
    %v6926 = vmul.f32 %v5648, %v6383
    %v6927 = vmul.f32 %v5648, %v6387
    %v6928 = vmul.f32 %v5652, %v6383
    %v6929 = vmul.f32 %v5652, %v6387
    %v6930 = vmul.f32 %v5656, %v6383
    %v6931 = vmul.f32 %v5656, %v6387
    %v6932 = vmul.f32 %v5660, %v6383
    %v6933 = vmul.f32 %v5660, %v6387
    %v6934 = vmul.f32 %v5664, %v6383
    %v6935 = vmul.f32 %v5664, %v6387
    %v6936 = vmul.f32 %v5668, %v6383
    %v6937 = vmul.f32 %v5668, %v6387
    %v6938 = vmul.f32 %v5672, %v6383
    %v6939 = vmul.f32 %v5672, %v6387
    %v6940 = vmul.f32 %v5676, %v6383
    %v6941 = vmul.f32 %v5676, %v6387
    %v6942 = vmul.f32 %v5680, %v6383
    %v6943 = vmul.f32 %v5680, %v6387
    %v6944 = vmul.f32 %v5684, %v6383
    %v6945 = vmul.f32 %v5684, %v6387
    %v6946 = vmul.f32 %v5688, %v6383
    %v6947 = vmul.f32 %v5688, %v6387
    %v6948 = vmul.f32 %v5692, %v6383
    %v6949 = vmul.f32 %v5692, %v6387
    %v6950 = vmul.f32 %v5696, %v6383
    %v6951 = vmul.f32 %v5696, %v6387
    %v6952 = vmul.f32 %v5700, %v6383
    %v6953 = vmul.f32 %v5700, %v6387
    %v6954 = vmul.f32 %v5704, %v6383
    %v6955 = vmul.f32 %v5704, %v6387
    %v6956 = vmul.f32 %v5708, %v6383
    %v6957 = vmul.f32 %v5708, %v6387
    %v6958 = vmul.f32 %v5712, %v6383
    %v6959 = vmul.f32 %v5712, %v6387
    %v6960 = vmul.f32 %v5716, %v6383
    %v6961 = vmul.f32 %v5716, %v6387
    %v6962 = vmul.f32 %v5720, %v6383
    %v6963 = vmul.f32 %v5720, %v6387
    %v6964 = vmul.f32 %v5724, %v6383
    %v6965 = vmul.f32 %v5724, %v6387
    %v6966 = vmul.f32 %v5728, %v6383
    %v6967 = vmul.f32 %v5728, %v6387
    %v6968 = vmul.f32 %v5732, %v6383
    %v6969 = vmul.f32 %v5732, %v6387
    %v6970 = vmul.f32 %v5736, %v6383
    %v6971 = vmul.f32 %v5736, %v6387
    %v6972 = vmul.f32 %v5740, %v6383
    %v6973 = vmul.f32 %v5740, %v6387
    %v6974 = vmul.f32 %v5744, %v6383
    %v6975 = vmul.f32 %v5744, %v6387
    %v6976 = vmul.f32 %v5748, %v6383
    %v6977 = vmul.f32 %v5748, %v6387
    %v6978 = vmul.f32 %v5752, %v6383
    %v6979 = vmul.f32 %v5752, %v6387
    %v6980 = vmul.f32 %v5756, %v6383
    %v6981 = vmul.f32 %v5756, %v6387
    %v6982 = vmul.f32 %v5760, %v6383
    %v6983 = vmul.f32 %v5760, %v6387
    %v6984 = vmul.f32 %v5764, %v6383
    %v6985 = vmul.f32 %v5764, %v6387
    %v6986 = vmul.f32 %v5768, %v6383
    %v6987 = vmul.f32 %v5768, %v6387
    %v6988 = vmul.f32 %v5772, %v6383
    %v6989 = vmul.f32 %v5772, %v6387
    %v6990 = vmul.f32 %v5776, %v6383
    %v6991 = vmul.f32 %v5776, %v6387
    %v6992 = vmul.f32 %v5780, %v6383
    %v6993 = vmul.f32 %v5780, %v6387
    %v6994 = vmul.f32 %v5784, %v6383
    %v6995 = vmul.f32 %v5784, %v6387
    %v6996 = vmul.f32 %v5788, %v6383
    %v6997 = vmul.f32 %v5788, %v6387
    %v6998 = vmul.f32 %v5792, %v6383
    %v6999 = vmul.f32 %v5792, %v6387
    %v7000 = vmul.f32 %v5796, %v6383
    %v7001 = vmul.f32 %v5796, %v6387
    %v7002 = vmul.f32 %v5800, %v6383
    %v7003 = vmul.f32 %v5800, %v6387
    %v7004 = vmul.f32 %v5804, %v6383
    %v7005 = vmul.f32 %v5804, %v6387
    %v7006 = vmul.f32 %v5808, %v6383
    %v7007 = vmul.f32 %v5808, %v6387
    %v7008 = vmul.f32 %v5812, %v6383
    %v7009 = vmul.f32 %v5812, %v6387
    %v7010 = vmul.f32 %v5816, %v6383
    %v7011 = vmul.f32 %v5816, %v6387
    %v7012 = vmul.f32 %v5820, %v6383
    %v7013 = vmul.f32 %v5820, %v6387
    %v7014 = vmul.f32 %v5824, %v6383
    %v7015 = vmul.f32 %v5824, %v6387
    %v7016 = vmul.f32 %v5828, %v6383
    %v7017 = vmul.f32 %v5828, %v6387
    %v7018 = vmul.f32 %v5832, %v6383
    %v7019 = vmul.f32 %v5832, %v6387
    %v7020 = vmul.f32 %v5836, %v6383
    %v7021 = vmul.f32 %v5836, %v6387
    %v7022 = vmul.f32 %v5840, %v6383
    %v7023 = vmul.f32 %v5840, %v6387
    %v7024 = vmul.f32 %v5844, %v6383
    %v7025 = vmul.f32 %v5844, %v6387
    %v7026 = vmul.f32 %v5848, %v6383
    %v7027 = vmul.f32 %v5848, %v6387
    %v7028 = vmul.f32 %v5852, %v6383
    %v7029 = vmul.f32 %v5852, %v6387
    %v7030 = vmul.f32 %v5856, %v6383
    %v7031 = vmul.f32 %v5856, %v6387
    %v7032 = vmul.f32 %v5860, %v6383
    %v7033 = vmul.f32 %v5860, %v6387
    %v7034 = vmul.f32 %v5864, %v6383
    %v7035 = vmul.f32 %v5864, %v6387
    %v7036 = vmul.f32 %v5868, %v6383
    %v7037 = vmul.f32 %v5868, %v6387
    %v7038 = vmul.f32 %v5872, %v6383
    %v7039 = vmul.f32 %v5872, %v6387
    %v7040 = vmul.f32 %v5876, %v6383
    %v7041 = vmul.f32 %v5876, %v6387
    %v7042 = vmul.f32 %v5880, %v6383
    %v7043 = vmul.f32 %v5880, %v6387
    %v7044 = vmul.f32 %v5884, %v6383
    %v7045 = vmul.f32 %v5884, %v6387
    %v7046 = vmul.f32 %v5888, %v6383
    %v7047 = vmul.f32 %v5888, %v6387
    %v7048 = vmul.f32 %v5892, %v6383
    %v7049 = vmul.f32 %v5892, %v6387
    %v7050 = vmul.f32 %v5896, %v6383
    %v7051 = vmul.f32 %v5896, %v6387
    %v7052 = vmul.f32 %v5900, %v6383
    %v7053 = vmul.f32 %v5900, %v6387
    %v7054 = vmul.f32 %v5904, %v6383
    %v7055 = vmul.f32 %v5904, %v6387
    %v7056 = vmul.f32 %v5908, %v6383
    %v7057 = vmul.f32 %v5908, %v6387
    %v7058 = vmul.f32 %v5912, %v6383
    %v7059 = vmul.f32 %v5912, %v6387
    %v7060 = vmul.f32 %v5916, %v6383
    %v7061 = vmul.f32 %v5916, %v6387
    %v7062 = vmul.f32 %v5920, %v6383
    %v7063 = vmul.f32 %v5920, %v6387
    %v7064 = vmul.f32 %v5924, %v6383
    %v7065 = vmul.f32 %v5924, %v6387
    %v7066 = vmul.f32 %v5928, %v6383
    %v7067 = vmul.f32 %v5928, %v6387
    %v7068 = vmul.f32 %v5932, %v6383
    %v7069 = vmul.f32 %v5932, %v6387
    %v7070 = vmul.f32 %v5936, %v6383
    %v7071 = vmul.f32 %v5936, %v6387
    %v7072 = vmul.f32 %v5940, %v6383
    %v7073 = vmul.f32 %v5940, %v6387
    %v7074 = vmul.f32 %v5944, %v6383
    %v7075 = vmul.f32 %v5944, %v6387
    %v7076 = vmul.f32 %v5948, %v6383
    %v7077 = vmul.f32 %v5948, %v6387
    %v7078 = vmul.f32 %v5952, %v6383
    %v7079 = vmul.f32 %v5952, %v6387
    %v7080 = vmul.f32 %v5956, %v6383
    %v7081 = vmul.f32 %v5956, %v6387
    %v7082 = vmul.f32 %v5960, %v6383
    %v7083 = vmul.f32 %v5960, %v6387
    %v7084 = vmul.f32 %v5964, %v6383
    %v7085 = vmul.f32 %v5964, %v6387
    %v7086 = vmul.f32 %v5968, %v6383
    %v7087 = vmul.f32 %v5968, %v6387
    %v7088 = vmul.f32 %v5972, %v6383
    %v7089 = vmul.f32 %v5972, %v6387
    %v7090 = vmul.f32 %v5976, %v6383
    %v7091 = vmul.f32 %v5976, %v6387
    %v7092 = vmul.f32 %v5980, %v6383
    %v7093 = vmul.f32 %v5980, %v6387
    %v7094 = vmul.f32 %v5984, %v6383
    %v7095 = vmul.f32 %v5984, %v6387
    %v7096 = vmul.f32 %v5988, %v6383
    %v7097 = vmul.f32 %v5988, %v6387
    %v7098 = vmul.f32 %v5992, %v6383
    %v7099 = vmul.f32 %v5992, %v6387
    %v7100 = vmul.f32 %v5996, %v6383
    %v7101 = vmul.f32 %v5996, %v6387
    %v7102 = vmul.f32 %v6000, %v6383
    %v7103 = vmul.f32 %v6000, %v6387
    %v7104 = vmul.f32 %v6004, %v6383
    %v7105 = vmul.f32 %v6004, %v6387
    %v7106 = vmul.f32 %v6008, %v6383
    %v7107 = vmul.f32 %v6008, %v6387
    %v7108 = vmul.f32 %v6012, %v6383
    %v7109 = vmul.f32 %v6012, %v6387
    %v7110 = vmul.f32 %v6016, %v6383
    %v7111 = vmul.f32 %v6016, %v6387
    %v7112 = vmul.f32 %v6020, %v6383
    %v7113 = vmul.f32 %v6020, %v6387
    %v7114 = vmul.f32 %v6024, %v6383
    %v7115 = vmul.f32 %v6024, %v6387
    %v7116 = vmul.f32 %v6028, %v6383
    %v7117 = vmul.f32 %v6028, %v6387
    %v7118 = vmul.f32 %v6032, %v6383
    %v7119 = vmul.f32 %v6032, %v6387
    %v7120 = vmul.f32 %v6036, %v6383
    %v7121 = vmul.f32 %v6036, %v6387
    %v7122 = vmul.f32 %v6040, %v6383
    %v7123 = vmul.f32 %v6040, %v6387
    %v7124 = vmul.f32 %v6044, %v6383
    %v7125 = vmul.f32 %v6044, %v6387
    %v7126 = vmul.f32 %v6048, %v6383
    %v7127 = vmul.f32 %v6048, %v6387
    %v7128 = vmul.f32 %v6052, %v6383
    %v7129 = vmul.f32 %v6052, %v6387
    %v7130 = vmul.f32 %v6056, %v6383
    %v7131 = vmul.f32 %v6056, %v6387
    %v7132 = vmul.f32 %v6060, %v6383
    %v7133 = vmul.f32 %v6060, %v6387
    %v7134 = vmul.f32 %v6064, %v6383
    %v7135 = vmul.f32 %v6064, %v6387
    %v7136 = vmul.f32 %v6068, %v6383
    %v7137 = vmul.f32 %v6068, %v6387
    %v7138 = vmul.f32 %v6072, %v6383
    %v7139 = vmul.f32 %v6072, %v6387
    %v7140 = vmul.f32 %v6076, %v6383
    %v7141 = vmul.f32 %v6076, %v6387
    %v7142 = vmul.f32 %v6080, %v6383
    %v7143 = vmul.f32 %v6080, %v6387
    %v7144 = vmul.f32 %v6084, %v6383
    %v7145 = vmul.f32 %v6084, %v6387
    %v7146 = vmul.f32 %v6088, %v6383
    %v7147 = vmul.f32 %v6088, %v6387
    %v7148 = vmul.f32 %v6092, %v6383
    %v7149 = vmul.f32 %v6092, %v6387
    %v7150 = vmul.f32 %v6096, %v6383
    %v7151 = vmul.f32 %v6096, %v6387
    %v7152 = vmul.f32 %v6100, %v6383
    %v7153 = vmul.f32 %v6100, %v6387
    %v7154 = vmul.f32 %v6104, %v6383
    %v7155 = vmul.f32 %v6104, %v6387
    %v7156 = vmul.f32 %v6108, %v6383
    %v7157 = vmul.f32 %v6108, %v6387
    %v7158 = vmul.f32 %v6112, %v6383
    %v7159 = vmul.f32 %v6112, %v6387
    %v7160 = vmul.f32 %v6116, %v6383
    %v7161 = vmul.f32 %v6116, %v6387
    %v7162 = vmul.f32 %v6120, %v6383
    %v7163 = vmul.f32 %v6120, %v6387
    %v7164 = vmul.f32 %v6124, %v6383
    %v7165 = vmul.f32 %v6124, %v6387
    %v7166 = vmul.f32 %v6128, %v6383
    %v7167 = vmul.f32 %v6128, %v6387
    %v7168 = vmul.f32 %v6132, %v6383
    %v7169 = vmul.f32 %v6132, %v6387
    %v7170 = vmul.f32 %v6136, %v6383
    %v7171 = vmul.f32 %v6136, %v6387
    %v7172 = vmul.f32 %v6140, %v6383
    %v7173 = vmul.f32 %v6140, %v6387
    %v7174 = vmul.f32 %v6144, %v6383
    %v7175 = vmul.f32 %v6144, %v6387
    %v7176 = vmul.f32 %v6148, %v6383
    %v7177 = vmul.f32 %v6148, %v6387
    %v7178 = vmul.f32 %v6152, %v6383
    %v7179 = vmul.f32 %v6152, %v6387
    %v7180 = vmul.f32 %v6156, %v6383
    %v7181 = vmul.f32 %v6156, %v6387
    %v7182 = vmul.f32 %v6160, %v6383
    %v7183 = vmul.f32 %v6160, %v6387
    %v7184 = vmul.f32 %v6164, %v6383
    %v7185 = vmul.f32 %v6164, %v6387
    %v7186 = vmul.f32 %v6168, %v6383
    %v7187 = vmul.f32 %v6168, %v6387
    %v7188 = vmul.f32 %v6172, %v6383
    %v7189 = vmul.f32 %v6172, %v6387
    %v7190 = vmul.f32 %v6176, %v6383
    %v7191 = vmul.f32 %v6176, %v6387
    %v7192 = vmul.f32 %v6180, %v6383
    %v7193 = vmul.f32 %v6180, %v6387
    %v7194 = vmul.f32 %v6184, %v6383
    %v7195 = vmul.f32 %v6184, %v6387
    %v7196 = vmul.f32 %v6188, %v6383
    %v7197 = vmul.f32 %v6188, %v6387
    %v7198 = vmul.f32 %v6192, %v6383
    %v7199 = vmul.f32 %v6192, %v6387
    %v7200 = vmul.f32 %v6196, %v6383
    %v7201 = vmul.f32 %v6196, %v6387
    %v7202 = vmul.f32 %v6200, %v6383
    %v7203 = vmul.f32 %v6200, %v6387
    %v7204 = vmul.f32 %v6204, %v6383
    %v7205 = vmul.f32 %v6204, %v6387
    %v7206 = vmul.f32 %v6208, %v6383
    %v7207 = vmul.f32 %v6208, %v6387
    %v7208 = vmul.f32 %v6212, %v6383
    %v7209 = vmul.f32 %v6212, %v6387
    %v7210 = vmul.f32 %v6216, %v6383
    %v7211 = vmul.f32 %v6216, %v6387
    %v7212 = vmul.f32 %v6220, %v6383
    %v7213 = vmul.f32 %v6220, %v6387
    %v7214 = vmul.f32 %v6224, %v6383
    %v7215 = vmul.f32 %v6224, %v6387
    %v7216 = vmul.f32 %v6228, %v6383
    %v7217 = vmul.f32 %v6228, %v6387
    %v7218 = vmul.f32 %v6232, %v6383
    %v7219 = vmul.f32 %v6232, %v6387
    %v7220 = vmul.f32 %v6236, %v6383
    %v7221 = vmul.f32 %v6236, %v6387
    %v7222 = vmul.f32 %v6240, %v6383
    %v7223 = vmul.f32 %v6240, %v6387
    %v7224 = vmul.f32 %v6244, %v6383
    %v7225 = vmul.f32 %v6244, %v6387
    %v7226 = vmul.f32 %v6248, %v6383
    %v7227 = vmul.f32 %v6248, %v6387
    %v7228 = vmul.f32 %v6252, %v6383
    %v7229 = vmul.f32 %v6252, %v6387
    %v7230 = vmul.f32 %v6256, %v6383
    %v7231 = vmul.f32 %v6256, %v6387
    %v7232 = vmul.f32 %v6260, %v6383
    %v7233 = vmul.f32 %v6260, %v6387
    %v7234 = vmul.f32 %v6264, %v6383
    %v7235 = vmul.f32 %v6264, %v6387
    %v7236 = vmul.f32 %v6268, %v6383
    %v7237 = vmul.f32 %v6268, %v6387
    %v7238 = vmul.f32 %v6272, %v6383
    %v7239 = vmul.f32 %v6272, %v6387
    %v7240 = vmul.f32 %v6276, %v6383
    %v7241 = vmul.f32 %v6276, %v6387
    %v7242 = vmul.f32 %v6280, %v6383
    %v7243 = vmul.f32 %v6280, %v6387
    %v7244 = vmul.f32 %v6284, %v6383
    %v7245 = vmul.f32 %v6284, %v6387
    %v7246 = vmul.f32 %v6288, %v6383
    %v7247 = vmul.f32 %v6288, %v6387
    %v7248 = vmul.f32 %v6292, %v6383
    %v7249 = vmul.f32 %v6292, %v6387
    %v7250 = vmul.f32 %v6296, %v6383
    %v7251 = vmul.f32 %v6296, %v6387
    %v7252 = vmul.f32 %v6300, %v6383
    %v7253 = vmul.f32 %v6300, %v6387
    %v7254 = vmul.f32 %v6304, %v6383
    %v7255 = vmul.f32 %v6304, %v6387
    %v7256 = vmul.f32 %v6308, %v6383
    %v7257 = vmul.f32 %v6308, %v6387
    %v7258 = vmul.f32 %v6312, %v6383
    %v7259 = vmul.f32 %v6312, %v6387
    %v7260 = vmul.f32 %v6316, %v6383
    %v7261 = vmul.f32 %v6316, %v6387
    %v7262 = vmul.f32 %v6320, %v6383
    %v7263 = vmul.f32 %v6320, %v6387
    %v7264 = vmul.f32 %v6324, %v6383
    %v7265 = vmul.f32 %v6324, %v6387
    %v7266 = vmul.f32 %v6328, %v6383
    %v7267 = vmul.f32 %v6328, %v6387
    %v7268 = vmul.f32 %v6332, %v6383
    %v7269 = vmul.f32 %v6332, %v6387
    %v7270 = vmul.f32 %v6336, %v6383
    %v7271 = vmul.f32 %v6336, %v6387
    %v7272 = vmul.f32 %v6340, %v6383
    %v7273 = vmul.f32 %v6340, %v6387
    %v7274 = vmul.f32 %v6344, %v6383
    %v7275 = vmul.f32 %v6344, %v6387
    %v7276 = vmul.f32 %v6348, %v6383
    %v7277 = vmul.f32 %v6348, %v6387
    %v7278 = vmul.f32 %v6352, %v6383
    %v7279 = vmul.f32 %v6352, %v6387
    %v7280 = vmul.f32 %v6356, %v6383
    %v7281 = vmul.f32 %v6356, %v6387
    %v7282 = vmul.f32 %v6360, %v6383
    %v7283 = vmul.f32 %v6360, %v6387
    %v7284 = vmul.f32 %v6364, %v6383
    %v7285 = vmul.f32 %v6364, %v6387
    %v7286 = vmul.f32 %v6368, %v6383
    %v7287 = vmul.f32 %v6368, %v6387
    %v7288 = vadd.f32 %v3670, %v6388
    %v7289 = vadd.f32 %v3671, %v6389
    %v7290 = vadd.f32 %v3672, %v6390
    %v7291 = vadd.f32 %v3673, %v6391
    %v7292 = vadd.f32 %v3674, %v6392
    %v7293 = vadd.f32 %v3675, %v6393
    %v7294 = vadd.f32 %v3676, %v6394
    %v7295 = vadd.f32 %v3677, %v6395
    %v7296 = vadd.f32 %v3678, %v6396
    %v7297 = vadd.f32 %v3679, %v6397
    %v7298 = vadd.f32 %v3680, %v6398
    %v7299 = vadd.f32 %v3681, %v6399
    %v7300 = vadd.f32 %v3682, %v6400
    %v7301 = vadd.f32 %v3683, %v6401
    %v7302 = vadd.f32 %v3684, %v6402
    %v7303 = vadd.f32 %v3685, %v6403
    %v7304 = vadd.f32 %v3686, %v6404
    %v7305 = vadd.f32 %v3687, %v6405
    %v7306 = vadd.f32 %v3688, %v6406
    %v7307 = vadd.f32 %v3689, %v6407
    %v7308 = vadd.f32 %v3690, %v6408
    %v7309 = vadd.f32 %v3691, %v6409
    %v7310 = vadd.f32 %v3692, %v6410
    %v7311 = vadd.f32 %v3693, %v6411
    %v7312 = vadd.f32 %v3694, %v6412
    %v7313 = vadd.f32 %v3695, %v6413
    %v7314 = vadd.f32 %v3696, %v6414
    %v7315 = vadd.f32 %v3697, %v6415
    %v7316 = vadd.f32 %v3698, %v6416
    %v7317 = vadd.f32 %v3699, %v6417
    %v7318 = vadd.f32 %v3700, %v6418
    %v7319 = vadd.f32 %v3701, %v6419
    %v7320 = vadd.f32 %v3702, %v6420
    %v7321 = vadd.f32 %v3703, %v6421
    %v7322 = vadd.f32 %v3704, %v6422
    %v7323 = vadd.f32 %v3705, %v6423
    %v7324 = vadd.f32 %v3706, %v6424
    %v7325 = vadd.f32 %v3707, %v6425
    %v7326 = vadd.f32 %v3708, %v6426
    %v7327 = vadd.f32 %v3709, %v6427
    %v7328 = vadd.f32 %v3710, %v6428
    %v7329 = vadd.f32 %v3711, %v6429
    %v7330 = vadd.f32 %v3712, %v6430
    %v7331 = vadd.f32 %v3713, %v6431
    %v7332 = vadd.f32 %v3714, %v6432
    %v7333 = vadd.f32 %v3715, %v6433
    %v7334 = vadd.f32 %v3716, %v6434
    %v7335 = vadd.f32 %v3717, %v6435
    %v7336 = vadd.f32 %v3718, %v6436
    %v7337 = vadd.f32 %v3719, %v6437
    %v7338 = vadd.f32 %v3720, %v6438
    %v7339 = vadd.f32 %v3721, %v6439
    %v7340 = vadd.f32 %v3722, %v6440
    %v7341 = vadd.f32 %v3723, %v6441
    %v7342 = vadd.f32 %v3724, %v6442
    %v7343 = vadd.f32 %v3725, %v6443
    %v7344 = vadd.f32 %v3726, %v6444
    %v7345 = vadd.f32 %v3727, %v6445
    %v7346 = vadd.f32 %v3728, %v6446
    %v7347 = vadd.f32 %v3729, %v6447
    %v7348 = vadd.f32 %v3730, %v6448
    %v7349 = vadd.f32 %v3731, %v6449
    %v7350 = vadd.f32 %v3732, %v6450
    %v7351 = vadd.f32 %v3733, %v6451
    %v7352 = vadd.f32 %v3734, %v6452
    %v7353 = vadd.f32 %v3735, %v6453
    %v7354 = vadd.f32 %v3736, %v6454
    %v7355 = vadd.f32 %v3737, %v6455
    %v7356 = vadd.f32 %v3738, %v6456
    %v7357 = vadd.f32 %v3739, %v6457
    %v7358 = vadd.f32 %v3740, %v6458
    %v7359 = vadd.f32 %v3741, %v6459
    %v7360 = vadd.f32 %v3742, %v6460
    %v7361 = vadd.f32 %v3743, %v6461
    %v7362 = vadd.f32 %v3744, %v6462
    %v7363 = vadd.f32 %v3745, %v6463
    %v7364 = vadd.f32 %v3746, %v6464
    %v7365 = vadd.f32 %v3747, %v6465
    %v7366 = vadd.f32 %v3748, %v6466
    %v7367 = vadd.f32 %v3749, %v6467
    %v7368 = vadd.f32 %v3750, %v6468
    %v7369 = vadd.f32 %v3751, %v6469
    %v7370 = vadd.f32 %v3752, %v6470
    %v7371 = vadd.f32 %v3753, %v6471
    %v7372 = vadd.f32 %v3754, %v6472
    %v7373 = vadd.f32 %v3755, %v6473
    %v7374 = vadd.f32 %v3756, %v6474
    %v7375 = vadd.f32 %v3757, %v6475
    %v7376 = vadd.f32 %v3758, %v6476
    %v7377 = vadd.f32 %v3759, %v6477
    %v7378 = vadd.f32 %v3760, %v6478
    %v7379 = vadd.f32 %v3761, %v6479
    %v7380 = vadd.f32 %v3762, %v6480
    %v7381 = vadd.f32 %v3763, %v6481
    %v7382 = vadd.f32 %v3764, %v6482
    %v7383 = vadd.f32 %v3765, %v6483
    %v7384 = vadd.f32 %v3766, %v6484
    %v7385 = vadd.f32 %v3767, %v6485
    %v7386 = vadd.f32 %v3768, %v6486
    %v7387 = vadd.f32 %v3769, %v6487
    %v7388 = vadd.f32 %v3770, %v6488
    %v7389 = vadd.f32 %v3771, %v6489
    %v7390 = vadd.f32 %v3772, %v6490
    %v7391 = vadd.f32 %v3773, %v6491
    %v7392 = vadd.f32 %v3774, %v6492
    %v7393 = vadd.f32 %v3775, %v6493
    %v7394 = vadd.f32 %v3776, %v6494
    %v7395 = vadd.f32 %v3777, %v6495
    %v7396 = vadd.f32 %v3778, %v6496
    %v7397 = vadd.f32 %v3779, %v6497
    %v7398 = vadd.f32 %v3780, %v6498
    %v7399 = vadd.f32 %v3781, %v6499
    %v7400 = vadd.f32 %v3782, %v6500
    %v7401 = vadd.f32 %v3783, %v6501
    %v7402 = vadd.f32 %v3784, %v6502
    %v7403 = vadd.f32 %v3785, %v6503
    %v7404 = vadd.f32 %v3786, %v6504
    %v7405 = vadd.f32 %v3787, %v6505
    %v7406 = vadd.f32 %v3788, %v6506
    %v7407 = vadd.f32 %v3789, %v6507
    %v7408 = vadd.f32 %v3790, %v6508
    %v7409 = vadd.f32 %v3791, %v6509
    %v7410 = vadd.f32 %v3792, %v6510
    %v7411 = vadd.f32 %v3793, %v6511
    %v7412 = vadd.f32 %v3794, %v6512
    %v7413 = vadd.f32 %v3795, %v6513
    %v7414 = vadd.f32 %v3796, %v6514
    %v7415 = vadd.f32 %v3797, %v6515
    %v7416 = vadd.f32 %v3798, %v6516
    %v7417 = vadd.f32 %v3799, %v6517
    %v7418 = vadd.f32 %v3800, %v6518
    %v7419 = vadd.f32 %v3801, %v6519
    %v7420 = vadd.f32 %v3802, %v6520
    %v7421 = vadd.f32 %v3803, %v6521
    %v7422 = vadd.f32 %v3804, %v6522
    %v7423 = vadd.f32 %v3805, %v6523
    %v7424 = vadd.f32 %v3806, %v6524
    %v7425 = vadd.f32 %v3807, %v6525
    %v7426 = vadd.f32 %v3808, %v6526
    %v7427 = vadd.f32 %v3809, %v6527
    %v7428 = vadd.f32 %v3810, %v6528
    %v7429 = vadd.f32 %v3811, %v6529
    %v7430 = vadd.f32 %v3812, %v6530
    %v7431 = vadd.f32 %v3813, %v6531
    %v7432 = vadd.f32 %v3814, %v6532
    %v7433 = vadd.f32 %v3815, %v6533
    %v7434 = vadd.f32 %v3816, %v6534
    %v7435 = vadd.f32 %v3817, %v6535
    %v7436 = vadd.f32 %v3818, %v6536
    %v7437 = vadd.f32 %v3819, %v6537
    %v7438 = vadd.f32 %v3820, %v6538
    %v7439 = vadd.f32 %v3821, %v6539
    %v7440 = vadd.f32 %v3822, %v6540
    %v7441 = vadd.f32 %v3823, %v6541
    %v7442 = vadd.f32 %v3824, %v6542
    %v7443 = vadd.f32 %v3825, %v6543
    %v7444 = vadd.f32 %v3826, %v6544
    %v7445 = vadd.f32 %v3827, %v6545
    %v7446 = vadd.f32 %v3828, %v6546
    %v7447 = vadd.f32 %v3829, %v6547
    %v7448 = vadd.f32 %v3830, %v6548
    %v7449 = vadd.f32 %v3831, %v6549
    %v7450 = vadd.f32 %v3832, %v6550
    %v7451 = vadd.f32 %v3833, %v6551
    %v7452 = vadd.f32 %v3834, %v6552
    %v7453 = vadd.f32 %v3835, %v6553
    %v7454 = vadd.f32 %v3836, %v6554
    %v7455 = vadd.f32 %v3837, %v6555
    %v7456 = vadd.f32 %v3838, %v6556
    %v7457 = vadd.f32 %v3839, %v6557
    %v7458 = vadd.f32 %v3840, %v6558
    %v7459 = vadd.f32 %v3841, %v6559
    %v7460 = vadd.f32 %v3842, %v6560
    %v7461 = vadd.f32 %v3843, %v6561
    %v7462 = vadd.f32 %v3844, %v6562
    %v7463 = vadd.f32 %v3845, %v6563
    %v7464 = vadd.f32 %v3846, %v6564
    %v7465 = vadd.f32 %v3847, %v6565
    %v7466 = vadd.f32 %v3848, %v6566
    %v7467 = vadd.f32 %v3849, %v6567
    %v7468 = vadd.f32 %v3850, %v6568
    %v7469 = vadd.f32 %v3851, %v6569
    %v7470 = vadd.f32 %v3852, %v6570
    %v7471 = vadd.f32 %v3853, %v6571
    %v7472 = vadd.f32 %v3854, %v6572
    %v7473 = vadd.f32 %v3855, %v6573
    %v7474 = vadd.f32 %v3856, %v6574
    %v7475 = vadd.f32 %v3857, %v6575
    %v7476 = vadd.f32 %v3858, %v6576
    %v7477 = vadd.f32 %v3859, %v6577
    %v7478 = vadd.f32 %v3860, %v6578
    %v7479 = vadd.f32 %v3861, %v6579
    %v7480 = vadd.f32 %v3862, %v6580
    %v7481 = vadd.f32 %v3863, %v6581
    %v7482 = vadd.f32 %v3864, %v6582
    %v7483 = vadd.f32 %v3865, %v6583
    %v7484 = vadd.f32 %v3866, %v6584
    %v7485 = vadd.f32 %v3867, %v6585
    %v7486 = vadd.f32 %v3868, %v6586
    %v7487 = vadd.f32 %v3869, %v6587
    %v7488 = vadd.f32 %v3870, %v6588
    %v7489 = vadd.f32 %v3871, %v6589
    %v7490 = vadd.f32 %v3872, %v6590
    %v7491 = vadd.f32 %v3873, %v6591
    %v7492 = vadd.f32 %v3874, %v6592
    %v7493 = vadd.f32 %v3875, %v6593
    %v7494 = vadd.f32 %v3876, %v6594
    %v7495 = vadd.f32 %v3877, %v6595
    %v7496 = vadd.f32 %v3878, %v6596
    %v7497 = vadd.f32 %v3879, %v6597
    %v7498 = vadd.f32 %v3880, %v6598
    %v7499 = vadd.f32 %v3881, %v6599
    %v7500 = vadd.f32 %v3882, %v6600
    %v7501 = vadd.f32 %v3883, %v6601
    %v7502 = vadd.f32 %v3884, %v6602
    %v7503 = vadd.f32 %v3885, %v6603
    %v7504 = vadd.f32 %v3886, %v6604
    %v7505 = vadd.f32 %v3887, %v6605
    %v7506 = vadd.f32 %v3888, %v6606
    %v7507 = vadd.f32 %v3889, %v6607
    %v7508 = vadd.f32 %v3890, %v6608
    %v7509 = vadd.f32 %v3891, %v6609
    %v7510 = vadd.f32 %v3892, %v6610
    %v7511 = vadd.f32 %v3893, %v6611
    %v7512 = vadd.f32 %v3894, %v6612
    %v7513 = vadd.f32 %v3895, %v6613
    %v7514 = vadd.f32 %v3896, %v6614
    %v7515 = vadd.f32 %v3897, %v6615
    %v7516 = vadd.f32 %v3898, %v6616
    %v7517 = vadd.f32 %v3899, %v6617
    %v7518 = vadd.f32 %v3900, %v6618
    %v7519 = vadd.f32 %v3901, %v6619
    %v7520 = vadd.f32 %v3902, %v6620
    %v7521 = vadd.f32 %v3903, %v6621
    %v7522 = vadd.f32 %v3904, %v6622
    %v7523 = vadd.f32 %v3905, %v6623
    %v7524 = vadd.f32 %v3906, %v6624
    %v7525 = vadd.f32 %v3907, %v6625
    %v7526 = vadd.f32 %v3908, %v6626
    %v7527 = vadd.f32 %v3909, %v6627
    %v7528 = vadd.f32 %v3910, %v6628
    %v7529 = vadd.f32 %v3911, %v6629
    %v7530 = vadd.f32 %v3912, %v6630
    %v7531 = vadd.f32 %v3913, %v6631
    %v7532 = vadd.f32 %v3914, %v6632
    %v7533 = vadd.f32 %v3915, %v6633
    %v7534 = vadd.f32 %v3916, %v6634
    %v7535 = vadd.f32 %v3917, %v6635
    %v7536 = vadd.f32 %v3918, %v6636
    %v7537 = vadd.f32 %v3919, %v6637
    %v7538 = vadd.f32 %v3920, %v6638
    %v7539 = vadd.f32 %v3921, %v6639
    %v7540 = vadd.f32 %v3922, %v6640
    %v7541 = vadd.f32 %v3923, %v6641
    %v7542 = vadd.f32 %v3924, %v6642
    %v7543 = vadd.f32 %v3925, %v6643
    %v7544 = vadd.f32 %v3926, %v6644
    %v7545 = vadd.f32 %v3927, %v6645
    %v7546 = vadd.f32 %v3928, %v6646
    %v7547 = vadd.f32 %v3929, %v6647
    %v7548 = vadd.f32 %v3930, %v6648
    %v7549 = vadd.f32 %v3931, %v6649
    %v7550 = vadd.f32 %v3932, %v6650
    %v7551 = vadd.f32 %v3933, %v6651
    %v7552 = vadd.f32 %v3934, %v6652
    %v7553 = vadd.f32 %v3935, %v6653
    %v7554 = vadd.f32 %v3936, %v6654
    %v7555 = vadd.f32 %v3937, %v6655
    %v7556 = vadd.f32 %v3938, %v6656
    %v7557 = vadd.f32 %v3939, %v6657
    %v7558 = vadd.f32 %v3940, %v6658
    %v7559 = vadd.f32 %v3941, %v6659
    %v7560 = vadd.f32 %v3942, %v6660
    %v7561 = vadd.f32 %v3943, %v6661
    %v7562 = vadd.f32 %v3944, %v6662
    %v7563 = vadd.f32 %v3945, %v6663
    %v7564 = vadd.f32 %v3946, %v6664
    %v7565 = vadd.f32 %v3947, %v6665
    %v7566 = vadd.f32 %v3948, %v6666
    %v7567 = vadd.f32 %v3949, %v6667
    %v7568 = vadd.f32 %v3950, %v6668
    %v7569 = vadd.f32 %v3951, %v6669
    %v7570 = vadd.f32 %v3952, %v6670
    %v7571 = vadd.f32 %v3953, %v6671
    %v7572 = vadd.f32 %v3954, %v6672
    %v7573 = vadd.f32 %v3955, %v6673
    %v7574 = vadd.f32 %v3956, %v6674
    %v7575 = vadd.f32 %v3957, %v6675
    %v7576 = vadd.f32 %v3958, %v6676
    %v7577 = vadd.f32 %v3959, %v6677
    %v7578 = vadd.f32 %v3960, %v6678
    %v7579 = vadd.f32 %v3961, %v6679
    %v7580 = vadd.f32 %v3962, %v6680
    %v7581 = vadd.f32 %v3963, %v6681
    %v7582 = vadd.f32 %v3964, %v6682
    %v7583 = vadd.f32 %v3965, %v6683
    %v7584 = vadd.f32 %v3966, %v6684
    %v7585 = vadd.f32 %v3967, %v6685
    %v7586 = vadd.f32 %v3968, %v6686
    %v7587 = vadd.f32 %v3969, %v6687
    %v7588 = vadd.f32 %v3970, %v6688
    %v7589 = vadd.f32 %v3971, %v6689
    %v7590 = vadd.f32 %v3972, %v6690
    %v7591 = vadd.f32 %v3973, %v6691
    %v7592 = vadd.f32 %v3974, %v6692
    %v7593 = vadd.f32 %v3975, %v6693
    %v7594 = vadd.f32 %v3976, %v6694
    %v7595 = vadd.f32 %v3977, %v6695
    %v7596 = vadd.f32 %v3978, %v6696
    %v7597 = vadd.f32 %v3979, %v6697
    %v7598 = vadd.f32 %v3980, %v6698
    %v7599 = vadd.f32 %v3981, %v6699
    %v7600 = vadd.f32 %v3982, %v6700
    %v7601 = vadd.f32 %v3983, %v6701
    %v7602 = vadd.f32 %v3984, %v6702
    %v7603 = vadd.f32 %v3985, %v6703
    %v7604 = vadd.f32 %v3986, %v6704
    %v7605 = vadd.f32 %v3987, %v6705
    %v7606 = vadd.f32 %v3988, %v6706
    %v7607 = vadd.f32 %v3989, %v6707
    %v7608 = vadd.f32 %v3990, %v6708
    %v7609 = vadd.f32 %v3991, %v6709
    %v7610 = vadd.f32 %v3992, %v6710
    %v7611 = vadd.f32 %v3993, %v6711
    %v7612 = vadd.f32 %v3994, %v6712
    %v7613 = vadd.f32 %v3995, %v6713
    %v7614 = vadd.f32 %v3996, %v6714
    %v7615 = vadd.f32 %v3997, %v6715
    %v7616 = vadd.f32 %v3998, %v6716
    %v7617 = vadd.f32 %v3999, %v6717
    %v7618 = vadd.f32 %v4000, %v6718
    %v7619 = vadd.f32 %v4001, %v6719
    %v7620 = vadd.f32 %v4002, %v6720
    %v7621 = vadd.f32 %v4003, %v6721
    %v7622 = vadd.f32 %v4004, %v6722
    %v7623 = vadd.f32 %v4005, %v6723
    %v7624 = vadd.f32 %v4006, %v6724
    %v7625 = vadd.f32 %v4007, %v6725
    %v7626 = vadd.f32 %v4008, %v6726
    %v7627 = vadd.f32 %v4009, %v6727
    %v7628 = vadd.f32 %v4010, %v6728
    %v7629 = vadd.f32 %v4011, %v6729
    %v7630 = vadd.f32 %v4012, %v6730
    %v7631 = vadd.f32 %v4013, %v6731
    %v7632 = vadd.f32 %v4014, %v6732
    %v7633 = vadd.f32 %v4015, %v6733
    %v7634 = vadd.f32 %v4016, %v6734
    %v7635 = vadd.f32 %v4017, %v6735
    %v7636 = vadd.f32 %v4018, %v6736
    %v7637 = vadd.f32 %v4019, %v6737
    %v7638 = vadd.f32 %v4020, %v6738
    %v7639 = vadd.f32 %v4021, %v6739
    %v7640 = vadd.f32 %v4022, %v6740
    %v7641 = vadd.f32 %v4023, %v6741
    %v7642 = vadd.f32 %v4024, %v6742
    %v7643 = vadd.f32 %v4025, %v6743
    %v7644 = vadd.f32 %v4026, %v6744
    %v7645 = vadd.f32 %v4027, %v6745
    %v7646 = vadd.f32 %v4028, %v6746
    %v7647 = vadd.f32 %v4029, %v6747
    %v7648 = vadd.f32 %v4030, %v6748
    %v7649 = vadd.f32 %v4031, %v6749
    %v7650 = vadd.f32 %v4032, %v6750
    %v7651 = vadd.f32 %v4033, %v6751
    %v7652 = vadd.f32 %v4034, %v6752
    %v7653 = vadd.f32 %v4035, %v6753
    %v7654 = vadd.f32 %v4036, %v6754
    %v7655 = vadd.f32 %v4037, %v6755
    %v7656 = vadd.f32 %v4038, %v6756
    %v7657 = vadd.f32 %v4039, %v6757
    %v7658 = vadd.f32 %v4040, %v6758
    %v7659 = vadd.f32 %v4041, %v6759
    %v7660 = vadd.f32 %v4042, %v6760
    %v7661 = vadd.f32 %v4043, %v6761
    %v7662 = vadd.f32 %v4044, %v6762
    %v7663 = vadd.f32 %v4045, %v6763
    %v7664 = vadd.f32 %v4046, %v6764
    %v7665 = vadd.f32 %v4047, %v6765
    %v7666 = vadd.f32 %v4048, %v6766
    %v7667 = vadd.f32 %v4049, %v6767
    %v7668 = vadd.f32 %v4050, %v6768
    %v7669 = vadd.f32 %v4051, %v6769
    %v7670 = vadd.f32 %v4052, %v6770
    %v7671 = vadd.f32 %v4053, %v6771
    %v7672 = vadd.f32 %v4054, %v6772
    %v7673 = vadd.f32 %v4055, %v6773
    %v7674 = vadd.f32 %v4056, %v6774
    %v7675 = vadd.f32 %v4057, %v6775
    %v7676 = vadd.f32 %v4058, %v6776
    %v7677 = vadd.f32 %v4059, %v6777
    %v7678 = vadd.f32 %v4060, %v6778
    %v7679 = vadd.f32 %v4061, %v6779
    %v7680 = vadd.f32 %v4062, %v6780
    %v7681 = vadd.f32 %v4063, %v6781
    %v7682 = vadd.f32 %v4064, %v6782
    %v7683 = vadd.f32 %v4065, %v6783
    %v7684 = vadd.f32 %v4066, %v6784
    %v7685 = vadd.f32 %v4067, %v6785
    %v7686 = vadd.f32 %v4068, %v6786
    %v7687 = vadd.f32 %v4069, %v6787
    %v7688 = vadd.f32 %v4070, %v6788
    %v7689 = vadd.f32 %v4071, %v6789
    %v7690 = vadd.f32 %v4072, %v6790
    %v7691 = vadd.f32 %v4073, %v6791
    %v7692 = vadd.f32 %v4074, %v6792
    %v7693 = vadd.f32 %v4075, %v6793
    %v7694 = vadd.f32 %v4076, %v6794
    %v7695 = vadd.f32 %v4077, %v6795
    %v7696 = vadd.f32 %v4078, %v6796
    %v7697 = vadd.f32 %v4079, %v6797
    %v7698 = vadd.f32 %v4080, %v6798
    %v7699 = vadd.f32 %v4081, %v6799
    %v7700 = vadd.f32 %v4082, %v6800
    %v7701 = vadd.f32 %v4083, %v6801
    %v7702 = vadd.f32 %v4084, %v6802
    %v7703 = vadd.f32 %v4085, %v6803
    %v7704 = vadd.f32 %v4086, %v6804
    %v7705 = vadd.f32 %v4087, %v6805
    %v7706 = vadd.f32 %v4088, %v6806
    %v7707 = vadd.f32 %v4089, %v6807
    %v7708 = vadd.f32 %v4090, %v6808
    %v7709 = vadd.f32 %v4091, %v6809
    %v7710 = vadd.f32 %v4092, %v6810
    %v7711 = vadd.f32 %v4093, %v6811
    %v7712 = vadd.f32 %v4094, %v6812
    %v7713 = vadd.f32 %v4095, %v6813
    %v7714 = vadd.f32 %v4096, %v6814
    %v7715 = vadd.f32 %v4097, %v6815
    %v7716 = vadd.f32 %v4098, %v6816
    %v7717 = vadd.f32 %v4099, %v6817
    %v7718 = vadd.f32 %v4100, %v6818
    %v7719 = vadd.f32 %v4101, %v6819
    %v7720 = vadd.f32 %v4102, %v6820
    %v7721 = vadd.f32 %v4103, %v6821
    %v7722 = vadd.f32 %v4104, %v6822
    %v7723 = vadd.f32 %v4105, %v6823
    %v7724 = vadd.f32 %v4106, %v6824
    %v7725 = vadd.f32 %v4107, %v6825
    %v7726 = vadd.f32 %v4108, %v6826
    %v7727 = vadd.f32 %v4109, %v6827
    %v7728 = vadd.f32 %v4110, %v6828
    %v7729 = vadd.f32 %v4111, %v6829
    %v7730 = vadd.f32 %v4112, %v6830
    %v7731 = vadd.f32 %v4113, %v6831
    %v7732 = vadd.f32 %v4114, %v6832
    %v7733 = vadd.f32 %v4115, %v6833
    %v7734 = vadd.f32 %v4116, %v6834
    %v7735 = vadd.f32 %v4117, %v6835
    %v7736 = vadd.f32 %v4118, %v6836
    %v7737 = vadd.f32 %v4119, %v6837
    %v7738 = vadd.f32 %v4120, %v6838
    %v7739 = vadd.f32 %v4121, %v6839
    %v7740 = vadd.f32 %v4122, %v6840
    %v7741 = vadd.f32 %v4123, %v6841
    %v7742 = vadd.f32 %v4124, %v6842
    %v7743 = vadd.f32 %v4125, %v6843
    %v7744 = vadd.f32 %v4126, %v6844
    %v7745 = vadd.f32 %v4127, %v6845
    %v7746 = vadd.f32 %v4128, %v6846
    %v7747 = vadd.f32 %v4129, %v6847
    %v7748 = vadd.f32 %v4130, %v6848
    %v7749 = vadd.f32 %v4131, %v6849
    %v7750 = vadd.f32 %v4132, %v6850
    %v7751 = vadd.f32 %v4133, %v6851
    %v7752 = vadd.f32 %v4134, %v6852
    %v7753 = vadd.f32 %v4135, %v6853
    %v7754 = vadd.f32 %v4136, %v6854
    %v7755 = vadd.f32 %v4137, %v6855
    %v7756 = vadd.f32 %v4138, %v6856
    %v7757 = vadd.f32 %v4139, %v6857
    %v7758 = vadd.f32 %v4140, %v6858
    %v7759 = vadd.f32 %v4141, %v6859
    %v7760 = vadd.f32 %v4142, %v6860
    %v7761 = vadd.f32 %v4143, %v6861
    %v7762 = vadd.f32 %v4144, %v6862
    %v7763 = vadd.f32 %v4145, %v6863
    %v7764 = vadd.f32 %v4146, %v6864
    %v7765 = vadd.f32 %v4147, %v6865
    %v7766 = vadd.f32 %v4148, %v6866
    %v7767 = vadd.f32 %v4149, %v6867
    %v7768 = vadd.f32 %v4150, %v6868
    %v7769 = vadd.f32 %v4151, %v6869
    %v7770 = vadd.f32 %v4152, %v6870
    %v7771 = vadd.f32 %v4153, %v6871
    %v7772 = vadd.f32 %v4154, %v6872
    %v7773 = vadd.f32 %v4155, %v6873
    %v7774 = vadd.f32 %v4156, %v6874
    %v7775 = vadd.f32 %v4157, %v6875
    %v7776 = vadd.f32 %v4158, %v6876
    %v7777 = vadd.f32 %v4159, %v6877
    %v7778 = vadd.f32 %v4160, %v6878
    %v7779 = vadd.f32 %v4161, %v6879
    %v7780 = vadd.f32 %v4162, %v6880
    %v7781 = vadd.f32 %v4163, %v6881
    %v7782 = vadd.f32 %v4164, %v6882
    %v7783 = vadd.f32 %v4165, %v6883
    %v7784 = vadd.f32 %v4166, %v6884
    %v7785 = vadd.f32 %v4167, %v6885
    %v7786 = vadd.f32 %v4168, %v6886
    %v7787 = vadd.f32 %v4169, %v6887
    %v7788 = vadd.f32 %v4170, %v6888
    %v7789 = vadd.f32 %v4171, %v6889
    %v7790 = vadd.f32 %v4172, %v6890
    %v7791 = vadd.f32 %v4173, %v6891
    %v7792 = vadd.f32 %v4174, %v6892
    %v7793 = vadd.f32 %v4175, %v6893
    %v7794 = vadd.f32 %v4176, %v6894
    %v7795 = vadd.f32 %v4177, %v6895
    %v7796 = vadd.f32 %v4178, %v6896
    %v7797 = vadd.f32 %v4179, %v6897
    %v7798 = vadd.f32 %v4180, %v6898
    %v7799 = vadd.f32 %v4181, %v6899
    %v7800 = vadd.f32 %v4182, %v6900
    %v7801 = vadd.f32 %v4183, %v6901
    %v7802 = vadd.f32 %v4184, %v6902
    %v7803 = vadd.f32 %v4185, %v6903
    %v7804 = vadd.f32 %v4186, %v6904
    %v7805 = vadd.f32 %v4187, %v6905
    %v7806 = vadd.f32 %v4188, %v6906
    %v7807 = vadd.f32 %v4189, %v6907
    %v7808 = vadd.f32 %v4190, %v6908
    %v7809 = vadd.f32 %v4191, %v6909
    %v7810 = vadd.f32 %v4192, %v6910
    %v7811 = vadd.f32 %v4193, %v6911
    %v7812 = vadd.f32 %v4194, %v6912
    %v7813 = vadd.f32 %v4195, %v6913
    %v7814 = vadd.f32 %v4196, %v6914
    %v7815 = vadd.f32 %v4197, %v6915
    %v7816 = vadd.f32 %v4198, %v6916
    %v7817 = vadd.f32 %v4199, %v6917
    %v7818 = vadd.f32 %v4200, %v6918
    %v7819 = vadd.f32 %v4201, %v6919
    %v7820 = vadd.f32 %v4202, %v6920
    %v7821 = vadd.f32 %v4203, %v6921
    %v7822 = vadd.f32 %v4204, %v6922
    %v7823 = vadd.f32 %v4205, %v6923
    %v7824 = vadd.f32 %v4206, %v6924
    %v7825 = vadd.f32 %v4207, %v6925
    %v7826 = vadd.f32 %v4208, %v6926
    %v7827 = vadd.f32 %v4209, %v6927
    %v7828 = vadd.f32 %v4210, %v6928
    %v7829 = vadd.f32 %v4211, %v6929
    %v7830 = vadd.f32 %v4212, %v6930
    %v7831 = vadd.f32 %v4213, %v6931
    %v7832 = vadd.f32 %v4214, %v6932
    %v7833 = vadd.f32 %v4215, %v6933
    %v7834 = vadd.f32 %v4216, %v6934
    %v7835 = vadd.f32 %v4217, %v6935
    %v7836 = vadd.f32 %v4218, %v6936
    %v7837 = vadd.f32 %v4219, %v6937
    %v7838 = vadd.f32 %v4220, %v6938
    %v7839 = vadd.f32 %v4221, %v6939
    %v7840 = vadd.f32 %v4222, %v6940
    %v7841 = vadd.f32 %v4223, %v6941
    %v7842 = vadd.f32 %v4224, %v6942
    %v7843 = vadd.f32 %v4225, %v6943
    %v7844 = vadd.f32 %v4226, %v6944
    %v7845 = vadd.f32 %v4227, %v6945
    %v7846 = vadd.f32 %v4228, %v6946
    %v7847 = vadd.f32 %v4229, %v6947
    %v7848 = vadd.f32 %v4230, %v6948
    %v7849 = vadd.f32 %v4231, %v6949
    %v7850 = vadd.f32 %v4232, %v6950
    %v7851 = vadd.f32 %v4233, %v6951
    %v7852 = vadd.f32 %v4234, %v6952
    %v7853 = vadd.f32 %v4235, %v6953
    %v7854 = vadd.f32 %v4236, %v6954
    %v7855 = vadd.f32 %v4237, %v6955
    %v7856 = vadd.f32 %v4238, %v6956
    %v7857 = vadd.f32 %v4239, %v6957
    %v7858 = vadd.f32 %v4240, %v6958
    %v7859 = vadd.f32 %v4241, %v6959
    %v7860 = vadd.f32 %v4242, %v6960
    %v7861 = vadd.f32 %v4243, %v6961
    %v7862 = vadd.f32 %v4244, %v6962
    %v7863 = vadd.f32 %v4245, %v6963
    %v7864 = vadd.f32 %v4246, %v6964
    %v7865 = vadd.f32 %v4247, %v6965
    %v7866 = vadd.f32 %v4248, %v6966
    %v7867 = vadd.f32 %v4249, %v6967
    %v7868 = vadd.f32 %v4250, %v6968
    %v7869 = vadd.f32 %v4251, %v6969
    %v7870 = vadd.f32 %v4252, %v6970
    %v7871 = vadd.f32 %v4253, %v6971
    %v7872 = vadd.f32 %v4254, %v6972
    %v7873 = vadd.f32 %v4255, %v6973
    %v7874 = vadd.f32 %v4256, %v6974
    %v7875 = vadd.f32 %v4257, %v6975
    %v7876 = vadd.f32 %v4258, %v6976
    %v7877 = vadd.f32 %v4259, %v6977
    %v7878 = vadd.f32 %v4260, %v6978
    %v7879 = vadd.f32 %v4261, %v6979
    %v7880 = vadd.f32 %v4262, %v6980
    %v7881 = vadd.f32 %v4263, %v6981
    %v7882 = vadd.f32 %v4264, %v6982
    %v7883 = vadd.f32 %v4265, %v6983
    %v7884 = vadd.f32 %v4266, %v6984
    %v7885 = vadd.f32 %v4267, %v6985
    %v7886 = vadd.f32 %v4268, %v6986
    %v7887 = vadd.f32 %v4269, %v6987
    %v7888 = vadd.f32 %v4270, %v6988
    %v7889 = vadd.f32 %v4271, %v6989
    %v7890 = vadd.f32 %v4272, %v6990
    %v7891 = vadd.f32 %v4273, %v6991
    %v7892 = vadd.f32 %v4274, %v6992
    %v7893 = vadd.f32 %v4275, %v6993
    %v7894 = vadd.f32 %v4276, %v6994
    %v7895 = vadd.f32 %v4277, %v6995
    %v7896 = vadd.f32 %v4278, %v6996
    %v7897 = vadd.f32 %v4279, %v6997
    %v7898 = vadd.f32 %v4280, %v6998
    %v7899 = vadd.f32 %v4281, %v6999
    %v7900 = vadd.f32 %v4282, %v7000
    %v7901 = vadd.f32 %v4283, %v7001
    %v7902 = vadd.f32 %v4284, %v7002
    %v7903 = vadd.f32 %v4285, %v7003
    %v7904 = vadd.f32 %v4286, %v7004
    %v7905 = vadd.f32 %v4287, %v7005
    %v7906 = vadd.f32 %v4288, %v7006
    %v7907 = vadd.f32 %v4289, %v7007
    %v7908 = vadd.f32 %v4290, %v7008
    %v7909 = vadd.f32 %v4291, %v7009
    %v7910 = vadd.f32 %v4292, %v7010
    %v7911 = vadd.f32 %v4293, %v7011
    %v7912 = vadd.f32 %v4294, %v7012
    %v7913 = vadd.f32 %v4295, %v7013
    %v7914 = vadd.f32 %v4296, %v7014
    %v7915 = vadd.f32 %v4297, %v7015
    %v7916 = vadd.f32 %v4298, %v7016
    %v7917 = vadd.f32 %v4299, %v7017
    %v7918 = vadd.f32 %v4300, %v7018
    %v7919 = vadd.f32 %v4301, %v7019
    %v7920 = vadd.f32 %v4302, %v7020
    %v7921 = vadd.f32 %v4303, %v7021
    %v7922 = vadd.f32 %v4304, %v7022
    %v7923 = vadd.f32 %v4305, %v7023
    %v7924 = vadd.f32 %v4306, %v7024
    %v7925 = vadd.f32 %v4307, %v7025
    %v7926 = vadd.f32 %v4308, %v7026
    %v7927 = vadd.f32 %v4309, %v7027
    %v7928 = vadd.f32 %v4310, %v7028
    %v7929 = vadd.f32 %v4311, %v7029
    %v7930 = vadd.f32 %v4312, %v7030
    %v7931 = vadd.f32 %v4313, %v7031
    %v7932 = vadd.f32 %v4314, %v7032
    %v7933 = vadd.f32 %v4315, %v7033
    %v7934 = vadd.f32 %v4316, %v7034
    %v7935 = vadd.f32 %v4317, %v7035
    %v7936 = vadd.f32 %v4318, %v7036
    %v7937 = vadd.f32 %v4319, %v7037
    %v7938 = vadd.f32 %v4320, %v7038
    %v7939 = vadd.f32 %v4321, %v7039
    %v7940 = vadd.f32 %v4322, %v7040
    %v7941 = vadd.f32 %v4323, %v7041
    %v7942 = vadd.f32 %v4324, %v7042
    %v7943 = vadd.f32 %v4325, %v7043
    %v7944 = vadd.f32 %v4326, %v7044
    %v7945 = vadd.f32 %v4327, %v7045
    %v7946 = vadd.f32 %v4328, %v7046
    %v7947 = vadd.f32 %v4329, %v7047
    %v7948 = vadd.f32 %v4330, %v7048
    %v7949 = vadd.f32 %v4331, %v7049
    %v7950 = vadd.f32 %v4332, %v7050
    %v7951 = vadd.f32 %v4333, %v7051
    %v7952 = vadd.f32 %v4334, %v7052
    %v7953 = vadd.f32 %v4335, %v7053
    %v7954 = vadd.f32 %v4336, %v7054
    %v7955 = vadd.f32 %v4337, %v7055
    %v7956 = vadd.f32 %v4338, %v7056
    %v7957 = vadd.f32 %v4339, %v7057
    %v7958 = vadd.f32 %v4340, %v7058
    %v7959 = vadd.f32 %v4341, %v7059
    %v7960 = vadd.f32 %v4342, %v7060
    %v7961 = vadd.f32 %v4343, %v7061
    %v7962 = vadd.f32 %v4344, %v7062
    %v7963 = vadd.f32 %v4345, %v7063
    %v7964 = vadd.f32 %v4346, %v7064
    %v7965 = vadd.f32 %v4347, %v7065
    %v7966 = vadd.f32 %v4348, %v7066
    %v7967 = vadd.f32 %v4349, %v7067
    %v7968 = vadd.f32 %v4350, %v7068
    %v7969 = vadd.f32 %v4351, %v7069
    %v7970 = vadd.f32 %v4352, %v7070
    %v7971 = vadd.f32 %v4353, %v7071
    %v7972 = vadd.f32 %v4354, %v7072
    %v7973 = vadd.f32 %v4355, %v7073
    %v7974 = vadd.f32 %v4356, %v7074
    %v7975 = vadd.f32 %v4357, %v7075
    %v7976 = vadd.f32 %v4358, %v7076
    %v7977 = vadd.f32 %v4359, %v7077
    %v7978 = vadd.f32 %v4360, %v7078
    %v7979 = vadd.f32 %v4361, %v7079
    %v7980 = vadd.f32 %v4362, %v7080
    %v7981 = vadd.f32 %v4363, %v7081
    %v7982 = vadd.f32 %v4364, %v7082
    %v7983 = vadd.f32 %v4365, %v7083
    %v7984 = vadd.f32 %v4366, %v7084
    %v7985 = vadd.f32 %v4367, %v7085
    %v7986 = vadd.f32 %v4368, %v7086
    %v7987 = vadd.f32 %v4369, %v7087
    %v7988 = vadd.f32 %v4370, %v7088
    %v7989 = vadd.f32 %v4371, %v7089
    %v7990 = vadd.f32 %v4372, %v7090
    %v7991 = vadd.f32 %v4373, %v7091
    %v7992 = vadd.f32 %v4374, %v7092
    %v7993 = vadd.f32 %v4375, %v7093
    %v7994 = vadd.f32 %v4376, %v7094
    %v7995 = vadd.f32 %v4377, %v7095
    %v7996 = vadd.f32 %v4378, %v7096
    %v7997 = vadd.f32 %v4379, %v7097
    %v7998 = vadd.f32 %v4380, %v7098
    %v7999 = vadd.f32 %v4381, %v7099
    %v8000 = vadd.f32 %v4382, %v7100
    %v8001 = vadd.f32 %v4383, %v7101
    %v8002 = vadd.f32 %v4384, %v7102
    %v8003 = vadd.f32 %v4385, %v7103
    %v8004 = vadd.f32 %v4386, %v7104
    %v8005 = vadd.f32 %v4387, %v7105
    %v8006 = vadd.f32 %v4388, %v7106
    %v8007 = vadd.f32 %v4389, %v7107
    %v8008 = vadd.f32 %v4390, %v7108
    %v8009 = vadd.f32 %v4391, %v7109
    %v8010 = vadd.f32 %v4392, %v7110
    %v8011 = vadd.f32 %v4393, %v7111
    %v8012 = vadd.f32 %v4394, %v7112
    %v8013 = vadd.f32 %v4395, %v7113
    %v8014 = vadd.f32 %v4396, %v7114
    %v8015 = vadd.f32 %v4397, %v7115
    %v8016 = vadd.f32 %v4398, %v7116
    %v8017 = vadd.f32 %v4399, %v7117
    %v8018 = vadd.f32 %v4400, %v7118
    %v8019 = vadd.f32 %v4401, %v7119
    %v8020 = vadd.f32 %v4402, %v7120
    %v8021 = vadd.f32 %v4403, %v7121
    %v8022 = vadd.f32 %v4404, %v7122
    %v8023 = vadd.f32 %v4405, %v7123
    %v8024 = vadd.f32 %v4406, %v7124
    %v8025 = vadd.f32 %v4407, %v7125
    %v8026 = vadd.f32 %v4408, %v7126
    %v8027 = vadd.f32 %v4409, %v7127
    %v8028 = vadd.f32 %v4410, %v7128
    %v8029 = vadd.f32 %v4411, %v7129
    %v8030 = vadd.f32 %v4412, %v7130
    %v8031 = vadd.f32 %v4413, %v7131
    %v8032 = vadd.f32 %v4414, %v7132
    %v8033 = vadd.f32 %v4415, %v7133
    %v8034 = vadd.f32 %v4416, %v7134
    %v8035 = vadd.f32 %v4417, %v7135
    %v8036 = vadd.f32 %v4418, %v7136
    %v8037 = vadd.f32 %v4419, %v7137
    %v8038 = vadd.f32 %v4420, %v7138
    %v8039 = vadd.f32 %v4421, %v7139
    %v8040 = vadd.f32 %v4422, %v7140
    %v8041 = vadd.f32 %v4423, %v7141
    %v8042 = vadd.f32 %v4424, %v7142
    %v8043 = vadd.f32 %v4425, %v7143
    %v8044 = vadd.f32 %v4426, %v7144
    %v8045 = vadd.f32 %v4427, %v7145
    %v8046 = vadd.f32 %v4428, %v7146
    %v8047 = vadd.f32 %v4429, %v7147
    %v8048 = vadd.f32 %v4430, %v7148
    %v8049 = vadd.f32 %v4431, %v7149
    %v8050 = vadd.f32 %v4432, %v7150
    %v8051 = vadd.f32 %v4433, %v7151
    %v8052 = vadd.f32 %v4434, %v7152
    %v8053 = vadd.f32 %v4435, %v7153
    %v8054 = vadd.f32 %v4436, %v7154
    %v8055 = vadd.f32 %v4437, %v7155
    %v8056 = vadd.f32 %v4438, %v7156
    %v8057 = vadd.f32 %v4439, %v7157
    %v8058 = vadd.f32 %v4440, %v7158
    %v8059 = vadd.f32 %v4441, %v7159
    %v8060 = vadd.f32 %v4442, %v7160
    %v8061 = vadd.f32 %v4443, %v7161
    %v8062 = vadd.f32 %v4444, %v7162
    %v8063 = vadd.f32 %v4445, %v7163
    %v8064 = vadd.f32 %v4446, %v7164
    %v8065 = vadd.f32 %v4447, %v7165
    %v8066 = vadd.f32 %v4448, %v7166
    %v8067 = vadd.f32 %v4449, %v7167
    %v8068 = vadd.f32 %v4450, %v7168
    %v8069 = vadd.f32 %v4451, %v7169
    %v8070 = vadd.f32 %v4452, %v7170
    %v8071 = vadd.f32 %v4453, %v7171
    %v8072 = vadd.f32 %v4454, %v7172
    %v8073 = vadd.f32 %v4455, %v7173
    %v8074 = vadd.f32 %v4456, %v7174
    %v8075 = vadd.f32 %v4457, %v7175
    %v8076 = vadd.f32 %v4458, %v7176
    %v8077 = vadd.f32 %v4459, %v7177
    %v8078 = vadd.f32 %v4460, %v7178
    %v8079 = vadd.f32 %v4461, %v7179
    %v8080 = vadd.f32 %v4462, %v7180
    %v8081 = vadd.f32 %v4463, %v7181
    %v8082 = vadd.f32 %v4464, %v7182
    %v8083 = vadd.f32 %v4465, %v7183
    %v8084 = vadd.f32 %v4466, %v7184
    %v8085 = vadd.f32 %v4467, %v7185
    %v8086 = vadd.f32 %v4468, %v7186
    %v8087 = vadd.f32 %v4469, %v7187
    %v8088 = vadd.f32 %v4470, %v7188
    %v8089 = vadd.f32 %v4471, %v7189
    %v8090 = vadd.f32 %v4472, %v7190
    %v8091 = vadd.f32 %v4473, %v7191
    %v8092 = vadd.f32 %v4474, %v7192
    %v8093 = vadd.f32 %v4475, %v7193
    %v8094 = vadd.f32 %v4476, %v7194
    %v8095 = vadd.f32 %v4477, %v7195
    %v8096 = vadd.f32 %v4478, %v7196
    %v8097 = vadd.f32 %v4479, %v7197
    %v8098 = vadd.f32 %v4480, %v7198
    %v8099 = vadd.f32 %v4481, %v7199
    %v8100 = vadd.f32 %v4482, %v7200
    %v8101 = vadd.f32 %v4483, %v7201
    %v8102 = vadd.f32 %v4484, %v7202
    %v8103 = vadd.f32 %v4485, %v7203
    %v8104 = vadd.f32 %v4486, %v7204
    %v8105 = vadd.f32 %v4487, %v7205
    %v8106 = vadd.f32 %v4488, %v7206
    %v8107 = vadd.f32 %v4489, %v7207
    %v8108 = vadd.f32 %v4490, %v7208
    %v8109 = vadd.f32 %v4491, %v7209
    %v8110 = vadd.f32 %v4492, %v7210
    %v8111 = vadd.f32 %v4493, %v7211
    %v8112 = vadd.f32 %v4494, %v7212
    %v8113 = vadd.f32 %v4495, %v7213
    %v8114 = vadd.f32 %v4496, %v7214
    %v8115 = vadd.f32 %v4497, %v7215
    %v8116 = vadd.f32 %v4498, %v7216
    %v8117 = vadd.f32 %v4499, %v7217
    %v8118 = vadd.f32 %v4500, %v7218
    %v8119 = vadd.f32 %v4501, %v7219
    %v8120 = vadd.f32 %v4502, %v7220
    %v8121 = vadd.f32 %v4503, %v7221
    %v8122 = vadd.f32 %v4504, %v7222
    %v8123 = vadd.f32 %v4505, %v7223
    %v8124 = vadd.f32 %v4506, %v7224
    %v8125 = vadd.f32 %v4507, %v7225
    %v8126 = vadd.f32 %v4508, %v7226
    %v8127 = vadd.f32 %v4509, %v7227
    %v8128 = vadd.f32 %v4510, %v7228
    %v8129 = vadd.f32 %v4511, %v7229
    %v8130 = vadd.f32 %v4512, %v7230
    %v8131 = vadd.f32 %v4513, %v7231
    %v8132 = vadd.f32 %v4514, %v7232
    %v8133 = vadd.f32 %v4515, %v7233
    %v8134 = vadd.f32 %v4516, %v7234
    %v8135 = vadd.f32 %v4517, %v7235
    %v8136 = vadd.f32 %v4518, %v7236
    %v8137 = vadd.f32 %v4519, %v7237
    %v8138 = vadd.f32 %v4520, %v7238
    %v8139 = vadd.f32 %v4521, %v7239
    %v8140 = vadd.f32 %v4522, %v7240
    %v8141 = vadd.f32 %v4523, %v7241
    %v8142 = vadd.f32 %v4524, %v7242
    %v8143 = vadd.f32 %v4525, %v7243
    %v8144 = vadd.f32 %v4526, %v7244
    %v8145 = vadd.f32 %v4527, %v7245
    %v8146 = vadd.f32 %v4528, %v7246
    %v8147 = vadd.f32 %v4529, %v7247
    %v8148 = vadd.f32 %v4530, %v7248
    %v8149 = vadd.f32 %v4531, %v7249
    %v8150 = vadd.f32 %v4532, %v7250
    %v8151 = vadd.f32 %v4533, %v7251
    %v8152 = vadd.f32 %v4534, %v7252
    %v8153 = vadd.f32 %v4535, %v7253
    %v8154 = vadd.f32 %v4536, %v7254
    %v8155 = vadd.f32 %v4537, %v7255
    %v8156 = vadd.f32 %v4538, %v7256
    %v8157 = vadd.f32 %v4539, %v7257
    %v8158 = vadd.f32 %v4540, %v7258
    %v8159 = vadd.f32 %v4541, %v7259
    %v8160 = vadd.f32 %v4542, %v7260
    %v8161 = vadd.f32 %v4543, %v7261
    %v8162 = vadd.f32 %v4544, %v7262
    %v8163 = vadd.f32 %v4545, %v7263
    %v8164 = vadd.f32 %v4546, %v7264
    %v8165 = vadd.f32 %v4547, %v7265
    %v8166 = vadd.f32 %v4548, %v7266
    %v8167 = vadd.f32 %v4549, %v7267
    %v8168 = vadd.f32 %v4550, %v7268
    %v8169 = vadd.f32 %v4551, %v7269
    %v8170 = vadd.f32 %v4552, %v7270
    %v8171 = vadd.f32 %v4553, %v7271
    %v8172 = vadd.f32 %v4554, %v7272
    %v8173 = vadd.f32 %v4555, %v7273
    %v8174 = vadd.f32 %v4556, %v7274
    %v8175 = vadd.f32 %v4557, %v7275
    %v8176 = vadd.f32 %v4558, %v7276
    %v8177 = vadd.f32 %v4559, %v7277
    %v8178 = vadd.f32 %v4560, %v7278
    %v8179 = vadd.f32 %v4561, %v7279
    %v8180 = vadd.f32 %v4562, %v7280
    %v8181 = vadd.f32 %v4563, %v7281
    %v8182 = vadd.f32 %v4564, %v7282
    %v8183 = vadd.f32 %v4565, %v7283
    %v8184 = vadd.f32 %v4566, %v7284
    %v8185 = vadd.f32 %v4567, %v7285
    %v8186 = vadd.f32 %v4568, %v7286
    %v8187 = vadd.f32 %v4569, %v7287
    %8188 = vset.pattern.permute.xlu0 2
    %8189 = vperm.xlu0 %8188, %v38
    %v8190 = vpop.permute.xlu0 %8189
    %8192 = vset.pattern.permute.xlu0 2
    %8193 = vperm.xlu0 %8192, %v39
    %v8194 = vpop.permute.xlu0 %8193
    %8196 = vset.pattern.permute.xlu0 2
    %8197 = vperm.xlu0 %8196, %v40
    %v8198 = vpop.permute.xlu0 %8197
    %8200 = vset.pattern.permute.xlu0 2
    %8201 = vperm.xlu0 %8200, %v41
    %v8202 = vpop.permute.xlu0 %8201
    %8204 = vset.pattern.permute.xlu0 2
    %8205 = vperm.xlu0 %8204, %v42
    %v8206 = vpop.permute.xlu0 %8205
    %8208 = vset.pattern.permute.xlu0 2
    %8209 = vperm.xlu0 %8208, %v43
    %v8210 = vpop.permute.xlu0 %8209
    %8212 = vset.pattern.permute.xlu0 2
    %8213 = vperm.xlu0 %8212, %v44
    %v8214 = vpop.permute.xlu0 %8213
    %8216 = vset.pattern.permute.xlu0 2
    %8217 = vperm.xlu0 %8216, %v45
    %v8218 = vpop.permute.xlu0 %8217
    %8220 = vset.pattern.permute.xlu0 2
    %8221 = vperm.xlu0 %8220, %v46
    %v8222 = vpop.permute.xlu0 %8221
    %8224 = vset.pattern.permute.xlu0 2
    %8225 = vperm.xlu0 %8224, %v47
    %v8226 = vpop.permute.xlu0 %8225
    %8228 = vset.pattern.permute.xlu0 2
    %8229 = vperm.xlu0 %8228, %v48
    %v8230 = vpop.permute.xlu0 %8229
    %8232 = vset.pattern.permute.xlu0 2
    %8233 = vperm.xlu0 %8232, %v49
    %v8234 = vpop.permute.xlu0 %8233
    %8236 = vset.pattern.permute.xlu0 2
    %8237 = vperm.xlu0 %8236, %v50
    %v8238 = vpop.permute.xlu0 %8237
    %8240 = vset.pattern.permute.xlu0 2
    %8241 = vperm.xlu0 %8240, %v51
    %v8242 = vpop.permute.xlu0 %8241
    %8244 = vset.pattern.permute.xlu0 2
    %8245 = vperm.xlu0 %8244, %v52
    %v8246 = vpop.permute.xlu0 %8245
    %8248 = vset.pattern.permute.xlu0 2
    %8249 = vperm.xlu0 %8248, %v53
    %v8250 = vpop.permute.xlu0 %8249
    %8252 = vset.pattern.permute.xlu0 2
    %8253 = vperm.xlu0 %8252, %v54
    %v8254 = vpop.permute.xlu0 %8253
    %8256 = vset.pattern.permute.xlu0 2
    %8257 = vperm.xlu0 %8256, %v55
    %v8258 = vpop.permute.xlu0 %8257
    %8260 = vset.pattern.permute.xlu0 2
    %8261 = vperm.xlu0 %8260, %v56
    %v8262 = vpop.permute.xlu0 %8261
    %8264 = vset.pattern.permute.xlu0 2
    %8265 = vperm.xlu0 %8264, %v57
    %v8266 = vpop.permute.xlu0 %8265
    %8268 = vset.pattern.permute.xlu0 2
    %8269 = vperm.xlu0 %8268, %v58
    %v8270 = vpop.permute.xlu0 %8269
    %8272 = vset.pattern.permute.xlu0 2
    %8273 = vperm.xlu0 %8272, %v59
    %v8274 = vpop.permute.xlu0 %8273
    %8276 = vset.pattern.permute.xlu0 2
    %8277 = vperm.xlu0 %8276, %v60
    %v8278 = vpop.permute.xlu0 %8277
    %8280 = vset.pattern.permute.xlu0 2
    %8281 = vperm.xlu0 %8280, %v61
    %v8282 = vpop.permute.xlu0 %8281
    %8284 = vset.pattern.permute.xlu0 2
    %8285 = vperm.xlu0 %8284, %v62
    %v8286 = vpop.permute.xlu0 %8285
    %8288 = vset.pattern.permute.xlu0 2
    %8289 = vperm.xlu0 %8288, %v63
    %v8290 = vpop.permute.xlu0 %8289
    %8292 = vset.pattern.permute.xlu0 2
    %8293 = vperm.xlu0 %8292, %v64
    %v8294 = vpop.permute.xlu0 %8293
    %8296 = vset.pattern.permute.xlu0 2
    %8297 = vperm.xlu0 %8296, %v65
    %v8298 = vpop.permute.xlu0 %8297
    %8300 = vset.pattern.permute.xlu0 2
    %8301 = vperm.xlu0 %8300, %v66
    %v8302 = vpop.permute.xlu0 %8301
    %8304 = vset.pattern.permute.xlu0 2
    %8305 = vperm.xlu0 %8304, %v67
    %v8306 = vpop.permute.xlu0 %8305
    %8308 = vset.pattern.permute.xlu0 2
    %8309 = vperm.xlu0 %8308, %v68
    %v8310 = vpop.permute.xlu0 %8309
    %8312 = vset.pattern.permute.xlu0 2
    %8313 = vperm.xlu0 %8312, %v69
    %v8314 = vpop.permute.xlu0 %8313
    %8316 = vset.pattern.permute.xlu0 2
    %8317 = vperm.xlu0 %8316, %v70
    %v8318 = vpop.permute.xlu0 %8317
    %8320 = vset.pattern.permute.xlu0 2
    %8321 = vperm.xlu0 %8320, %v71
    %v8322 = vpop.permute.xlu0 %8321
    %8324 = vset.pattern.permute.xlu0 2
    %8325 = vperm.xlu0 %8324, %v72
    %v8326 = vpop.permute.xlu0 %8325
    %8328 = vset.pattern.permute.xlu0 2
    %8329 = vperm.xlu0 %8328, %v73
    %v8330 = vpop.permute.xlu0 %8329
    %8332 = vset.pattern.permute.xlu0 2
    %8333 = vperm.xlu0 %8332, %v74
    %v8334 = vpop.permute.xlu0 %8333
    %8336 = vset.pattern.permute.xlu0 2
    %8337 = vperm.xlu0 %8336, %v75
    %v8338 = vpop.permute.xlu0 %8337
    %8340 = vset.pattern.permute.xlu0 2
    %8341 = vperm.xlu0 %8340, %v76
    %v8342 = vpop.permute.xlu0 %8341
    %8344 = vset.pattern.permute.xlu0 2
    %8345 = vperm.xlu0 %8344, %v77
    %v8346 = vpop.permute.xlu0 %8345
    %8348 = vset.pattern.permute.xlu0 2
    %8349 = vperm.xlu0 %8348, %v78
    %v8350 = vpop.permute.xlu0 %8349
    %8352 = vset.pattern.permute.xlu0 2
    %8353 = vperm.xlu0 %8352, %v79
    %v8354 = vpop.permute.xlu0 %8353
    %8356 = vset.pattern.permute.xlu0 2
    %8357 = vperm.xlu0 %8356, %v80
    %v8358 = vpop.permute.xlu0 %8357
    %8360 = vset.pattern.permute.xlu0 2
    %8361 = vperm.xlu0 %8360, %v81
    %v8362 = vpop.permute.xlu0 %8361
    %8364 = vset.pattern.permute.xlu0 2
    %8365 = vperm.xlu0 %8364, %v82
    %v8366 = vpop.permute.xlu0 %8365
    %8368 = vset.pattern.permute.xlu0 2
    %8369 = vperm.xlu0 %8368, %v83
    %v8370 = vpop.permute.xlu0 %8369
    %8372 = vset.pattern.permute.xlu0 2
    %8373 = vperm.xlu0 %8372, %v84
    %v8374 = vpop.permute.xlu0 %8373
    %8376 = vset.pattern.permute.xlu0 2
    %8377 = vperm.xlu0 %8376, %v85
    %v8378 = vpop.permute.xlu0 %8377
    %8380 = vset.pattern.permute.xlu0 2
    %8381 = vperm.xlu0 %8380, %v86
    %v8382 = vpop.permute.xlu0 %8381
    %8384 = vset.pattern.permute.xlu0 2
    %8385 = vperm.xlu0 %8384, %v87
    %v8386 = vpop.permute.xlu0 %8385
    %8388 = vset.pattern.permute.xlu0 2
    %8389 = vperm.xlu0 %8388, %v88
    %v8390 = vpop.permute.xlu0 %8389
    %8392 = vset.pattern.permute.xlu0 2
    %8393 = vperm.xlu0 %8392, %v89
    %v8394 = vpop.permute.xlu0 %8393
    %8396 = vset.pattern.permute.xlu0 2
    %8397 = vperm.xlu0 %8396, %v90
    %v8398 = vpop.permute.xlu0 %8397
    %8400 = vset.pattern.permute.xlu0 2
    %8401 = vperm.xlu0 %8400, %v91
    %v8402 = vpop.permute.xlu0 %8401
    %8404 = vset.pattern.permute.xlu0 2
    %8405 = vperm.xlu0 %8404, %v92
    %v8406 = vpop.permute.xlu0 %8405
    %8408 = vset.pattern.permute.xlu0 2
    %8409 = vperm.xlu0 %8408, %v93
    %v8410 = vpop.permute.xlu0 %8409
    %8412 = vset.pattern.permute.xlu0 2
    %8413 = vperm.xlu0 %8412, %v94
    %v8414 = vpop.permute.xlu0 %8413
    %8416 = vset.pattern.permute.xlu0 2
    %8417 = vperm.xlu0 %8416, %v95
    %v8418 = vpop.permute.xlu0 %8417
    %8420 = vset.pattern.permute.xlu0 2
    %8421 = vperm.xlu0 %8420, %v96
    %v8422 = vpop.permute.xlu0 %8421
    %8424 = vset.pattern.permute.xlu0 2
    %8425 = vperm.xlu0 %8424, %v97
    %v8426 = vpop.permute.xlu0 %8425
    %8428 = vset.pattern.permute.xlu0 2
    %8429 = vperm.xlu0 %8428, %v98
    %v8430 = vpop.permute.xlu0 %8429
    %8432 = vset.pattern.permute.xlu0 2
    %8433 = vperm.xlu0 %8432, %v99
    %v8434 = vpop.permute.xlu0 %8433
    %8436 = vset.pattern.permute.xlu0 2
    %8437 = vperm.xlu0 %8436, %v100
    %v8438 = vpop.permute.xlu0 %8437
    %8440 = vset.pattern.permute.xlu0 2
    %8441 = vperm.xlu0 %8440, %v101
    %v8442 = vpop.permute.xlu0 %8441
    %8444 = vset.pattern.permute.xlu0 2
    %8445 = vperm.xlu0 %8444, %v102
    %v8446 = vpop.permute.xlu0 %8445
    %8448 = vset.pattern.permute.xlu0 2
    %8449 = vperm.xlu0 %8448, %v103
    %v8450 = vpop.permute.xlu0 %8449
    %8452 = vset.pattern.permute.xlu0 2
    %8453 = vperm.xlu0 %8452, %v104
    %v8454 = vpop.permute.xlu0 %8453
    %8456 = vset.pattern.permute.xlu0 2
    %8457 = vperm.xlu0 %8456, %v105
    %v8458 = vpop.permute.xlu0 %8457
    %8460 = vset.pattern.permute.xlu0 2
    %8461 = vperm.xlu0 %8460, %v106
    %v8462 = vpop.permute.xlu0 %8461
    %8464 = vset.pattern.permute.xlu0 2
    %8465 = vperm.xlu0 %8464, %v107
    %v8466 = vpop.permute.xlu0 %8465
    %8468 = vset.pattern.permute.xlu0 2
    %8469 = vperm.xlu0 %8468, %v108
    %v8470 = vpop.permute.xlu0 %8469
    %8472 = vset.pattern.permute.xlu0 2
    %8473 = vperm.xlu0 %8472, %v109
    %v8474 = vpop.permute.xlu0 %8473
    %8476 = vset.pattern.permute.xlu0 2
    %8477 = vperm.xlu0 %8476, %v110
    %v8478 = vpop.permute.xlu0 %8477
    %8480 = vset.pattern.permute.xlu0 2
    %8481 = vperm.xlu0 %8480, %v111
    %v8482 = vpop.permute.xlu0 %8481
    %8484 = vset.pattern.permute.xlu0 2
    %8485 = vperm.xlu0 %8484, %v112
    %v8486 = vpop.permute.xlu0 %8485
    %8488 = vset.pattern.permute.xlu0 2
    %8489 = vperm.xlu0 %8488, %v113
    %v8490 = vpop.permute.xlu0 %8489
    %8492 = vset.pattern.permute.xlu0 2
    %8493 = vperm.xlu0 %8492, %v114
    %v8494 = vpop.permute.xlu0 %8493
    %8496 = vset.pattern.permute.xlu0 2
    %8497 = vperm.xlu0 %8496, %v115
    %v8498 = vpop.permute.xlu0 %8497
    %8500 = vset.pattern.permute.xlu0 2
    %8501 = vperm.xlu0 %8500, %v116
    %v8502 = vpop.permute.xlu0 %8501
    %8504 = vset.pattern.permute.xlu0 2
    %8505 = vperm.xlu0 %8504, %v117
    %v8506 = vpop.permute.xlu0 %8505
    %8508 = vset.pattern.permute.xlu0 2
    %8509 = vperm.xlu0 %8508, %v118
    %v8510 = vpop.permute.xlu0 %8509
    %8512 = vset.pattern.permute.xlu0 2
    %8513 = vperm.xlu0 %8512, %v119
    %v8514 = vpop.permute.xlu0 %8513
    %8516 = vset.pattern.permute.xlu0 2
    %8517 = vperm.xlu0 %8516, %v120
    %v8518 = vpop.permute.xlu0 %8517
    %8520 = vset.pattern.permute.xlu0 2
    %8521 = vperm.xlu0 %8520, %v121
    %v8522 = vpop.permute.xlu0 %8521
    %8524 = vset.pattern.permute.xlu0 2
    %8525 = vperm.xlu0 %8524, %v122
    %v8526 = vpop.permute.xlu0 %8525
    %8528 = vset.pattern.permute.xlu0 2
    %8529 = vperm.xlu0 %8528, %v123
    %v8530 = vpop.permute.xlu0 %8529
    %8532 = vset.pattern.permute.xlu0 2
    %8533 = vperm.xlu0 %8532, %v124
    %v8534 = vpop.permute.xlu0 %8533
    %8536 = vset.pattern.permute.xlu0 2
    %8537 = vperm.xlu0 %8536, %v125
    %v8538 = vpop.permute.xlu0 %8537
    %8540 = vset.pattern.permute.xlu0 2
    %8541 = vperm.xlu0 %8540, %v126
    %v8542 = vpop.permute.xlu0 %8541
    %8544 = vset.pattern.permute.xlu0 2
    %8545 = vperm.xlu0 %8544, %v127
    %v8546 = vpop.permute.xlu0 %8545
    %8548 = vset.pattern.permute.xlu0 2
    %8549 = vperm.xlu0 %8548, %v128
    %v8550 = vpop.permute.xlu0 %8549
    %8552 = vset.pattern.permute.xlu0 2
    %8553 = vperm.xlu0 %8552, %v129
    %v8554 = vpop.permute.xlu0 %8553
    %8556 = vset.pattern.permute.xlu0 2
    %8557 = vperm.xlu0 %8556, %v130
    %v8558 = vpop.permute.xlu0 %8557
    %8560 = vset.pattern.permute.xlu0 2
    %8561 = vperm.xlu0 %8560, %v131
    %v8562 = vpop.permute.xlu0 %8561
    %8564 = vset.pattern.permute.xlu0 2
    %8565 = vperm.xlu0 %8564, %v132
    %v8566 = vpop.permute.xlu0 %8565
    %8568 = vset.pattern.permute.xlu0 2
    %8569 = vperm.xlu0 %8568, %v133
    %v8570 = vpop.permute.xlu0 %8569
    %8572 = vset.pattern.permute.xlu0 2
    %8573 = vperm.xlu0 %8572, %v134
    %v8574 = vpop.permute.xlu0 %8573
    %8576 = vset.pattern.permute.xlu0 2
    %8577 = vperm.xlu0 %8576, %v135
    %v8578 = vpop.permute.xlu0 %8577
    %8580 = vset.pattern.permute.xlu0 2
    %8581 = vperm.xlu0 %8580, %v136
    %v8582 = vpop.permute.xlu0 %8581
    %8584 = vset.pattern.permute.xlu0 2
    %8585 = vperm.xlu0 %8584, %v137
    %v8586 = vpop.permute.xlu0 %8585
    %8588 = vset.pattern.permute.xlu0 2
    %8589 = vperm.xlu0 %8588, %v138
    %v8590 = vpop.permute.xlu0 %8589
    %8592 = vset.pattern.permute.xlu0 2
    %8593 = vperm.xlu0 %8592, %v139
    %v8594 = vpop.permute.xlu0 %8593
    %8596 = vset.pattern.permute.xlu0 2
    %8597 = vperm.xlu0 %8596, %v140
    %v8598 = vpop.permute.xlu0 %8597
    %8600 = vset.pattern.permute.xlu0 2
    %8601 = vperm.xlu0 %8600, %v141
    %v8602 = vpop.permute.xlu0 %8601
    %8604 = vset.pattern.permute.xlu0 2
    %8605 = vperm.xlu0 %8604, %v142
    %v8606 = vpop.permute.xlu0 %8605
    %8608 = vset.pattern.permute.xlu0 2
    %8609 = vperm.xlu0 %8608, %v143
    %v8610 = vpop.permute.xlu0 %8609
    %8612 = vset.pattern.permute.xlu0 2
    %8613 = vperm.xlu0 %8612, %v144
    %v8614 = vpop.permute.xlu0 %8613
    %8616 = vset.pattern.permute.xlu0 2
    %8617 = vperm.xlu0 %8616, %v145
    %v8618 = vpop.permute.xlu0 %8617
    %8620 = vset.pattern.permute.xlu0 2
    %8621 = vperm.xlu0 %8620, %v146
    %v8622 = vpop.permute.xlu0 %8621
    %8624 = vset.pattern.permute.xlu0 2
    %8625 = vperm.xlu0 %8624, %v147
    %v8626 = vpop.permute.xlu0 %8625
    %8628 = vset.pattern.permute.xlu0 2
    %8629 = vperm.xlu0 %8628, %v148
    %v8630 = vpop.permute.xlu0 %8629
    %8632 = vset.pattern.permute.xlu0 2
    %8633 = vperm.xlu0 %8632, %v149
    %v8634 = vpop.permute.xlu0 %8633
    %8636 = vset.pattern.permute.xlu0 2
    %8637 = vperm.xlu0 %8636, %v150
    %v8638 = vpop.permute.xlu0 %8637
    %8640 = vset.pattern.permute.xlu0 2
    %8641 = vperm.xlu0 %8640, %v151
    %v8642 = vpop.permute.xlu0 %8641
    %8644 = vset.pattern.permute.xlu0 2
    %8645 = vperm.xlu0 %8644, %v152
    %v8646 = vpop.permute.xlu0 %8645
    %8648 = vset.pattern.permute.xlu0 2
    %8649 = vperm.xlu0 %8648, %v153
    %v8650 = vpop.permute.xlu0 %8649
    %8652 = vset.pattern.permute.xlu0 2
    %8653 = vperm.xlu0 %8652, %v154
    %v8654 = vpop.permute.xlu0 %8653
    %8656 = vset.pattern.permute.xlu0 2
    %8657 = vperm.xlu0 %8656, %v155
    %v8658 = vpop.permute.xlu0 %8657
    %8660 = vset.pattern.permute.xlu0 2
    %8661 = vperm.xlu0 %8660, %v156
    %v8662 = vpop.permute.xlu0 %8661
    %8664 = vset.pattern.permute.xlu0 2
    %8665 = vperm.xlu0 %8664, %v157
    %v8666 = vpop.permute.xlu0 %8665
    %8668 = vset.pattern.permute.xlu0 2
    %8669 = vperm.xlu0 %8668, %v158
    %v8670 = vpop.permute.xlu0 %8669
    %8672 = vset.pattern.permute.xlu0 2
    %8673 = vperm.xlu0 %8672, %v159
    %v8674 = vpop.permute.xlu0 %8673
    %8676 = vset.pattern.permute.xlu0 2
    %8677 = vperm.xlu0 %8676, %v160
    %v8678 = vpop.permute.xlu0 %8677
    %8680 = vset.pattern.permute.xlu0 2
    %8681 = vperm.xlu0 %8680, %v161
    %v8682 = vpop.permute.xlu0 %8681
    %8684 = vset.pattern.permute.xlu0 2
    %8685 = vperm.xlu0 %8684, %v162
    %v8686 = vpop.permute.xlu0 %8685
    %8688 = vset.pattern.permute.xlu0 2
    %8689 = vperm.xlu0 %8688, %v163
    %v8690 = vpop.permute.xlu0 %8689
    %8692 = vset.pattern.permute.xlu0 2
    %8693 = vperm.xlu0 %8692, %v164
    %v8694 = vpop.permute.xlu0 %8693
    %8696 = vset.pattern.permute.xlu0 2
    %8697 = vperm.xlu0 %8696, %v165
    %v8698 = vpop.permute.xlu0 %8697
    %8700 = vset.pattern.permute.xlu0 2
    %8701 = vperm.xlu0 %8700, %v166
    %v8702 = vpop.permute.xlu0 %8701
    %8704 = vset.pattern.permute.xlu0 2
    %8705 = vperm.xlu0 %8704, %v167
    %v8706 = vpop.permute.xlu0 %8705
    %8708 = vset.pattern.permute.xlu0 2
    %8709 = vperm.xlu0 %8708, %v168
    %v8710 = vpop.permute.xlu0 %8709
    %8712 = vset.pattern.permute.xlu0 2
    %8713 = vperm.xlu0 %8712, %v169
    %v8714 = vpop.permute.xlu0 %8713
    %8716 = vset.pattern.permute.xlu0 2
    %8717 = vperm.xlu0 %8716, %v170
    %v8718 = vpop.permute.xlu0 %8717
    %8720 = vset.pattern.permute.xlu0 2
    %8721 = vperm.xlu0 %8720, %v171
    %v8722 = vpop.permute.xlu0 %8721
    %8724 = vset.pattern.permute.xlu0 2
    %8725 = vperm.xlu0 %8724, %v172
    %v8726 = vpop.permute.xlu0 %8725
    %8728 = vset.pattern.permute.xlu0 2
    %8729 = vperm.xlu0 %8728, %v173
    %v8730 = vpop.permute.xlu0 %8729
    %8732 = vset.pattern.permute.xlu0 2
    %8733 = vperm.xlu0 %8732, %v174
    %v8734 = vpop.permute.xlu0 %8733
    %8736 = vset.pattern.permute.xlu0 2
    %8737 = vperm.xlu0 %8736, %v175
    %v8738 = vpop.permute.xlu0 %8737
    %8740 = vset.pattern.permute.xlu0 2
    %8741 = vperm.xlu0 %8740, %v176
    %v8742 = vpop.permute.xlu0 %8741
    %8744 = vset.pattern.permute.xlu0 2
    %8745 = vperm.xlu0 %8744, %v177
    %v8746 = vpop.permute.xlu0 %8745
    %8748 = vset.pattern.permute.xlu0 2
    %8749 = vperm.xlu0 %8748, %v178
    %v8750 = vpop.permute.xlu0 %8749
    %8752 = vset.pattern.permute.xlu0 2
    %8753 = vperm.xlu0 %8752, %v179
    %v8754 = vpop.permute.xlu0 %8753
    %8756 = vset.pattern.permute.xlu0 2
    %8757 = vperm.xlu0 %8756, %v180
    %v8758 = vpop.permute.xlu0 %8757
    %8760 = vset.pattern.permute.xlu0 2
    %8761 = vperm.xlu0 %8760, %v181
    %v8762 = vpop.permute.xlu0 %8761
    %8764 = vset.pattern.permute.xlu0 2
    %8765 = vperm.xlu0 %8764, %v182
    %v8766 = vpop.permute.xlu0 %8765
    %8768 = vset.pattern.permute.xlu0 2
    %8769 = vperm.xlu0 %8768, %v183
    %v8770 = vpop.permute.xlu0 %8769
    %8772 = vset.pattern.permute.xlu0 2
    %8773 = vperm.xlu0 %8772, %v184
    %v8774 = vpop.permute.xlu0 %8773
    %8776 = vset.pattern.permute.xlu0 2
    %8777 = vperm.xlu0 %8776, %v185
    %v8778 = vpop.permute.xlu0 %8777
    %8780 = vset.pattern.permute.xlu0 2
    %8781 = vperm.xlu0 %8780, %v186
    %v8782 = vpop.permute.xlu0 %8781
    %8784 = vset.pattern.permute.xlu0 2
    %8785 = vperm.xlu0 %8784, %v187
    %v8786 = vpop.permute.xlu0 %8785
    %8788 = vset.pattern.permute.xlu0 2
    %8789 = vperm.xlu0 %8788, %v188
    %v8790 = vpop.permute.xlu0 %8789
    %8792 = vset.pattern.permute.xlu0 2
    %8793 = vperm.xlu0 %8792, %v189
    %v8794 = vpop.permute.xlu0 %8793
    %8796 = vset.pattern.permute.xlu0 2
    %8797 = vperm.xlu0 %8796, %v190
    %v8798 = vpop.permute.xlu0 %8797
    %8800 = vset.pattern.permute.xlu0 2
    %8801 = vperm.xlu0 %8800, %v191
    %v8802 = vpop.permute.xlu0 %8801
    %8804 = vset.pattern.permute.xlu0 2
    %8805 = vperm.xlu0 %8804, %v192
    %v8806 = vpop.permute.xlu0 %8805
    %8808 = vset.pattern.permute.xlu0 2
    %8809 = vperm.xlu0 %8808, %v193
    %v8810 = vpop.permute.xlu0 %8809
    %8812 = vset.pattern.permute.xlu0 2
    %8813 = vperm.xlu0 %8812, %v194
    %v8814 = vpop.permute.xlu0 %8813
    %8816 = vset.pattern.permute.xlu0 2
    %8817 = vperm.xlu0 %8816, %v195
    %v8818 = vpop.permute.xlu0 %8817
    %8820 = vset.pattern.permute.xlu0 2
    %8821 = vperm.xlu0 %8820, %v196
    %v8822 = vpop.permute.xlu0 %8821
    %8824 = vset.pattern.permute.xlu0 2
    %8825 = vperm.xlu0 %8824, %v197
    %v8826 = vpop.permute.xlu0 %8825
    %8828 = vset.pattern.permute.xlu0 2
    %8829 = vperm.xlu0 %8828, %v198
    %v8830 = vpop.permute.xlu0 %8829
    %8832 = vset.pattern.permute.xlu0 2
    %8833 = vperm.xlu0 %8832, %v199
    %v8834 = vpop.permute.xlu0 %8833
    %8836 = vset.pattern.permute.xlu0 2
    %8837 = vperm.xlu0 %8836, %v200
    %v8838 = vpop.permute.xlu0 %8837
    %8840 = vset.pattern.permute.xlu0 2
    %8841 = vperm.xlu0 %8840, %v201
    %v8842 = vpop.permute.xlu0 %8841
    %8844 = vset.pattern.permute.xlu0 2
    %8845 = vperm.xlu0 %8844, %v202
    %v8846 = vpop.permute.xlu0 %8845
    %8848 = vset.pattern.permute.xlu0 2
    %8849 = vperm.xlu0 %8848, %v203
    %v8850 = vpop.permute.xlu0 %8849
    %8852 = vset.pattern.permute.xlu0 2
    %8853 = vperm.xlu0 %8852, %v204
    %v8854 = vpop.permute.xlu0 %8853
    %8856 = vset.pattern.permute.xlu0 2
    %8857 = vperm.xlu0 %8856, %v205
    %v8858 = vpop.permute.xlu0 %8857
    %8860 = vset.pattern.permute.xlu0 2
    %8861 = vperm.xlu0 %8860, %v206
    %v8862 = vpop.permute.xlu0 %8861
    %8864 = vset.pattern.permute.xlu0 2
    %8865 = vperm.xlu0 %8864, %v207
    %v8866 = vpop.permute.xlu0 %8865
    %8868 = vset.pattern.permute.xlu0 2
    %8869 = vperm.xlu0 %8868, %v208
    %v8870 = vpop.permute.xlu0 %8869
    %8872 = vset.pattern.permute.xlu0 2
    %8873 = vperm.xlu0 %8872, %v209
    %v8874 = vpop.permute.xlu0 %8873
    %8876 = vset.pattern.permute.xlu0 2
    %8877 = vperm.xlu0 %8876, %v210
    %v8878 = vpop.permute.xlu0 %8877
    %8880 = vset.pattern.permute.xlu0 2
    %8881 = vperm.xlu0 %8880, %v211
    %v8882 = vpop.permute.xlu0 %8881
    %8884 = vset.pattern.permute.xlu0 2
    %8885 = vperm.xlu0 %8884, %v212
    %v8886 = vpop.permute.xlu0 %8885
    %8888 = vset.pattern.permute.xlu0 2
    %8889 = vperm.xlu0 %8888, %v213
    %v8890 = vpop.permute.xlu0 %8889
    %8892 = vset.pattern.permute.xlu0 2
    %8893 = vperm.xlu0 %8892, %v214
    %v8894 = vpop.permute.xlu0 %8893
    %8896 = vset.pattern.permute.xlu0 2
    %8897 = vperm.xlu0 %8896, %v215
    %v8898 = vpop.permute.xlu0 %8897
    %8900 = vset.pattern.permute.xlu0 2
    %8901 = vperm.xlu0 %8900, %v216
    %v8902 = vpop.permute.xlu0 %8901
    %8904 = vset.pattern.permute.xlu0 2
    %8905 = vperm.xlu0 %8904, %v217
    %v8906 = vpop.permute.xlu0 %8905
    %8908 = vset.pattern.permute.xlu0 2
    %8909 = vperm.xlu0 %8908, %v218
    %v8910 = vpop.permute.xlu0 %8909
    %8912 = vset.pattern.permute.xlu0 2
    %8913 = vperm.xlu0 %8912, %v219
    %v8914 = vpop.permute.xlu0 %8913
    %8916 = vset.pattern.permute.xlu0 2
    %8917 = vperm.xlu0 %8916, %v220
    %v8918 = vpop.permute.xlu0 %8917
    %8920 = vset.pattern.permute.xlu0 2
    %8921 = vperm.xlu0 %8920, %v221
    %v8922 = vpop.permute.xlu0 %8921
    %8924 = vset.pattern.permute.xlu0 2
    %8925 = vperm.xlu0 %8924, %v222
    %v8926 = vpop.permute.xlu0 %8925
    %8928 = vset.pattern.permute.xlu0 2
    %8929 = vperm.xlu0 %8928, %v223
    %v8930 = vpop.permute.xlu0 %8929
    %8932 = vset.pattern.permute.xlu0 2
    %8933 = vperm.xlu0 %8932, %v224
    %v8934 = vpop.permute.xlu0 %8933
    %8936 = vset.pattern.permute.xlu0 2
    %8937 = vperm.xlu0 %8936, %v225
    %v8938 = vpop.permute.xlu0 %8937
    %8940 = vset.pattern.permute.xlu0 2
    %8941 = vperm.xlu0 %8940, %v226
    %v8942 = vpop.permute.xlu0 %8941
    %8944 = vset.pattern.permute.xlu0 2
    %8945 = vperm.xlu0 %8944, %v227
    %v8946 = vpop.permute.xlu0 %8945
    %8948 = vset.pattern.permute.xlu0 2
    %8949 = vperm.xlu0 %8948, %v228
    %v8950 = vpop.permute.xlu0 %8949
    %8952 = vset.pattern.permute.xlu0 2
    %8953 = vperm.xlu0 %8952, %v229
    %v8954 = vpop.permute.xlu0 %8953
    %8956 = vset.pattern.permute.xlu0 2
    %8957 = vperm.xlu0 %8956, %v230
    %v8958 = vpop.permute.xlu0 %8957
    %8960 = vset.pattern.permute.xlu0 2
    %8961 = vperm.xlu0 %8960, %v231
    %v8962 = vpop.permute.xlu0 %8961
    %8964 = vset.pattern.permute.xlu0 2
    %8965 = vperm.xlu0 %8964, %v232
    %v8966 = vpop.permute.xlu0 %8965
    %8968 = vset.pattern.permute.xlu0 2
    %8969 = vperm.xlu0 %8968, %v233
    %v8970 = vpop.permute.xlu0 %8969
    %8972 = vset.pattern.permute.xlu0 2
    %8973 = vperm.xlu0 %8972, %v234
    %v8974 = vpop.permute.xlu0 %8973
    %8976 = vset.pattern.permute.xlu0 2
    %8977 = vperm.xlu0 %8976, %v235
    %v8978 = vpop.permute.xlu0 %8977
    %8980 = vset.pattern.permute.xlu0 2
    %8981 = vperm.xlu0 %8980, %v236
    %v8982 = vpop.permute.xlu0 %8981
    %8984 = vset.pattern.permute.xlu0 2
    %8985 = vperm.xlu0 %8984, %v237
    %v8986 = vpop.permute.xlu0 %8985
    %8988 = vset.pattern.permute.xlu0 2
    %8989 = vperm.xlu0 %8988, %v238
    %v8990 = vpop.permute.xlu0 %8989
    %8992 = vset.pattern.permute.xlu0 2
    %8993 = vperm.xlu0 %8992, %v239
    %v8994 = vpop.permute.xlu0 %8993
    %8996 = vset.pattern.permute.xlu0 2
    %8997 = vperm.xlu0 %8996, %v240
    %v8998 = vpop.permute.xlu0 %8997
    %9000 = vset.pattern.permute.xlu0 2
    %9001 = vperm.xlu0 %9000, %v241
    %v9002 = vpop.permute.xlu0 %9001
    %9004 = vset.pattern.permute.xlu0 2
    %9005 = vperm.xlu0 %9004, %v242
    %v9006 = vpop.permute.xlu0 %9005
    %9008 = vset.pattern.permute.xlu0 2
    %9009 = vperm.xlu0 %9008, %v243
    %v9010 = vpop.permute.xlu0 %9009
    %9012 = vset.pattern.permute.xlu0 2
    %9013 = vperm.xlu0 %9012, %v244
    %v9014 = vpop.permute.xlu0 %9013
    %9016 = vset.pattern.permute.xlu0 2
    %9017 = vperm.xlu0 %9016, %v245
    %v9018 = vpop.permute.xlu0 %9017
    %9020 = vset.pattern.permute.xlu0 2
    %9021 = vperm.xlu0 %9020, %v246
    %v9022 = vpop.permute.xlu0 %9021
    %9024 = vset.pattern.permute.xlu0 2
    %9025 = vperm.xlu0 %9024, %v247
    %v9026 = vpop.permute.xlu0 %9025
    %9028 = vset.pattern.permute.xlu0 2
    %9029 = vperm.xlu0 %9028, %v248
    %v9030 = vpop.permute.xlu0 %9029
    %9032 = vset.pattern.permute.xlu0 2
    %9033 = vperm.xlu0 %9032, %v249
    %v9034 = vpop.permute.xlu0 %9033
    %9036 = vset.pattern.permute.xlu0 2
    %9037 = vperm.xlu0 %9036, %v250
    %v9038 = vpop.permute.xlu0 %9037
    %9040 = vset.pattern.permute.xlu0 2
    %9041 = vperm.xlu0 %9040, %v251
    %v9042 = vpop.permute.xlu0 %9041
    %9044 = vset.pattern.permute.xlu0 2
    %9045 = vperm.xlu0 %9044, %v252
    %v9046 = vpop.permute.xlu0 %9045
    %9048 = vset.pattern.permute.xlu0 2
    %9049 = vperm.xlu0 %9048, %v253
    %v9050 = vpop.permute.xlu0 %9049
    %9052 = vset.pattern.permute.xlu0 2
    %9053 = vperm.xlu0 %9052, %v254
    %v9054 = vpop.permute.xlu0 %9053
    %9056 = vset.pattern.permute.xlu0 2
    %9057 = vperm.xlu0 %9056, %v255
    %v9058 = vpop.permute.xlu0 %9057
    %9060 = vset.pattern.permute.xlu0 2
    %9061 = vperm.xlu0 %9060, %v256
    %v9062 = vpop.permute.xlu0 %9061
    %9064 = vset.pattern.permute.xlu0 2
    %9065 = vperm.xlu0 %9064, %v257
    %v9066 = vpop.permute.xlu0 %9065
    %9068 = vset.pattern.permute.xlu0 2
    %9069 = vperm.xlu0 %9068, %v258
    %v9070 = vpop.permute.xlu0 %9069
    %9072 = vset.pattern.permute.xlu0 2
    %9073 = vperm.xlu0 %9072, %v259
    %v9074 = vpop.permute.xlu0 %9073
    %9076 = vset.pattern.permute.xlu0 2
    %9077 = vperm.xlu0 %9076, %v260
    %v9078 = vpop.permute.xlu0 %9077
    %9080 = vset.pattern.permute.xlu0 2
    %9081 = vperm.xlu0 %9080, %v261
    %v9082 = vpop.permute.xlu0 %9081
    %9084 = vset.pattern.permute.xlu0 2
    %9085 = vperm.xlu0 %9084, %v262
    %v9086 = vpop.permute.xlu0 %9085
    %9088 = vset.pattern.permute.xlu0 2
    %9089 = vperm.xlu0 %9088, %v263
    %v9090 = vpop.permute.xlu0 %9089
    %9092 = vset.pattern.permute.xlu0 2
    %9093 = vperm.xlu0 %9092, %v264
    %v9094 = vpop.permute.xlu0 %9093
    %9096 = vset.pattern.permute.xlu0 2
    %9097 = vperm.xlu0 %9096, %v265
    %v9098 = vpop.permute.xlu0 %9097
    %9100 = vset.pattern.permute.xlu0 2
    %9101 = vperm.xlu0 %9100, %v266
    %v9102 = vpop.permute.xlu0 %9101
    %9104 = vset.pattern.permute.xlu0 2
    %9105 = vperm.xlu0 %9104, %v267
    %v9106 = vpop.permute.xlu0 %9105
    %9108 = vset.pattern.permute.xlu0 2
    %9109 = vperm.xlu0 %9108, %v268
    %v9110 = vpop.permute.xlu0 %9109
    %9112 = vset.pattern.permute.xlu0 2
    %9113 = vperm.xlu0 %9112, %v269
    %v9114 = vpop.permute.xlu0 %9113
    %9116 = vset.pattern.permute.xlu0 2
    %9117 = vperm.xlu0 %9116, %v270
    %v9118 = vpop.permute.xlu0 %9117
    %9120 = vset.pattern.permute.xlu0 2
    %9121 = vperm.xlu0 %9120, %v271
    %v9122 = vpop.permute.xlu0 %9121
    %9124 = vset.pattern.permute.xlu0 2
    %9125 = vperm.xlu0 %9124, %v272
    %v9126 = vpop.permute.xlu0 %9125
    %9128 = vset.pattern.permute.xlu0 2
    %9129 = vperm.xlu0 %9128, %v273
    %v9130 = vpop.permute.xlu0 %9129
    %9132 = vset.pattern.permute.xlu0 2
    %9133 = vperm.xlu0 %9132, %v274
    %v9134 = vpop.permute.xlu0 %9133
    %9136 = vset.pattern.permute.xlu0 2
    %9137 = vperm.xlu0 %9136, %v275
    %v9138 = vpop.permute.xlu0 %9137
    %9140 = vset.pattern.permute.xlu0 2
    %9141 = vperm.xlu0 %9140, %v276
    %v9142 = vpop.permute.xlu0 %9141
    %9144 = vset.pattern.permute.xlu0 2
    %9145 = vperm.xlu0 %9144, %v277
    %v9146 = vpop.permute.xlu0 %9145
    %9148 = vset.pattern.permute.xlu0 2
    %9149 = vperm.xlu0 %9148, %v278
    %v9150 = vpop.permute.xlu0 %9149
    %9152 = vset.pattern.permute.xlu0 2
    %9153 = vperm.xlu0 %9152, %v279
    %v9154 = vpop.permute.xlu0 %9153
    %9156 = vset.pattern.permute.xlu0 2
    %9157 = vperm.xlu0 %9156, %v280
    %v9158 = vpop.permute.xlu0 %9157
    %9160 = vset.pattern.permute.xlu0 2
    %9161 = vperm.xlu0 %9160, %v281
    %v9162 = vpop.permute.xlu0 %9161
    %9164 = vset.pattern.permute.xlu0 2
    %9165 = vperm.xlu0 %9164, %v282
    %v9166 = vpop.permute.xlu0 %9165
    %9168 = vset.pattern.permute.xlu0 2
    %9169 = vperm.xlu0 %9168, %v283
    %v9170 = vpop.permute.xlu0 %9169
    %9172 = vset.pattern.permute.xlu0 2
    %9173 = vperm.xlu0 %9172, %v284
    %v9174 = vpop.permute.xlu0 %9173
    %9176 = vset.pattern.permute.xlu0 2
    %9177 = vperm.xlu0 %9176, %v285
    %v9178 = vpop.permute.xlu0 %9177
    %9180 = vset.pattern.permute.xlu0 2
    %9181 = vperm.xlu0 %9180, %v286
    %v9182 = vpop.permute.xlu0 %9181
    %9184 = vset.pattern.permute.xlu0 2
    %9185 = vperm.xlu0 %9184, %v287
    %v9186 = vpop.permute.xlu0 %9185
    %9188 = vset.pattern.permute.xlu0 2
    %9189 = vperm.xlu0 %9188, %v288
    %v9190 = vpop.permute.xlu0 %9189
    %9192 = vset.pattern.permute.xlu0 2
    %9193 = vperm.xlu0 %9192, %v289
    %v9194 = vpop.permute.xlu0 %9193
    %9196 = vset.pattern.permute.xlu0 2
    %9197 = vperm.xlu0 %9196, %v290
    %v9198 = vpop.permute.xlu0 %9197
    %9200 = vset.pattern.permute.xlu0 2
    %9201 = vperm.xlu0 %9200, %v291
    %v9202 = vpop.permute.xlu0 %9201
    %9204 = vset.pattern.permute.xlu0 2
    %9205 = vperm.xlu0 %9204, %v292
    %v9206 = vpop.permute.xlu0 %9205
    %9208 = vset.pattern.permute.xlu0 2
    %9209 = vperm.xlu0 %9208, %v293
    %v9210 = vpop.permute.xlu0 %9209
    %9212 = vset.pattern.permute.xlu0 2
    %9213 = vperm.xlu0 %9212, %v294
    %v9214 = vpop.permute.xlu0 %9213
    %9216 = vset.pattern.permute.xlu0 2
    %9217 = vperm.xlu0 %9216, %v295
    %v9218 = vpop.permute.xlu0 %9217
    %9220 = vset.pattern.permute.xlu0 2
    %9221 = vperm.xlu0 %9220, %v296
    %v9222 = vpop.permute.xlu0 %9221
    %9224 = vset.pattern.permute.xlu0 2
    %9225 = vperm.xlu0 %9224, %v297
    %v9226 = vpop.permute.xlu0 %9225
    %9228 = vset.pattern.permute.xlu0 2
    %9229 = vperm.xlu0 %9228, %v298
    %v9230 = vpop.permute.xlu0 %9229
    %9232 = vset.pattern.permute.xlu0 2
    %9233 = vperm.xlu0 %9232, %v299
    %v9234 = vpop.permute.xlu0 %9233
    %9236 = vset.pattern.permute.xlu0 2
    %9237 = vperm.xlu0 %9236, %v300
    %v9238 = vpop.permute.xlu0 %9237
    %9240 = vset.pattern.permute.xlu0 2
    %9241 = vperm.xlu0 %9240, %v301
    %v9242 = vpop.permute.xlu0 %9241
    %9244 = vset.pattern.permute.xlu0 2
    %9245 = vperm.xlu0 %9244, %v302
    %v9246 = vpop.permute.xlu0 %9245
    %9248 = vset.pattern.permute.xlu0 2
    %9249 = vperm.xlu0 %9248, %v303
    %v9250 = vpop.permute.xlu0 %9249
    %9252 = vset.pattern.permute.xlu0 2
    %9253 = vperm.xlu0 %9252, %v304
    %v9254 = vpop.permute.xlu0 %9253
    %9256 = vset.pattern.permute.xlu0 2
    %9257 = vperm.xlu0 %9256, %v305
    %v9258 = vpop.permute.xlu0 %9257
    %9260 = vset.pattern.permute.xlu0 2
    %9261 = vperm.xlu0 %9260, %v306
    %v9262 = vpop.permute.xlu0 %9261
    %9264 = vset.pattern.permute.xlu0 2
    %9265 = vperm.xlu0 %9264, %v307
    %v9266 = vpop.permute.xlu0 %9265
    %9268 = vset.pattern.permute.xlu0 2
    %9269 = vperm.xlu0 %9268, %v308
    %v9270 = vpop.permute.xlu0 %9269
    %9272 = vset.pattern.permute.xlu0 2
    %9273 = vperm.xlu0 %9272, %v309
    %v9274 = vpop.permute.xlu0 %9273
    %9276 = vset.pattern.permute.xlu0 2
    %9277 = vperm.xlu0 %9276, %v310
    %v9278 = vpop.permute.xlu0 %9277
    %9280 = vset.pattern.permute.xlu0 2
    %9281 = vperm.xlu0 %9280, %v311
    %v9282 = vpop.permute.xlu0 %9281
    %9284 = vset.pattern.permute.xlu0 2
    %9285 = vperm.xlu0 %9284, %v312
    %v9286 = vpop.permute.xlu0 %9285
    %9288 = vset.pattern.permute.xlu0 2
    %9289 = vperm.xlu0 %9288, %v313
    %v9290 = vpop.permute.xlu0 %9289
    %9292 = vset.pattern.permute.xlu0 2
    %9293 = vperm.xlu0 %9292, %v314
    %v9294 = vpop.permute.xlu0 %9293
    %9296 = vset.pattern.permute.xlu0 2
    %9297 = vperm.xlu0 %9296, %v315
    %v9298 = vpop.permute.xlu0 %9297
    %9300 = vset.pattern.permute.xlu0 2
    %9301 = vperm.xlu0 %9300, %v316
    %v9302 = vpop.permute.xlu0 %9301
    %9304 = vset.pattern.permute.xlu0 2
    %9305 = vperm.xlu0 %9304, %v317
    %v9306 = vpop.permute.xlu0 %9305
    %9308 = vset.pattern.permute.xlu0 2
    %9309 = vperm.xlu0 %9308, %v318
    %v9310 = vpop.permute.xlu0 %9309
    %9312 = vset.pattern.permute.xlu0 2
    %9313 = vperm.xlu0 %9312, %v319
    %v9314 = vpop.permute.xlu0 %9313
    %9316 = vset.pattern.permute.xlu0 2
    %9317 = vperm.xlu0 %9316, %v320
    %v9318 = vpop.permute.xlu0 %9317
    %9320 = vset.pattern.permute.xlu0 2
    %9321 = vperm.xlu0 %9320, %v321
    %v9322 = vpop.permute.xlu0 %9321
    %9324 = vset.pattern.permute.xlu0 2
    %9325 = vperm.xlu0 %9324, %v322
    %v9326 = vpop.permute.xlu0 %9325
    %9328 = vset.pattern.permute.xlu0 2
    %9329 = vperm.xlu0 %9328, %v323
    %v9330 = vpop.permute.xlu0 %9329
    %9332 = vset.pattern.permute.xlu0 2
    %9333 = vperm.xlu0 %9332, %v324
    %v9334 = vpop.permute.xlu0 %9333
    %9336 = vset.pattern.permute.xlu0 2
    %9337 = vperm.xlu0 %9336, %v325
    %v9338 = vpop.permute.xlu0 %9337
    %9340 = vset.pattern.permute.xlu0 2
    %9341 = vperm.xlu0 %9340, %v326
    %v9342 = vpop.permute.xlu0 %9341
    %9344 = vset.pattern.permute.xlu0 2
    %9345 = vperm.xlu0 %9344, %v327
    %v9346 = vpop.permute.xlu0 %9345
    %9348 = vset.pattern.permute.xlu0 2
    %9349 = vperm.xlu0 %9348, %v328
    %v9350 = vpop.permute.xlu0 %9349
    %9352 = vset.pattern.permute.xlu0 2
    %9353 = vperm.xlu0 %9352, %v329
    %v9354 = vpop.permute.xlu0 %9353
    %9356 = vset.pattern.permute.xlu0 2
    %9357 = vperm.xlu0 %9356, %v330
    %v9358 = vpop.permute.xlu0 %9357
    %9360 = vset.pattern.permute.xlu0 2
    %9361 = vperm.xlu0 %9360, %v331
    %v9362 = vpop.permute.xlu0 %9361
    %9364 = vset.pattern.permute.xlu0 2
    %9365 = vperm.xlu0 %9364, %v332
    %v9366 = vpop.permute.xlu0 %9365
    %9368 = vset.pattern.permute.xlu0 2
    %9369 = vperm.xlu0 %9368, %v333
    %v9370 = vpop.permute.xlu0 %9369
    %9372 = vset.pattern.permute.xlu0 2
    %9373 = vperm.xlu0 %9372, %v334
    %v9374 = vpop.permute.xlu0 %9373
    %9376 = vset.pattern.permute.xlu0 2
    %9377 = vperm.xlu0 %9376, %v335
    %v9378 = vpop.permute.xlu0 %9377
    %9380 = vset.pattern.permute.xlu0 2
    %9381 = vperm.xlu0 %9380, %v336
    %v9382 = vpop.permute.xlu0 %9381
    %9384 = vset.pattern.permute.xlu0 2
    %9385 = vperm.xlu0 %9384, %v337
    %v9386 = vpop.permute.xlu0 %9385
    %9388 = vset.pattern.permute.xlu0 2
    %9389 = vperm.xlu0 %9388, %v338
    %v9390 = vpop.permute.xlu0 %9389
    %9392 = vset.pattern.permute.xlu0 2
    %9393 = vperm.xlu0 %9392, %v339
    %v9394 = vpop.permute.xlu0 %9393
    %9396 = vset.pattern.permute.xlu0 2
    %9397 = vperm.xlu0 %9396, %v340
    %v9398 = vpop.permute.xlu0 %9397
    %9400 = vset.pattern.permute.xlu0 2
    %9401 = vperm.xlu0 %9400, %v341
    %v9402 = vpop.permute.xlu0 %9401
    %9404 = vset.pattern.permute.xlu0 2
    %9405 = vperm.xlu0 %9404, %v342
    %v9406 = vpop.permute.xlu0 %9405
    %9408 = vset.pattern.permute.xlu0 2
    %9409 = vperm.xlu0 %9408, %v343
    %v9410 = vpop.permute.xlu0 %9409
    %9412 = vset.pattern.permute.xlu0 2
    %9413 = vperm.xlu0 %9412, %v344
    %v9414 = vpop.permute.xlu0 %9413
    %9416 = vset.pattern.permute.xlu0 2
    %9417 = vperm.xlu0 %9416, %v345
    %v9418 = vpop.permute.xlu0 %9417
    %9420 = vset.pattern.permute.xlu0 2
    %9421 = vperm.xlu0 %9420, %v346
    %v9422 = vpop.permute.xlu0 %9421
    %9424 = vset.pattern.permute.xlu0 2
    %9425 = vperm.xlu0 %9424, %v347
    %v9426 = vpop.permute.xlu0 %9425
    %9428 = vset.pattern.permute.xlu0 2
    %9429 = vperm.xlu0 %9428, %v348
    %v9430 = vpop.permute.xlu0 %9429
    %9432 = vset.pattern.permute.xlu0 2
    %9433 = vperm.xlu0 %9432, %v349
    %v9434 = vpop.permute.xlu0 %9433
    %9436 = vset.pattern.permute.xlu0 2
    %9437 = vperm.xlu0 %9436, %v350
    %v9438 = vpop.permute.xlu0 %9437
    %9440 = vset.pattern.permute.xlu0 2
    %9441 = vperm.xlu0 %9440, %v351
    %v9442 = vpop.permute.xlu0 %9441
    %9444 = vset.pattern.permute.xlu0 2
    %9445 = vperm.xlu0 %9444, %v352
    %v9446 = vpop.permute.xlu0 %9445
    %9448 = vset.pattern.permute.xlu0 2
    %9449 = vperm.xlu0 %9448, %v353
    %v9450 = vpop.permute.xlu0 %9449
    %9452 = vset.pattern.permute.xlu0 2
    %9453 = vperm.xlu0 %9452, %v354
    %v9454 = vpop.permute.xlu0 %9453
    %9456 = vset.pattern.permute.xlu0 2
    %9457 = vperm.xlu0 %9456, %v355
    %v9458 = vpop.permute.xlu0 %9457
    %9460 = vset.pattern.permute.xlu0 2
    %9461 = vperm.xlu0 %9460, %v356
    %v9462 = vpop.permute.xlu0 %9461
    %9464 = vset.pattern.permute.xlu0 2
    %9465 = vperm.xlu0 %9464, %v357
    %v9466 = vpop.permute.xlu0 %9465
    %9468 = vset.pattern.permute.xlu0 2
    %9469 = vperm.xlu0 %9468, %v358
    %v9470 = vpop.permute.xlu0 %9469
    %9472 = vset.pattern.permute.xlu0 2
    %9473 = vperm.xlu0 %9472, %v359
    %v9474 = vpop.permute.xlu0 %9473
    %9476 = vset.pattern.permute.xlu0 2
    %9477 = vperm.xlu0 %9476, %v360
    %v9478 = vpop.permute.xlu0 %9477
    %9480 = vset.pattern.permute.xlu0 2
    %9481 = vperm.xlu0 %9480, %v361
    %v9482 = vpop.permute.xlu0 %9481
    %9484 = vset.pattern.permute.xlu0 2
    %9485 = vperm.xlu0 %9484, %v362
    %v9486 = vpop.permute.xlu0 %9485
    %9488 = vset.pattern.permute.xlu0 2
    %9489 = vperm.xlu0 %9488, %v363
    %v9490 = vpop.permute.xlu0 %9489
    %9492 = vset.pattern.permute.xlu0 2
    %9493 = vperm.xlu0 %9492, %v364
    %v9494 = vpop.permute.xlu0 %9493
    %9496 = vset.pattern.permute.xlu0 2
    %9497 = vperm.xlu0 %9496, %v365
    %v9498 = vpop.permute.xlu0 %9497
    %9500 = vset.pattern.permute.xlu0 2
    %9501 = vperm.xlu0 %9500, %v366
    %v9502 = vpop.permute.xlu0 %9501
    %9504 = vset.pattern.permute.xlu0 2
    %9505 = vperm.xlu0 %9504, %v367
    %v9506 = vpop.permute.xlu0 %9505
    %9508 = vset.pattern.permute.xlu0 2
    %9509 = vperm.xlu0 %9508, %v368
    %v9510 = vpop.permute.xlu0 %9509
    %9512 = vset.pattern.permute.xlu0 2
    %9513 = vperm.xlu0 %9512, %v369
    %v9514 = vpop.permute.xlu0 %9513
    %9516 = vset.pattern.permute.xlu0 2
    %9517 = vperm.xlu0 %9516, %v370
    %v9518 = vpop.permute.xlu0 %9517
    %9520 = vset.pattern.permute.xlu0 2
    %9521 = vperm.xlu0 %9520, %v371
    %v9522 = vpop.permute.xlu0 %9521
    %9524 = vset.pattern.permute.xlu0 2
    %9525 = vperm.xlu0 %9524, %v372
    %v9526 = vpop.permute.xlu0 %9525
    %9528 = vset.pattern.permute.xlu0 2
    %9529 = vperm.xlu0 %9528, %v373
    %v9530 = vpop.permute.xlu0 %9529
    %9532 = vset.pattern.permute.xlu0 2
    %9533 = vperm.xlu0 %9532, %v374
    %v9534 = vpop.permute.xlu0 %9533
    %9536 = vset.pattern.permute.xlu0 2
    %9537 = vperm.xlu0 %9536, %v375
    %v9538 = vpop.permute.xlu0 %9537
    %9540 = vset.pattern.permute.xlu0 2
    %9541 = vperm.xlu0 %9540, %v376
    %v9542 = vpop.permute.xlu0 %9541
    %9544 = vset.pattern.permute.xlu0 2
    %9545 = vperm.xlu0 %9544, %v377
    %v9546 = vpop.permute.xlu0 %9545
    %9548 = vset.pattern.permute.xlu0 2
    %9549 = vperm.xlu0 %9548, %v378
    %v9550 = vpop.permute.xlu0 %9549
    %9552 = vset.pattern.permute.xlu0 2
    %9553 = vperm.xlu0 %9552, %v379
    %v9554 = vpop.permute.xlu0 %9553
    %9556 = vset.pattern.permute.xlu0 2
    %9557 = vperm.xlu0 %9556, %v380
    %v9558 = vpop.permute.xlu0 %9557
    %9560 = vset.pattern.permute.xlu0 2
    %9561 = vperm.xlu0 %9560, %v381
    %v9562 = vpop.permute.xlu0 %9561
    %9564 = vset.pattern.permute.xlu0 2
    %9565 = vperm.xlu0 %9564, %v382
    %v9566 = vpop.permute.xlu0 %9565
    %9568 = vset.pattern.permute.xlu0 2
    %9569 = vperm.xlu0 %9568, %v383
    %v9570 = vpop.permute.xlu0 %9569
    %9572 = vset.pattern.permute.xlu0 2
    %9573 = vperm.xlu0 %9572, %v384
    %v9574 = vpop.permute.xlu0 %9573
    %9576 = vset.pattern.permute.xlu0 2
    %9577 = vperm.xlu0 %9576, %v385
    %v9578 = vpop.permute.xlu0 %9577
    %9580 = vset.pattern.permute.xlu0 2
    %9581 = vperm.xlu0 %9580, %v386
    %v9582 = vpop.permute.xlu0 %9581
    %9584 = vset.pattern.permute.xlu0 2
    %9585 = vperm.xlu0 %9584, %v387
    %v9586 = vpop.permute.xlu0 %9585
    %9588 = vset.pattern.permute.xlu0 2
    %9589 = vperm.xlu0 %9588, %v388
    %v9590 = vpop.permute.xlu0 %9589
    %9592 = vset.pattern.permute.xlu0 2
    %9593 = vperm.xlu0 %9592, %v389
    %v9594 = vpop.permute.xlu0 %9593
    %9596 = vset.pattern.permute.xlu0 2
    %9597 = vperm.xlu0 %9596, %v390
    %v9598 = vpop.permute.xlu0 %9597
    %9600 = vset.pattern.permute.xlu0 2
    %9601 = vperm.xlu0 %9600, %v391
    %v9602 = vpop.permute.xlu0 %9601
    %9604 = vset.pattern.permute.xlu0 2
    %9605 = vperm.xlu0 %9604, %v392
    %v9606 = vpop.permute.xlu0 %9605
    %9608 = vset.pattern.permute.xlu0 2
    %9609 = vperm.xlu0 %9608, %v393
    %v9610 = vpop.permute.xlu0 %9609
    %9612 = vset.pattern.permute.xlu0 2
    %9613 = vperm.xlu0 %9612, %v394
    %v9614 = vpop.permute.xlu0 %9613
    %9616 = vset.pattern.permute.xlu0 2
    %9617 = vperm.xlu0 %9616, %v395
    %v9618 = vpop.permute.xlu0 %9617
    %9620 = vset.pattern.permute.xlu0 2
    %9621 = vperm.xlu0 %9620, %v396
    %v9622 = vpop.permute.xlu0 %9621
    %9624 = vset.pattern.permute.xlu0 2
    %9625 = vperm.xlu0 %9624, %v397
    %v9626 = vpop.permute.xlu0 %9625
    %9628 = vset.pattern.permute.xlu0 2
    %9629 = vperm.xlu0 %9628, %v398
    %v9630 = vpop.permute.xlu0 %9629
    %9632 = vset.pattern.permute.xlu0 2
    %9633 = vperm.xlu0 %9632, %v399
    %v9634 = vpop.permute.xlu0 %9633
    %9636 = vset.pattern.permute.xlu0 2
    %9637 = vperm.xlu0 %9636, %v400
    %v9638 = vpop.permute.xlu0 %9637
    %9640 = vset.pattern.permute.xlu0 2
    %9641 = vperm.xlu0 %9640, %v401
    %v9642 = vpop.permute.xlu0 %9641
    %9644 = vset.pattern.permute.xlu0 2
    %9645 = vperm.xlu0 %9644, %v402
    %v9646 = vpop.permute.xlu0 %9645
    %9648 = vset.pattern.permute.xlu0 2
    %9649 = vperm.xlu0 %9648, %v403
    %v9650 = vpop.permute.xlu0 %9649
    %9652 = vset.pattern.permute.xlu0 2
    %9653 = vperm.xlu0 %9652, %v404
    %v9654 = vpop.permute.xlu0 %9653
    %9656 = vset.pattern.permute.xlu0 2
    %9657 = vperm.xlu0 %9656, %v405
    %v9658 = vpop.permute.xlu0 %9657
    %9660 = vset.pattern.permute.xlu0 2
    %9661 = vperm.xlu0 %9660, %v406
    %v9662 = vpop.permute.xlu0 %9661
    %9664 = vset.pattern.permute.xlu0 2
    %9665 = vperm.xlu0 %9664, %v407
    %v9666 = vpop.permute.xlu0 %9665
    %9668 = vset.pattern.permute.xlu0 2
    %9669 = vperm.xlu0 %9668, %v408
    %v9670 = vpop.permute.xlu0 %9669
    %9672 = vset.pattern.permute.xlu0 2
    %9673 = vperm.xlu0 %9672, %v409
    %v9674 = vpop.permute.xlu0 %9673
    %9676 = vset.pattern.permute.xlu0 2
    %9677 = vperm.xlu0 %9676, %v410
    %v9678 = vpop.permute.xlu0 %9677
    %9680 = vset.pattern.permute.xlu0 2
    %9681 = vperm.xlu0 %9680, %v411
    %v9682 = vpop.permute.xlu0 %9681
    %9684 = vset.pattern.permute.xlu0 2
    %9685 = vperm.xlu0 %9684, %v412
    %v9686 = vpop.permute.xlu0 %9685
    %9688 = vset.pattern.permute.xlu0 2
    %9689 = vperm.xlu0 %9688, %v413
    %v9690 = vpop.permute.xlu0 %9689
    %9692 = vset.pattern.permute.xlu0 2
    %9693 = vperm.xlu0 %9692, %v414
    %v9694 = vpop.permute.xlu0 %9693
    %9696 = vset.pattern.permute.xlu0 2
    %9697 = vperm.xlu0 %9696, %v415
    %v9698 = vpop.permute.xlu0 %9697
    %9700 = vset.pattern.permute.xlu0 2
    %9701 = vperm.xlu0 %9700, %v416
    %v9702 = vpop.permute.xlu0 %9701
    %9704 = vset.pattern.permute.xlu0 2
    %9705 = vperm.xlu0 %9704, %v417
    %v9706 = vpop.permute.xlu0 %9705
    %9708 = vset.pattern.permute.xlu0 2
    %9709 = vperm.xlu0 %9708, %v418
    %v9710 = vpop.permute.xlu0 %9709
    %9712 = vset.pattern.permute.xlu0 2
    %9713 = vperm.xlu0 %9712, %v419
    %v9714 = vpop.permute.xlu0 %9713
    %9716 = vset.pattern.permute.xlu0 2
    %9717 = vperm.xlu0 %9716, %v420
    %v9718 = vpop.permute.xlu0 %9717
    %9720 = vset.pattern.permute.xlu0 2
    %9721 = vperm.xlu0 %9720, %v421
    %v9722 = vpop.permute.xlu0 %9721
    %9724 = vset.pattern.permute.xlu0 2
    %9725 = vperm.xlu0 %9724, %v422
    %v9726 = vpop.permute.xlu0 %9725
    %9728 = vset.pattern.permute.xlu0 2
    %9729 = vperm.xlu0 %9728, %v423
    %v9730 = vpop.permute.xlu0 %9729
    %9732 = vset.pattern.permute.xlu0 2
    %9733 = vperm.xlu0 %9732, %v424
    %v9734 = vpop.permute.xlu0 %9733
    %9736 = vset.pattern.permute.xlu0 2
    %9737 = vperm.xlu0 %9736, %v425
    %v9738 = vpop.permute.xlu0 %9737
    %9740 = vset.pattern.permute.xlu0 2
    %9741 = vperm.xlu0 %9740, %v426
    %v9742 = vpop.permute.xlu0 %9741
    %9744 = vset.pattern.permute.xlu0 2
    %9745 = vperm.xlu0 %9744, %v427
    %v9746 = vpop.permute.xlu0 %9745
    %9748 = vset.pattern.permute.xlu0 2
    %9749 = vperm.xlu0 %9748, %v428
    %v9750 = vpop.permute.xlu0 %9749
    %9752 = vset.pattern.permute.xlu0 2
    %9753 = vperm.xlu0 %9752, %v429
    %v9754 = vpop.permute.xlu0 %9753
    %9756 = vset.pattern.permute.xlu0 2
    %9757 = vperm.xlu0 %9756, %v430
    %v9758 = vpop.permute.xlu0 %9757
    %9760 = vset.pattern.permute.xlu0 2
    %9761 = vperm.xlu0 %9760, %v431
    %v9762 = vpop.permute.xlu0 %9761
    %9764 = vset.pattern.permute.xlu0 2
    %9765 = vperm.xlu0 %9764, %v432
    %v9766 = vpop.permute.xlu0 %9765
    %9768 = vset.pattern.permute.xlu0 2
    %9769 = vperm.xlu0 %9768, %v433
    %v9770 = vpop.permute.xlu0 %9769
    %9772 = vset.pattern.permute.xlu0 2
    %9773 = vperm.xlu0 %9772, %v434
    %v9774 = vpop.permute.xlu0 %9773
    %9776 = vset.pattern.permute.xlu0 2
    %9777 = vperm.xlu0 %9776, %v435
    %v9778 = vpop.permute.xlu0 %9777
    %9780 = vset.pattern.permute.xlu0 2
    %9781 = vperm.xlu0 %9780, %v436
    %v9782 = vpop.permute.xlu0 %9781
    %9784 = vset.pattern.permute.xlu0 2
    %9785 = vperm.xlu0 %9784, %v437
    %v9786 = vpop.permute.xlu0 %9785
    %9788 = vset.pattern.permute.xlu0 2
    %9789 = vperm.xlu0 %9788, %v438
    %v9790 = vpop.permute.xlu0 %9789
    %9792 = vset.pattern.permute.xlu0 2
    %9793 = vperm.xlu0 %9792, %v439
    %v9794 = vpop.permute.xlu0 %9793
    %9796 = vset.pattern.permute.xlu0 2
    %9797 = vperm.xlu0 %9796, %v440
    %v9798 = vpop.permute.xlu0 %9797
    %9800 = vset.pattern.permute.xlu0 2
    %9801 = vperm.xlu0 %9800, %v441
    %v9802 = vpop.permute.xlu0 %9801
    %9804 = vset.pattern.permute.xlu0 2
    %9805 = vperm.xlu0 %9804, %v442
    %v9806 = vpop.permute.xlu0 %9805
    %9808 = vset.pattern.permute.xlu0 2
    %9809 = vperm.xlu0 %9808, %v443
    %v9810 = vpop.permute.xlu0 %9809
    %9812 = vset.pattern.permute.xlu0 2
    %9813 = vperm.xlu0 %9812, %v444
    %v9814 = vpop.permute.xlu0 %9813
    %9816 = vset.pattern.permute.xlu0 2
    %9817 = vperm.xlu0 %9816, %v445
    %v9818 = vpop.permute.xlu0 %9817
    %9820 = vset.pattern.permute.xlu0 2
    %9821 = vperm.xlu0 %9820, %v446
    %v9822 = vpop.permute.xlu0 %9821
    %9824 = vset.pattern.permute.xlu0 2
    %9825 = vperm.xlu0 %9824, %v447
    %v9826 = vpop.permute.xlu0 %9825
    %9828 = vset.pattern.permute.xlu0 2
    %9829 = vperm.xlu0 %9828, %v448
    %v9830 = vpop.permute.xlu0 %9829
    %9832 = vset.pattern.permute.xlu0 2
    %9833 = vperm.xlu0 %9832, %v449
    %v9834 = vpop.permute.xlu0 %9833
    %9836 = vset.pattern.permute.xlu0 2
    %9837 = vperm.xlu0 %9836, %v450
    %v9838 = vpop.permute.xlu0 %9837
    %9840 = vset.pattern.permute.xlu0 2
    %9841 = vperm.xlu0 %9840, %v451
    %v9842 = vpop.permute.xlu0 %9841
    %9844 = vset.pattern.permute.xlu0 2
    %9845 = vperm.xlu0 %9844, %v452
    %v9846 = vpop.permute.xlu0 %9845
    %9848 = vset.pattern.permute.xlu0 2
    %9849 = vperm.xlu0 %9848, %v453
    %v9850 = vpop.permute.xlu0 %9849
    %9852 = vset.pattern.permute.xlu0 2
    %9853 = vperm.xlu0 %9852, %v454
    %v9854 = vpop.permute.xlu0 %9853
    %9856 = vset.pattern.permute.xlu0 2
    %9857 = vperm.xlu0 %9856, %v455
    %v9858 = vpop.permute.xlu0 %9857
    %9860 = vset.pattern.permute.xlu0 2
    %9861 = vperm.xlu0 %9860, %v456
    %v9862 = vpop.permute.xlu0 %9861
    %9864 = vset.pattern.permute.xlu0 2
    %9865 = vperm.xlu0 %9864, %v457
    %v9866 = vpop.permute.xlu0 %9865
    %9868 = vset.pattern.permute.xlu0 2
    %9869 = vperm.xlu0 %9868, %v458
    %v9870 = vpop.permute.xlu0 %9869
    %9872 = vset.pattern.permute.xlu0 2
    %9873 = vperm.xlu0 %9872, %v459
    %v9874 = vpop.permute.xlu0 %9873
    %9876 = vset.pattern.permute.xlu0 2
    %9877 = vperm.xlu0 %9876, %v460
    %v9878 = vpop.permute.xlu0 %9877
    %9880 = vset.pattern.permute.xlu0 2
    %9881 = vperm.xlu0 %9880, %v461
    %v9882 = vpop.permute.xlu0 %9881
    %9884 = vset.pattern.permute.xlu0 2
    %9885 = vperm.xlu0 %9884, %v462
    %v9886 = vpop.permute.xlu0 %9885
    %9888 = vset.pattern.permute.xlu0 2
    %9889 = vperm.xlu0 %9888, %v463
    %v9890 = vpop.permute.xlu0 %9889
    %9892 = vset.pattern.permute.xlu0 2
    %9893 = vperm.xlu0 %9892, %v464
    %v9894 = vpop.permute.xlu0 %9893
    %9896 = vset.pattern.permute.xlu0 2
    %9897 = vperm.xlu0 %9896, %v465
    %v9898 = vpop.permute.xlu0 %9897
    %9900 = vset.pattern.permute.xlu0 2
    %9901 = vperm.xlu0 %9900, %v466
    %v9902 = vpop.permute.xlu0 %9901
    %9904 = vset.pattern.permute.xlu0 2
    %9905 = vperm.xlu0 %9904, %v467
    %v9906 = vpop.permute.xlu0 %9905
    %9908 = vset.pattern.permute.xlu0 2
    %9909 = vperm.xlu0 %9908, %v468
    %v9910 = vpop.permute.xlu0 %9909
    %9912 = vset.pattern.permute.xlu0 2
    %9913 = vperm.xlu0 %9912, %v469
    %v9914 = vpop.permute.xlu0 %9913
    %9916 = vset.pattern.permute.xlu0 2
    %9917 = vperm.xlu0 %9916, %v470
    %v9918 = vpop.permute.xlu0 %9917
    %9920 = vset.pattern.permute.xlu0 2
    %9921 = vperm.xlu0 %9920, %v471
    %v9922 = vpop.permute.xlu0 %9921
    %9924 = vset.pattern.permute.xlu0 2
    %9925 = vperm.xlu0 %9924, %v472
    %v9926 = vpop.permute.xlu0 %9925
    %9928 = vset.pattern.permute.xlu0 2
    %9929 = vperm.xlu0 %9928, %v473
    %v9930 = vpop.permute.xlu0 %9929
    %9932 = vset.pattern.permute.xlu0 2
    %9933 = vperm.xlu0 %9932, %v474
    %v9934 = vpop.permute.xlu0 %9933
    %9936 = vset.pattern.permute.xlu0 2
    %9937 = vperm.xlu0 %9936, %v475
    %v9938 = vpop.permute.xlu0 %9937
    %9940 = vset.pattern.permute.xlu0 2
    %9941 = vperm.xlu0 %9940, %v476
    %v9942 = vpop.permute.xlu0 %9941
    %9944 = vset.pattern.permute.xlu0 2
    %9945 = vperm.xlu0 %9944, %v477
    %v9946 = vpop.permute.xlu0 %9945
    %9948 = vset.pattern.permute.xlu0 2
    %9949 = vperm.xlu0 %9948, %v478
    %v9950 = vpop.permute.xlu0 %9949
    %9952 = vset.pattern.permute.xlu0 2
    %9953 = vperm.xlu0 %9952, %v479
    %v9954 = vpop.permute.xlu0 %9953
    %9956 = vset.pattern.permute.xlu0 2
    %9957 = vperm.xlu0 %9956, %v480
    %v9958 = vpop.permute.xlu0 %9957
    %9960 = vset.pattern.permute.xlu0 2
    %9961 = vperm.xlu0 %9960, %v481
    %v9962 = vpop.permute.xlu0 %9961
    %9964 = vset.pattern.permute.xlu0 2
    %9965 = vperm.xlu0 %9964, %v482
    %v9966 = vpop.permute.xlu0 %9965
    %9968 = vset.pattern.permute.xlu0 2
    %9969 = vperm.xlu0 %9968, %v483
    %v9970 = vpop.permute.xlu0 %9969
    %9972 = vset.pattern.permute.xlu0 2
    %9973 = vperm.xlu0 %9972, %v484
    %v9974 = vpop.permute.xlu0 %9973
    %9976 = vset.pattern.permute.xlu0 2
    %9977 = vperm.xlu0 %9976, %v485
    %v9978 = vpop.permute.xlu0 %9977
    %9980 = vset.pattern.permute.xlu0 2
    %9981 = vperm.xlu0 %9980, %v486
    %v9982 = vpop.permute.xlu0 %9981
    %9984 = vset.pattern.permute.xlu0 2
    %9985 = vperm.xlu0 %9984, %v487
    %v9986 = vpop.permute.xlu0 %9985
    %v9988 = vlaneseq
    %v9989 = vshrl.u32 %v9988, 7
    %v9990 = vsub.s32 2, %v9989
    %v9991 = vrot.slane %v488, %v9990
    %v9992 = vlaneseq
    %v9993 = vshrl.u32 %v9992, 7
    %v9994 = vsub.s32 6, %v9993
    %v9995 = vrot.slane %v488, %v9994
    %v9998 = vlaneseq
    %v9999 = vshrl.u32 %v9998, 7
    %v10000 = vsub.s32 2, %v9999
    %v10001 = vrot.slane %v9991, %v10000
    %v10002 = vlaneseq
    %v10003 = vshrl.u32 %v10002, 7
    %v10004 = vsub.s32 2, %v10003
    %v10005 = vrot.slane %v9995, %v10004
    %v10006 = vmul.f32 %v8190, %v10001
    %v10007 = vmul.f32 %v8190, %v10005
    %v10008 = vmul.f32 %v8194, %v10001
    %v10009 = vmul.f32 %v8194, %v10005
    %v10010 = vmul.f32 %v8198, %v10001
    %v10011 = vmul.f32 %v8198, %v10005
    %v10012 = vmul.f32 %v8202, %v10001
    %v10013 = vmul.f32 %v8202, %v10005
    %v10014 = vmul.f32 %v8206, %v10001
    %v10015 = vmul.f32 %v8206, %v10005
    %v10016 = vmul.f32 %v8210, %v10001
    %v10017 = vmul.f32 %v8210, %v10005
    %v10018 = vmul.f32 %v8214, %v10001
    %v10019 = vmul.f32 %v8214, %v10005
    %v10020 = vmul.f32 %v8218, %v10001
    %v10021 = vmul.f32 %v8218, %v10005
    %v10022 = vmul.f32 %v8222, %v10001
    %v10023 = vmul.f32 %v8222, %v10005
    %v10024 = vmul.f32 %v8226, %v10001
    %v10025 = vmul.f32 %v8226, %v10005
    %v10026 = vmul.f32 %v8230, %v10001
    %v10027 = vmul.f32 %v8230, %v10005
    %v10028 = vmul.f32 %v8234, %v10001
    %v10029 = vmul.f32 %v8234, %v10005
    %v10030 = vmul.f32 %v8238, %v10001
    %v10031 = vmul.f32 %v8238, %v10005
    %v10032 = vmul.f32 %v8242, %v10001
    %v10033 = vmul.f32 %v8242, %v10005
    %v10034 = vmul.f32 %v8246, %v10001
    %v10035 = vmul.f32 %v8246, %v10005
    %v10036 = vmul.f32 %v8250, %v10001
    %v10037 = vmul.f32 %v8250, %v10005
    %v10038 = vmul.f32 %v8254, %v10001
    %v10039 = vmul.f32 %v8254, %v10005
    %v10040 = vmul.f32 %v8258, %v10001
    %v10041 = vmul.f32 %v8258, %v10005
    %v10042 = vmul.f32 %v8262, %v10001
    %v10043 = vmul.f32 %v8262, %v10005
    %v10044 = vmul.f32 %v8266, %v10001
    %v10045 = vmul.f32 %v8266, %v10005
    %v10046 = vmul.f32 %v8270, %v10001
    %v10047 = vmul.f32 %v8270, %v10005
    %v10048 = vmul.f32 %v8274, %v10001
    %v10049 = vmul.f32 %v8274, %v10005
    %v10050 = vmul.f32 %v8278, %v10001
    %v10051 = vmul.f32 %v8278, %v10005
    %v10052 = vmul.f32 %v8282, %v10001
    %v10053 = vmul.f32 %v8282, %v10005
    %v10054 = vmul.f32 %v8286, %v10001
    %v10055 = vmul.f32 %v8286, %v10005
    %v10056 = vmul.f32 %v8290, %v10001
    %v10057 = vmul.f32 %v8290, %v10005
    %v10058 = vmul.f32 %v8294, %v10001
    %v10059 = vmul.f32 %v8294, %v10005
    %v10060 = vmul.f32 %v8298, %v10001
    %v10061 = vmul.f32 %v8298, %v10005
    %v10062 = vmul.f32 %v8302, %v10001
    %v10063 = vmul.f32 %v8302, %v10005
    %v10064 = vmul.f32 %v8306, %v10001
    %v10065 = vmul.f32 %v8306, %v10005
    %v10066 = vmul.f32 %v8310, %v10001
    %v10067 = vmul.f32 %v8310, %v10005
    %v10068 = vmul.f32 %v8314, %v10001
    %v10069 = vmul.f32 %v8314, %v10005
    %v10070 = vmul.f32 %v8318, %v10001
    %v10071 = vmul.f32 %v8318, %v10005
    %v10072 = vmul.f32 %v8322, %v10001
    %v10073 = vmul.f32 %v8322, %v10005
    %v10074 = vmul.f32 %v8326, %v10001
    %v10075 = vmul.f32 %v8326, %v10005
    %v10076 = vmul.f32 %v8330, %v10001
    %v10077 = vmul.f32 %v8330, %v10005
    %v10078 = vmul.f32 %v8334, %v10001
    %v10079 = vmul.f32 %v8334, %v10005
    %v10080 = vmul.f32 %v8338, %v10001
    %v10081 = vmul.f32 %v8338, %v10005
    %v10082 = vmul.f32 %v8342, %v10001
    %v10083 = vmul.f32 %v8342, %v10005
    %v10084 = vmul.f32 %v8346, %v10001
    %v10085 = vmul.f32 %v8346, %v10005
    %v10086 = vmul.f32 %v8350, %v10001
    %v10087 = vmul.f32 %v8350, %v10005
    %v10088 = vmul.f32 %v8354, %v10001
    %v10089 = vmul.f32 %v8354, %v10005
    %v10090 = vmul.f32 %v8358, %v10001
    %v10091 = vmul.f32 %v8358, %v10005
    %v10092 = vmul.f32 %v8362, %v10001
    %v10093 = vmul.f32 %v8362, %v10005
    %v10094 = vmul.f32 %v8366, %v10001
    %v10095 = vmul.f32 %v8366, %v10005
    %v10096 = vmul.f32 %v8370, %v10001
    %v10097 = vmul.f32 %v8370, %v10005
    %v10098 = vmul.f32 %v8374, %v10001
    %v10099 = vmul.f32 %v8374, %v10005
    %v10100 = vmul.f32 %v8378, %v10001
    %v10101 = vmul.f32 %v8378, %v10005
    %v10102 = vmul.f32 %v8382, %v10001
    %v10103 = vmul.f32 %v8382, %v10005
    %v10104 = vmul.f32 %v8386, %v10001
    %v10105 = vmul.f32 %v8386, %v10005
    %v10106 = vmul.f32 %v8390, %v10001
    %v10107 = vmul.f32 %v8390, %v10005
    %v10108 = vmul.f32 %v8394, %v10001
    %v10109 = vmul.f32 %v8394, %v10005
    %v10110 = vmul.f32 %v8398, %v10001
    %v10111 = vmul.f32 %v8398, %v10005
    %v10112 = vmul.f32 %v8402, %v10001
    %v10113 = vmul.f32 %v8402, %v10005
    %v10114 = vmul.f32 %v8406, %v10001
    %v10115 = vmul.f32 %v8406, %v10005
    %v10116 = vmul.f32 %v8410, %v10001
    %v10117 = vmul.f32 %v8410, %v10005
    %v10118 = vmul.f32 %v8414, %v10001
    %v10119 = vmul.f32 %v8414, %v10005
    %v10120 = vmul.f32 %v8418, %v10001
    %v10121 = vmul.f32 %v8418, %v10005
    %v10122 = vmul.f32 %v8422, %v10001
    %v10123 = vmul.f32 %v8422, %v10005
    %v10124 = vmul.f32 %v8426, %v10001
    %v10125 = vmul.f32 %v8426, %v10005
    %v10126 = vmul.f32 %v8430, %v10001
    %v10127 = vmul.f32 %v8430, %v10005
    %v10128 = vmul.f32 %v8434, %v10001
    %v10129 = vmul.f32 %v8434, %v10005
    %v10130 = vmul.f32 %v8438, %v10001
    %v10131 = vmul.f32 %v8438, %v10005
    %v10132 = vmul.f32 %v8442, %v10001
    %v10133 = vmul.f32 %v8442, %v10005
    %v10134 = vmul.f32 %v8446, %v10001
    %v10135 = vmul.f32 %v8446, %v10005
    %v10136 = vmul.f32 %v8450, %v10001
    %v10137 = vmul.f32 %v8450, %v10005
    %v10138 = vmul.f32 %v8454, %v10001
    %v10139 = vmul.f32 %v8454, %v10005
    %v10140 = vmul.f32 %v8458, %v10001
    %v10141 = vmul.f32 %v8458, %v10005
    %v10142 = vmul.f32 %v8462, %v10001
    %v10143 = vmul.f32 %v8462, %v10005
    %v10144 = vmul.f32 %v8466, %v10001
    %v10145 = vmul.f32 %v8466, %v10005
    %v10146 = vmul.f32 %v8470, %v10001
    %v10147 = vmul.f32 %v8470, %v10005
    %v10148 = vmul.f32 %v8474, %v10001
    %v10149 = vmul.f32 %v8474, %v10005
    %v10150 = vmul.f32 %v8478, %v10001
    %v10151 = vmul.f32 %v8478, %v10005
    %v10152 = vmul.f32 %v8482, %v10001
    %v10153 = vmul.f32 %v8482, %v10005
    %v10154 = vmul.f32 %v8486, %v10001
    %v10155 = vmul.f32 %v8486, %v10005
    %v10156 = vmul.f32 %v8490, %v10001
    %v10157 = vmul.f32 %v8490, %v10005
    %v10158 = vmul.f32 %v8494, %v10001
    %v10159 = vmul.f32 %v8494, %v10005
    %v10160 = vmul.f32 %v8498, %v10001
    %v10161 = vmul.f32 %v8498, %v10005
    %v10162 = vmul.f32 %v8502, %v10001
    %v10163 = vmul.f32 %v8502, %v10005
    %v10164 = vmul.f32 %v8506, %v10001
    %v10165 = vmul.f32 %v8506, %v10005
    %v10166 = vmul.f32 %v8510, %v10001
    %v10167 = vmul.f32 %v8510, %v10005
    %v10168 = vmul.f32 %v8514, %v10001
    %v10169 = vmul.f32 %v8514, %v10005
    %v10170 = vmul.f32 %v8518, %v10001
    %v10171 = vmul.f32 %v8518, %v10005
    %v10172 = vmul.f32 %v8522, %v10001
    %v10173 = vmul.f32 %v8522, %v10005
    %v10174 = vmul.f32 %v8526, %v10001
    %v10175 = vmul.f32 %v8526, %v10005
    %v10176 = vmul.f32 %v8530, %v10001
    %v10177 = vmul.f32 %v8530, %v10005
    %v10178 = vmul.f32 %v8534, %v10001
    %v10179 = vmul.f32 %v8534, %v10005
    %v10180 = vmul.f32 %v8538, %v10001
    %v10181 = vmul.f32 %v8538, %v10005
    %v10182 = vmul.f32 %v8542, %v10001
    %v10183 = vmul.f32 %v8542, %v10005
    %v10184 = vmul.f32 %v8546, %v10001
    %v10185 = vmul.f32 %v8546, %v10005
    %v10186 = vmul.f32 %v8550, %v10001
    %v10187 = vmul.f32 %v8550, %v10005
    %v10188 = vmul.f32 %v8554, %v10001
    %v10189 = vmul.f32 %v8554, %v10005
    %v10190 = vmul.f32 %v8558, %v10001
    %v10191 = vmul.f32 %v8558, %v10005
    %v10192 = vmul.f32 %v8562, %v10001
    %v10193 = vmul.f32 %v8562, %v10005
    %v10194 = vmul.f32 %v8566, %v10001
    %v10195 = vmul.f32 %v8566, %v10005
    %v10196 = vmul.f32 %v8570, %v10001
    %v10197 = vmul.f32 %v8570, %v10005
    %v10198 = vmul.f32 %v8574, %v10001
    %v10199 = vmul.f32 %v8574, %v10005
    %v10200 = vmul.f32 %v8578, %v10001
    %v10201 = vmul.f32 %v8578, %v10005
    %v10202 = vmul.f32 %v8582, %v10001
    %v10203 = vmul.f32 %v8582, %v10005
    %v10204 = vmul.f32 %v8586, %v10001
    %v10205 = vmul.f32 %v8586, %v10005
    %v10206 = vmul.f32 %v8590, %v10001
    %v10207 = vmul.f32 %v8590, %v10005
    %v10208 = vmul.f32 %v8594, %v10001
    %v10209 = vmul.f32 %v8594, %v10005
    %v10210 = vmul.f32 %v8598, %v10001
    %v10211 = vmul.f32 %v8598, %v10005
    %v10212 = vmul.f32 %v8602, %v10001
    %v10213 = vmul.f32 %v8602, %v10005
    %v10214 = vmul.f32 %v8606, %v10001
    %v10215 = vmul.f32 %v8606, %v10005
    %v10216 = vmul.f32 %v8610, %v10001
    %v10217 = vmul.f32 %v8610, %v10005
    %v10218 = vmul.f32 %v8614, %v10001
    %v10219 = vmul.f32 %v8614, %v10005
    %v10220 = vmul.f32 %v8618, %v10001
    %v10221 = vmul.f32 %v8618, %v10005
    %v10222 = vmul.f32 %v8622, %v10001
    %v10223 = vmul.f32 %v8622, %v10005
    %v10224 = vmul.f32 %v8626, %v10001
    %v10225 = vmul.f32 %v8626, %v10005
    %v10226 = vmul.f32 %v8630, %v10001
    %v10227 = vmul.f32 %v8630, %v10005
    %v10228 = vmul.f32 %v8634, %v10001
    %v10229 = vmul.f32 %v8634, %v10005
    %v10230 = vmul.f32 %v8638, %v10001
    %v10231 = vmul.f32 %v8638, %v10005
    %v10232 = vmul.f32 %v8642, %v10001
    %v10233 = vmul.f32 %v8642, %v10005
    %v10234 = vmul.f32 %v8646, %v10001
    %v10235 = vmul.f32 %v8646, %v10005
    %v10236 = vmul.f32 %v8650, %v10001
    %v10237 = vmul.f32 %v8650, %v10005
    %v10238 = vmul.f32 %v8654, %v10001
    %v10239 = vmul.f32 %v8654, %v10005
    %v10240 = vmul.f32 %v8658, %v10001
    %v10241 = vmul.f32 %v8658, %v10005
    %v10242 = vmul.f32 %v8662, %v10001
    %v10243 = vmul.f32 %v8662, %v10005
    %v10244 = vmul.f32 %v8666, %v10001
    %v10245 = vmul.f32 %v8666, %v10005
    %v10246 = vmul.f32 %v8670, %v10001
    %v10247 = vmul.f32 %v8670, %v10005
    %v10248 = vmul.f32 %v8674, %v10001
    %v10249 = vmul.f32 %v8674, %v10005
    %v10250 = vmul.f32 %v8678, %v10001
    %v10251 = vmul.f32 %v8678, %v10005
    %v10252 = vmul.f32 %v8682, %v10001
    %v10253 = vmul.f32 %v8682, %v10005
    %v10254 = vmul.f32 %v8686, %v10001
    %v10255 = vmul.f32 %v8686, %v10005
    %v10256 = vmul.f32 %v8690, %v10001
    %v10257 = vmul.f32 %v8690, %v10005
    %v10258 = vmul.f32 %v8694, %v10001
    %v10259 = vmul.f32 %v8694, %v10005
    %v10260 = vmul.f32 %v8698, %v10001
    %v10261 = vmul.f32 %v8698, %v10005
    %v10262 = vmul.f32 %v8702, %v10001
    %v10263 = vmul.f32 %v8702, %v10005
    %v10264 = vmul.f32 %v8706, %v10001
    %v10265 = vmul.f32 %v8706, %v10005
    %v10266 = vmul.f32 %v8710, %v10001
    %v10267 = vmul.f32 %v8710, %v10005
    %v10268 = vmul.f32 %v8714, %v10001
    %v10269 = vmul.f32 %v8714, %v10005
    %v10270 = vmul.f32 %v8718, %v10001
    %v10271 = vmul.f32 %v8718, %v10005
    %v10272 = vmul.f32 %v8722, %v10001
    %v10273 = vmul.f32 %v8722, %v10005
    %v10274 = vmul.f32 %v8726, %v10001
    %v10275 = vmul.f32 %v8726, %v10005
    %v10276 = vmul.f32 %v8730, %v10001
    %v10277 = vmul.f32 %v8730, %v10005
    %v10278 = vmul.f32 %v8734, %v10001
    %v10279 = vmul.f32 %v8734, %v10005
    %v10280 = vmul.f32 %v8738, %v10001
    %v10281 = vmul.f32 %v8738, %v10005
    %v10282 = vmul.f32 %v8742, %v10001
    %v10283 = vmul.f32 %v8742, %v10005
    %v10284 = vmul.f32 %v8746, %v10001
    %v10285 = vmul.f32 %v8746, %v10005
    %v10286 = vmul.f32 %v8750, %v10001
    %v10287 = vmul.f32 %v8750, %v10005
    %v10288 = vmul.f32 %v8754, %v10001
    %v10289 = vmul.f32 %v8754, %v10005
    %v10290 = vmul.f32 %v8758, %v10001
    %v10291 = vmul.f32 %v8758, %v10005
    %v10292 = vmul.f32 %v8762, %v10001
    %v10293 = vmul.f32 %v8762, %v10005
    %v10294 = vmul.f32 %v8766, %v10001
    %v10295 = vmul.f32 %v8766, %v10005
    %v10296 = vmul.f32 %v8770, %v10001
    %v10297 = vmul.f32 %v8770, %v10005
    %v10298 = vmul.f32 %v8774, %v10001
    %v10299 = vmul.f32 %v8774, %v10005
    %v10300 = vmul.f32 %v8778, %v10001
    %v10301 = vmul.f32 %v8778, %v10005
    %v10302 = vmul.f32 %v8782, %v10001
    %v10303 = vmul.f32 %v8782, %v10005
    %v10304 = vmul.f32 %v8786, %v10001
    %v10305 = vmul.f32 %v8786, %v10005
    %v10306 = vmul.f32 %v8790, %v10001
    %v10307 = vmul.f32 %v8790, %v10005
    %v10308 = vmul.f32 %v8794, %v10001
    %v10309 = vmul.f32 %v8794, %v10005
    %v10310 = vmul.f32 %v8798, %v10001
    %v10311 = vmul.f32 %v8798, %v10005
    %v10312 = vmul.f32 %v8802, %v10001
    %v10313 = vmul.f32 %v8802, %v10005
    %v10314 = vmul.f32 %v8806, %v10001
    %v10315 = vmul.f32 %v8806, %v10005
    %v10316 = vmul.f32 %v8810, %v10001
    %v10317 = vmul.f32 %v8810, %v10005
    %v10318 = vmul.f32 %v8814, %v10001
    %v10319 = vmul.f32 %v8814, %v10005
    %v10320 = vmul.f32 %v8818, %v10001
    %v10321 = vmul.f32 %v8818, %v10005
    %v10322 = vmul.f32 %v8822, %v10001
    %v10323 = vmul.f32 %v8822, %v10005
    %v10324 = vmul.f32 %v8826, %v10001
    %v10325 = vmul.f32 %v8826, %v10005
    %v10326 = vmul.f32 %v8830, %v10001
    %v10327 = vmul.f32 %v8830, %v10005
    %v10328 = vmul.f32 %v8834, %v10001
    %v10329 = vmul.f32 %v8834, %v10005
    %v10330 = vmul.f32 %v8838, %v10001
    %v10331 = vmul.f32 %v8838, %v10005
    %v10332 = vmul.f32 %v8842, %v10001
    %v10333 = vmul.f32 %v8842, %v10005
    %v10334 = vmul.f32 %v8846, %v10001
    %v10335 = vmul.f32 %v8846, %v10005
    %v10336 = vmul.f32 %v8850, %v10001
    %v10337 = vmul.f32 %v8850, %v10005
    %v10338 = vmul.f32 %v8854, %v10001
    %v10339 = vmul.f32 %v8854, %v10005
    %v10340 = vmul.f32 %v8858, %v10001
    %v10341 = vmul.f32 %v8858, %v10005
    %v10342 = vmul.f32 %v8862, %v10001
    %v10343 = vmul.f32 %v8862, %v10005
    %v10344 = vmul.f32 %v8866, %v10001
    %v10345 = vmul.f32 %v8866, %v10005
    %v10346 = vmul.f32 %v8870, %v10001
    %v10347 = vmul.f32 %v8870, %v10005
    %v10348 = vmul.f32 %v8874, %v10001
    %v10349 = vmul.f32 %v8874, %v10005
    %v10350 = vmul.f32 %v8878, %v10001
    %v10351 = vmul.f32 %v8878, %v10005
    %v10352 = vmul.f32 %v8882, %v10001
    %v10353 = vmul.f32 %v8882, %v10005
    %v10354 = vmul.f32 %v8886, %v10001
    %v10355 = vmul.f32 %v8886, %v10005
    %v10356 = vmul.f32 %v8890, %v10001
    %v10357 = vmul.f32 %v8890, %v10005
    %v10358 = vmul.f32 %v8894, %v10001
    %v10359 = vmul.f32 %v8894, %v10005
    %v10360 = vmul.f32 %v8898, %v10001
    %v10361 = vmul.f32 %v8898, %v10005
    %v10362 = vmul.f32 %v8902, %v10001
    %v10363 = vmul.f32 %v8902, %v10005
    %v10364 = vmul.f32 %v8906, %v10001
    %v10365 = vmul.f32 %v8906, %v10005
    %v10366 = vmul.f32 %v8910, %v10001
    %v10367 = vmul.f32 %v8910, %v10005
    %v10368 = vmul.f32 %v8914, %v10001
    %v10369 = vmul.f32 %v8914, %v10005
    %v10370 = vmul.f32 %v8918, %v10001
    %v10371 = vmul.f32 %v8918, %v10005
    %v10372 = vmul.f32 %v8922, %v10001
    %v10373 = vmul.f32 %v8922, %v10005
    %v10374 = vmul.f32 %v8926, %v10001
    %v10375 = vmul.f32 %v8926, %v10005
    %v10376 = vmul.f32 %v8930, %v10001
    %v10377 = vmul.f32 %v8930, %v10005
    %v10378 = vmul.f32 %v8934, %v10001
    %v10379 = vmul.f32 %v8934, %v10005
    %v10380 = vmul.f32 %v8938, %v10001
    %v10381 = vmul.f32 %v8938, %v10005
    %v10382 = vmul.f32 %v8942, %v10001
    %v10383 = vmul.f32 %v8942, %v10005
    %v10384 = vmul.f32 %v8946, %v10001
    %v10385 = vmul.f32 %v8946, %v10005
    %v10386 = vmul.f32 %v8950, %v10001
    %v10387 = vmul.f32 %v8950, %v10005
    %v10388 = vmul.f32 %v8954, %v10001
    %v10389 = vmul.f32 %v8954, %v10005
    %v10390 = vmul.f32 %v8958, %v10001
    %v10391 = vmul.f32 %v8958, %v10005
    %v10392 = vmul.f32 %v8962, %v10001
    %v10393 = vmul.f32 %v8962, %v10005
    %v10394 = vmul.f32 %v8966, %v10001
    %v10395 = vmul.f32 %v8966, %v10005
    %v10396 = vmul.f32 %v8970, %v10001
    %v10397 = vmul.f32 %v8970, %v10005
    %v10398 = vmul.f32 %v8974, %v10001
    %v10399 = vmul.f32 %v8974, %v10005
    %v10400 = vmul.f32 %v8978, %v10001
    %v10401 = vmul.f32 %v8978, %v10005
    %v10402 = vmul.f32 %v8982, %v10001
    %v10403 = vmul.f32 %v8982, %v10005
    %v10404 = vmul.f32 %v8986, %v10001
    %v10405 = vmul.f32 %v8986, %v10005
    %v10406 = vmul.f32 %v8990, %v10001
    %v10407 = vmul.f32 %v8990, %v10005
    %v10408 = vmul.f32 %v8994, %v10001
    %v10409 = vmul.f32 %v8994, %v10005
    %v10410 = vmul.f32 %v8998, %v10001
    %v10411 = vmul.f32 %v8998, %v10005
    %v10412 = vmul.f32 %v9002, %v10001
    %v10413 = vmul.f32 %v9002, %v10005
    %v10414 = vmul.f32 %v9006, %v10001
    %v10415 = vmul.f32 %v9006, %v10005
    %v10416 = vmul.f32 %v9010, %v10001
    %v10417 = vmul.f32 %v9010, %v10005
    %v10418 = vmul.f32 %v9014, %v10001
    %v10419 = vmul.f32 %v9014, %v10005
    %v10420 = vmul.f32 %v9018, %v10001
    %v10421 = vmul.f32 %v9018, %v10005
    %v10422 = vmul.f32 %v9022, %v10001
    %v10423 = vmul.f32 %v9022, %v10005
    %v10424 = vmul.f32 %v9026, %v10001
    %v10425 = vmul.f32 %v9026, %v10005
    %v10426 = vmul.f32 %v9030, %v10001
    %v10427 = vmul.f32 %v9030, %v10005
    %v10428 = vmul.f32 %v9034, %v10001
    %v10429 = vmul.f32 %v9034, %v10005
    %v10430 = vmul.f32 %v9038, %v10001
    %v10431 = vmul.f32 %v9038, %v10005
    %v10432 = vmul.f32 %v9042, %v10001
    %v10433 = vmul.f32 %v9042, %v10005
    %v10434 = vmul.f32 %v9046, %v10001
    %v10435 = vmul.f32 %v9046, %v10005
    %v10436 = vmul.f32 %v9050, %v10001
    %v10437 = vmul.f32 %v9050, %v10005
    %v10438 = vmul.f32 %v9054, %v10001
    %v10439 = vmul.f32 %v9054, %v10005
    %v10440 = vmul.f32 %v9058, %v10001
    %v10441 = vmul.f32 %v9058, %v10005
    %v10442 = vmul.f32 %v9062, %v10001
    %v10443 = vmul.f32 %v9062, %v10005
    %v10444 = vmul.f32 %v9066, %v10001
    %v10445 = vmul.f32 %v9066, %v10005
    %v10446 = vmul.f32 %v9070, %v10001
    %v10447 = vmul.f32 %v9070, %v10005
    %v10448 = vmul.f32 %v9074, %v10001
    %v10449 = vmul.f32 %v9074, %v10005
    %v10450 = vmul.f32 %v9078, %v10001
    %v10451 = vmul.f32 %v9078, %v10005
    %v10452 = vmul.f32 %v9082, %v10001
    %v10453 = vmul.f32 %v9082, %v10005
    %v10454 = vmul.f32 %v9086, %v10001
    %v10455 = vmul.f32 %v9086, %v10005
    %v10456 = vmul.f32 %v9090, %v10001
    %v10457 = vmul.f32 %v9090, %v10005
    %v10458 = vmul.f32 %v9094, %v10001
    %v10459 = vmul.f32 %v9094, %v10005
    %v10460 = vmul.f32 %v9098, %v10001
    %v10461 = vmul.f32 %v9098, %v10005
    %v10462 = vmul.f32 %v9102, %v10001
    %v10463 = vmul.f32 %v9102, %v10005
    %v10464 = vmul.f32 %v9106, %v10001
    %v10465 = vmul.f32 %v9106, %v10005
    %v10466 = vmul.f32 %v9110, %v10001
    %v10467 = vmul.f32 %v9110, %v10005
    %v10468 = vmul.f32 %v9114, %v10001
    %v10469 = vmul.f32 %v9114, %v10005
    %v10470 = vmul.f32 %v9118, %v10001
    %v10471 = vmul.f32 %v9118, %v10005
    %v10472 = vmul.f32 %v9122, %v10001
    %v10473 = vmul.f32 %v9122, %v10005
    %v10474 = vmul.f32 %v9126, %v10001
    %v10475 = vmul.f32 %v9126, %v10005
    %v10476 = vmul.f32 %v9130, %v10001
    %v10477 = vmul.f32 %v9130, %v10005
    %v10478 = vmul.f32 %v9134, %v10001
    %v10479 = vmul.f32 %v9134, %v10005
    %v10480 = vmul.f32 %v9138, %v10001
    %v10481 = vmul.f32 %v9138, %v10005
    %v10482 = vmul.f32 %v9142, %v10001
    %v10483 = vmul.f32 %v9142, %v10005
    %v10484 = vmul.f32 %v9146, %v10001
    %v10485 = vmul.f32 %v9146, %v10005
    %v10486 = vmul.f32 %v9150, %v10001
    %v10487 = vmul.f32 %v9150, %v10005
    %v10488 = vmul.f32 %v9154, %v10001
    %v10489 = vmul.f32 %v9154, %v10005
    %v10490 = vmul.f32 %v9158, %v10001
    %v10491 = vmul.f32 %v9158, %v10005
    %v10492 = vmul.f32 %v9162, %v10001
    %v10493 = vmul.f32 %v9162, %v10005
    %v10494 = vmul.f32 %v9166, %v10001
    %v10495 = vmul.f32 %v9166, %v10005
    %v10496 = vmul.f32 %v9170, %v10001
    %v10497 = vmul.f32 %v9170, %v10005
    %v10498 = vmul.f32 %v9174, %v10001
    %v10499 = vmul.f32 %v9174, %v10005
    %v10500 = vmul.f32 %v9178, %v10001
    %v10501 = vmul.f32 %v9178, %v10005
    %v10502 = vmul.f32 %v9182, %v10001
    %v10503 = vmul.f32 %v9182, %v10005
    %v10504 = vmul.f32 %v9186, %v10001
    %v10505 = vmul.f32 %v9186, %v10005
    %v10506 = vmul.f32 %v9190, %v10001
    %v10507 = vmul.f32 %v9190, %v10005
    %v10508 = vmul.f32 %v9194, %v10001
    %v10509 = vmul.f32 %v9194, %v10005
    %v10510 = vmul.f32 %v9198, %v10001
    %v10511 = vmul.f32 %v9198, %v10005
    %v10512 = vmul.f32 %v9202, %v10001
    %v10513 = vmul.f32 %v9202, %v10005
    %v10514 = vmul.f32 %v9206, %v10001
    %v10515 = vmul.f32 %v9206, %v10005
    %v10516 = vmul.f32 %v9210, %v10001
    %v10517 = vmul.f32 %v9210, %v10005
    %v10518 = vmul.f32 %v9214, %v10001
    %v10519 = vmul.f32 %v9214, %v10005
    %v10520 = vmul.f32 %v9218, %v10001
    %v10521 = vmul.f32 %v9218, %v10005
    %v10522 = vmul.f32 %v9222, %v10001
    %v10523 = vmul.f32 %v9222, %v10005
    %v10524 = vmul.f32 %v9226, %v10001
    %v10525 = vmul.f32 %v9226, %v10005
    %v10526 = vmul.f32 %v9230, %v10001
    %v10527 = vmul.f32 %v9230, %v10005
    %v10528 = vmul.f32 %v9234, %v10001
    %v10529 = vmul.f32 %v9234, %v10005
    %v10530 = vmul.f32 %v9238, %v10001
    %v10531 = vmul.f32 %v9238, %v10005
    %v10532 = vmul.f32 %v9242, %v10001
    %v10533 = vmul.f32 %v9242, %v10005
    %v10534 = vmul.f32 %v9246, %v10001
    %v10535 = vmul.f32 %v9246, %v10005
    %v10536 = vmul.f32 %v9250, %v10001
    %v10537 = vmul.f32 %v9250, %v10005
    %v10538 = vmul.f32 %v9254, %v10001
    %v10539 = vmul.f32 %v9254, %v10005
    %v10540 = vmul.f32 %v9258, %v10001
    %v10541 = vmul.f32 %v9258, %v10005
    %v10542 = vmul.f32 %v9262, %v10001
    %v10543 = vmul.f32 %v9262, %v10005
    %v10544 = vmul.f32 %v9266, %v10001
    %v10545 = vmul.f32 %v9266, %v10005
    %v10546 = vmul.f32 %v9270, %v10001
    %v10547 = vmul.f32 %v9270, %v10005
    %v10548 = vmul.f32 %v9274, %v10001
    %v10549 = vmul.f32 %v9274, %v10005
    %v10550 = vmul.f32 %v9278, %v10001
    %v10551 = vmul.f32 %v9278, %v10005
    %v10552 = vmul.f32 %v9282, %v10001
    %v10553 = vmul.f32 %v9282, %v10005
    %v10554 = vmul.f32 %v9286, %v10001
    %v10555 = vmul.f32 %v9286, %v10005
    %v10556 = vmul.f32 %v9290, %v10001
    %v10557 = vmul.f32 %v9290, %v10005
    %v10558 = vmul.f32 %v9294, %v10001
    %v10559 = vmul.f32 %v9294, %v10005
    %v10560 = vmul.f32 %v9298, %v10001
    %v10561 = vmul.f32 %v9298, %v10005
    %v10562 = vmul.f32 %v9302, %v10001
    %v10563 = vmul.f32 %v9302, %v10005
    %v10564 = vmul.f32 %v9306, %v10001
    %v10565 = vmul.f32 %v9306, %v10005
    %v10566 = vmul.f32 %v9310, %v10001
    %v10567 = vmul.f32 %v9310, %v10005
    %v10568 = vmul.f32 %v9314, %v10001
    %v10569 = vmul.f32 %v9314, %v10005
    %v10570 = vmul.f32 %v9318, %v10001
    %v10571 = vmul.f32 %v9318, %v10005
    %v10572 = vmul.f32 %v9322, %v10001
    %v10573 = vmul.f32 %v9322, %v10005
    %v10574 = vmul.f32 %v9326, %v10001
    %v10575 = vmul.f32 %v9326, %v10005
    %v10576 = vmul.f32 %v9330, %v10001
    %v10577 = vmul.f32 %v9330, %v10005
    %v10578 = vmul.f32 %v9334, %v10001
    %v10579 = vmul.f32 %v9334, %v10005
    %v10580 = vmul.f32 %v9338, %v10001
    %v10581 = vmul.f32 %v9338, %v10005
    %v10582 = vmul.f32 %v9342, %v10001
    %v10583 = vmul.f32 %v9342, %v10005
    %v10584 = vmul.f32 %v9346, %v10001
    %v10585 = vmul.f32 %v9346, %v10005
    %v10586 = vmul.f32 %v9350, %v10001
    %v10587 = vmul.f32 %v9350, %v10005
    %v10588 = vmul.f32 %v9354, %v10001
    %v10589 = vmul.f32 %v9354, %v10005
    %v10590 = vmul.f32 %v9358, %v10001
    %v10591 = vmul.f32 %v9358, %v10005
    %v10592 = vmul.f32 %v9362, %v10001
    %v10593 = vmul.f32 %v9362, %v10005
    %v10594 = vmul.f32 %v9366, %v10001
    %v10595 = vmul.f32 %v9366, %v10005
    %v10596 = vmul.f32 %v9370, %v10001
    %v10597 = vmul.f32 %v9370, %v10005
    %v10598 = vmul.f32 %v9374, %v10001
    %v10599 = vmul.f32 %v9374, %v10005
    %v10600 = vmul.f32 %v9378, %v10001
    %v10601 = vmul.f32 %v9378, %v10005
    %v10602 = vmul.f32 %v9382, %v10001
    %v10603 = vmul.f32 %v9382, %v10005
    %v10604 = vmul.f32 %v9386, %v10001
    %v10605 = vmul.f32 %v9386, %v10005
    %v10606 = vmul.f32 %v9390, %v10001
    %v10607 = vmul.f32 %v9390, %v10005
    %v10608 = vmul.f32 %v9394, %v10001
    %v10609 = vmul.f32 %v9394, %v10005
    %v10610 = vmul.f32 %v9398, %v10001
    %v10611 = vmul.f32 %v9398, %v10005
    %v10612 = vmul.f32 %v9402, %v10001
    %v10613 = vmul.f32 %v9402, %v10005
    %v10614 = vmul.f32 %v9406, %v10001
    %v10615 = vmul.f32 %v9406, %v10005
    %v10616 = vmul.f32 %v9410, %v10001
    %v10617 = vmul.f32 %v9410, %v10005
    %v10618 = vmul.f32 %v9414, %v10001
    %v10619 = vmul.f32 %v9414, %v10005
    %v10620 = vmul.f32 %v9418, %v10001
    %v10621 = vmul.f32 %v9418, %v10005
    %v10622 = vmul.f32 %v9422, %v10001
    %v10623 = vmul.f32 %v9422, %v10005
    %v10624 = vmul.f32 %v9426, %v10001
    %v10625 = vmul.f32 %v9426, %v10005
    %v10626 = vmul.f32 %v9430, %v10001
    %v10627 = vmul.f32 %v9430, %v10005
    %v10628 = vmul.f32 %v9434, %v10001
    %v10629 = vmul.f32 %v9434, %v10005
    %v10630 = vmul.f32 %v9438, %v10001
    %v10631 = vmul.f32 %v9438, %v10005
    %v10632 = vmul.f32 %v9442, %v10001
    %v10633 = vmul.f32 %v9442, %v10005
    %v10634 = vmul.f32 %v9446, %v10001
    %v10635 = vmul.f32 %v9446, %v10005
    %v10636 = vmul.f32 %v9450, %v10001
    %v10637 = vmul.f32 %v9450, %v10005
    %v10638 = vmul.f32 %v9454, %v10001
    %v10639 = vmul.f32 %v9454, %v10005
    %v10640 = vmul.f32 %v9458, %v10001
    %v10641 = vmul.f32 %v9458, %v10005
    %v10642 = vmul.f32 %v9462, %v10001
    %v10643 = vmul.f32 %v9462, %v10005
    %v10644 = vmul.f32 %v9466, %v10001
    %v10645 = vmul.f32 %v9466, %v10005
    %v10646 = vmul.f32 %v9470, %v10001
    %v10647 = vmul.f32 %v9470, %v10005
    %v10648 = vmul.f32 %v9474, %v10001
    %v10649 = vmul.f32 %v9474, %v10005
    %v10650 = vmul.f32 %v9478, %v10001
    %v10651 = vmul.f32 %v9478, %v10005
    %v10652 = vmul.f32 %v9482, %v10001
    %v10653 = vmul.f32 %v9482, %v10005
    %v10654 = vmul.f32 %v9486, %v10001
    %v10655 = vmul.f32 %v9486, %v10005
    %v10656 = vmul.f32 %v9490, %v10001
    %v10657 = vmul.f32 %v9490, %v10005
    %v10658 = vmul.f32 %v9494, %v10001
    %v10659 = vmul.f32 %v9494, %v10005
    %v10660 = vmul.f32 %v9498, %v10001
    %v10661 = vmul.f32 %v9498, %v10005
    %v10662 = vmul.f32 %v9502, %v10001
    %v10663 = vmul.f32 %v9502, %v10005
    %v10664 = vmul.f32 %v9506, %v10001
    %v10665 = vmul.f32 %v9506, %v10005
    %v10666 = vmul.f32 %v9510, %v10001
    %v10667 = vmul.f32 %v9510, %v10005
    %v10668 = vmul.f32 %v9514, %v10001
    %v10669 = vmul.f32 %v9514, %v10005
    %v10670 = vmul.f32 %v9518, %v10001
    %v10671 = vmul.f32 %v9518, %v10005
    %v10672 = vmul.f32 %v9522, %v10001
    %v10673 = vmul.f32 %v9522, %v10005
    %v10674 = vmul.f32 %v9526, %v10001
    %v10675 = vmul.f32 %v9526, %v10005
    %v10676 = vmul.f32 %v9530, %v10001
    %v10677 = vmul.f32 %v9530, %v10005
    %v10678 = vmul.f32 %v9534, %v10001
    %v10679 = vmul.f32 %v9534, %v10005
    %v10680 = vmul.f32 %v9538, %v10001
    %v10681 = vmul.f32 %v9538, %v10005
    %v10682 = vmul.f32 %v9542, %v10001
    %v10683 = vmul.f32 %v9542, %v10005
    %v10684 = vmul.f32 %v9546, %v10001
    %v10685 = vmul.f32 %v9546, %v10005
    %v10686 = vmul.f32 %v9550, %v10001
    %v10687 = vmul.f32 %v9550, %v10005
    %v10688 = vmul.f32 %v9554, %v10001
    %v10689 = vmul.f32 %v9554, %v10005
    %v10690 = vmul.f32 %v9558, %v10001
    %v10691 = vmul.f32 %v9558, %v10005
    %v10692 = vmul.f32 %v9562, %v10001
    %v10693 = vmul.f32 %v9562, %v10005
    %v10694 = vmul.f32 %v9566, %v10001
    %v10695 = vmul.f32 %v9566, %v10005
    %v10696 = vmul.f32 %v9570, %v10001
    %v10697 = vmul.f32 %v9570, %v10005
    %v10698 = vmul.f32 %v9574, %v10001
    %v10699 = vmul.f32 %v9574, %v10005
    %v10700 = vmul.f32 %v9578, %v10001
    %v10701 = vmul.f32 %v9578, %v10005
    %v10702 = vmul.f32 %v9582, %v10001
    %v10703 = vmul.f32 %v9582, %v10005
    %v10704 = vmul.f32 %v9586, %v10001
    %v10705 = vmul.f32 %v9586, %v10005
    %v10706 = vmul.f32 %v9590, %v10001
    %v10707 = vmul.f32 %v9590, %v10005
    %v10708 = vmul.f32 %v9594, %v10001
    %v10709 = vmul.f32 %v9594, %v10005
    %v10710 = vmul.f32 %v9598, %v10001
    %v10711 = vmul.f32 %v9598, %v10005
    %v10712 = vmul.f32 %v9602, %v10001
    %v10713 = vmul.f32 %v9602, %v10005
    %v10714 = vmul.f32 %v9606, %v10001
    %v10715 = vmul.f32 %v9606, %v10005
    %v10716 = vmul.f32 %v9610, %v10001
    %v10717 = vmul.f32 %v9610, %v10005
    %v10718 = vmul.f32 %v9614, %v10001
    %v10719 = vmul.f32 %v9614, %v10005
    %v10720 = vmul.f32 %v9618, %v10001
    %v10721 = vmul.f32 %v9618, %v10005
    %v10722 = vmul.f32 %v9622, %v10001
    %v10723 = vmul.f32 %v9622, %v10005
    %v10724 = vmul.f32 %v9626, %v10001
    %v10725 = vmul.f32 %v9626, %v10005
    %v10726 = vmul.f32 %v9630, %v10001
    %v10727 = vmul.f32 %v9630, %v10005
    %v10728 = vmul.f32 %v9634, %v10001
    %v10729 = vmul.f32 %v9634, %v10005
    %v10730 = vmul.f32 %v9638, %v10001
    %v10731 = vmul.f32 %v9638, %v10005
    %v10732 = vmul.f32 %v9642, %v10001
    %v10733 = vmul.f32 %v9642, %v10005
    %v10734 = vmul.f32 %v9646, %v10001
    %v10735 = vmul.f32 %v9646, %v10005
    %v10736 = vmul.f32 %v9650, %v10001
    %v10737 = vmul.f32 %v9650, %v10005
    %v10738 = vmul.f32 %v9654, %v10001
    %v10739 = vmul.f32 %v9654, %v10005
    %v10740 = vmul.f32 %v9658, %v10001
    %v10741 = vmul.f32 %v9658, %v10005
    %v10742 = vmul.f32 %v9662, %v10001
    %v10743 = vmul.f32 %v9662, %v10005
    %v10744 = vmul.f32 %v9666, %v10001
    %v10745 = vmul.f32 %v9666, %v10005
    %v10746 = vmul.f32 %v9670, %v10001
    %v10747 = vmul.f32 %v9670, %v10005
    %v10748 = vmul.f32 %v9674, %v10001
    %v10749 = vmul.f32 %v9674, %v10005
    %v10750 = vmul.f32 %v9678, %v10001
    %v10751 = vmul.f32 %v9678, %v10005
    %v10752 = vmul.f32 %v9682, %v10001
    %v10753 = vmul.f32 %v9682, %v10005
    %v10754 = vmul.f32 %v9686, %v10001
    %v10755 = vmul.f32 %v9686, %v10005
    %v10756 = vmul.f32 %v9690, %v10001
    %v10757 = vmul.f32 %v9690, %v10005
    %v10758 = vmul.f32 %v9694, %v10001
    %v10759 = vmul.f32 %v9694, %v10005
    %v10760 = vmul.f32 %v9698, %v10001
    %v10761 = vmul.f32 %v9698, %v10005
    %v10762 = vmul.f32 %v9702, %v10001
    %v10763 = vmul.f32 %v9702, %v10005
    %v10764 = vmul.f32 %v9706, %v10001
    %v10765 = vmul.f32 %v9706, %v10005
    %v10766 = vmul.f32 %v9710, %v10001
    %v10767 = vmul.f32 %v9710, %v10005
    %v10768 = vmul.f32 %v9714, %v10001
    %v10769 = vmul.f32 %v9714, %v10005
    %v10770 = vmul.f32 %v9718, %v10001
    %v10771 = vmul.f32 %v9718, %v10005
    %v10772 = vmul.f32 %v9722, %v10001
    %v10773 = vmul.f32 %v9722, %v10005
    %v10774 = vmul.f32 %v9726, %v10001
    %v10775 = vmul.f32 %v9726, %v10005
    %v10776 = vmul.f32 %v9730, %v10001
    %v10777 = vmul.f32 %v9730, %v10005
    %v10778 = vmul.f32 %v9734, %v10001
    %v10779 = vmul.f32 %v9734, %v10005
    %v10780 = vmul.f32 %v9738, %v10001
    %v10781 = vmul.f32 %v9738, %v10005
    %v10782 = vmul.f32 %v9742, %v10001
    %v10783 = vmul.f32 %v9742, %v10005
    %v10784 = vmul.f32 %v9746, %v10001
    %v10785 = vmul.f32 %v9746, %v10005
    %v10786 = vmul.f32 %v9750, %v10001
    %v10787 = vmul.f32 %v9750, %v10005
    %v10788 = vmul.f32 %v9754, %v10001
    %v10789 = vmul.f32 %v9754, %v10005
    %v10790 = vmul.f32 %v9758, %v10001
    %v10791 = vmul.f32 %v9758, %v10005
    %v10792 = vmul.f32 %v9762, %v10001
    %v10793 = vmul.f32 %v9762, %v10005
    %v10794 = vmul.f32 %v9766, %v10001
    %v10795 = vmul.f32 %v9766, %v10005
    %v10796 = vmul.f32 %v9770, %v10001
    %v10797 = vmul.f32 %v9770, %v10005
    %v10798 = vmul.f32 %v9774, %v10001
    %v10799 = vmul.f32 %v9774, %v10005
    %v10800 = vmul.f32 %v9778, %v10001
    %v10801 = vmul.f32 %v9778, %v10005
    %v10802 = vmul.f32 %v9782, %v10001
    %v10803 = vmul.f32 %v9782, %v10005
    %v10804 = vmul.f32 %v9786, %v10001
    %v10805 = vmul.f32 %v9786, %v10005
    %v10806 = vmul.f32 %v9790, %v10001
    %v10807 = vmul.f32 %v9790, %v10005
    %v10808 = vmul.f32 %v9794, %v10001
    %v10809 = vmul.f32 %v9794, %v10005
    %v10810 = vmul.f32 %v9798, %v10001
    %v10811 = vmul.f32 %v9798, %v10005
    %v10812 = vmul.f32 %v9802, %v10001
    %v10813 = vmul.f32 %v9802, %v10005
    %v10814 = vmul.f32 %v9806, %v10001
    %v10815 = vmul.f32 %v9806, %v10005
    %v10816 = vmul.f32 %v9810, %v10001
    %v10817 = vmul.f32 %v9810, %v10005
    %v10818 = vmul.f32 %v9814, %v10001
    %v10819 = vmul.f32 %v9814, %v10005
    %v10820 = vmul.f32 %v9818, %v10001
    %v10821 = vmul.f32 %v9818, %v10005
    %v10822 = vmul.f32 %v9822, %v10001
    %v10823 = vmul.f32 %v9822, %v10005
    %v10824 = vmul.f32 %v9826, %v10001
    %v10825 = vmul.f32 %v9826, %v10005
    %v10826 = vmul.f32 %v9830, %v10001
    %v10827 = vmul.f32 %v9830, %v10005
    %v10828 = vmul.f32 %v9834, %v10001
    %v10829 = vmul.f32 %v9834, %v10005
    %v10830 = vmul.f32 %v9838, %v10001
    %v10831 = vmul.f32 %v9838, %v10005
    %v10832 = vmul.f32 %v9842, %v10001
    %v10833 = vmul.f32 %v9842, %v10005
    %v10834 = vmul.f32 %v9846, %v10001
    %v10835 = vmul.f32 %v9846, %v10005
    %v10836 = vmul.f32 %v9850, %v10001
    %v10837 = vmul.f32 %v9850, %v10005
    %v10838 = vmul.f32 %v9854, %v10001
    %v10839 = vmul.f32 %v9854, %v10005
    %v10840 = vmul.f32 %v9858, %v10001
    %v10841 = vmul.f32 %v9858, %v10005
    %v10842 = vmul.f32 %v9862, %v10001
    %v10843 = vmul.f32 %v9862, %v10005
    %v10844 = vmul.f32 %v9866, %v10001
    %v10845 = vmul.f32 %v9866, %v10005
    %v10846 = vmul.f32 %v9870, %v10001
    %v10847 = vmul.f32 %v9870, %v10005
    %v10848 = vmul.f32 %v9874, %v10001
    %v10849 = vmul.f32 %v9874, %v10005
    %v10850 = vmul.f32 %v9878, %v10001
    %v10851 = vmul.f32 %v9878, %v10005
    %v10852 = vmul.f32 %v9882, %v10001
    %v10853 = vmul.f32 %v9882, %v10005
    %v10854 = vmul.f32 %v9886, %v10001
    %v10855 = vmul.f32 %v9886, %v10005
    %v10856 = vmul.f32 %v9890, %v10001
    %v10857 = vmul.f32 %v9890, %v10005
    %v10858 = vmul.f32 %v9894, %v10001
    %v10859 = vmul.f32 %v9894, %v10005
    %v10860 = vmul.f32 %v9898, %v10001
    %v10861 = vmul.f32 %v9898, %v10005
    %v10862 = vmul.f32 %v9902, %v10001
    %v10863 = vmul.f32 %v9902, %v10005
    %v10864 = vmul.f32 %v9906, %v10001
    %v10865 = vmul.f32 %v9906, %v10005
    %v10866 = vmul.f32 %v9910, %v10001
    %v10867 = vmul.f32 %v9910, %v10005
    %v10868 = vmul.f32 %v9914, %v10001
    %v10869 = vmul.f32 %v9914, %v10005
    %v10870 = vmul.f32 %v9918, %v10001
    %v10871 = vmul.f32 %v9918, %v10005
    %v10872 = vmul.f32 %v9922, %v10001
    %v10873 = vmul.f32 %v9922, %v10005
    %v10874 = vmul.f32 %v9926, %v10001
    %v10875 = vmul.f32 %v9926, %v10005
    %v10876 = vmul.f32 %v9930, %v10001
    %v10877 = vmul.f32 %v9930, %v10005
    %v10878 = vmul.f32 %v9934, %v10001
    %v10879 = vmul.f32 %v9934, %v10005
    %v10880 = vmul.f32 %v9938, %v10001
    %v10881 = vmul.f32 %v9938, %v10005
    %v10882 = vmul.f32 %v9942, %v10001
    %v10883 = vmul.f32 %v9942, %v10005
    %v10884 = vmul.f32 %v9946, %v10001
    %v10885 = vmul.f32 %v9946, %v10005
    %v10886 = vmul.f32 %v9950, %v10001
    %v10887 = vmul.f32 %v9950, %v10005
    %v10888 = vmul.f32 %v9954, %v10001
    %v10889 = vmul.f32 %v9954, %v10005
    %v10890 = vmul.f32 %v9958, %v10001
    %v10891 = vmul.f32 %v9958, %v10005
    %v10892 = vmul.f32 %v9962, %v10001
    %v10893 = vmul.f32 %v9962, %v10005
    %v10894 = vmul.f32 %v9966, %v10001
    %v10895 = vmul.f32 %v9966, %v10005
    %v10896 = vmul.f32 %v9970, %v10001
    %v10897 = vmul.f32 %v9970, %v10005
    %v10898 = vmul.f32 %v9974, %v10001
    %v10899 = vmul.f32 %v9974, %v10005
    %v10900 = vmul.f32 %v9978, %v10001
    %v10901 = vmul.f32 %v9978, %v10005
    %v10902 = vmul.f32 %v9982, %v10001
    %v10903 = vmul.f32 %v9982, %v10005
    %v10904 = vmul.f32 %v9986, %v10001
    %v10905 = vmul.f32 %v9986, %v10005
    %v10906 = vadd.f32 %v7288, %v10006
    %v10907 = vadd.f32 %v7289, %v10007
    %v10908 = vadd.f32 %v7290, %v10008
    %v10909 = vadd.f32 %v7291, %v10009
    %v10910 = vadd.f32 %v7292, %v10010
    %v10911 = vadd.f32 %v7293, %v10011
    %v10912 = vadd.f32 %v7294, %v10012
    %v10913 = vadd.f32 %v7295, %v10013
    %v10914 = vadd.f32 %v7296, %v10014
    %v10915 = vadd.f32 %v7297, %v10015
    %v10916 = vadd.f32 %v7298, %v10016
    %v10917 = vadd.f32 %v7299, %v10017
    %v10918 = vadd.f32 %v7300, %v10018
    %v10919 = vadd.f32 %v7301, %v10019
    %v10920 = vadd.f32 %v7302, %v10020
    %v10921 = vadd.f32 %v7303, %v10021
    %v10922 = vadd.f32 %v7304, %v10022
    %v10923 = vadd.f32 %v7305, %v10023
    %v10924 = vadd.f32 %v7306, %v10024
    %v10925 = vadd.f32 %v7307, %v10025
    %v10926 = vadd.f32 %v7308, %v10026
    %v10927 = vadd.f32 %v7309, %v10027
    %v10928 = vadd.f32 %v7310, %v10028
    %v10929 = vadd.f32 %v7311, %v10029
    %v10930 = vadd.f32 %v7312, %v10030
    %v10931 = vadd.f32 %v7313, %v10031
    %v10932 = vadd.f32 %v7314, %v10032
    %v10933 = vadd.f32 %v7315, %v10033
    %v10934 = vadd.f32 %v7316, %v10034
    %v10935 = vadd.f32 %v7317, %v10035
    %v10936 = vadd.f32 %v7318, %v10036
    %v10937 = vadd.f32 %v7319, %v10037
    %v10938 = vadd.f32 %v7320, %v10038
    %v10939 = vadd.f32 %v7321, %v10039
    %v10940 = vadd.f32 %v7322, %v10040
    %v10941 = vadd.f32 %v7323, %v10041
    %v10942 = vadd.f32 %v7324, %v10042
    %v10943 = vadd.f32 %v7325, %v10043
    %v10944 = vadd.f32 %v7326, %v10044
    %v10945 = vadd.f32 %v7327, %v10045
    %v10946 = vadd.f32 %v7328, %v10046
    %v10947 = vadd.f32 %v7329, %v10047
    %v10948 = vadd.f32 %v7330, %v10048
    %v10949 = vadd.f32 %v7331, %v10049
    %v10950 = vadd.f32 %v7332, %v10050
    %v10951 = vadd.f32 %v7333, %v10051
    %v10952 = vadd.f32 %v7334, %v10052
    %v10953 = vadd.f32 %v7335, %v10053
    %v10954 = vadd.f32 %v7336, %v10054
    %v10955 = vadd.f32 %v7337, %v10055
    %v10956 = vadd.f32 %v7338, %v10056
    %v10957 = vadd.f32 %v7339, %v10057
    %v10958 = vadd.f32 %v7340, %v10058
    %v10959 = vadd.f32 %v7341, %v10059
    %v10960 = vadd.f32 %v7342, %v10060
    %v10961 = vadd.f32 %v7343, %v10061
    %v10962 = vadd.f32 %v7344, %v10062
    %v10963 = vadd.f32 %v7345, %v10063
    %v10964 = vadd.f32 %v7346, %v10064
    %v10965 = vadd.f32 %v7347, %v10065
    %v10966 = vadd.f32 %v7348, %v10066
    %v10967 = vadd.f32 %v7349, %v10067
    %v10968 = vadd.f32 %v7350, %v10068
    %v10969 = vadd.f32 %v7351, %v10069
    %v10970 = vadd.f32 %v7352, %v10070
    %v10971 = vadd.f32 %v7353, %v10071
    %v10972 = vadd.f32 %v7354, %v10072
    %v10973 = vadd.f32 %v7355, %v10073
    %v10974 = vadd.f32 %v7356, %v10074
    %v10975 = vadd.f32 %v7357, %v10075
    %v10976 = vadd.f32 %v7358, %v10076
    %v10977 = vadd.f32 %v7359, %v10077
    %v10978 = vadd.f32 %v7360, %v10078
    %v10979 = vadd.f32 %v7361, %v10079
    %v10980 = vadd.f32 %v7362, %v10080
    %v10981 = vadd.f32 %v7363, %v10081
    %v10982 = vadd.f32 %v7364, %v10082
    %v10983 = vadd.f32 %v7365, %v10083
    %v10984 = vadd.f32 %v7366, %v10084
    %v10985 = vadd.f32 %v7367, %v10085
    %v10986 = vadd.f32 %v7368, %v10086
    %v10987 = vadd.f32 %v7369, %v10087
    %v10988 = vadd.f32 %v7370, %v10088
    %v10989 = vadd.f32 %v7371, %v10089
    %v10990 = vadd.f32 %v7372, %v10090
    %v10991 = vadd.f32 %v7373, %v10091
    %v10992 = vadd.f32 %v7374, %v10092
    %v10993 = vadd.f32 %v7375, %v10093
    %v10994 = vadd.f32 %v7376, %v10094
    %v10995 = vadd.f32 %v7377, %v10095
    %v10996 = vadd.f32 %v7378, %v10096
    %v10997 = vadd.f32 %v7379, %v10097
    %v10998 = vadd.f32 %v7380, %v10098
    %v10999 = vadd.f32 %v7381, %v10099
    %v11000 = vadd.f32 %v7382, %v10100
    %v11001 = vadd.f32 %v7383, %v10101
    %v11002 = vadd.f32 %v7384, %v10102
    %v11003 = vadd.f32 %v7385, %v10103
    %v11004 = vadd.f32 %v7386, %v10104
    %v11005 = vadd.f32 %v7387, %v10105
    %v11006 = vadd.f32 %v7388, %v10106
    %v11007 = vadd.f32 %v7389, %v10107
    %v11008 = vadd.f32 %v7390, %v10108
    %v11009 = vadd.f32 %v7391, %v10109
    %v11010 = vadd.f32 %v7392, %v10110
    %v11011 = vadd.f32 %v7393, %v10111
    %v11012 = vadd.f32 %v7394, %v10112
    %v11013 = vadd.f32 %v7395, %v10113
    %v11014 = vadd.f32 %v7396, %v10114
    %v11015 = vadd.f32 %v7397, %v10115
    %v11016 = vadd.f32 %v7398, %v10116
    %v11017 = vadd.f32 %v7399, %v10117
    %v11018 = vadd.f32 %v7400, %v10118
    %v11019 = vadd.f32 %v7401, %v10119
    %v11020 = vadd.f32 %v7402, %v10120
    %v11021 = vadd.f32 %v7403, %v10121
    %v11022 = vadd.f32 %v7404, %v10122
    %v11023 = vadd.f32 %v7405, %v10123
    %v11024 = vadd.f32 %v7406, %v10124
    %v11025 = vadd.f32 %v7407, %v10125
    %v11026 = vadd.f32 %v7408, %v10126
    %v11027 = vadd.f32 %v7409, %v10127
    %v11028 = vadd.f32 %v7410, %v10128
    %v11029 = vadd.f32 %v7411, %v10129
    %v11030 = vadd.f32 %v7412, %v10130
    %v11031 = vadd.f32 %v7413, %v10131
    %v11032 = vadd.f32 %v7414, %v10132
    %v11033 = vadd.f32 %v7415, %v10133
    %v11034 = vadd.f32 %v7416, %v10134
    %v11035 = vadd.f32 %v7417, %v10135
    %v11036 = vadd.f32 %v7418, %v10136
    %v11037 = vadd.f32 %v7419, %v10137
    %v11038 = vadd.f32 %v7420, %v10138
    %v11039 = vadd.f32 %v7421, %v10139
    %v11040 = vadd.f32 %v7422, %v10140
    %v11041 = vadd.f32 %v7423, %v10141
    %v11042 = vadd.f32 %v7424, %v10142
    %v11043 = vadd.f32 %v7425, %v10143
    %v11044 = vadd.f32 %v7426, %v10144
    %v11045 = vadd.f32 %v7427, %v10145
    %v11046 = vadd.f32 %v7428, %v10146
    %v11047 = vadd.f32 %v7429, %v10147
    %v11048 = vadd.f32 %v7430, %v10148
    %v11049 = vadd.f32 %v7431, %v10149
    %v11050 = vadd.f32 %v7432, %v10150
    %v11051 = vadd.f32 %v7433, %v10151
    %v11052 = vadd.f32 %v7434, %v10152
    %v11053 = vadd.f32 %v7435, %v10153
    %v11054 = vadd.f32 %v7436, %v10154
    %v11055 = vadd.f32 %v7437, %v10155
    %v11056 = vadd.f32 %v7438, %v10156
    %v11057 = vadd.f32 %v7439, %v10157
    %v11058 = vadd.f32 %v7440, %v10158
    %v11059 = vadd.f32 %v7441, %v10159
    %v11060 = vadd.f32 %v7442, %v10160
    %v11061 = vadd.f32 %v7443, %v10161
    %v11062 = vadd.f32 %v7444, %v10162
    %v11063 = vadd.f32 %v7445, %v10163
    %v11064 = vadd.f32 %v7446, %v10164
    %v11065 = vadd.f32 %v7447, %v10165
    %v11066 = vadd.f32 %v7448, %v10166
    %v11067 = vadd.f32 %v7449, %v10167
    %v11068 = vadd.f32 %v7450, %v10168
    %v11069 = vadd.f32 %v7451, %v10169
    %v11070 = vadd.f32 %v7452, %v10170
    %v11071 = vadd.f32 %v7453, %v10171
    %v11072 = vadd.f32 %v7454, %v10172
    %v11073 = vadd.f32 %v7455, %v10173
    %v11074 = vadd.f32 %v7456, %v10174
    %v11075 = vadd.f32 %v7457, %v10175
    %v11076 = vadd.f32 %v7458, %v10176
    %v11077 = vadd.f32 %v7459, %v10177
    %v11078 = vadd.f32 %v7460, %v10178
    %v11079 = vadd.f32 %v7461, %v10179
    %v11080 = vadd.f32 %v7462, %v10180
    %v11081 = vadd.f32 %v7463, %v10181
    %v11082 = vadd.f32 %v7464, %v10182
    %v11083 = vadd.f32 %v7465, %v10183
    %v11084 = vadd.f32 %v7466, %v10184
    %v11085 = vadd.f32 %v7467, %v10185
    %v11086 = vadd.f32 %v7468, %v10186
    %v11087 = vadd.f32 %v7469, %v10187
    %v11088 = vadd.f32 %v7470, %v10188
    %v11089 = vadd.f32 %v7471, %v10189
    %v11090 = vadd.f32 %v7472, %v10190
    %v11091 = vadd.f32 %v7473, %v10191
    %v11092 = vadd.f32 %v7474, %v10192
    %v11093 = vadd.f32 %v7475, %v10193
    %v11094 = vadd.f32 %v7476, %v10194
    %v11095 = vadd.f32 %v7477, %v10195
    %v11096 = vadd.f32 %v7478, %v10196
    %v11097 = vadd.f32 %v7479, %v10197
    %v11098 = vadd.f32 %v7480, %v10198
    %v11099 = vadd.f32 %v7481, %v10199
    %v11100 = vadd.f32 %v7482, %v10200
    %v11101 = vadd.f32 %v7483, %v10201
    %v11102 = vadd.f32 %v7484, %v10202
    %v11103 = vadd.f32 %v7485, %v10203
    %v11104 = vadd.f32 %v7486, %v10204
    %v11105 = vadd.f32 %v7487, %v10205
    %v11106 = vadd.f32 %v7488, %v10206
    %v11107 = vadd.f32 %v7489, %v10207
    %v11108 = vadd.f32 %v7490, %v10208
    %v11109 = vadd.f32 %v7491, %v10209
    %v11110 = vadd.f32 %v7492, %v10210
    %v11111 = vadd.f32 %v7493, %v10211
    %v11112 = vadd.f32 %v7494, %v10212
    %v11113 = vadd.f32 %v7495, %v10213
    %v11114 = vadd.f32 %v7496, %v10214
    %v11115 = vadd.f32 %v7497, %v10215
    %v11116 = vadd.f32 %v7498, %v10216
    %v11117 = vadd.f32 %v7499, %v10217
    %v11118 = vadd.f32 %v7500, %v10218
    %v11119 = vadd.f32 %v7501, %v10219
    %v11120 = vadd.f32 %v7502, %v10220
    %v11121 = vadd.f32 %v7503, %v10221
    %v11122 = vadd.f32 %v7504, %v10222
    %v11123 = vadd.f32 %v7505, %v10223
    %v11124 = vadd.f32 %v7506, %v10224
    %v11125 = vadd.f32 %v7507, %v10225
    %v11126 = vadd.f32 %v7508, %v10226
    %v11127 = vadd.f32 %v7509, %v10227
    %v11128 = vadd.f32 %v7510, %v10228
    %v11129 = vadd.f32 %v7511, %v10229
    %v11130 = vadd.f32 %v7512, %v10230
    %v11131 = vadd.f32 %v7513, %v10231
    %v11132 = vadd.f32 %v7514, %v10232
    %v11133 = vadd.f32 %v7515, %v10233
    %v11134 = vadd.f32 %v7516, %v10234
    %v11135 = vadd.f32 %v7517, %v10235
    %v11136 = vadd.f32 %v7518, %v10236
    %v11137 = vadd.f32 %v7519, %v10237
    %v11138 = vadd.f32 %v7520, %v10238
    %v11139 = vadd.f32 %v7521, %v10239
    %v11140 = vadd.f32 %v7522, %v10240
    %v11141 = vadd.f32 %v7523, %v10241
    %v11142 = vadd.f32 %v7524, %v10242
    %v11143 = vadd.f32 %v7525, %v10243
    %v11144 = vadd.f32 %v7526, %v10244
    %v11145 = vadd.f32 %v7527, %v10245
    %v11146 = vadd.f32 %v7528, %v10246
    %v11147 = vadd.f32 %v7529, %v10247
    %v11148 = vadd.f32 %v7530, %v10248
    %v11149 = vadd.f32 %v7531, %v10249
    %v11150 = vadd.f32 %v7532, %v10250
    %v11151 = vadd.f32 %v7533, %v10251
    %v11152 = vadd.f32 %v7534, %v10252
    %v11153 = vadd.f32 %v7535, %v10253
    %v11154 = vadd.f32 %v7536, %v10254
    %v11155 = vadd.f32 %v7537, %v10255
    %v11156 = vadd.f32 %v7538, %v10256
    %v11157 = vadd.f32 %v7539, %v10257
    %v11158 = vadd.f32 %v7540, %v10258
    %v11159 = vadd.f32 %v7541, %v10259
    %v11160 = vadd.f32 %v7542, %v10260
    %v11161 = vadd.f32 %v7543, %v10261
    %v11162 = vadd.f32 %v7544, %v10262
    %v11163 = vadd.f32 %v7545, %v10263
    %v11164 = vadd.f32 %v7546, %v10264
    %v11165 = vadd.f32 %v7547, %v10265
    %v11166 = vadd.f32 %v7548, %v10266
    %v11167 = vadd.f32 %v7549, %v10267
    %v11168 = vadd.f32 %v7550, %v10268
    %v11169 = vadd.f32 %v7551, %v10269
    %v11170 = vadd.f32 %v7552, %v10270
    %v11171 = vadd.f32 %v7553, %v10271
    %v11172 = vadd.f32 %v7554, %v10272
    %v11173 = vadd.f32 %v7555, %v10273
    %v11174 = vadd.f32 %v7556, %v10274
    %v11175 = vadd.f32 %v7557, %v10275
    %v11176 = vadd.f32 %v7558, %v10276
    %v11177 = vadd.f32 %v7559, %v10277
    %v11178 = vadd.f32 %v7560, %v10278
    %v11179 = vadd.f32 %v7561, %v10279
    %v11180 = vadd.f32 %v7562, %v10280
    %v11181 = vadd.f32 %v7563, %v10281
    %v11182 = vadd.f32 %v7564, %v10282
    %v11183 = vadd.f32 %v7565, %v10283
    %v11184 = vadd.f32 %v7566, %v10284
    %v11185 = vadd.f32 %v7567, %v10285
    %v11186 = vadd.f32 %v7568, %v10286
    %v11187 = vadd.f32 %v7569, %v10287
    %v11188 = vadd.f32 %v7570, %v10288
    %v11189 = vadd.f32 %v7571, %v10289
    %v11190 = vadd.f32 %v7572, %v10290
    %v11191 = vadd.f32 %v7573, %v10291
    %v11192 = vadd.f32 %v7574, %v10292
    %v11193 = vadd.f32 %v7575, %v10293
    %v11194 = vadd.f32 %v7576, %v10294
    %v11195 = vadd.f32 %v7577, %v10295
    %v11196 = vadd.f32 %v7578, %v10296
    %v11197 = vadd.f32 %v7579, %v10297
    %v11198 = vadd.f32 %v7580, %v10298
    %v11199 = vadd.f32 %v7581, %v10299
    %v11200 = vadd.f32 %v7582, %v10300
    %v11201 = vadd.f32 %v7583, %v10301
    %v11202 = vadd.f32 %v7584, %v10302
    %v11203 = vadd.f32 %v7585, %v10303
    %v11204 = vadd.f32 %v7586, %v10304
    %v11205 = vadd.f32 %v7587, %v10305
    %v11206 = vadd.f32 %v7588, %v10306
    %v11207 = vadd.f32 %v7589, %v10307
    %v11208 = vadd.f32 %v7590, %v10308
    %v11209 = vadd.f32 %v7591, %v10309
    %v11210 = vadd.f32 %v7592, %v10310
    %v11211 = vadd.f32 %v7593, %v10311
    %v11212 = vadd.f32 %v7594, %v10312
    %v11213 = vadd.f32 %v7595, %v10313
    %v11214 = vadd.f32 %v7596, %v10314
    %v11215 = vadd.f32 %v7597, %v10315
    %v11216 = vadd.f32 %v7598, %v10316
    %v11217 = vadd.f32 %v7599, %v10317
    %v11218 = vadd.f32 %v7600, %v10318
    %v11219 = vadd.f32 %v7601, %v10319
    %v11220 = vadd.f32 %v7602, %v10320
    %v11221 = vadd.f32 %v7603, %v10321
    %v11222 = vadd.f32 %v7604, %v10322
    %v11223 = vadd.f32 %v7605, %v10323
    %v11224 = vadd.f32 %v7606, %v10324
    %v11225 = vadd.f32 %v7607, %v10325
    %v11226 = vadd.f32 %v7608, %v10326
    %v11227 = vadd.f32 %v7609, %v10327
    %v11228 = vadd.f32 %v7610, %v10328
    %v11229 = vadd.f32 %v7611, %v10329
    %v11230 = vadd.f32 %v7612, %v10330
    %v11231 = vadd.f32 %v7613, %v10331
    %v11232 = vadd.f32 %v7614, %v10332
    %v11233 = vadd.f32 %v7615, %v10333
    %v11234 = vadd.f32 %v7616, %v10334
    %v11235 = vadd.f32 %v7617, %v10335
    %v11236 = vadd.f32 %v7618, %v10336
    %v11237 = vadd.f32 %v7619, %v10337
    %v11238 = vadd.f32 %v7620, %v10338
    %v11239 = vadd.f32 %v7621, %v10339
    %v11240 = vadd.f32 %v7622, %v10340
    %v11241 = vadd.f32 %v7623, %v10341
    %v11242 = vadd.f32 %v7624, %v10342
    %v11243 = vadd.f32 %v7625, %v10343
    %v11244 = vadd.f32 %v7626, %v10344
    %v11245 = vadd.f32 %v7627, %v10345
    %v11246 = vadd.f32 %v7628, %v10346
    %v11247 = vadd.f32 %v7629, %v10347
    %v11248 = vadd.f32 %v7630, %v10348
    %v11249 = vadd.f32 %v7631, %v10349
    %v11250 = vadd.f32 %v7632, %v10350
    %v11251 = vadd.f32 %v7633, %v10351
    %v11252 = vadd.f32 %v7634, %v10352
    %v11253 = vadd.f32 %v7635, %v10353
    %v11254 = vadd.f32 %v7636, %v10354
    %v11255 = vadd.f32 %v7637, %v10355
    %v11256 = vadd.f32 %v7638, %v10356
    %v11257 = vadd.f32 %v7639, %v10357
    %v11258 = vadd.f32 %v7640, %v10358
    %v11259 = vadd.f32 %v7641, %v10359
    %v11260 = vadd.f32 %v7642, %v10360
    %v11261 = vadd.f32 %v7643, %v10361
    %v11262 = vadd.f32 %v7644, %v10362
    %v11263 = vadd.f32 %v7645, %v10363
    %v11264 = vadd.f32 %v7646, %v10364
    %v11265 = vadd.f32 %v7647, %v10365
    %v11266 = vadd.f32 %v7648, %v10366
    %v11267 = vadd.f32 %v7649, %v10367
    %v11268 = vadd.f32 %v7650, %v10368
    %v11269 = vadd.f32 %v7651, %v10369
    %v11270 = vadd.f32 %v7652, %v10370
    %v11271 = vadd.f32 %v7653, %v10371
    %v11272 = vadd.f32 %v7654, %v10372
    %v11273 = vadd.f32 %v7655, %v10373
    %v11274 = vadd.f32 %v7656, %v10374
    %v11275 = vadd.f32 %v7657, %v10375
    %v11276 = vadd.f32 %v7658, %v10376
    %v11277 = vadd.f32 %v7659, %v10377
    %v11278 = vadd.f32 %v7660, %v10378
    %v11279 = vadd.f32 %v7661, %v10379
    %v11280 = vadd.f32 %v7662, %v10380
    %v11281 = vadd.f32 %v7663, %v10381
    %v11282 = vadd.f32 %v7664, %v10382
    %v11283 = vadd.f32 %v7665, %v10383
    %v11284 = vadd.f32 %v7666, %v10384
    %v11285 = vadd.f32 %v7667, %v10385
    %v11286 = vadd.f32 %v7668, %v10386
    %v11287 = vadd.f32 %v7669, %v10387
    %v11288 = vadd.f32 %v7670, %v10388
    %v11289 = vadd.f32 %v7671, %v10389
    %v11290 = vadd.f32 %v7672, %v10390
    %v11291 = vadd.f32 %v7673, %v10391
    %v11292 = vadd.f32 %v7674, %v10392
    %v11293 = vadd.f32 %v7675, %v10393
    %v11294 = vadd.f32 %v7676, %v10394
    %v11295 = vadd.f32 %v7677, %v10395
    %v11296 = vadd.f32 %v7678, %v10396
    %v11297 = vadd.f32 %v7679, %v10397
    %v11298 = vadd.f32 %v7680, %v10398
    %v11299 = vadd.f32 %v7681, %v10399
    %v11300 = vadd.f32 %v7682, %v10400
    %v11301 = vadd.f32 %v7683, %v10401
    %v11302 = vadd.f32 %v7684, %v10402
    %v11303 = vadd.f32 %v7685, %v10403
    %v11304 = vadd.f32 %v7686, %v10404
    %v11305 = vadd.f32 %v7687, %v10405
    %v11306 = vadd.f32 %v7688, %v10406
    %v11307 = vadd.f32 %v7689, %v10407
    %v11308 = vadd.f32 %v7690, %v10408
    %v11309 = vadd.f32 %v7691, %v10409
    %v11310 = vadd.f32 %v7692, %v10410
    %v11311 = vadd.f32 %v7693, %v10411
    %v11312 = vadd.f32 %v7694, %v10412
    %v11313 = vadd.f32 %v7695, %v10413
    %v11314 = vadd.f32 %v7696, %v10414
    %v11315 = vadd.f32 %v7697, %v10415
    %v11316 = vadd.f32 %v7698, %v10416
    %v11317 = vadd.f32 %v7699, %v10417
    %v11318 = vadd.f32 %v7700, %v10418
    %v11319 = vadd.f32 %v7701, %v10419
    %v11320 = vadd.f32 %v7702, %v10420
    %v11321 = vadd.f32 %v7703, %v10421
    %v11322 = vadd.f32 %v7704, %v10422
    %v11323 = vadd.f32 %v7705, %v10423
    %v11324 = vadd.f32 %v7706, %v10424
    %v11325 = vadd.f32 %v7707, %v10425
    %v11326 = vadd.f32 %v7708, %v10426
    %v11327 = vadd.f32 %v7709, %v10427
    %v11328 = vadd.f32 %v7710, %v10428
    %v11329 = vadd.f32 %v7711, %v10429
    %v11330 = vadd.f32 %v7712, %v10430
    %v11331 = vadd.f32 %v7713, %v10431
    %v11332 = vadd.f32 %v7714, %v10432
    %v11333 = vadd.f32 %v7715, %v10433
    %v11334 = vadd.f32 %v7716, %v10434
    %v11335 = vadd.f32 %v7717, %v10435
    %v11336 = vadd.f32 %v7718, %v10436
    %v11337 = vadd.f32 %v7719, %v10437
    %v11338 = vadd.f32 %v7720, %v10438
    %v11339 = vadd.f32 %v7721, %v10439
    %v11340 = vadd.f32 %v7722, %v10440
    %v11341 = vadd.f32 %v7723, %v10441
    %v11342 = vadd.f32 %v7724, %v10442
    %v11343 = vadd.f32 %v7725, %v10443
    %v11344 = vadd.f32 %v7726, %v10444
    %v11345 = vadd.f32 %v7727, %v10445
    %v11346 = vadd.f32 %v7728, %v10446
    %v11347 = vadd.f32 %v7729, %v10447
    %v11348 = vadd.f32 %v7730, %v10448
    %v11349 = vadd.f32 %v7731, %v10449
    %v11350 = vadd.f32 %v7732, %v10450
    %v11351 = vadd.f32 %v7733, %v10451
    %v11352 = vadd.f32 %v7734, %v10452
    %v11353 = vadd.f32 %v7735, %v10453
    %v11354 = vadd.f32 %v7736, %v10454
    %v11355 = vadd.f32 %v7737, %v10455
    %v11356 = vadd.f32 %v7738, %v10456
    %v11357 = vadd.f32 %v7739, %v10457
    %v11358 = vadd.f32 %v7740, %v10458
    %v11359 = vadd.f32 %v7741, %v10459
    %v11360 = vadd.f32 %v7742, %v10460
    %v11361 = vadd.f32 %v7743, %v10461
    %v11362 = vadd.f32 %v7744, %v10462
    %v11363 = vadd.f32 %v7745, %v10463
    %v11364 = vadd.f32 %v7746, %v10464
    %v11365 = vadd.f32 %v7747, %v10465
    %v11366 = vadd.f32 %v7748, %v10466
    %v11367 = vadd.f32 %v7749, %v10467
    %v11368 = vadd.f32 %v7750, %v10468
    %v11369 = vadd.f32 %v7751, %v10469
    %v11370 = vadd.f32 %v7752, %v10470
    %v11371 = vadd.f32 %v7753, %v10471
    %v11372 = vadd.f32 %v7754, %v10472
    %v11373 = vadd.f32 %v7755, %v10473
    %v11374 = vadd.f32 %v7756, %v10474
    %v11375 = vadd.f32 %v7757, %v10475
    %v11376 = vadd.f32 %v7758, %v10476
    %v11377 = vadd.f32 %v7759, %v10477
    %v11378 = vadd.f32 %v7760, %v10478
    %v11379 = vadd.f32 %v7761, %v10479
    %v11380 = vadd.f32 %v7762, %v10480
    %v11381 = vadd.f32 %v7763, %v10481
    %v11382 = vadd.f32 %v7764, %v10482
    %v11383 = vadd.f32 %v7765, %v10483
    %v11384 = vadd.f32 %v7766, %v10484
    %v11385 = vadd.f32 %v7767, %v10485
    %v11386 = vadd.f32 %v7768, %v10486
    %v11387 = vadd.f32 %v7769, %v10487
    %v11388 = vadd.f32 %v7770, %v10488
    %v11389 = vadd.f32 %v7771, %v10489
    %v11390 = vadd.f32 %v7772, %v10490
    %v11391 = vadd.f32 %v7773, %v10491
    %v11392 = vadd.f32 %v7774, %v10492
    %v11393 = vadd.f32 %v7775, %v10493
    %v11394 = vadd.f32 %v7776, %v10494
    %v11395 = vadd.f32 %v7777, %v10495
    %v11396 = vadd.f32 %v7778, %v10496
    %v11397 = vadd.f32 %v7779, %v10497
    %v11398 = vadd.f32 %v7780, %v10498
    %v11399 = vadd.f32 %v7781, %v10499
    %v11400 = vadd.f32 %v7782, %v10500
    %v11401 = vadd.f32 %v7783, %v10501
    %v11402 = vadd.f32 %v7784, %v10502
    %v11403 = vadd.f32 %v7785, %v10503
    %v11404 = vadd.f32 %v7786, %v10504
    %v11405 = vadd.f32 %v7787, %v10505
    %v11406 = vadd.f32 %v7788, %v10506
    %v11407 = vadd.f32 %v7789, %v10507
    %v11408 = vadd.f32 %v7790, %v10508
    %v11409 = vadd.f32 %v7791, %v10509
    %v11410 = vadd.f32 %v7792, %v10510
    %v11411 = vadd.f32 %v7793, %v10511
    %v11412 = vadd.f32 %v7794, %v10512
    %v11413 = vadd.f32 %v7795, %v10513
    %v11414 = vadd.f32 %v7796, %v10514
    %v11415 = vadd.f32 %v7797, %v10515
    %v11416 = vadd.f32 %v7798, %v10516
    %v11417 = vadd.f32 %v7799, %v10517
    %v11418 = vadd.f32 %v7800, %v10518
    %v11419 = vadd.f32 %v7801, %v10519
    %v11420 = vadd.f32 %v7802, %v10520
    %v11421 = vadd.f32 %v7803, %v10521
    %v11422 = vadd.f32 %v7804, %v10522
    %v11423 = vadd.f32 %v7805, %v10523
    %v11424 = vadd.f32 %v7806, %v10524
    %v11425 = vadd.f32 %v7807, %v10525
    %v11426 = vadd.f32 %v7808, %v10526
    %v11427 = vadd.f32 %v7809, %v10527
    %v11428 = vadd.f32 %v7810, %v10528
    %v11429 = vadd.f32 %v7811, %v10529
    %v11430 = vadd.f32 %v7812, %v10530
    %v11431 = vadd.f32 %v7813, %v10531
    %v11432 = vadd.f32 %v7814, %v10532
    %v11433 = vadd.f32 %v7815, %v10533
    %v11434 = vadd.f32 %v7816, %v10534
    %v11435 = vadd.f32 %v7817, %v10535
    %v11436 = vadd.f32 %v7818, %v10536
    %v11437 = vadd.f32 %v7819, %v10537
    %v11438 = vadd.f32 %v7820, %v10538
    %v11439 = vadd.f32 %v7821, %v10539
    %v11440 = vadd.f32 %v7822, %v10540
    %v11441 = vadd.f32 %v7823, %v10541
    %v11442 = vadd.f32 %v7824, %v10542
    %v11443 = vadd.f32 %v7825, %v10543
    %v11444 = vadd.f32 %v7826, %v10544
    %v11445 = vadd.f32 %v7827, %v10545
    %v11446 = vadd.f32 %v7828, %v10546
    %v11447 = vadd.f32 %v7829, %v10547
    %v11448 = vadd.f32 %v7830, %v10548
    %v11449 = vadd.f32 %v7831, %v10549
    %v11450 = vadd.f32 %v7832, %v10550
    %v11451 = vadd.f32 %v7833, %v10551
    %v11452 = vadd.f32 %v7834, %v10552
    %v11453 = vadd.f32 %v7835, %v10553
    %v11454 = vadd.f32 %v7836, %v10554
    %v11455 = vadd.f32 %v7837, %v10555
    %v11456 = vadd.f32 %v7838, %v10556
    %v11457 = vadd.f32 %v7839, %v10557
    %v11458 = vadd.f32 %v7840, %v10558
    %v11459 = vadd.f32 %v7841, %v10559
    %v11460 = vadd.f32 %v7842, %v10560
    %v11461 = vadd.f32 %v7843, %v10561
    %v11462 = vadd.f32 %v7844, %v10562
    %v11463 = vadd.f32 %v7845, %v10563
    %v11464 = vadd.f32 %v7846, %v10564
    %v11465 = vadd.f32 %v7847, %v10565
    %v11466 = vadd.f32 %v7848, %v10566
    %v11467 = vadd.f32 %v7849, %v10567
    %v11468 = vadd.f32 %v7850, %v10568
    %v11469 = vadd.f32 %v7851, %v10569
    %v11470 = vadd.f32 %v7852, %v10570
    %v11471 = vadd.f32 %v7853, %v10571
    %v11472 = vadd.f32 %v7854, %v10572
    %v11473 = vadd.f32 %v7855, %v10573
    %v11474 = vadd.f32 %v7856, %v10574
    %v11475 = vadd.f32 %v7857, %v10575
    %v11476 = vadd.f32 %v7858, %v10576
    %v11477 = vadd.f32 %v7859, %v10577
    %v11478 = vadd.f32 %v7860, %v10578
    %v11479 = vadd.f32 %v7861, %v10579
    %v11480 = vadd.f32 %v7862, %v10580
    %v11481 = vadd.f32 %v7863, %v10581
    %v11482 = vadd.f32 %v7864, %v10582
    %v11483 = vadd.f32 %v7865, %v10583
    %v11484 = vadd.f32 %v7866, %v10584
    %v11485 = vadd.f32 %v7867, %v10585
    %v11486 = vadd.f32 %v7868, %v10586
    %v11487 = vadd.f32 %v7869, %v10587
    %v11488 = vadd.f32 %v7870, %v10588
    %v11489 = vadd.f32 %v7871, %v10589
    %v11490 = vadd.f32 %v7872, %v10590
    %v11491 = vadd.f32 %v7873, %v10591
    %v11492 = vadd.f32 %v7874, %v10592
    %v11493 = vadd.f32 %v7875, %v10593
    %v11494 = vadd.f32 %v7876, %v10594
    %v11495 = vadd.f32 %v7877, %v10595
    %v11496 = vadd.f32 %v7878, %v10596
    %v11497 = vadd.f32 %v7879, %v10597
    %v11498 = vadd.f32 %v7880, %v10598
    %v11499 = vadd.f32 %v7881, %v10599
    %v11500 = vadd.f32 %v7882, %v10600
    %v11501 = vadd.f32 %v7883, %v10601
    %v11502 = vadd.f32 %v7884, %v10602
    %v11503 = vadd.f32 %v7885, %v10603
    %v11504 = vadd.f32 %v7886, %v10604
    %v11505 = vadd.f32 %v7887, %v10605
    %v11506 = vadd.f32 %v7888, %v10606
    %v11507 = vadd.f32 %v7889, %v10607
    %v11508 = vadd.f32 %v7890, %v10608
    %v11509 = vadd.f32 %v7891, %v10609
    %v11510 = vadd.f32 %v7892, %v10610
    %v11511 = vadd.f32 %v7893, %v10611
    %v11512 = vadd.f32 %v7894, %v10612
    %v11513 = vadd.f32 %v7895, %v10613
    %v11514 = vadd.f32 %v7896, %v10614
    %v11515 = vadd.f32 %v7897, %v10615
    %v11516 = vadd.f32 %v7898, %v10616
    %v11517 = vadd.f32 %v7899, %v10617
    %v11518 = vadd.f32 %v7900, %v10618
    %v11519 = vadd.f32 %v7901, %v10619
    %v11520 = vadd.f32 %v7902, %v10620
    %v11521 = vadd.f32 %v7903, %v10621
    %v11522 = vadd.f32 %v7904, %v10622
    %v11523 = vadd.f32 %v7905, %v10623
    %v11524 = vadd.f32 %v7906, %v10624
    %v11525 = vadd.f32 %v7907, %v10625
    %v11526 = vadd.f32 %v7908, %v10626
    %v11527 = vadd.f32 %v7909, %v10627
    %v11528 = vadd.f32 %v7910, %v10628
    %v11529 = vadd.f32 %v7911, %v10629
    %v11530 = vadd.f32 %v7912, %v10630
    %v11531 = vadd.f32 %v7913, %v10631
    %v11532 = vadd.f32 %v7914, %v10632
    %v11533 = vadd.f32 %v7915, %v10633
    %v11534 = vadd.f32 %v7916, %v10634
    %v11535 = vadd.f32 %v7917, %v10635
    %v11536 = vadd.f32 %v7918, %v10636
    %v11537 = vadd.f32 %v7919, %v10637
    %v11538 = vadd.f32 %v7920, %v10638
    %v11539 = vadd.f32 %v7921, %v10639
    %v11540 = vadd.f32 %v7922, %v10640
    %v11541 = vadd.f32 %v7923, %v10641
    %v11542 = vadd.f32 %v7924, %v10642
    %v11543 = vadd.f32 %v7925, %v10643
    %v11544 = vadd.f32 %v7926, %v10644
    %v11545 = vadd.f32 %v7927, %v10645
    %v11546 = vadd.f32 %v7928, %v10646
    %v11547 = vadd.f32 %v7929, %v10647
    %v11548 = vadd.f32 %v7930, %v10648
    %v11549 = vadd.f32 %v7931, %v10649
    %v11550 = vadd.f32 %v7932, %v10650
    %v11551 = vadd.f32 %v7933, %v10651
    %v11552 = vadd.f32 %v7934, %v10652
    %v11553 = vadd.f32 %v7935, %v10653
    %v11554 = vadd.f32 %v7936, %v10654
    %v11555 = vadd.f32 %v7937, %v10655
    %v11556 = vadd.f32 %v7938, %v10656
    %v11557 = vadd.f32 %v7939, %v10657
    %v11558 = vadd.f32 %v7940, %v10658
    %v11559 = vadd.f32 %v7941, %v10659
    %v11560 = vadd.f32 %v7942, %v10660
    %v11561 = vadd.f32 %v7943, %v10661
    %v11562 = vadd.f32 %v7944, %v10662
    %v11563 = vadd.f32 %v7945, %v10663
    %v11564 = vadd.f32 %v7946, %v10664
    %v11565 = vadd.f32 %v7947, %v10665
    %v11566 = vadd.f32 %v7948, %v10666
    %v11567 = vadd.f32 %v7949, %v10667
    %v11568 = vadd.f32 %v7950, %v10668
    %v11569 = vadd.f32 %v7951, %v10669
    %v11570 = vadd.f32 %v7952, %v10670
    %v11571 = vadd.f32 %v7953, %v10671
    %v11572 = vadd.f32 %v7954, %v10672
    %v11573 = vadd.f32 %v7955, %v10673
    %v11574 = vadd.f32 %v7956, %v10674
    %v11575 = vadd.f32 %v7957, %v10675
    %v11576 = vadd.f32 %v7958, %v10676
    %v11577 = vadd.f32 %v7959, %v10677
    %v11578 = vadd.f32 %v7960, %v10678
    %v11579 = vadd.f32 %v7961, %v10679
    %v11580 = vadd.f32 %v7962, %v10680
    %v11581 = vadd.f32 %v7963, %v10681
    %v11582 = vadd.f32 %v7964, %v10682
    %v11583 = vadd.f32 %v7965, %v10683
    %v11584 = vadd.f32 %v7966, %v10684
    %v11585 = vadd.f32 %v7967, %v10685
    %v11586 = vadd.f32 %v7968, %v10686
    %v11587 = vadd.f32 %v7969, %v10687
    %v11588 = vadd.f32 %v7970, %v10688
    %v11589 = vadd.f32 %v7971, %v10689
    %v11590 = vadd.f32 %v7972, %v10690
    %v11591 = vadd.f32 %v7973, %v10691
    %v11592 = vadd.f32 %v7974, %v10692
    %v11593 = vadd.f32 %v7975, %v10693
    %v11594 = vadd.f32 %v7976, %v10694
    %v11595 = vadd.f32 %v7977, %v10695
    %v11596 = vadd.f32 %v7978, %v10696
    %v11597 = vadd.f32 %v7979, %v10697
    %v11598 = vadd.f32 %v7980, %v10698
    %v11599 = vadd.f32 %v7981, %v10699
    %v11600 = vadd.f32 %v7982, %v10700
    %v11601 = vadd.f32 %v7983, %v10701
    %v11602 = vadd.f32 %v7984, %v10702
    %v11603 = vadd.f32 %v7985, %v10703
    %v11604 = vadd.f32 %v7986, %v10704
    %v11605 = vadd.f32 %v7987, %v10705
    %v11606 = vadd.f32 %v7988, %v10706
    %v11607 = vadd.f32 %v7989, %v10707
    %v11608 = vadd.f32 %v7990, %v10708
    %v11609 = vadd.f32 %v7991, %v10709
    %v11610 = vadd.f32 %v7992, %v10710
    %v11611 = vadd.f32 %v7993, %v10711
    %v11612 = vadd.f32 %v7994, %v10712
    %v11613 = vadd.f32 %v7995, %v10713
    %v11614 = vadd.f32 %v7996, %v10714
    %v11615 = vadd.f32 %v7997, %v10715
    %v11616 = vadd.f32 %v7998, %v10716
    %v11617 = vadd.f32 %v7999, %v10717
    %v11618 = vadd.f32 %v8000, %v10718
    %v11619 = vadd.f32 %v8001, %v10719
    %v11620 = vadd.f32 %v8002, %v10720
    %v11621 = vadd.f32 %v8003, %v10721
    %v11622 = vadd.f32 %v8004, %v10722
    %v11623 = vadd.f32 %v8005, %v10723
    %v11624 = vadd.f32 %v8006, %v10724
    %v11625 = vadd.f32 %v8007, %v10725
    %v11626 = vadd.f32 %v8008, %v10726
    %v11627 = vadd.f32 %v8009, %v10727
    %v11628 = vadd.f32 %v8010, %v10728
    %v11629 = vadd.f32 %v8011, %v10729
    %v11630 = vadd.f32 %v8012, %v10730
    %v11631 = vadd.f32 %v8013, %v10731
    %v11632 = vadd.f32 %v8014, %v10732
    %v11633 = vadd.f32 %v8015, %v10733
    %v11634 = vadd.f32 %v8016, %v10734
    %v11635 = vadd.f32 %v8017, %v10735
    %v11636 = vadd.f32 %v8018, %v10736
    %v11637 = vadd.f32 %v8019, %v10737
    %v11638 = vadd.f32 %v8020, %v10738
    %v11639 = vadd.f32 %v8021, %v10739
    %v11640 = vadd.f32 %v8022, %v10740
    %v11641 = vadd.f32 %v8023, %v10741
    %v11642 = vadd.f32 %v8024, %v10742
    %v11643 = vadd.f32 %v8025, %v10743
    %v11644 = vadd.f32 %v8026, %v10744
    %v11645 = vadd.f32 %v8027, %v10745
    %v11646 = vadd.f32 %v8028, %v10746
    %v11647 = vadd.f32 %v8029, %v10747
    %v11648 = vadd.f32 %v8030, %v10748
    %v11649 = vadd.f32 %v8031, %v10749
    %v11650 = vadd.f32 %v8032, %v10750
    %v11651 = vadd.f32 %v8033, %v10751
    %v11652 = vadd.f32 %v8034, %v10752
    %v11653 = vadd.f32 %v8035, %v10753
    %v11654 = vadd.f32 %v8036, %v10754
    %v11655 = vadd.f32 %v8037, %v10755
    %v11656 = vadd.f32 %v8038, %v10756
    %v11657 = vadd.f32 %v8039, %v10757
    %v11658 = vadd.f32 %v8040, %v10758
    %v11659 = vadd.f32 %v8041, %v10759
    %v11660 = vadd.f32 %v8042, %v10760
    %v11661 = vadd.f32 %v8043, %v10761
    %v11662 = vadd.f32 %v8044, %v10762
    %v11663 = vadd.f32 %v8045, %v10763
    %v11664 = vadd.f32 %v8046, %v10764
    %v11665 = vadd.f32 %v8047, %v10765
    %v11666 = vadd.f32 %v8048, %v10766
    %v11667 = vadd.f32 %v8049, %v10767
    %v11668 = vadd.f32 %v8050, %v10768
    %v11669 = vadd.f32 %v8051, %v10769
    %v11670 = vadd.f32 %v8052, %v10770
    %v11671 = vadd.f32 %v8053, %v10771
    %v11672 = vadd.f32 %v8054, %v10772
    %v11673 = vadd.f32 %v8055, %v10773
    %v11674 = vadd.f32 %v8056, %v10774
    %v11675 = vadd.f32 %v8057, %v10775
    %v11676 = vadd.f32 %v8058, %v10776
    %v11677 = vadd.f32 %v8059, %v10777
    %v11678 = vadd.f32 %v8060, %v10778
    %v11679 = vadd.f32 %v8061, %v10779
    %v11680 = vadd.f32 %v8062, %v10780
    %v11681 = vadd.f32 %v8063, %v10781
    %v11682 = vadd.f32 %v8064, %v10782
    %v11683 = vadd.f32 %v8065, %v10783
    %v11684 = vadd.f32 %v8066, %v10784
    %v11685 = vadd.f32 %v8067, %v10785
    %v11686 = vadd.f32 %v8068, %v10786
    %v11687 = vadd.f32 %v8069, %v10787
    %v11688 = vadd.f32 %v8070, %v10788
    %v11689 = vadd.f32 %v8071, %v10789
    %v11690 = vadd.f32 %v8072, %v10790
    %v11691 = vadd.f32 %v8073, %v10791
    %v11692 = vadd.f32 %v8074, %v10792
    %v11693 = vadd.f32 %v8075, %v10793
    %v11694 = vadd.f32 %v8076, %v10794
    %v11695 = vadd.f32 %v8077, %v10795
    %v11696 = vadd.f32 %v8078, %v10796
    %v11697 = vadd.f32 %v8079, %v10797
    %v11698 = vadd.f32 %v8080, %v10798
    %v11699 = vadd.f32 %v8081, %v10799
    %v11700 = vadd.f32 %v8082, %v10800
    %v11701 = vadd.f32 %v8083, %v10801
    %v11702 = vadd.f32 %v8084, %v10802
    %v11703 = vadd.f32 %v8085, %v10803
    %v11704 = vadd.f32 %v8086, %v10804
    %v11705 = vadd.f32 %v8087, %v10805
    %v11706 = vadd.f32 %v8088, %v10806
    %v11707 = vadd.f32 %v8089, %v10807
    %v11708 = vadd.f32 %v8090, %v10808
    %v11709 = vadd.f32 %v8091, %v10809
    %v11710 = vadd.f32 %v8092, %v10810
    %v11711 = vadd.f32 %v8093, %v10811
    %v11712 = vadd.f32 %v8094, %v10812
    %v11713 = vadd.f32 %v8095, %v10813
    %v11714 = vadd.f32 %v8096, %v10814
    %v11715 = vadd.f32 %v8097, %v10815
    %v11716 = vadd.f32 %v8098, %v10816
    %v11717 = vadd.f32 %v8099, %v10817
    %v11718 = vadd.f32 %v8100, %v10818
    %v11719 = vadd.f32 %v8101, %v10819
    %v11720 = vadd.f32 %v8102, %v10820
    %v11721 = vadd.f32 %v8103, %v10821
    %v11722 = vadd.f32 %v8104, %v10822
    %v11723 = vadd.f32 %v8105, %v10823
    %v11724 = vadd.f32 %v8106, %v10824
    %v11725 = vadd.f32 %v8107, %v10825
    %v11726 = vadd.f32 %v8108, %v10826
    %v11727 = vadd.f32 %v8109, %v10827
    %v11728 = vadd.f32 %v8110, %v10828
    %v11729 = vadd.f32 %v8111, %v10829
    %v11730 = vadd.f32 %v8112, %v10830
    %v11731 = vadd.f32 %v8113, %v10831
    %v11732 = vadd.f32 %v8114, %v10832
    %v11733 = vadd.f32 %v8115, %v10833
    %v11734 = vadd.f32 %v8116, %v10834
    %v11735 = vadd.f32 %v8117, %v10835
    %v11736 = vadd.f32 %v8118, %v10836
    %v11737 = vadd.f32 %v8119, %v10837
    %v11738 = vadd.f32 %v8120, %v10838
    %v11739 = vadd.f32 %v8121, %v10839
    %v11740 = vadd.f32 %v8122, %v10840
    %v11741 = vadd.f32 %v8123, %v10841
    %v11742 = vadd.f32 %v8124, %v10842
    %v11743 = vadd.f32 %v8125, %v10843
    %v11744 = vadd.f32 %v8126, %v10844
    %v11745 = vadd.f32 %v8127, %v10845
    %v11746 = vadd.f32 %v8128, %v10846
    %v11747 = vadd.f32 %v8129, %v10847
    %v11748 = vadd.f32 %v8130, %v10848
    %v11749 = vadd.f32 %v8131, %v10849
    %v11750 = vadd.f32 %v8132, %v10850
    %v11751 = vadd.f32 %v8133, %v10851
    %v11752 = vadd.f32 %v8134, %v10852
    %v11753 = vadd.f32 %v8135, %v10853
    %v11754 = vadd.f32 %v8136, %v10854
    %v11755 = vadd.f32 %v8137, %v10855
    %v11756 = vadd.f32 %v8138, %v10856
    %v11757 = vadd.f32 %v8139, %v10857
    %v11758 = vadd.f32 %v8140, %v10858
    %v11759 = vadd.f32 %v8141, %v10859
    %v11760 = vadd.f32 %v8142, %v10860
    %v11761 = vadd.f32 %v8143, %v10861
    %v11762 = vadd.f32 %v8144, %v10862
    %v11763 = vadd.f32 %v8145, %v10863
    %v11764 = vadd.f32 %v8146, %v10864
    %v11765 = vadd.f32 %v8147, %v10865
    %v11766 = vadd.f32 %v8148, %v10866
    %v11767 = vadd.f32 %v8149, %v10867
    %v11768 = vadd.f32 %v8150, %v10868
    %v11769 = vadd.f32 %v8151, %v10869
    %v11770 = vadd.f32 %v8152, %v10870
    %v11771 = vadd.f32 %v8153, %v10871
    %v11772 = vadd.f32 %v8154, %v10872
    %v11773 = vadd.f32 %v8155, %v10873
    %v11774 = vadd.f32 %v8156, %v10874
    %v11775 = vadd.f32 %v8157, %v10875
    %v11776 = vadd.f32 %v8158, %v10876
    %v11777 = vadd.f32 %v8159, %v10877
    %v11778 = vadd.f32 %v8160, %v10878
    %v11779 = vadd.f32 %v8161, %v10879
    %v11780 = vadd.f32 %v8162, %v10880
    %v11781 = vadd.f32 %v8163, %v10881
    %v11782 = vadd.f32 %v8164, %v10882
    %v11783 = vadd.f32 %v8165, %v10883
    %v11784 = vadd.f32 %v8166, %v10884
    %v11785 = vadd.f32 %v8167, %v10885
    %v11786 = vadd.f32 %v8168, %v10886
    %v11787 = vadd.f32 %v8169, %v10887
    %v11788 = vadd.f32 %v8170, %v10888
    %v11789 = vadd.f32 %v8171, %v10889
    %v11790 = vadd.f32 %v8172, %v10890
    %v11791 = vadd.f32 %v8173, %v10891
    %v11792 = vadd.f32 %v8174, %v10892
    %v11793 = vadd.f32 %v8175, %v10893
    %v11794 = vadd.f32 %v8176, %v10894
    %v11795 = vadd.f32 %v8177, %v10895
    %v11796 = vadd.f32 %v8178, %v10896
    %v11797 = vadd.f32 %v8179, %v10897
    %v11798 = vadd.f32 %v8180, %v10898
    %v11799 = vadd.f32 %v8181, %v10899
    %v11800 = vadd.f32 %v8182, %v10900
    %v11801 = vadd.f32 %v8183, %v10901
    %v11802 = vadd.f32 %v8184, %v10902
    %v11803 = vadd.f32 %v8185, %v10903
    %v11804 = vadd.f32 %v8186, %v10904
    %v11805 = vadd.f32 %v8187, %v10905
    %11806 = vst [vmem:[%s3] sm:$0xff] %v10906
    %11807 = vst [vmem:[%s3 + $0x8] sm:$0xff] %v10907
    %11808 = vst [vmem:[%s3 + $0x10] sm:$0xff] %v10908
    %11809 = vst [vmem:[%s3 + $0x18] sm:$0xff] %v10909
    %11810 = vst [vmem:[%s3 + $0x20] sm:$0xff] %v10910
    %11811 = vst [vmem:[%s3 + $0x28] sm:$0xff] %v10911
    %11812 = vst [vmem:[%s3 + $0x30] sm:$0xff] %v10912
    %11813 = vst [vmem:[%s3 + $0x38] sm:$0xff] %v10913
    %11814 = vst [vmem:[%s3 + $0x40] sm:$0xff] %v10914
    %11815 = vst [vmem:[%s3 + $0x48] sm:$0xff] %v10915
    %11816 = vst [vmem:[%s3 + $0x50] sm:$0xff] %v10916
    %11817 = vst [vmem:[%s3 + $0x58] sm:$0xff] %v10917
    %11818 = vst [vmem:[%s3 + $0x60] sm:$0xff] %v10918
    %11819 = vst [vmem:[%s3 + $0x68] sm:$0xff] %v10919
    %11820 = vst [vmem:[%s3 + $0x70] sm:$0xff] %v10920
    %11821 = vst [vmem:[%s3 + $0x78] sm:$0xff] %v10921
    %11822 = vst [vmem:[%s3 + $0x80] sm:$0xff] %v10922
    %11823 = vst [vmem:[%s3 + $0x88] sm:$0xff] %v10923
    %11824 = vst [vmem:[%s3 + $0x90] sm:$0xff] %v10924
    %11825 = vst [vmem:[%s3 + $0x98] sm:$0xff] %v10925
    %11826 = vst [vmem:[%s3 + $0xa0] sm:$0xff] %v10926
    %11827 = vst [vmem:[%s3 + $0xa8] sm:$0xff] %v10927
    %11828 = vst [vmem:[%s3 + $0xb0] sm:$0xff] %v10928
    %11829 = vst [vmem:[%s3 + $0xb8] sm:$0xff] %v10929
    %11830 = vst [vmem:[%s3 + $0xc0] sm:$0xff] %v10930
    %11831 = vst [vmem:[%s3 + $0xc8] sm:$0xff] %v10931
    %11832 = vst [vmem:[%s3 + $0xd0] sm:$0xff] %v10932
    %11833 = vst [vmem:[%s3 + $0xd8] sm:$0xff] %v10933
    %11834 = vst [vmem:[%s3 + $0xe0] sm:$0xff] %v10934
    %11835 = vst [vmem:[%s3 + $0xe8] sm:$0xff] %v10935
    %11836 = vst [vmem:[%s3 + $0xf0] sm:$0xff] %v10936
    %11837 = vst [vmem:[%s3 + $0xf8] sm:$0xff] %v10937
    %11838 = vst [vmem:[%s3 + $0x100] sm:$0xff] %v10938
    %11839 = vst [vmem:[%s3 + $0x108] sm:$0xff] %v10939
    %11840 = vst [vmem:[%s3 + $0x110] sm:$0xff] %v10940
    %11841 = vst [vmem:[%s3 + $0x118] sm:$0xff] %v10941
    %11842 = vst [vmem:[%s3 + $0x120] sm:$0xff] %v10942
    %11843 = vst [vmem:[%s3 + $0x128] sm:$0xff] %v10943
    %11844 = vst [vmem:[%s3 + $0x130] sm:$0xff] %v10944
    %11845 = vst [vmem:[%s3 + $0x138] sm:$0xff] %v10945
    %11846 = vst [vmem:[%s3 + $0x140] sm:$0xff] %v10946
    %11847 = vst [vmem:[%s3 + $0x148] sm:$0xff] %v10947
    %11848 = vst [vmem:[%s3 + $0x150] sm:$0xff] %v10948
    %11849 = vst [vmem:[%s3 + $0x158] sm:$0xff] %v10949
    %11850 = vst [vmem:[%s3 + $0x160] sm:$0xff] %v10950
    %11851 = vst [vmem:[%s3 + $0x168] sm:$0xff] %v10951
    %11852 = vst [vmem:[%s3 + $0x170] sm:$0xff] %v10952
    %11853 = vst [vmem:[%s3 + $0x178] sm:$0xff] %v10953
    %11854 = vst [vmem:[%s3 + $0x180] sm:$0xff] %v10954
    %11855 = vst [vmem:[%s3 + $0x188] sm:$0xff] %v10955
    %11856 = vst [vmem:[%s3 + $0x190] sm:$0xff] %v10956
    %11857 = vst [vmem:[%s3 + $0x198] sm:$0xff] %v10957
    %11858 = vst [vmem:[%s3 + $0x1a0] sm:$0xff] %v10958
    %11859 = vst [vmem:[%s3 + $0x1a8] sm:$0xff] %v10959
    %11860 = vst [vmem:[%s3 + $0x1b0] sm:$0xff] %v10960
    %11861 = vst [vmem:[%s3 + $0x1b8] sm:$0xff] %v10961
    %11862 = vst [vmem:[%s3 + $0x1c0] sm:$0xff] %v10962
    %11863 = vst [vmem:[%s3 + $0x1c8] sm:$0xff] %v10963
    %11864 = vst [vmem:[%s3 + $0x1d0] sm:$0xff] %v10964
    %11865 = vst [vmem:[%s3 + $0x1d8] sm:$0xff] %v10965
    %11866 = vst [vmem:[%s3 + $0x1e0] sm:$0xff] %v10966
    %11867 = vst [vmem:[%s3 + $0x1e8] sm:$0xff] %v10967
    %11868 = vst [vmem:[%s3 + $0x1f0] sm:$0xff] %v10968
    %11869 = vst [vmem:[%s3 + $0x1f8] sm:$0xff] %v10969
    %11870 = vst [vmem:[%s3 + $0x200] sm:$0xff] %v10970
    %11871 = vst [vmem:[%s3 + $0x208] sm:$0xff] %v10971
    %11872 = vst [vmem:[%s3 + $0x210] sm:$0xff] %v10972
    %11873 = vst [vmem:[%s3 + $0x218] sm:$0xff] %v10973
    %11874 = vst [vmem:[%s3 + $0x220] sm:$0xff] %v10974
    %11875 = vst [vmem:[%s3 + $0x228] sm:$0xff] %v10975
    %11876 = vst [vmem:[%s3 + $0x230] sm:$0xff] %v10976
    %11877 = vst [vmem:[%s3 + $0x238] sm:$0xff] %v10977
    %11878 = vst [vmem:[%s3 + $0x240] sm:$0xff] %v10978
    %11879 = vst [vmem:[%s3 + $0x248] sm:$0xff] %v10979
    %11880 = vst [vmem:[%s3 + $0x250] sm:$0xff] %v10980
    %11881 = vst [vmem:[%s3 + $0x258] sm:$0xff] %v10981
    %11882 = vst [vmem:[%s3 + $0x260] sm:$0xff] %v10982
    %11883 = vst [vmem:[%s3 + $0x268] sm:$0xff] %v10983
    %11884 = vst [vmem:[%s3 + $0x270] sm:$0xff] %v10984
    %11885 = vst [vmem:[%s3 + $0x278] sm:$0xff] %v10985
    %11886 = vst [vmem:[%s3 + $0x280] sm:$0xff] %v10986
    %11887 = vst [vmem:[%s3 + $0x288] sm:$0xff] %v10987
    %11888 = vst [vmem:[%s3 + $0x290] sm:$0xff] %v10988
    %11889 = vst [vmem:[%s3 + $0x298] sm:$0xff] %v10989
    %11890 = vst [vmem:[%s3 + $0x2a0] sm:$0xff] %v10990
    %11891 = vst [vmem:[%s3 + $0x2a8] sm:$0xff] %v10991
    %11892 = vst [vmem:[%s3 + $0x2b0] sm:$0xff] %v10992
    %11893 = vst [vmem:[%s3 + $0x2b8] sm:$0xff] %v10993
    %11894 = vst [vmem:[%s3 + $0x2c0] sm:$0xff] %v10994
    %11895 = vst [vmem:[%s3 + $0x2c8] sm:$0xff] %v10995
    %11896 = vst [vmem:[%s3 + $0x2d0] sm:$0xff] %v10996
    %11897 = vst [vmem:[%s3 + $0x2d8] sm:$0xff] %v10997
    %11898 = vst [vmem:[%s3 + $0x2e0] sm:$0xff] %v10998
    %11899 = vst [vmem:[%s3 + $0x2e8] sm:$0xff] %v10999
    %11900 = vst [vmem:[%s3 + $0x2f0] sm:$0xff] %v11000
    %11901 = vst [vmem:[%s3 + $0x2f8] sm:$0xff] %v11001
    %11902 = vst [vmem:[%s3 + $0x300] sm:$0xff] %v11002
    %11903 = vst [vmem:[%s3 + $0x308] sm:$0xff] %v11003
    %11904 = vst [vmem:[%s3 + $0x310] sm:$0xff] %v11004
    %11905 = vst [vmem:[%s3 + $0x318] sm:$0xff] %v11005
    %11906 = vst [vmem:[%s3 + $0x320] sm:$0xff] %v11006
    %11907 = vst [vmem:[%s3 + $0x328] sm:$0xff] %v11007
    %11908 = vst [vmem:[%s3 + $0x330] sm:$0xff] %v11008
    %11909 = vst [vmem:[%s3 + $0x338] sm:$0xff] %v11009
    %11910 = vst [vmem:[%s3 + $0x340] sm:$0xff] %v11010
    %11911 = vst [vmem:[%s3 + $0x348] sm:$0xff] %v11011
    %11912 = vst [vmem:[%s3 + $0x350] sm:$0xff] %v11012
    %11913 = vst [vmem:[%s3 + $0x358] sm:$0xff] %v11013
    %11914 = vst [vmem:[%s3 + $0x360] sm:$0xff] %v11014
    %11915 = vst [vmem:[%s3 + $0x368] sm:$0xff] %v11015
    %11916 = vst [vmem:[%s3 + $0x370] sm:$0xff] %v11016
    %11917 = vst [vmem:[%s3 + $0x378] sm:$0xff] %v11017
    %11918 = vst [vmem:[%s3 + $0x380] sm:$0xff] %v11018
    %11919 = vst [vmem:[%s3 + $0x388] sm:$0xff] %v11019
    %11920 = vst [vmem:[%s3 + $0x390] sm:$0xff] %v11020
    %11921 = vst [vmem:[%s3 + $0x398] sm:$0xff] %v11021
    %11922 = vst [vmem:[%s3 + $0x3a0] sm:$0xff] %v11022
    %11923 = vst [vmem:[%s3 + $0x3a8] sm:$0xff] %v11023
    %11924 = vst [vmem:[%s3 + $0x3b0] sm:$0xff] %v11024
    %11925 = vst [vmem:[%s3 + $0x3b8] sm:$0xff] %v11025
    %11926 = vst [vmem:[%s3 + $0x3c0] sm:$0xff] %v11026
    %11927 = vst [vmem:[%s3 + $0x3c8] sm:$0xff] %v11027
    %11928 = vst [vmem:[%s3 + $0x3d0] sm:$0xff] %v11028
    %11929 = vst [vmem:[%s3 + $0x3d8] sm:$0xff] %v11029
    %11930 = vst [vmem:[%s3 + $0x3e0] sm:$0xff] %v11030
    %11931 = vst [vmem:[%s3 + $0x3e8] sm:$0xff] %v11031
    %11932 = vst [vmem:[%s3 + $0x3f0] sm:$0xff] %v11032
    %11933 = vst [vmem:[%s3 + $0x3f8] sm:$0xff] %v11033
    %11934 = vst [vmem:[%s3 + $0x400] sm:$0xff] %v11034
    %11935 = vst [vmem:[%s3 + $0x408] sm:$0xff] %v11035
    %11936 = vst [vmem:[%s3 + $0x410] sm:$0xff] %v11036
    %11937 = vst [vmem:[%s3 + $0x418] sm:$0xff] %v11037
    %11938 = vst [vmem:[%s3 + $0x420] sm:$0xff] %v11038
    %11939 = vst [vmem:[%s3 + $0x428] sm:$0xff] %v11039
    %11940 = vst [vmem:[%s3 + $0x430] sm:$0xff] %v11040
    %11941 = vst [vmem:[%s3 + $0x438] sm:$0xff] %v11041
    %11942 = vst [vmem:[%s3 + $0x440] sm:$0xff] %v11042
    %11943 = vst [vmem:[%s3 + $0x448] sm:$0xff] %v11043
    %11944 = vst [vmem:[%s3 + $0x450] sm:$0xff] %v11044
    %11945 = vst [vmem:[%s3 + $0x458] sm:$0xff] %v11045
    %11946 = vst [vmem:[%s3 + $0x460] sm:$0xff] %v11046
    %11947 = vst [vmem:[%s3 + $0x468] sm:$0xff] %v11047
    %11948 = vst [vmem:[%s3 + $0x470] sm:$0xff] %v11048
    %11949 = vst [vmem:[%s3 + $0x478] sm:$0xff] %v11049
    %11950 = vst [vmem:[%s3 + $0x480] sm:$0xff] %v11050
    %11951 = vst [vmem:[%s3 + $0x488] sm:$0xff] %v11051
    %11952 = vst [vmem:[%s3 + $0x490] sm:$0xff] %v11052
    %11953 = vst [vmem:[%s3 + $0x498] sm:$0xff] %v11053
    %11954 = vst [vmem:[%s3 + $0x4a0] sm:$0xff] %v11054
    %11955 = vst [vmem:[%s3 + $0x4a8] sm:$0xff] %v11055
    %11956 = vst [vmem:[%s3 + $0x4b0] sm:$0xff] %v11056
    %11957 = vst [vmem:[%s3 + $0x4b8] sm:$0xff] %v11057
    %11958 = vst [vmem:[%s3 + $0x4c0] sm:$0xff] %v11058
    %11959 = vst [vmem:[%s3 + $0x4c8] sm:$0xff] %v11059
    %11960 = vst [vmem:[%s3 + $0x4d0] sm:$0xff] %v11060
    %11961 = vst [vmem:[%s3 + $0x4d8] sm:$0xff] %v11061
    %11962 = vst [vmem:[%s3 + $0x4e0] sm:$0xff] %v11062
    %11963 = vst [vmem:[%s3 + $0x4e8] sm:$0xff] %v11063
    %11964 = vst [vmem:[%s3 + $0x4f0] sm:$0xff] %v11064
    %11965 = vst [vmem:[%s3 + $0x4f8] sm:$0xff] %v11065
    %11966 = vst [vmem:[%s3 + $0x500] sm:$0xff] %v11066
    %11967 = vst [vmem:[%s3 + $0x508] sm:$0xff] %v11067
    %11968 = vst [vmem:[%s3 + $0x510] sm:$0xff] %v11068
    %11969 = vst [vmem:[%s3 + $0x518] sm:$0xff] %v11069
    %11970 = vst [vmem:[%s3 + $0x520] sm:$0xff] %v11070
    %11971 = vst [vmem:[%s3 + $0x528] sm:$0xff] %v11071
    %11972 = vst [vmem:[%s3 + $0x530] sm:$0xff] %v11072
    %11973 = vst [vmem:[%s3 + $0x538] sm:$0xff] %v11073
    %11974 = vst [vmem:[%s3 + $0x540] sm:$0xff] %v11074
    %11975 = vst [vmem:[%s3 + $0x548] sm:$0xff] %v11075
    %11976 = vst [vmem:[%s3 + $0x550] sm:$0xff] %v11076
    %11977 = vst [vmem:[%s3 + $0x558] sm:$0xff] %v11077
    %11978 = vst [vmem:[%s3 + $0x560] sm:$0xff] %v11078
    %11979 = vst [vmem:[%s3 + $0x568] sm:$0xff] %v11079
    %11980 = vst [vmem:[%s3 + $0x570] sm:$0xff] %v11080
    %11981 = vst [vmem:[%s3 + $0x578] sm:$0xff] %v11081
    %11982 = vst [vmem:[%s3 + $0x580] sm:$0xff] %v11082
    %11983 = vst [vmem:[%s3 + $0x588] sm:$0xff] %v11083
    %11984 = vst [vmem:[%s3 + $0x590] sm:$0xff] %v11084
    %11985 = vst [vmem:[%s3 + $0x598] sm:$0xff] %v11085
    %11986 = vst [vmem:[%s3 + $0x5a0] sm:$0xff] %v11086
    %11987 = vst [vmem:[%s3 + $0x5a8] sm:$0xff] %v11087
    %11988 = vst [vmem:[%s3 + $0x5b0] sm:$0xff] %v11088
    %11989 = vst [vmem:[%s3 + $0x5b8] sm:$0xff] %v11089
    %11990 = vst [vmem:[%s3 + $0x5c0] sm:$0xff] %v11090
    %11991 = vst [vmem:[%s3 + $0x5c8] sm:$0xff] %v11091
    %11992 = vst [vmem:[%s3 + $0x5d0] sm:$0xff] %v11092
    %11993 = vst [vmem:[%s3 + $0x5d8] sm:$0xff] %v11093
    %11994 = vst [vmem:[%s3 + $0x5e0] sm:$0xff] %v11094
    %11995 = vst [vmem:[%s3 + $0x5e8] sm:$0xff] %v11095
    %11996 = vst [vmem:[%s3 + $0x5f0] sm:$0xff] %v11096
    %11997 = vst [vmem:[%s3 + $0x5f8] sm:$0xff] %v11097
    %11998 = vst [vmem:[%s3 + $0x600] sm:$0xff] %v11098
    %11999 = vst [vmem:[%s3 + $0x608] sm:$0xff] %v11099
    %12000 = vst [vmem:[%s3 + $0x610] sm:$0xff] %v11100
    %12001 = vst [vmem:[%s3 + $0x618] sm:$0xff] %v11101
    %12002 = vst [vmem:[%s3 + $0x620] sm:$0xff] %v11102
    %12003 = vst [vmem:[%s3 + $0x628] sm:$0xff] %v11103
    %12004 = vst [vmem:[%s3 + $0x630] sm:$0xff] %v11104
    %12005 = vst [vmem:[%s3 + $0x638] sm:$0xff] %v11105
    %12006 = vst [vmem:[%s3 + $0x640] sm:$0xff] %v11106
    %12007 = vst [vmem:[%s3 + $0x648] sm:$0xff] %v11107
    %12008 = vst [vmem:[%s3 + $0x650] sm:$0xff] %v11108
    %12009 = vst [vmem:[%s3 + $0x658] sm:$0xff] %v11109
    %12010 = vst [vmem:[%s3 + $0x660] sm:$0xff] %v11110
    %12011 = vst [vmem:[%s3 + $0x668] sm:$0xff] %v11111
    %12012 = vst [vmem:[%s3 + $0x670] sm:$0xff] %v11112
    %12013 = vst [vmem:[%s3 + $0x678] sm:$0xff] %v11113
    %12014 = vst [vmem:[%s3 + $0x680] sm:$0xff] %v11114
    %12015 = vst [vmem:[%s3 + $0x688] sm:$0xff] %v11115
    %12016 = vst [vmem:[%s3 + $0x690] sm:$0xff] %v11116
    %12017 = vst [vmem:[%s3 + $0x698] sm:$0xff] %v11117
    %12018 = vst [vmem:[%s3 + $0x6a0] sm:$0xff] %v11118
    %12019 = vst [vmem:[%s3 + $0x6a8] sm:$0xff] %v11119
    %12020 = vst [vmem:[%s3 + $0x6b0] sm:$0xff] %v11120
    %12021 = vst [vmem:[%s3 + $0x6b8] sm:$0xff] %v11121
    %12022 = vst [vmem:[%s3 + $0x6c0] sm:$0xff] %v11122
    %12023 = vst [vmem:[%s3 + $0x6c8] sm:$0xff] %v11123
    %12024 = vst [vmem:[%s3 + $0x6d0] sm:$0xff] %v11124
    %12025 = vst [vmem:[%s3 + $0x6d8] sm:$0xff] %v11125
    %12026 = vst [vmem:[%s3 + $0x6e0] sm:$0xff] %v11126
    %12027 = vst [vmem:[%s3 + $0x6e8] sm:$0xff] %v11127
    %12028 = vst [vmem:[%s3 + $0x6f0] sm:$0xff] %v11128
    %12029 = vst [vmem:[%s3 + $0x6f8] sm:$0xff] %v11129
    %12030 = vst [vmem:[%s3 + $0x700] sm:$0xff] %v11130
    %12031 = vst [vmem:[%s3 + $0x708] sm:$0xff] %v11131
    %12032 = vst [vmem:[%s3 + $0x710] sm:$0xff] %v11132
    %12033 = vst [vmem:[%s3 + $0x718] sm:$0xff] %v11133
    %12034 = vst [vmem:[%s3 + $0x720] sm:$0xff] %v11134
    %12035 = vst [vmem:[%s3 + $0x728] sm:$0xff] %v11135
    %12036 = vst [vmem:[%s3 + $0x730] sm:$0xff] %v11136
    %12037 = vst [vmem:[%s3 + $0x738] sm:$0xff] %v11137
    %12038 = vst [vmem:[%s3 + $0x740] sm:$0xff] %v11138
    %12039 = vst [vmem:[%s3 + $0x748] sm:$0xff] %v11139
    %12040 = vst [vmem:[%s3 + $0x750] sm:$0xff] %v11140
    %12041 = vst [vmem:[%s3 + $0x758] sm:$0xff] %v11141
    %12042 = vst [vmem:[%s3 + $0x760] sm:$0xff] %v11142
    %12043 = vst [vmem:[%s3 + $0x768] sm:$0xff] %v11143
    %12044 = vst [vmem:[%s3 + $0x770] sm:$0xff] %v11144
    %12045 = vst [vmem:[%s3 + $0x778] sm:$0xff] %v11145
    %12046 = vst [vmem:[%s3 + $0x780] sm:$0xff] %v11146
    %12047 = vst [vmem:[%s3 + $0x788] sm:$0xff] %v11147
    %12048 = vst [vmem:[%s3 + $0x790] sm:$0xff] %v11148
    %12049 = vst [vmem:[%s3 + $0x798] sm:$0xff] %v11149
    %12050 = vst [vmem:[%s3 + $0x7a0] sm:$0xff] %v11150
    %12051 = vst [vmem:[%s3 + $0x7a8] sm:$0xff] %v11151
    %12052 = vst [vmem:[%s3 + $0x7b0] sm:$0xff] %v11152
    %12053 = vst [vmem:[%s3 + $0x7b8] sm:$0xff] %v11153
    %12054 = vst [vmem:[%s3 + $0x7c0] sm:$0xff] %v11154
    %12055 = vst [vmem:[%s3 + $0x7c8] sm:$0xff] %v11155
    %12056 = vst [vmem:[%s3 + $0x7d0] sm:$0xff] %v11156
    %12057 = vst [vmem:[%s3 + $0x7d8] sm:$0xff] %v11157
    %12058 = vst [vmem:[%s3 + $0x7e0] sm:$0xff] %v11158
    %12059 = vst [vmem:[%s3 + $0x7e8] sm:$0xff] %v11159
    %12060 = vst [vmem:[%s3 + $0x7f0] sm:$0xff] %v11160
    %12061 = vst [vmem:[%s3 + $0x7f8] sm:$0xff] %v11161
    %12062 = vst [vmem:[%s3 + $0x800] sm:$0xff] %v11162
    %12063 = vst [vmem:[%s3 + $0x808] sm:$0xff] %v11163
    %12064 = vst [vmem:[%s3 + $0x810] sm:$0xff] %v11164
    %12065 = vst [vmem:[%s3 + $0x818] sm:$0xff] %v11165
    %12066 = vst [vmem:[%s3 + $0x820] sm:$0xff] %v11166
    %12067 = vst [vmem:[%s3 + $0x828] sm:$0xff] %v11167
    %12068 = vst [vmem:[%s3 + $0x830] sm:$0xff] %v11168
    %12069 = vst [vmem:[%s3 + $0x838] sm:$0xff] %v11169
    %12070 = vst [vmem:[%s3 + $0x840] sm:$0xff] %v11170
    %12071 = vst [vmem:[%s3 + $0x848] sm:$0xff] %v11171
    %12072 = vst [vmem:[%s3 + $0x850] sm:$0xff] %v11172
    %12073 = vst [vmem:[%s3 + $0x858] sm:$0xff] %v11173
    %12074 = vst [vmem:[%s3 + $0x860] sm:$0xff] %v11174
    %12075 = vst [vmem:[%s3 + $0x868] sm:$0xff] %v11175
    %12076 = vst [vmem:[%s3 + $0x870] sm:$0xff] %v11176
    %12077 = vst [vmem:[%s3 + $0x878] sm:$0xff] %v11177
    %12078 = vst [vmem:[%s3 + $0x880] sm:$0xff] %v11178
    %12079 = vst [vmem:[%s3 + $0x888] sm:$0xff] %v11179
    %12080 = vst [vmem:[%s3 + $0x890] sm:$0xff] %v11180
    %12081 = vst [vmem:[%s3 + $0x898] sm:$0xff] %v11181
    %12082 = vst [vmem:[%s3 + $0x8a0] sm:$0xff] %v11182
    %12083 = vst [vmem:[%s3 + $0x8a8] sm:$0xff] %v11183
    %12084 = vst [vmem:[%s3 + $0x8b0] sm:$0xff] %v11184
    %12085 = vst [vmem:[%s3 + $0x8b8] sm:$0xff] %v11185
    %12086 = vst [vmem:[%s3 + $0x8c0] sm:$0xff] %v11186
    %12087 = vst [vmem:[%s3 + $0x8c8] sm:$0xff] %v11187
    %12088 = vst [vmem:[%s3 + $0x8d0] sm:$0xff] %v11188
    %12089 = vst [vmem:[%s3 + $0x8d8] sm:$0xff] %v11189
    %12090 = vst [vmem:[%s3 + $0x8e0] sm:$0xff] %v11190
    %12091 = vst [vmem:[%s3 + $0x8e8] sm:$0xff] %v11191
    %12092 = vst [vmem:[%s3 + $0x8f0] sm:$0xff] %v11192
    %12093 = vst [vmem:[%s3 + $0x8f8] sm:$0xff] %v11193
    %12094 = vst [vmem:[%s3 + $0x900] sm:$0xff] %v11194
    %12095 = vst [vmem:[%s3 + $0x908] sm:$0xff] %v11195
    %12096 = vst [vmem:[%s3 + $0x910] sm:$0xff] %v11196
    %12097 = vst [vmem:[%s3 + $0x918] sm:$0xff] %v11197
    %12098 = vst [vmem:[%s3 + $0x920] sm:$0xff] %v11198
    %12099 = vst [vmem:[%s3 + $0x928] sm:$0xff] %v11199
    %12100 = vst [vmem:[%s3 + $0x930] sm:$0xff] %v11200
    %12101 = vst [vmem:[%s3 + $0x938] sm:$0xff] %v11201
    %12102 = vst [vmem:[%s3 + $0x940] sm:$0xff] %v11202
    %12103 = vst [vmem:[%s3 + $0x948] sm:$0xff] %v11203
    %12104 = vst [vmem:[%s3 + $0x950] sm:$0xff] %v11204
    %12105 = vst [vmem:[%s3 + $0x958] sm:$0xff] %v11205
    %12106 = vst [vmem:[%s3 + $0x960] sm:$0xff] %v11206
    %12107 = vst [vmem:[%s3 + $0x968] sm:$0xff] %v11207
    %12108 = vst [vmem:[%s3 + $0x970] sm:$0xff] %v11208
    %12109 = vst [vmem:[%s3 + $0x978] sm:$0xff] %v11209
    %12110 = vst [vmem:[%s3 + $0x980] sm:$0xff] %v11210
    %12111 = vst [vmem:[%s3 + $0x988] sm:$0xff] %v11211
    %12112 = vst [vmem:[%s3 + $0x990] sm:$0xff] %v11212
    %12113 = vst [vmem:[%s3 + $0x998] sm:$0xff] %v11213
    %12114 = vst [vmem:[%s3 + $0x9a0] sm:$0xff] %v11214
    %12115 = vst [vmem:[%s3 + $0x9a8] sm:$0xff] %v11215
    %12116 = vst [vmem:[%s3 + $0x9b0] sm:$0xff] %v11216
    %12117 = vst [vmem:[%s3 + $0x9b8] sm:$0xff] %v11217
    %12118 = vst [vmem:[%s3 + $0x9c0] sm:$0xff] %v11218
    %12119 = vst [vmem:[%s3 + $0x9c8] sm:$0xff] %v11219
    %12120 = vst [vmem:[%s3 + $0x9d0] sm:$0xff] %v11220
    %12121 = vst [vmem:[%s3 + $0x9d8] sm:$0xff] %v11221
    %12122 = vst [vmem:[%s3 + $0x9e0] sm:$0xff] %v11222
    %12123 = vst [vmem:[%s3 + $0x9e8] sm:$0xff] %v11223
    %12124 = vst [vmem:[%s3 + $0x9f0] sm:$0xff] %v11224
    %12125 = vst [vmem:[%s3 + $0x9f8] sm:$0xff] %v11225
    %12126 = vst [vmem:[%s3 + $0xa00] sm:$0xff] %v11226
    %12127 = vst [vmem:[%s3 + $0xa08] sm:$0xff] %v11227
    %12128 = vst [vmem:[%s3 + $0xa10] sm:$0xff] %v11228
    %12129 = vst [vmem:[%s3 + $0xa18] sm:$0xff] %v11229
    %12130 = vst [vmem:[%s3 + $0xa20] sm:$0xff] %v11230
    %12131 = vst [vmem:[%s3 + $0xa28] sm:$0xff] %v11231
    %12132 = vst [vmem:[%s3 + $0xa30] sm:$0xff] %v11232
    %12133 = vst [vmem:[%s3 + $0xa38] sm:$0xff] %v11233
    %12134 = vst [vmem:[%s3 + $0xa40] sm:$0xff] %v11234
    %12135 = vst [vmem:[%s3 + $0xa48] sm:$0xff] %v11235
    %12136 = vst [vmem:[%s3 + $0xa50] sm:$0xff] %v11236
    %12137 = vst [vmem:[%s3 + $0xa58] sm:$0xff] %v11237
    %12138 = vst [vmem:[%s3 + $0xa60] sm:$0xff] %v11238
    %12139 = vst [vmem:[%s3 + $0xa68] sm:$0xff] %v11239
    %12140 = vst [vmem:[%s3 + $0xa70] sm:$0xff] %v11240
    %12141 = vst [vmem:[%s3 + $0xa78] sm:$0xff] %v11241
    %12142 = vst [vmem:[%s3 + $0xa80] sm:$0xff] %v11242
    %12143 = vst [vmem:[%s3 + $0xa88] sm:$0xff] %v11243
    %12144 = vst [vmem:[%s3 + $0xa90] sm:$0xff] %v11244
    %12145 = vst [vmem:[%s3 + $0xa98] sm:$0xff] %v11245
    %12146 = vst [vmem:[%s3 + $0xaa0] sm:$0xff] %v11246
    %12147 = vst [vmem:[%s3 + $0xaa8] sm:$0xff] %v11247
    %12148 = vst [vmem:[%s3 + $0xab0] sm:$0xff] %v11248
    %12149 = vst [vmem:[%s3 + $0xab8] sm:$0xff] %v11249
    %12150 = vst [vmem:[%s3 + $0xac0] sm:$0xff] %v11250
    %12151 = vst [vmem:[%s3 + $0xac8] sm:$0xff] %v11251
    %12152 = vst [vmem:[%s3 + $0xad0] sm:$0xff] %v11252
    %12153 = vst [vmem:[%s3 + $0xad8] sm:$0xff] %v11253
    %12154 = vst [vmem:[%s3 + $0xae0] sm:$0xff] %v11254
    %12155 = vst [vmem:[%s3 + $0xae8] sm:$0xff] %v11255
    %12156 = vst [vmem:[%s3 + $0xaf0] sm:$0xff] %v11256
    %12157 = vst [vmem:[%s3 + $0xaf8] sm:$0xff] %v11257
    %12158 = vst [vmem:[%s3 + $0xb00] sm:$0xff] %v11258
    %12159 = vst [vmem:[%s3 + $0xb08] sm:$0xff] %v11259
    %12160 = vst [vmem:[%s3 + $0xb10] sm:$0xff] %v11260
    %12161 = vst [vmem:[%s3 + $0xb18] sm:$0xff] %v11261
    %12162 = vst [vmem:[%s3 + $0xb20] sm:$0xff] %v11262
    %12163 = vst [vmem:[%s3 + $0xb28] sm:$0xff] %v11263
    %12164 = vst [vmem:[%s3 + $0xb30] sm:$0xff] %v11264
    %12165 = vst [vmem:[%s3 + $0xb38] sm:$0xff] %v11265
    %12166 = vst [vmem:[%s3 + $0xb40] sm:$0xff] %v11266
    %12167 = vst [vmem:[%s3 + $0xb48] sm:$0xff] %v11267
    %12168 = vst [vmem:[%s3 + $0xb50] sm:$0xff] %v11268
    %12169 = vst [vmem:[%s3 + $0xb58] sm:$0xff] %v11269
    %12170 = vst [vmem:[%s3 + $0xb60] sm:$0xff] %v11270
    %12171 = vst [vmem:[%s3 + $0xb68] sm:$0xff] %v11271
    %12172 = vst [vmem:[%s3 + $0xb70] sm:$0xff] %v11272
    %12173 = vst [vmem:[%s3 + $0xb78] sm:$0xff] %v11273
    %12174 = vst [vmem:[%s3 + $0xb80] sm:$0xff] %v11274
    %12175 = vst [vmem:[%s3 + $0xb88] sm:$0xff] %v11275
    %12176 = vst [vmem:[%s3 + $0xb90] sm:$0xff] %v11276
    %12177 = vst [vmem:[%s3 + $0xb98] sm:$0xff] %v11277
    %12178 = vst [vmem:[%s3 + $0xba0] sm:$0xff] %v11278
    %12179 = vst [vmem:[%s3 + $0xba8] sm:$0xff] %v11279
    %12180 = vst [vmem:[%s3 + $0xbb0] sm:$0xff] %v11280
    %12181 = vst [vmem:[%s3 + $0xbb8] sm:$0xff] %v11281
    %12182 = vst [vmem:[%s3 + $0xbc0] sm:$0xff] %v11282
    %12183 = vst [vmem:[%s3 + $0xbc8] sm:$0xff] %v11283
    %12184 = vst [vmem:[%s3 + $0xbd0] sm:$0xff] %v11284
    %12185 = vst [vmem:[%s3 + $0xbd8] sm:$0xff] %v11285
    %12186 = vst [vmem:[%s3 + $0xbe0] sm:$0xff] %v11286
    %12187 = vst [vmem:[%s3 + $0xbe8] sm:$0xff] %v11287
    %12188 = vst [vmem:[%s3 + $0xbf0] sm:$0xff] %v11288
    %12189 = vst [vmem:[%s3 + $0xbf8] sm:$0xff] %v11289
    %12190 = vst [vmem:[%s3 + $0xc00] sm:$0xff] %v11290
    %12191 = vst [vmem:[%s3 + $0xc08] sm:$0xff] %v11291
    %12192 = vst [vmem:[%s3 + $0xc10] sm:$0xff] %v11292
    %12193 = vst [vmem:[%s3 + $0xc18] sm:$0xff] %v11293
    %12194 = vst [vmem:[%s3 + $0xc20] sm:$0xff] %v11294
    %12195 = vst [vmem:[%s3 + $0xc28] sm:$0xff] %v11295
    %12196 = vst [vmem:[%s3 + $0xc30] sm:$0xff] %v11296
    %12197 = vst [vmem:[%s3 + $0xc38] sm:$0xff] %v11297
    %12198 = vst [vmem:[%s3 + $0xc40] sm:$0xff] %v11298
    %12199 = vst [vmem:[%s3 + $0xc48] sm:$0xff] %v11299
    %12200 = vst [vmem:[%s3 + $0xc50] sm:$0xff] %v11300
    %12201 = vst [vmem:[%s3 + $0xc58] sm:$0xff] %v11301
    %12202 = vst [vmem:[%s3 + $0xc60] sm:$0xff] %v11302
    %12203 = vst [vmem:[%s3 + $0xc68] sm:$0xff] %v11303
    %12204 = vst [vmem:[%s3 + $0xc70] sm:$0xff] %v11304
    %12205 = vst [vmem:[%s3 + $0xc78] sm:$0xff] %v11305
    %12206 = vst [vmem:[%s3 + $0xc80] sm:$0xff] %v11306
    %12207 = vst [vmem:[%s3 + $0xc88] sm:$0xff] %v11307
    %12208 = vst [vmem:[%s3 + $0xc90] sm:$0xff] %v11308
    %12209 = vst [vmem:[%s3 + $0xc98] sm:$0xff] %v11309
    %12210 = vst [vmem:[%s3 + $0xca0] sm:$0xff] %v11310
    %12211 = vst [vmem:[%s3 + $0xca8] sm:$0xff] %v11311
    %12212 = vst [vmem:[%s3 + $0xcb0] sm:$0xff] %v11312
    %12213 = vst [vmem:[%s3 + $0xcb8] sm:$0xff] %v11313
    %12214 = vst [vmem:[%s3 + $0xcc0] sm:$0xff] %v11314
    %12215 = vst [vmem:[%s3 + $0xcc8] sm:$0xff] %v11315
    %12216 = vst [vmem:[%s3 + $0xcd0] sm:$0xff] %v11316
    %12217 = vst [vmem:[%s3 + $0xcd8] sm:$0xff] %v11317
    %12218 = vst [vmem:[%s3 + $0xce0] sm:$0xff] %v11318
    %12219 = vst [vmem:[%s3 + $0xce8] sm:$0xff] %v11319
    %12220 = vst [vmem:[%s3 + $0xcf0] sm:$0xff] %v11320
    %12221 = vst [vmem:[%s3 + $0xcf8] sm:$0xff] %v11321
    %12222 = vst [vmem:[%s3 + $0xd00] sm:$0xff] %v11322
    %12223 = vst [vmem:[%s3 + $0xd08] sm:$0xff] %v11323
    %12224 = vst [vmem:[%s3 + $0xd10] sm:$0xff] %v11324
    %12225 = vst [vmem:[%s3 + $0xd18] sm:$0xff] %v11325
    %12226 = vst [vmem:[%s3 + $0xd20] sm:$0xff] %v11326
    %12227 = vst [vmem:[%s3 + $0xd28] sm:$0xff] %v11327
    %12228 = vst [vmem:[%s3 + $0xd30] sm:$0xff] %v11328
    %12229 = vst [vmem:[%s3 + $0xd38] sm:$0xff] %v11329
    %12230 = vst [vmem:[%s3 + $0xd40] sm:$0xff] %v11330
    %12231 = vst [vmem:[%s3 + $0xd48] sm:$0xff] %v11331
    %12232 = vst [vmem:[%s3 + $0xd50] sm:$0xff] %v11332
    %12233 = vst [vmem:[%s3 + $0xd58] sm:$0xff] %v11333
    %12234 = vst [vmem:[%s3 + $0xd60] sm:$0xff] %v11334
    %12235 = vst [vmem:[%s3 + $0xd68] sm:$0xff] %v11335
    %12236 = vst [vmem:[%s3 + $0xd70] sm:$0xff] %v11336
    %12237 = vst [vmem:[%s3 + $0xd78] sm:$0xff] %v11337
    %12238 = vst [vmem:[%s3 + $0xd80] sm:$0xff] %v11338
    %12239 = vst [vmem:[%s3 + $0xd88] sm:$0xff] %v11339
    %12240 = vst [vmem:[%s3 + $0xd90] sm:$0xff] %v11340
    %12241 = vst [vmem:[%s3 + $0xd98] sm:$0xff] %v11341
    %12242 = vst [vmem:[%s3 + $0xda0] sm:$0xff] %v11342
    %12243 = vst [vmem:[%s3 + $0xda8] sm:$0xff] %v11343
    %12244 = vst [vmem:[%s3 + $0xdb0] sm:$0xff] %v11344
    %12245 = vst [vmem:[%s3 + $0xdb8] sm:$0xff] %v11345
    %12246 = vst [vmem:[%s3 + $0xdc0] sm:$0xff] %v11346
    %12247 = vst [vmem:[%s3 + $0xdc8] sm:$0xff] %v11347
    %12248 = vst [vmem:[%s3 + $0xdd0] sm:$0xff] %v11348
    %12249 = vst [vmem:[%s3 + $0xdd8] sm:$0xff] %v11349
    %12250 = vst [vmem:[%s3 + $0xde0] sm:$0xff] %v11350
    %12251 = vst [vmem:[%s3 + $0xde8] sm:$0xff] %v11351
    %12252 = vst [vmem:[%s3 + $0xdf0] sm:$0xff] %v11352
    %12253 = vst [vmem:[%s3 + $0xdf8] sm:$0xff] %v11353
    %12254 = vst [vmem:[%s3 + $0xe00] sm:$0xff] %v11354
    %12255 = vst [vmem:[%s3 + $0xe08] sm:$0xff] %v11355
    %12256 = vst [vmem:[%s3 + $0xe10] sm:$0xff] %v11356
    %12257 = vst [vmem:[%s3 + $0xe18] sm:$0xff] %v11357
    %12258 = vst [vmem:[%s3 + $0xe20] sm:$0xff] %v11358
    %12259 = vst [vmem:[%s3 + $0xe28] sm:$0xff] %v11359
    %12260 = vst [vmem:[%s3 + $0xe30] sm:$0xff] %v11360
    %12261 = vst [vmem:[%s3 + $0xe38] sm:$0xff] %v11361
    %12262 = vst [vmem:[%s3 + $0xe40] sm:$0xff] %v11362
    %12263 = vst [vmem:[%s3 + $0xe48] sm:$0xff] %v11363
    %12264 = vst [vmem:[%s3 + $0xe50] sm:$0xff] %v11364
    %12265 = vst [vmem:[%s3 + $0xe58] sm:$0xff] %v11365
    %12266 = vst [vmem:[%s3 + $0xe60] sm:$0xff] %v11366
    %12267 = vst [vmem:[%s3 + $0xe68] sm:$0xff] %v11367
    %12268 = vst [vmem:[%s3 + $0xe70] sm:$0xff] %v11368
    %12269 = vst [vmem:[%s3 + $0xe78] sm:$0xff] %v11369
    %12270 = vst [vmem:[%s3 + $0xe80] sm:$0xff] %v11370
    %12271 = vst [vmem:[%s3 + $0xe88] sm:$0xff] %v11371
    %12272 = vst [vmem:[%s3 + $0xe90] sm:$0xff] %v11372
    %12273 = vst [vmem:[%s3 + $0xe98] sm:$0xff] %v11373
    %12274 = vst [vmem:[%s3 + $0xea0] sm:$0xff] %v11374
    %12275 = vst [vmem:[%s3 + $0xea8] sm:$0xff] %v11375
    %12276 = vst [vmem:[%s3 + $0xeb0] sm:$0xff] %v11376
    %12277 = vst [vmem:[%s3 + $0xeb8] sm:$0xff] %v11377
    %12278 = vst [vmem:[%s3 + $0xec0] sm:$0xff] %v11378
    %12279 = vst [vmem:[%s3 + $0xec8] sm:$0xff] %v11379
    %12280 = vst [vmem:[%s3 + $0xed0] sm:$0xff] %v11380
    %12281 = vst [vmem:[%s3 + $0xed8] sm:$0xff] %v11381
    %12282 = vst [vmem:[%s3 + $0xee0] sm:$0xff] %v11382
    %12283 = vst [vmem:[%s3 + $0xee8] sm:$0xff] %v11383
    %12284 = vst [vmem:[%s3 + $0xef0] sm:$0xff] %v11384
    %12285 = vst [vmem:[%s3 + $0xef8] sm:$0xff] %v11385
    %12286 = vst [vmem:[%s3 + $0xf00] sm:$0xff] %v11386
    %12287 = vst [vmem:[%s3 + $0xf08] sm:$0xff] %v11387
    %12288 = vst [vmem:[%s3 + $0xf10] sm:$0xff] %v11388
    %12289 = vst [vmem:[%s3 + $0xf18] sm:$0xff] %v11389
    %12290 = vst [vmem:[%s3 + $0xf20] sm:$0xff] %v11390
    %12291 = vst [vmem:[%s3 + $0xf28] sm:$0xff] %v11391
    %12292 = vst [vmem:[%s3 + $0xf30] sm:$0xff] %v11392
    %12293 = vst [vmem:[%s3 + $0xf38] sm:$0xff] %v11393
    %12294 = vst [vmem:[%s3 + $0xf40] sm:$0xff] %v11394
    %12295 = vst [vmem:[%s3 + $0xf48] sm:$0xff] %v11395
    %12296 = vst [vmem:[%s3 + $0xf50] sm:$0xff] %v11396
    %12297 = vst [vmem:[%s3 + $0xf58] sm:$0xff] %v11397
    %12298 = vst [vmem:[%s3 + $0xf60] sm:$0xff] %v11398
    %12299 = vst [vmem:[%s3 + $0xf68] sm:$0xff] %v11399
    %12300 = vst [vmem:[%s3 + $0xf70] sm:$0xff] %v11400
    %12301 = vst [vmem:[%s3 + $0xf78] sm:$0xff] %v11401
    %12302 = vst [vmem:[%s3 + $0xf80] sm:$0xff] %v11402
    %12303 = vst [vmem:[%s3 + $0xf88] sm:$0xff] %v11403
    %12304 = vst [vmem:[%s3 + $0xf90] sm:$0xff] %v11404
    %12305 = vst [vmem:[%s3 + $0xf98] sm:$0xff] %v11405
    %12306 = vst [vmem:[%s3 + $0xfa0] sm:$0xff] %v11406
    %12307 = vst [vmem:[%s3 + $0xfa8] sm:$0xff] %v11407
    %12308 = vst [vmem:[%s3 + $0xfb0] sm:$0xff] %v11408
    %12309 = vst [vmem:[%s3 + $0xfb8] sm:$0xff] %v11409
    %12310 = vst [vmem:[%s3 + $0xfc0] sm:$0xff] %v11410
    %12311 = vst [vmem:[%s3 + $0xfc8] sm:$0xff] %v11411
    %12312 = vst [vmem:[%s3 + $0xfd0] sm:$0xff] %v11412
    %12313 = vst [vmem:[%s3 + $0xfd8] sm:$0xff] %v11413
    %12314 = vst [vmem:[%s3 + $0xfe0] sm:$0xff] %v11414
    %12315 = vst [vmem:[%s3 + $0xfe8] sm:$0xff] %v11415
    %12316 = vst [vmem:[%s3 + $0xff0] sm:$0xff] %v11416
    %12317 = vst [vmem:[%s3 + $0xff8] sm:$0xff] %v11417
    %12318 = vst [vmem:[%s3 + $0x1000] sm:$0xff] %v11418
    %12319 = vst [vmem:[%s3 + $0x1008] sm:$0xff] %v11419
    %12320 = vst [vmem:[%s3 + $0x1010] sm:$0xff] %v11420
    %12321 = vst [vmem:[%s3 + $0x1018] sm:$0xff] %v11421
    %12322 = vst [vmem:[%s3 + $0x1020] sm:$0xff] %v11422
    %12323 = vst [vmem:[%s3 + $0x1028] sm:$0xff] %v11423
    %12324 = vst [vmem:[%s3 + $0x1030] sm:$0xff] %v11424
    %12325 = vst [vmem:[%s3 + $0x1038] sm:$0xff] %v11425
    %12326 = vst [vmem:[%s3 + $0x1040] sm:$0xff] %v11426
    %12327 = vst [vmem:[%s3 + $0x1048] sm:$0xff] %v11427
    %12328 = vst [vmem:[%s3 + $0x1050] sm:$0xff] %v11428
    %12329 = vst [vmem:[%s3 + $0x1058] sm:$0xff] %v11429
    %12330 = vst [vmem:[%s3 + $0x1060] sm:$0xff] %v11430
    %12331 = vst [vmem:[%s3 + $0x1068] sm:$0xff] %v11431
    %12332 = vst [vmem:[%s3 + $0x1070] sm:$0xff] %v11432
    %12333 = vst [vmem:[%s3 + $0x1078] sm:$0xff] %v11433
    %12334 = vst [vmem:[%s3 + $0x1080] sm:$0xff] %v11434
    %12335 = vst [vmem:[%s3 + $0x1088] sm:$0xff] %v11435
    %12336 = vst [vmem:[%s3 + $0x1090] sm:$0xff] %v11436
    %12337 = vst [vmem:[%s3 + $0x1098] sm:$0xff] %v11437
    %12338 = vst [vmem:[%s3 + $0x10a0] sm:$0xff] %v11438
    %12339 = vst [vmem:[%s3 + $0x10a8] sm:$0xff] %v11439
    %12340 = vst [vmem:[%s3 + $0x10b0] sm:$0xff] %v11440
    %12341 = vst [vmem:[%s3 + $0x10b8] sm:$0xff] %v11441
    %12342 = vst [vmem:[%s3 + $0x10c0] sm:$0xff] %v11442
    %12343 = vst [vmem:[%s3 + $0x10c8] sm:$0xff] %v11443
    %12344 = vst [vmem:[%s3 + $0x10d0] sm:$0xff] %v11444
    %12345 = vst [vmem:[%s3 + $0x10d8] sm:$0xff] %v11445
    %12346 = vst [vmem:[%s3 + $0x10e0] sm:$0xff] %v11446
    %12347 = vst [vmem:[%s3 + $0x10e8] sm:$0xff] %v11447
    %12348 = vst [vmem:[%s3 + $0x10f0] sm:$0xff] %v11448
    %12349 = vst [vmem:[%s3 + $0x10f8] sm:$0xff] %v11449
    %12350 = vst [vmem:[%s3 + $0x1100] sm:$0xff] %v11450
    %12351 = vst [vmem:[%s3 + $0x1108] sm:$0xff] %v11451
    %12352 = vst [vmem:[%s3 + $0x1110] sm:$0xff] %v11452
    %12353 = vst [vmem:[%s3 + $0x1118] sm:$0xff] %v11453
    %12354 = vst [vmem:[%s3 + $0x1120] sm:$0xff] %v11454
    %12355 = vst [vmem:[%s3 + $0x1128] sm:$0xff] %v11455
    %12356 = vst [vmem:[%s3 + $0x1130] sm:$0xff] %v11456
    %12357 = vst [vmem:[%s3 + $0x1138] sm:$0xff] %v11457
    %12358 = vst [vmem:[%s3 + $0x1140] sm:$0xff] %v11458
    %12359 = vst [vmem:[%s3 + $0x1148] sm:$0xff] %v11459
    %12360 = vst [vmem:[%s3 + $0x1150] sm:$0xff] %v11460
    %12361 = vst [vmem:[%s3 + $0x1158] sm:$0xff] %v11461
    %12362 = vst [vmem:[%s3 + $0x1160] sm:$0xff] %v11462
    %12363 = vst [vmem:[%s3 + $0x1168] sm:$0xff] %v11463
    %12364 = vst [vmem:[%s3 + $0x1170] sm:$0xff] %v11464
    %12365 = vst [vmem:[%s3 + $0x1178] sm:$0xff] %v11465
    %12366 = vst [vmem:[%s3 + $0x1180] sm:$0xff] %v11466
    %12367 = vst [vmem:[%s3 + $0x1188] sm:$0xff] %v11467
    %12368 = vst [vmem:[%s3 + $0x1190] sm:$0xff] %v11468
    %12369 = vst [vmem:[%s3 + $0x1198] sm:$0xff] %v11469
    %12370 = vst [vmem:[%s3 + $0x11a0] sm:$0xff] %v11470
    %12371 = vst [vmem:[%s3 + $0x11a8] sm:$0xff] %v11471
    %12372 = vst [vmem:[%s3 + $0x11b0] sm:$0xff] %v11472
    %12373 = vst [vmem:[%s3 + $0x11b8] sm:$0xff] %v11473
    %12374 = vst [vmem:[%s3 + $0x11c0] sm:$0xff] %v11474
    %12375 = vst [vmem:[%s3 + $0x11c8] sm:$0xff] %v11475
    %12376 = vst [vmem:[%s3 + $0x11d0] sm:$0xff] %v11476
    %12377 = vst [vmem:[%s3 + $0x11d8] sm:$0xff] %v11477
    %12378 = vst [vmem:[%s3 + $0x11e0] sm:$0xff] %v11478
    %12379 = vst [vmem:[%s3 + $0x11e8] sm:$0xff] %v11479
    %12380 = vst [vmem:[%s3 + $0x11f0] sm:$0xff] %v11480
    %12381 = vst [vmem:[%s3 + $0x11f8] sm:$0xff] %v11481
    %12382 = vst [vmem:[%s3 + $0x1200] sm:$0xff] %v11482
    %12383 = vst [vmem:[%s3 + $0x1208] sm:$0xff] %v11483
    %12384 = vst [vmem:[%s3 + $0x1210] sm:$0xff] %v11484
    %12385 = vst [vmem:[%s3 + $0x1218] sm:$0xff] %v11485
    %12386 = vst [vmem:[%s3 + $0x1220] sm:$0xff] %v11486
    %12387 = vst [vmem:[%s3 + $0x1228] sm:$0xff] %v11487
    %12388 = vst [vmem:[%s3 + $0x1230] sm:$0xff] %v11488
    %12389 = vst [vmem:[%s3 + $0x1238] sm:$0xff] %v11489
    %12390 = vst [vmem:[%s3 + $0x1240] sm:$0xff] %v11490
    %12391 = vst [vmem:[%s3 + $0x1248] sm:$0xff] %v11491
    %12392 = vst [vmem:[%s3 + $0x1250] sm:$0xff] %v11492
    %12393 = vst [vmem:[%s3 + $0x1258] sm:$0xff] %v11493
    %12394 = vst [vmem:[%s3 + $0x1260] sm:$0xff] %v11494
    %12395 = vst [vmem:[%s3 + $0x1268] sm:$0xff] %v11495
    %12396 = vst [vmem:[%s3 + $0x1270] sm:$0xff] %v11496
    %12397 = vst [vmem:[%s3 + $0x1278] sm:$0xff] %v11497
    %12398 = vst [vmem:[%s3 + $0x1280] sm:$0xff] %v11498
    %12399 = vst [vmem:[%s3 + $0x1288] sm:$0xff] %v11499
    %12400 = vst [vmem:[%s3 + $0x1290] sm:$0xff] %v11500
    %12401 = vst [vmem:[%s3 + $0x1298] sm:$0xff] %v11501
    %12402 = vst [vmem:[%s3 + $0x12a0] sm:$0xff] %v11502
    %12403 = vst [vmem:[%s3 + $0x12a8] sm:$0xff] %v11503
    %12404 = vst [vmem:[%s3 + $0x12b0] sm:$0xff] %v11504
    %12405 = vst [vmem:[%s3 + $0x12b8] sm:$0xff] %v11505
    %12406 = vst [vmem:[%s3 + $0x12c0] sm:$0xff] %v11506
    %12407 = vst [vmem:[%s3 + $0x12c8] sm:$0xff] %v11507
    %12408 = vst [vmem:[%s3 + $0x12d0] sm:$0xff] %v11508
    %12409 = vst [vmem:[%s3 + $0x12d8] sm:$0xff] %v11509
    %12410 = vst [vmem:[%s3 + $0x12e0] sm:$0xff] %v11510
    %12411 = vst [vmem:[%s3 + $0x12e8] sm:$0xff] %v11511
    %12412 = vst [vmem:[%s3 + $0x12f0] sm:$0xff] %v11512
    %12413 = vst [vmem:[%s3 + $0x12f8] sm:$0xff] %v11513
    %12414 = vst [vmem:[%s3 + $0x1300] sm:$0xff] %v11514
    %12415 = vst [vmem:[%s3 + $0x1308] sm:$0xff] %v11515
    %12416 = vst [vmem:[%s3 + $0x1310] sm:$0xff] %v11516
    %12417 = vst [vmem:[%s3 + $0x1318] sm:$0xff] %v11517
    %12418 = vst [vmem:[%s3 + $0x1320] sm:$0xff] %v11518
    %12419 = vst [vmem:[%s3 + $0x1328] sm:$0xff] %v11519
    %12420 = vst [vmem:[%s3 + $0x1330] sm:$0xff] %v11520
    %12421 = vst [vmem:[%s3 + $0x1338] sm:$0xff] %v11521
    %12422 = vst [vmem:[%s3 + $0x1340] sm:$0xff] %v11522
    %12423 = vst [vmem:[%s3 + $0x1348] sm:$0xff] %v11523
    %12424 = vst [vmem:[%s3 + $0x1350] sm:$0xff] %v11524
    %12425 = vst [vmem:[%s3 + $0x1358] sm:$0xff] %v11525
    %12426 = vst [vmem:[%s3 + $0x1360] sm:$0xff] %v11526
    %12427 = vst [vmem:[%s3 + $0x1368] sm:$0xff] %v11527
    %12428 = vst [vmem:[%s3 + $0x1370] sm:$0xff] %v11528
    %12429 = vst [vmem:[%s3 + $0x1378] sm:$0xff] %v11529
    %12430 = vst [vmem:[%s3 + $0x1380] sm:$0xff] %v11530
    %12431 = vst [vmem:[%s3 + $0x1388] sm:$0xff] %v11531
    %12432 = vst [vmem:[%s3 + $0x1390] sm:$0xff] %v11532
    %12433 = vst [vmem:[%s3 + $0x1398] sm:$0xff] %v11533
    %12434 = vst [vmem:[%s3 + $0x13a0] sm:$0xff] %v11534
    %12435 = vst [vmem:[%s3 + $0x13a8] sm:$0xff] %v11535
    %12436 = vst [vmem:[%s3 + $0x13b0] sm:$0xff] %v11536
    %12437 = vst [vmem:[%s3 + $0x13b8] sm:$0xff] %v11537
    %12438 = vst [vmem:[%s3 + $0x13c0] sm:$0xff] %v11538
    %12439 = vst [vmem:[%s3 + $0x13c8] sm:$0xff] %v11539
    %12440 = vst [vmem:[%s3 + $0x13d0] sm:$0xff] %v11540
    %12441 = vst [vmem:[%s3 + $0x13d8] sm:$0xff] %v11541
    %12442 = vst [vmem:[%s3 + $0x13e0] sm:$0xff] %v11542
    %12443 = vst [vmem:[%s3 + $0x13e8] sm:$0xff] %v11543
    %12444 = vst [vmem:[%s3 + $0x13f0] sm:$0xff] %v11544
    %12445 = vst [vmem:[%s3 + $0x13f8] sm:$0xff] %v11545
    %12446 = vst [vmem:[%s3 + $0x1400] sm:$0xff] %v11546
    %12447 = vst [vmem:[%s3 + $0x1408] sm:$0xff] %v11547
    %12448 = vst [vmem:[%s3 + $0x1410] sm:$0xff] %v11548
    %12449 = vst [vmem:[%s3 + $0x1418] sm:$0xff] %v11549
    %12450 = vst [vmem:[%s3 + $0x1420] sm:$0xff] %v11550
    %12451 = vst [vmem:[%s3 + $0x1428] sm:$0xff] %v11551
    %12452 = vst [vmem:[%s3 + $0x1430] sm:$0xff] %v11552
    %12453 = vst [vmem:[%s3 + $0x1438] sm:$0xff] %v11553
    %12454 = vst [vmem:[%s3 + $0x1440] sm:$0xff] %v11554
    %12455 = vst [vmem:[%s3 + $0x1448] sm:$0xff] %v11555
    %12456 = vst [vmem:[%s3 + $0x1450] sm:$0xff] %v11556
    %12457 = vst [vmem:[%s3 + $0x1458] sm:$0xff] %v11557
    %12458 = vst [vmem:[%s3 + $0x1460] sm:$0xff] %v11558
    %12459 = vst [vmem:[%s3 + $0x1468] sm:$0xff] %v11559
    %12460 = vst [vmem:[%s3 + $0x1470] sm:$0xff] %v11560
    %12461 = vst [vmem:[%s3 + $0x1478] sm:$0xff] %v11561
    %12462 = vst [vmem:[%s3 + $0x1480] sm:$0xff] %v11562
    %12463 = vst [vmem:[%s3 + $0x1488] sm:$0xff] %v11563
    %12464 = vst [vmem:[%s3 + $0x1490] sm:$0xff] %v11564
    %12465 = vst [vmem:[%s3 + $0x1498] sm:$0xff] %v11565
    %12466 = vst [vmem:[%s3 + $0x14a0] sm:$0xff] %v11566
    %12467 = vst [vmem:[%s3 + $0x14a8] sm:$0xff] %v11567
    %12468 = vst [vmem:[%s3 + $0x14b0] sm:$0xff] %v11568
    %12469 = vst [vmem:[%s3 + $0x14b8] sm:$0xff] %v11569
    %12470 = vst [vmem:[%s3 + $0x14c0] sm:$0xff] %v11570
    %12471 = vst [vmem:[%s3 + $0x14c8] sm:$0xff] %v11571
    %12472 = vst [vmem:[%s3 + $0x14d0] sm:$0xff] %v11572
    %12473 = vst [vmem:[%s3 + $0x14d8] sm:$0xff] %v11573
    %12474 = vst [vmem:[%s3 + $0x14e0] sm:$0xff] %v11574
    %12475 = vst [vmem:[%s3 + $0x14e8] sm:$0xff] %v11575
    %12476 = vst [vmem:[%s3 + $0x14f0] sm:$0xff] %v11576
    %12477 = vst [vmem:[%s3 + $0x14f8] sm:$0xff] %v11577
    %12478 = vst [vmem:[%s3 + $0x1500] sm:$0xff] %v11578
    %12479 = vst [vmem:[%s3 + $0x1508] sm:$0xff] %v11579
    %12480 = vst [vmem:[%s3 + $0x1510] sm:$0xff] %v11580
    %12481 = vst [vmem:[%s3 + $0x1518] sm:$0xff] %v11581
    %12482 = vst [vmem:[%s3 + $0x1520] sm:$0xff] %v11582
    %12483 = vst [vmem:[%s3 + $0x1528] sm:$0xff] %v11583
    %12484 = vst [vmem:[%s3 + $0x1530] sm:$0xff] %v11584
    %12485 = vst [vmem:[%s3 + $0x1538] sm:$0xff] %v11585
    %12486 = vst [vmem:[%s3 + $0x1540] sm:$0xff] %v11586
    %12487 = vst [vmem:[%s3 + $0x1548] sm:$0xff] %v11587
    %12488 = vst [vmem:[%s3 + $0x1550] sm:$0xff] %v11588
    %12489 = vst [vmem:[%s3 + $0x1558] sm:$0xff] %v11589
    %12490 = vst [vmem:[%s3 + $0x1560] sm:$0xff] %v11590
    %12491 = vst [vmem:[%s3 + $0x1568] sm:$0xff] %v11591
    %12492 = vst [vmem:[%s3 + $0x1570] sm:$0xff] %v11592
    %12493 = vst [vmem:[%s3 + $0x1578] sm:$0xff] %v11593
    %12494 = vst [vmem:[%s3 + $0x1580] sm:$0xff] %v11594
    %12495 = vst [vmem:[%s3 + $0x1588] sm:$0xff] %v11595
    %12496 = vst [vmem:[%s3 + $0x1590] sm:$0xff] %v11596
    %12497 = vst [vmem:[%s3 + $0x1598] sm:$0xff] %v11597
    %12498 = vst [vmem:[%s3 + $0x15a0] sm:$0xff] %v11598
    %12499 = vst [vmem:[%s3 + $0x15a8] sm:$0xff] %v11599
    %12500 = vst [vmem:[%s3 + $0x15b0] sm:$0xff] %v11600
    %12501 = vst [vmem:[%s3 + $0x15b8] sm:$0xff] %v11601
    %12502 = vst [vmem:[%s3 + $0x15c0] sm:$0xff] %v11602
    %12503 = vst [vmem:[%s3 + $0x15c8] sm:$0xff] %v11603
    %12504 = vst [vmem:[%s3 + $0x15d0] sm:$0xff] %v11604
    %12505 = vst [vmem:[%s3 + $0x15d8] sm:$0xff] %v11605
    %12506 = vst [vmem:[%s3 + $0x15e0] sm:$0xff] %v11606
    %12507 = vst [vmem:[%s3 + $0x15e8] sm:$0xff] %v11607
    %12508 = vst [vmem:[%s3 + $0x15f0] sm:$0xff] %v11608
    %12509 = vst [vmem:[%s3 + $0x15f8] sm:$0xff] %v11609
    %12510 = vst [vmem:[%s3 + $0x1600] sm:$0xff] %v11610
    %12511 = vst [vmem:[%s3 + $0x1608] sm:$0xff] %v11611
    %12512 = vst [vmem:[%s3 + $0x1610] sm:$0xff] %v11612
    %12513 = vst [vmem:[%s3 + $0x1618] sm:$0xff] %v11613
    %12514 = vst [vmem:[%s3 + $0x1620] sm:$0xff] %v11614
    %12515 = vst [vmem:[%s3 + $0x1628] sm:$0xff] %v11615
    %12516 = vst [vmem:[%s3 + $0x1630] sm:$0xff] %v11616
    %12517 = vst [vmem:[%s3 + $0x1638] sm:$0xff] %v11617
    %12518 = vst [vmem:[%s3 + $0x1640] sm:$0xff] %v11618
    %12519 = vst [vmem:[%s3 + $0x1648] sm:$0xff] %v11619
    %12520 = vst [vmem:[%s3 + $0x1650] sm:$0xff] %v11620
    %12521 = vst [vmem:[%s3 + $0x1658] sm:$0xff] %v11621
    %12522 = vst [vmem:[%s3 + $0x1660] sm:$0xff] %v11622
    %12523 = vst [vmem:[%s3 + $0x1668] sm:$0xff] %v11623
    %12524 = vst [vmem:[%s3 + $0x1670] sm:$0xff] %v11624
    %12525 = vst [vmem:[%s3 + $0x1678] sm:$0xff] %v11625
    %12526 = vst [vmem:[%s3 + $0x1680] sm:$0xff] %v11626
    %12527 = vst [vmem:[%s3 + $0x1688] sm:$0xff] %v11627
    %12528 = vst [vmem:[%s3 + $0x1690] sm:$0xff] %v11628
    %12529 = vst [vmem:[%s3 + $0x1698] sm:$0xff] %v11629
    %12530 = vst [vmem:[%s3 + $0x16a0] sm:$0xff] %v11630
    %12531 = vst [vmem:[%s3 + $0x16a8] sm:$0xff] %v11631
    %12532 = vst [vmem:[%s3 + $0x16b0] sm:$0xff] %v11632
    %12533 = vst [vmem:[%s3 + $0x16b8] sm:$0xff] %v11633
    %12534 = vst [vmem:[%s3 + $0x16c0] sm:$0xff] %v11634
    %12535 = vst [vmem:[%s3 + $0x16c8] sm:$0xff] %v11635
    %12536 = vst [vmem:[%s3 + $0x16d0] sm:$0xff] %v11636
    %12537 = vst [vmem:[%s3 + $0x16d8] sm:$0xff] %v11637
    %12538 = vst [vmem:[%s3 + $0x16e0] sm:$0xff] %v11638
    %12539 = vst [vmem:[%s3 + $0x16e8] sm:$0xff] %v11639
    %12540 = vst [vmem:[%s3 + $0x16f0] sm:$0xff] %v11640
    %12541 = vst [vmem:[%s3 + $0x16f8] sm:$0xff] %v11641
    %12542 = vst [vmem:[%s3 + $0x1700] sm:$0xff] %v11642
    %12543 = vst [vmem:[%s3 + $0x1708] sm:$0xff] %v11643
    %12544 = vst [vmem:[%s3 + $0x1710] sm:$0xff] %v11644
    %12545 = vst [vmem:[%s3 + $0x1718] sm:$0xff] %v11645
    %12546 = vst [vmem:[%s3 + $0x1720] sm:$0xff] %v11646
    %12547 = vst [vmem:[%s3 + $0x1728] sm:$0xff] %v11647
    %12548 = vst [vmem:[%s3 + $0x1730] sm:$0xff] %v11648
    %12549 = vst [vmem:[%s3 + $0x1738] sm:$0xff] %v11649
    %12550 = vst [vmem:[%s3 + $0x1740] sm:$0xff] %v11650
    %12551 = vst [vmem:[%s3 + $0x1748] sm:$0xff] %v11651
    %12552 = vst [vmem:[%s3 + $0x1750] sm:$0xff] %v11652
    %12553 = vst [vmem:[%s3 + $0x1758] sm:$0xff] %v11653
    %12554 = vst [vmem:[%s3 + $0x1760] sm:$0xff] %v11654
    %12555 = vst [vmem:[%s3 + $0x1768] sm:$0xff] %v11655
    %12556 = vst [vmem:[%s3 + $0x1770] sm:$0xff] %v11656
    %12557 = vst [vmem:[%s3 + $0x1778] sm:$0xff] %v11657
    %12558 = vst [vmem:[%s3 + $0x1780] sm:$0xff] %v11658
    %12559 = vst [vmem:[%s3 + $0x1788] sm:$0xff] %v11659
    %12560 = vst [vmem:[%s3 + $0x1790] sm:$0xff] %v11660
    %12561 = vst [vmem:[%s3 + $0x1798] sm:$0xff] %v11661
    %12562 = vst [vmem:[%s3 + $0x17a0] sm:$0xff] %v11662
    %12563 = vst [vmem:[%s3 + $0x17a8] sm:$0xff] %v11663
    %12564 = vst [vmem:[%s3 + $0x17b0] sm:$0xff] %v11664
    %12565 = vst [vmem:[%s3 + $0x17b8] sm:$0xff] %v11665
    %12566 = vst [vmem:[%s3 + $0x17c0] sm:$0xff] %v11666
    %12567 = vst [vmem:[%s3 + $0x17c8] sm:$0xff] %v11667
    %12568 = vst [vmem:[%s3 + $0x17d0] sm:$0xff] %v11668
    %12569 = vst [vmem:[%s3 + $0x17d8] sm:$0xff] %v11669
    %12570 = vst [vmem:[%s3 + $0x17e0] sm:$0xff] %v11670
    %12571 = vst [vmem:[%s3 + $0x17e8] sm:$0xff] %v11671
    %12572 = vst [vmem:[%s3 + $0x17f0] sm:$0xff] %v11672
    %12573 = vst [vmem:[%s3 + $0x17f8] sm:$0xff] %v11673
    %12574 = vst [vmem:[%s3 + $0x1800] sm:$0xff] %v11674
    %12575 = vst [vmem:[%s3 + $0x1808] sm:$0xff] %v11675
    %12576 = vst [vmem:[%s3 + $0x1810] sm:$0xff] %v11676
    %12577 = vst [vmem:[%s3 + $0x1818] sm:$0xff] %v11677
    %12578 = vst [vmem:[%s3 + $0x1820] sm:$0xff] %v11678
    %12579 = vst [vmem:[%s3 + $0x1828] sm:$0xff] %v11679
    %12580 = vst [vmem:[%s3 + $0x1830] sm:$0xff] %v11680
    %12581 = vst [vmem:[%s3 + $0x1838] sm:$0xff] %v11681
    %12582 = vst [vmem:[%s3 + $0x1840] sm:$0xff] %v11682
    %12583 = vst [vmem:[%s3 + $0x1848] sm:$0xff] %v11683
    %12584 = vst [vmem:[%s3 + $0x1850] sm:$0xff] %v11684
    %12585 = vst [vmem:[%s3 + $0x1858] sm:$0xff] %v11685
    %12586 = vst [vmem:[%s3 + $0x1860] sm:$0xff] %v11686
    %12587 = vst [vmem:[%s3 + $0x1868] sm:$0xff] %v11687
    %12588 = vst [vmem:[%s3 + $0x1870] sm:$0xff] %v11688
    %12589 = vst [vmem:[%s3 + $0x1878] sm:$0xff] %v11689
    %12590 = vst [vmem:[%s3 + $0x1880] sm:$0xff] %v11690
    %12591 = vst [vmem:[%s3 + $0x1888] sm:$0xff] %v11691
    %12592 = vst [vmem:[%s3 + $0x1890] sm:$0xff] %v11692
    %12593 = vst [vmem:[%s3 + $0x1898] sm:$0xff] %v11693
    %12594 = vst [vmem:[%s3 + $0x18a0] sm:$0xff] %v11694
    %12595 = vst [vmem:[%s3 + $0x18a8] sm:$0xff] %v11695
    %12596 = vst [vmem:[%s3 + $0x18b0] sm:$0xff] %v11696
    %12597 = vst [vmem:[%s3 + $0x18b8] sm:$0xff] %v11697
    %12598 = vst [vmem:[%s3 + $0x18c0] sm:$0xff] %v11698
    %12599 = vst [vmem:[%s3 + $0x18c8] sm:$0xff] %v11699
    %12600 = vst [vmem:[%s3 + $0x18d0] sm:$0xff] %v11700
    %12601 = vst [vmem:[%s3 + $0x18d8] sm:$0xff] %v11701
    %12602 = vst [vmem:[%s3 + $0x18e0] sm:$0xff] %v11702
    %12603 = vst [vmem:[%s3 + $0x18e8] sm:$0xff] %v11703
    %12604 = vst [vmem:[%s3 + $0x18f0] sm:$0xff] %v11704
    %12605 = vst [vmem:[%s3 + $0x18f8] sm:$0xff] %v11705
    %12606 = vst [vmem:[%s3 + $0x1900] sm:$0xff] %v11706
    %12607 = vst [vmem:[%s3 + $0x1908] sm:$0xff] %v11707
    %12608 = vst [vmem:[%s3 + $0x1910] sm:$0xff] %v11708
    %12609 = vst [vmem:[%s3 + $0x1918] sm:$0xff] %v11709
    %12610 = vst [vmem:[%s3 + $0x1920] sm:$0xff] %v11710
    %12611 = vst [vmem:[%s3 + $0x1928] sm:$0xff] %v11711
    %12612 = vst [vmem:[%s3 + $0x1930] sm:$0xff] %v11712
    %12613 = vst [vmem:[%s3 + $0x1938] sm:$0xff] %v11713
    %12614 = vst [vmem:[%s3 + $0x1940] sm:$0xff] %v11714
    %12615 = vst [vmem:[%s3 + $0x1948] sm:$0xff] %v11715
    %12616 = vst [vmem:[%s3 + $0x1950] sm:$0xff] %v11716
    %12617 = vst [vmem:[%s3 + $0x1958] sm:$0xff] %v11717
    %12618 = vst [vmem:[%s3 + $0x1960] sm:$0xff] %v11718
    %12619 = vst [vmem:[%s3 + $0x1968] sm:$0xff] %v11719
    %12620 = vst [vmem:[%s3 + $0x1970] sm:$0xff] %v11720
    %12621 = vst [vmem:[%s3 + $0x1978] sm:$0xff] %v11721
    %12622 = vst [vmem:[%s3 + $0x1980] sm:$0xff] %v11722
    %12623 = vst [vmem:[%s3 + $0x1988] sm:$0xff] %v11723
    %12624 = vst [vmem:[%s3 + $0x1990] sm:$0xff] %v11724
    %12625 = vst [vmem:[%s3 + $0x1998] sm:$0xff] %v11725
    %12626 = vst [vmem:[%s3 + $0x19a0] sm:$0xff] %v11726
    %12627 = vst [vmem:[%s3 + $0x19a8] sm:$0xff] %v11727
    %12628 = vst [vmem:[%s3 + $0x19b0] sm:$0xff] %v11728
    %12629 = vst [vmem:[%s3 + $0x19b8] sm:$0xff] %v11729
    %12630 = vst [vmem:[%s3 + $0x19c0] sm:$0xff] %v11730
    %12631 = vst [vmem:[%s3 + $0x19c8] sm:$0xff] %v11731
    %12632 = vst [vmem:[%s3 + $0x19d0] sm:$0xff] %v11732
    %12633 = vst [vmem:[%s3 + $0x19d8] sm:$0xff] %v11733
    %12634 = vst [vmem:[%s3 + $0x19e0] sm:$0xff] %v11734
    %12635 = vst [vmem:[%s3 + $0x19e8] sm:$0xff] %v11735
    %12636 = vst [vmem:[%s3 + $0x19f0] sm:$0xff] %v11736
    %12637 = vst [vmem:[%s3 + $0x19f8] sm:$0xff] %v11737
    %12638 = vst [vmem:[%s3 + $0x1a00] sm:$0xff] %v11738
    %12639 = vst [vmem:[%s3 + $0x1a08] sm:$0xff] %v11739
    %12640 = vst [vmem:[%s3 + $0x1a10] sm:$0xff] %v11740
    %12641 = vst [vmem:[%s3 + $0x1a18] sm:$0xff] %v11741
    %12642 = vst [vmem:[%s3 + $0x1a20] sm:$0xff] %v11742
    %12643 = vst [vmem:[%s3 + $0x1a28] sm:$0xff] %v11743
    %12644 = vst [vmem:[%s3 + $0x1a30] sm:$0xff] %v11744
    %12645 = vst [vmem:[%s3 + $0x1a38] sm:$0xff] %v11745
    %12646 = vst [vmem:[%s3 + $0x1a40] sm:$0xff] %v11746
    %12647 = vst [vmem:[%s3 + $0x1a48] sm:$0xff] %v11747
    %12648 = vst [vmem:[%s3 + $0x1a50] sm:$0xff] %v11748
    %12649 = vst [vmem:[%s3 + $0x1a58] sm:$0xff] %v11749
    %12650 = vst [vmem:[%s3 + $0x1a60] sm:$0xff] %v11750
    %12651 = vst [vmem:[%s3 + $0x1a68] sm:$0xff] %v11751
    %12652 = vst [vmem:[%s3 + $0x1a70] sm:$0xff] %v11752
    %12653 = vst [vmem:[%s3 + $0x1a78] sm:$0xff] %v11753
    %12654 = vst [vmem:[%s3 + $0x1a80] sm:$0xff] %v11754
    %12655 = vst [vmem:[%s3 + $0x1a88] sm:$0xff] %v11755
    %12656 = vst [vmem:[%s3 + $0x1a90] sm:$0xff] %v11756
    %12657 = vst [vmem:[%s3 + $0x1a98] sm:$0xff] %v11757
    %12658 = vst [vmem:[%s3 + $0x1aa0] sm:$0xff] %v11758
    %12659 = vst [vmem:[%s3 + $0x1aa8] sm:$0xff] %v11759
    %12660 = vst [vmem:[%s3 + $0x1ab0] sm:$0xff] %v11760
    %12661 = vst [vmem:[%s3 + $0x1ab8] sm:$0xff] %v11761
    %12662 = vst [vmem:[%s3 + $0x1ac0] sm:$0xff] %v11762
    %12663 = vst [vmem:[%s3 + $0x1ac8] sm:$0xff] %v11763
    %12664 = vst [vmem:[%s3 + $0x1ad0] sm:$0xff] %v11764
    %12665 = vst [vmem:[%s3 + $0x1ad8] sm:$0xff] %v11765
    %12666 = vst [vmem:[%s3 + $0x1ae0] sm:$0xff] %v11766
    %12667 = vst [vmem:[%s3 + $0x1ae8] sm:$0xff] %v11767
    %12668 = vst [vmem:[%s3 + $0x1af0] sm:$0xff] %v11768
    %12669 = vst [vmem:[%s3 + $0x1af8] sm:$0xff] %v11769
    %12670 = vst [vmem:[%s3 + $0x1b00] sm:$0xff] %v11770
    %12671 = vst [vmem:[%s3 + $0x1b08] sm:$0xff] %v11771
    %12672 = vst [vmem:[%s3 + $0x1b10] sm:$0xff] %v11772
    %12673 = vst [vmem:[%s3 + $0x1b18] sm:$0xff] %v11773
    %12674 = vst [vmem:[%s3 + $0x1b20] sm:$0xff] %v11774
    %12675 = vst [vmem:[%s3 + $0x1b28] sm:$0xff] %v11775
    %12676 = vst [vmem:[%s3 + $0x1b30] sm:$0xff] %v11776
    %12677 = vst [vmem:[%s3 + $0x1b38] sm:$0xff] %v11777
    %12678 = vst [vmem:[%s3 + $0x1b40] sm:$0xff] %v11778
    %12679 = vst [vmem:[%s3 + $0x1b48] sm:$0xff] %v11779
    %12680 = vst [vmem:[%s3 + $0x1b50] sm:$0xff] %v11780
    %12681 = vst [vmem:[%s3 + $0x1b58] sm:$0xff] %v11781
    %12682 = vst [vmem:[%s3 + $0x1b60] sm:$0xff] %v11782
    %12683 = vst [vmem:[%s3 + $0x1b68] sm:$0xff] %v11783
    %12684 = vst [vmem:[%s3 + $0x1b70] sm:$0xff] %v11784
    %12685 = vst [vmem:[%s3 + $0x1b78] sm:$0xff] %v11785
    %12686 = vst [vmem:[%s3 + $0x1b80] sm:$0xff] %v11786
    %12687 = vst [vmem:[%s3 + $0x1b88] sm:$0xff] %v11787
    %12688 = vst [vmem:[%s3 + $0x1b90] sm:$0xff] %v11788
    %12689 = vst [vmem:[%s3 + $0x1b98] sm:$0xff] %v11789
    %12690 = vst [vmem:[%s3 + $0x1ba0] sm:$0xff] %v11790
    %12691 = vst [vmem:[%s3 + $0x1ba8] sm:$0xff] %v11791
    %12692 = vst [vmem:[%s3 + $0x1bb0] sm:$0xff] %v11792
    %12693 = vst [vmem:[%s3 + $0x1bb8] sm:$0xff] %v11793
    %12694 = vst [vmem:[%s3 + $0x1bc0] sm:$0xff] %v11794
    %12695 = vst [vmem:[%s3 + $0x1bc8] sm:$0xff] %v11795
    %12696 = vst [vmem:[%s3 + $0x1bd0] sm:$0xff] %v11796
    %12697 = vst [vmem:[%s3 + $0x1bd8] sm:$0xff] %v11797
    %12698 = vst [vmem:[%s3 + $0x1be0] sm:$0xff] %v11798
    %12699 = vst [vmem:[%s3 + $0x1be8] sm:$0xff] %v11799
    %12700 = vst [vmem:[%s3 + $0x1bf0] sm:$0xff] %v11800
    %12701 = vst [vmem:[%s3 + $0x1bf8] sm:$0xff] %v11801
    %12702 = vst [vmem:[%s3 + $0x1c00] sm:$0xff] %v11802
    %12703 = vst [vmem:[%s3 + $0x1c08] sm:$0xff] %v11803
    %12704 = vst [vmem:[%s3 + $0x1c10] sm:$0xff] %v11804
    %12705 = vst [vmem:[%s3 + $0x1c18] sm:$0xff] %v11805
    // Predicated region
    $region22: #{edge_forward.1} parent=1 // pred_check
      _
    $region23: #{edge_forward.1} parent=1 // pred_check_branch
      %12707 = sbr.rel (0) target = $region25
    $region24: #{edge_forward.1} parent=1 // pred_region
      _
    $region25: #{edge_forward.1} parent=1 // pred_fallthru
      _
    // Predicated region
    $region26: #{edge_forward.1} parent=1 // pred_check
      _
    $region27: #{edge_forward.1} parent=1 // pred_check_branch
      %12709 = sbr.rel (0) target = $region29
    $region28: #{edge_forward.1} parent=1 // pred_region
      _
    $region29: #{edge_forward.1} parent=1 // pred_fallthru
      _
    %12710 = vsyncpa [#allocation3], 1
    %12711 = vsyncpa [#allocation5], 1

</llo_original>
